<compile_context>
chip_gen: v7x
topology: tpu7x:2x2x1
jax: 0.10.0
libtpu: 0.0.40
codegen_flags: <defaults>
</compile_context>

<pallas_src>
import functools

import jax
import jax.numpy as jnp
import numpy as np
from jax.experimental import pallas as pl
from jax.experimental.pallas import tpu as pltpu

LN_EPS = 1e-5
_NV = 18  # rows in the per-layer packed vector slab


def _round_up(x, m):
    return ((x + m - 1) // m) * m


def _vmem_limit_bytes():
    # Generation-aware budget: ~96 MiB on 128-MiB parts (v5e/v6e), ~48 MiB on v7x (64 MiB).
    try:
        cap = int(pltpu.get_tpu_info().vmem_capacity_bytes)
    except Exception:
        cap = 64 * 1024 * 1024
    return min((cap * 3) // 4, 100 * 1024 * 1024)


def _ln(y, g, b):
    mean = jnp.mean(y, axis=-1, keepdims=True)
    var = jnp.mean(jnp.square(y - mean), axis=-1, keepdims=True)
    return (y - mean) * jax.lax.rsqrt(var + LN_EPS) * g + b


# ----------------------------------------------------------------------------
# Fused kernel: init + (gather -> msg/pos MLPs -> scatter -> update) per layer + pool + pred
# ----------------------------------------------------------------------------
def _egnn_fused_kernel(src_col_ref, dst_col_ref, dst_row_ref, node_in_ref, batch_row_ref,
                       proj_w_ref, proj_b_ref, w_ref, v_ref,
                       pw1_ref, pb1_ref, pw2_ref, pb2_ref,
                       pred_ref,
                       state_ref, acc_ref,
                       *, D, proj_in, state_w, acc_w, out_dim, out_w, num_graphs, residual):
    l = pl.program_id(0)
    e = pl.program_id(1)
    n_pad = state_ref.shape[0]
    tile_e = src_col_ref.shape[0]

    # ---- once: embedding_proj, pack state = [h | pos | 0] into persistent VMEM scratch ----
    @pl.when((l == 0) & (e == 0))
    def _():
        ns = node_in_ref[...]
        h0 = jnp.dot(ns[:, :proj_in], proj_w_ref[...],
                     preferred_element_type=jnp.float32) + proj_b_ref[...]
        pos0 = ns[:, proj_in:proj_in + 3]
        state_ref[...] = jnp.concatenate(
            [h0, pos0, jnp.zeros((n_pad, state_w - D - 3), jnp.float32)], axis=-1)

    # ---- per layer: reset aggregation accumulator ----
    @pl.when(e == 0)
    def _():
        acc_ref[...] = jnp.zeros_like(acc_ref)

    w = w_ref[...]          # (7D, D) row-stacked matrices of this layer
    v = v_ref[...]          # (_NV, D) biases / LN params / pos_w2 row / pos_b2
    state = state_ref[...]  # (n_pad, state_w)

    # ---- in-kernel row gather via one-hot MXU matmuls (padded edges (-1) gather zeros) ----
    iota_n = jax.lax.broadcasted_iota(jnp.int32, (tile_e, n_pad), 1)
    oh_src = (src_col_ref[...] == iota_n).astype(jnp.float32)
    oh_dst = (dst_col_ref[...] == iota_n).astype(jnp.float32)
    s_j = jnp.dot(oh_src, state, preferred_element_type=jnp.float32)
    s_i = jnp.dot(oh_dst, state, preferred_element_type=jnp.float32)
    h_i = s_i[:, :D]
    h_j = s_j[:, :D]
    pos_diff = s_i[:, D:D + 3] - s_j[:, D:D + 3]
    dist = jnp.sqrt(jnp.sum(pos_diff * pos_diff, axis=-1, keepdims=True))

    # ---- mlp_msg: single merged K=2D matmul on a VMEM-only concat ----
    hij = jnp.concatenate([h_i, h_j], axis=-1)
    y = jnp.dot(hij, w[:2 * D], preferred_element_type=jnp.float32) + dist * v[0:1] + v[1:2]
    y = jnp.maximum(_ln(y, v[2:3], v[3:4]), 0.0)
    m = jnp.dot(y, w[2 * D:3 * D], preferred_element_type=jnp.float32) + v[4:5]
    m = jnp.maximum(_ln(m, v[5:6], v[6:7]), 0.0)

    # ---- mlp_pos -> displacement scaling ----
    p = jnp.dot(m, w[3 * D:4 * D], preferred_element_type=jnp.float32) + v[7:8]
    p = jnp.maximum(_ln(p, v[8:9], v[9:10]), 0.0)
    pscale = jnp.sum(p * v[10:11], axis=-1, keepdims=True) + v[11:12, 0:1]
    pos_msg = pos_diff * pscale

    # ---- scatter-add (msg | pos_msg | deg) with one MXU matmul into VMEM accumulator ----
    slab = jnp.concatenate(
        [m, pos_msg, jnp.ones((tile_e, 1), jnp.float32),
         jnp.zeros((tile_e, acc_w - D - 4), jnp.float32)], axis=-1)
    node_iota_col = jax.lax.broadcasted_iota(jnp.int32, (n_pad, 1), 0)
    oh_scatter = (dst_row_ref[...] == node_iota_col).astype(jnp.float32)   # (n_pad, tile_e)
    acc_ref[...] += jnp.dot(oh_scatter, slab, preferred_element_type=jnp.float32)

    # ---- per-layer epilogue: mlp_upd (merged K=2D) + residual + pos update ----
    @pl.when(e == pl.num_programs(1) - 1)
    def _():
        st = state_ref[...]
        h = st[:, :D]
        pos = st[:, D:D + 3]
        a = acc_ref[...]
        msg = a[:, :D]
        deg = jnp.maximum(a[:, D + 3:D + 4], 1.0)
        pos_new = pos + a[:, D:D + 3] / deg
        hm = jnp.concatenate([h, msg], axis=-1)
        y2 = jnp.dot(hm, w[4 * D:6 * D], preferred_element_type=jnp.float32) + v[12:13]
        y2 = jnp.maximum(_ln(y2, v[13:14], v[14:15]), 0.0)
        u = jnp.dot(y2, w[6 * D:7 * D], preferred_element_type=jnp.float32) + v[15:16]
        u = jnp.maximum(_ln(u, v[16:17], v[17:18]), 0.0)
        h_new = h + u if residual else u
        state_ref[...] = jnp.concatenate(
            [h_new, pos_new, jnp.zeros((n_pad, state_w - D - 3), jnp.float32)], axis=-1)

    # ---- final step: global_add_pool (in-kernel one-hot) + pred MLP ----
    @pl.when((l == pl.num_programs(0) - 1) & (e == pl.num_programs(1) - 1))
    def _():
        h = state_ref[...][:, :D]
        graph_iota = jax.lax.broadcasted_iota(jnp.int32, (num_graphs, 1), 0)
        oh_b = (batch_row_ref[...] == graph_iota).astype(jnp.float32)      # (B, n_pad)
        pooled = jnp.dot(oh_b, h, preferred_element_type=jnp.float32)
        yp = jnp.maximum(
            jnp.dot(pooled, pw1_ref[...], preferred_element_type=jnp.float32) + pb1_ref[...], 0.0)
        out = jnp.dot(yp, pw2_ref[...], preferred_element_type=jnp.float32) + pb2_ref[...]
        pred_ref[...] = jnp.concatenate(
            [out, jnp.zeros((num_graphs, out_w - out_dim), jnp.float32)], axis=-1)


# ----------------------------------------------------------------------------
# Parameter init (mirrors the PyTorch module) + packing into per-layer stacks
# ----------------------------------------------------------------------------
def _init_linear(key, din, dout):
    k1, k2 = jax.random.split(key)
    lim = 1.0 / np.sqrt(din)
    w = jax.random.uniform(k1, (din, dout), jnp.float32, -lim, lim)
    b = jax.random.uniform(k2, (1, dout), jnp.float32, -lim, lim)
    return w, b


def init_params(key, num_layers, emb_dim, in_dim, out_dim, num_atom_features):
    D = emb_dim
    keys = jax.random.split(key, 4 + num_layers)
    params = {"emb_dim": D, "out_dim": out_dim}
    params["embedding"] = jax.random.normal(keys[0], (in_dim, D), jnp.float32)
    proj_in = D + len(num_atom_features) - 1
    params["proj_w"], params["proj_b"] = _init_linear(keys[1], proj_in, D)
    params["pred_w1"], params["pred_b1"] = _init_linear(keys[2], D, D)
    params["pred_w2"], params["pred_b2"] = _init_linear(keys[3], D, out_dim)

    ones = jnp.ones((1, D), jnp.float32)
    zeros = jnp.zeros((1, D), jnp.float32)
    layers = []
    for l in range(num_layers):
        lk = jax.random.split(keys[4 + l], 6)
        lp = {}
        w1, b1 = _init_linear(lk[0], 2 * D + 1, D)        # mlp_msg first linear, split row-wise
        lp["msg_w1_hi"], lp["msg_w1_hj"], lp["msg_w1_d"] = w1[:D], w1[D:2 * D], w1[2 * D:]
        lp["msg_b1"] = b1
        lp["msg_g1"], lp["msg_be1"] = ones, zeros
        lp["msg_w2"], lp["msg_b2"] = _init_linear(lk[1], D, D)
        lp["msg_g2"], lp["msg_be2"] = ones, zeros
        lp["pos_w1"], lp["pos_b1"] = _init_linear(lk[2], D, D)
        lp["pos_g1"], lp["pos_be1"] = ones, zeros
        lp["pos_w2"], lp["pos_b2"] = _init_linear(lk[3], D, 1)
        wu, bu = _init_linear(lk[4], 2 * D, D)            # mlp_upd first linear, split row-wise
        lp["upd_w1_h"], lp["upd_w1_m"] = wu[:D], wu[D:]
        lp["upd_b1"] = bu
        lp["upd_g1"], lp["upd_be1"] = ones, zeros
        lp["upd_w2"], lp["upd_b2"] = _init_linear(lk[5], D, D)
        lp["upd_g2"], lp["upd_be2"] = ones, zeros
        layers.append(lp)
    params["layers"] = layers
    return params


def pack_layer_params(layers):
    """Pack each layer's 25 small tensors into one [7D,D] matrix stack + one [18,D] vector slab."""
    w_rows, v_rows = [], []
    for lp in layers:
        D = lp["msg_w2"].shape[0]
        W = jnp.concatenate(
            [lp["msg_w1_hi"], lp["msg_w1_hj"], lp["msg_w2"], lp["pos_w1"],
             lp["upd_w1_h"], lp["upd_w1_m"], lp["upd_w2"]], axis=0)
        V = jnp.concatenate(
            [lp["msg_w1_d"], lp["msg_b1"], lp["msg_g1"], lp["msg_be1"],
             lp["msg_b2"], lp["msg_g2"], lp["msg_be2"],
             lp["pos_b1"], lp["pos_g1"], lp["pos_be1"],
             lp["pos_w2"].T, jnp.broadcast_to(lp["pos_b2"], (1, D)),
             lp["upd_b1"], lp["upd_g1"], lp["upd_be1"],
             lp["upd_b2"], lp["upd_g2"], lp["upd_be2"]], axis=0)
        w_rows.append(W)
        v_rows.append(V)
    return jnp.stack(w_rows), jnp.stack(v_rows)


# ----------------------------------------------------------------------------
# EGNN forward (EGNNModel.forward with equivariant_pred=False, t=None)
# ----------------------------------------------------------------------------
def egnn_forward(params, atoms, pos, edge_index, batch_idx, num_graphs, residual=True):
    # TODO(synk): t-conditioning branch (t is not None) and equivariant_pred=True head omitted.
    D = params["emb_dim"]
    out_dim = params["out_dim"]
    proj_in = params["proj_w"].shape[0]
    state_w = _round_up(D + 3, 128)        # packed node state  [h | pos | 0]
    acc_w = _round_up(D + 4, 128)          # packed accumulator [msg | pos_sum | deg | 0]
    node_w = _round_up(proj_in + 3, 128)   # packed node input  [x | pos | 0]
    out_w = _round_up(out_dim, 128)

    N = atoms.shape[0]
    src = edge_index[0].astype(jnp.int32)
    dst = edge_index[1].astype(jnp.int32)
    E = src.shape[0]

    n_pad = _round_up(N, 8)
    # Edge tile: large tiles (>=512, up to 1024) amortize the ~600-cycle per-grid-step overhead.
    if E > 1024:
        tile_e = 1024
    else:
        tile_e = _round_up(E, 128)
    e_pad = _round_up(E, tile_e)

    # glue: embedding lookup + extra atom features packed into one lane-dense node-input slab
    h0 = params["embedding"][atoms[:, 0]]
    extra = atoms[:, 1:].astype(jnp.float32)
    x = jnp.concatenate([h0, extra], axis=-1)
    node_in = jnp.zeros((n_pad, node_w), jnp.float32)
    node_in = node_in.at[:N, :proj_in].set(x)
    node_in = node_in.at[:N, proj_in:proj_in + 3].set(pos.astype(jnp.float32))

    # padded edges / nodes get index -1 => their one-hot rows/cols are all-zero (masked out)
    src_col = jnp.pad(src, (0, e_pad - E), constant_values=-1).reshape(e_pad, 1)
    dst_p = jnp.pad(dst, (0, e_pad - E), constant_values=-1)
    dst_col = dst_p.reshape(e_pad, 1)
    dst_row = dst_p.reshape(1, e_pad)
    batch_row = jnp.pad(batch_idx.astype(jnp.int32), (0, n_pad - N),
                        constant_values=-1).reshape(1, n_pad)

    w_stack, v_stack = pack_layer_params(params["layers"])
    num_layers = w_stack.shape[0]

    kern = functools.partial(
        _egnn_fused_kernel, D=D, proj_in=proj_in, state_w=state_w, acc_w=acc_w,
        out_dim=out_dim, out_w=out_w, num_graphs=num_graphs, residual=residual)

    full = lambda a: pl.BlockSpec(a.shape, lambda l, e: (0, 0))
    pred_pad = pl.pallas_call(
        kern,
        out_shape=jax.ShapeDtypeStruct((num_graphs, out_w), jnp.float32),
        grid=(num_layers, e_pad // tile_e),
        in_specs=[
            pl.BlockSpec((tile_e, 1), lambda l, e: (e, 0)),            # src_col
            pl.BlockSpec((tile_e, 1), lambda l, e: (e, 0)),            # dst_col
            pl.BlockSpec((1, tile_e), lambda l, e: (0, e)),            # dst_row
            full(node_in),                                             # node input slab (resident)
            full(batch_row),                                           # graph ids (resident)
            full(params["proj_w"]), full(params["proj_b"]),
            pl.BlockSpec((None, 7 * D, D), lambda l, e: (l, 0, 0)),    # per-layer matrix stack
            pl.BlockSpec((None, _NV, D), lambda l, e: (l, 0, 0)),      # per-layer vector slab
            full(params["pred_w1"]), full(params["pred_b1"]),
            full(params["pred_w2"]), full(params["pred_b2"]),
        ],
        out_specs=pl.BlockSpec((num_graphs, out_w), lambda l, e: (0, 0)),
        scratch_shapes=[pltpu.VMEM((n_pad, state_w), jnp.float32),     # persistent node state
                        pltpu.VMEM((n_pad, acc_w), jnp.float32)],      # per-layer aggregation
        compiler_params=pltpu.CompilerParams(
            dimension_semantics=("arbitrary", "arbitrary"),
            vmem_limit_bytes=_vmem_limit_bytes()),
    )(src_col, dst_col, dst_row, node_in, batch_row,
      params["proj_w"], params["proj_b"], w_stack, v_stack,
      params["pred_w1"], params["pred_b1"], params["pred_w2"], params["pred_b2"])
    return pred_pad[:, :out_dim]


# ----------------------------------------------------------------------------
# Pure-JAX reference (correctness check only)
# ----------------------------------------------------------------------------
def egnn_forward_ref(params, atoms, pos, edge_index, batch_idx, num_graphs, residual=True):
    h0 = params["embedding"][atoms[:, 0]]
    extra = atoms[:, 1:].astype(jnp.float32)
    x = jnp.concatenate([h0, extra], axis=-1)
    h = x @ params["proj_w"] + params["proj_b"]
    pos = pos.astype(jnp.float32)
    src, dst = edge_index[0], edge_index[1]
    N = h.shape[0]

    for lp in params["layers"]:
        h_i, h_j = h[dst], h[src]
        pos_diff = pos[dst] - pos[src]
        dists = jnp.sqrt(jnp.sum(pos_diff ** 2, axis=-1, keepdims=True))
        y = h_i @ lp["msg_w1_hi"] + h_j @ lp["msg_w1_hj"] + dists * lp["msg_w1_d"] + lp["msg_b1"]
        y = jnp.maximum(_ln(y, lp["msg_g1"], lp["msg_be1"]), 0.0)
        m = jnp.maximum(_ln(y @ lp["msg_w2"] + lp["msg_b2"], lp["msg_g2"], lp["msg_be2"]), 0.0)
        p = jnp.maximum(_ln(m @ lp["pos_w1"] + lp["pos_b1"], lp["pos_g1"], lp["pos_be1"]), 0.0)
        p = p @ lp["pos_w2"] + lp["pos_b2"]
        pos_msg = pos_diff * p
        msg_aggr = jax.ops.segment_sum(m, dst, num_segments=N)
        pos_sum = jax.ops.segment_sum(pos_msg, dst, num_segments=N)
        deg = jnp.maximum(
            jax.ops.segment_sum(jnp.ones((dst.shape[0], 1), jnp.float32), dst, num_segments=N), 1.0)
        pos = pos + pos_sum / deg
        y = h @ lp["upd_w1_h"] + msg_aggr @ lp["upd_w1_m"] + lp["upd_b1"]
        y = jnp.maximum(_ln(y, lp["upd_g1"], lp["upd_be1"]), 0.0)
        u = jnp.maximum(_ln(y @ lp["upd_w2"] + lp["upd_b2"], lp["upd_g2"], lp["upd_be2"]), 0.0)
        h = h + u if residual else u

    onehot_b = (batch_idx[None, :] ==
                jnp.arange(num_graphs, dtype=jnp.int32)[:, None]).astype(jnp.float32)
    pooled = onehot_b @ h
    out = jnp.maximum(pooled @ params["pred_w1"] + params["pred_b1"], 0.0)
    return out @ params["pred_w2"] + params["pred_b2"]


def fully_connected_edges(n_per_graph, num_graphs):
    srcs, dsts = [], []
    for g in range(num_graphs):
        off = g * n_per_graph
        for i in range(n_per_graph):
            for j in range(n_per_graph):
                if i != j:
                    srcs.append(off + j)   # source j
                    dsts.append(off + i)   # target i
    return jnp.array([srcs, dsts], dtype=jnp.int32)


if __name__ == "__main__":
    key = jax.random.PRNGKey(0)

    num_layers = 3
    emb_dim = 32
    in_dim = 4
    out_dim = 1
    num_atom_features = [1]
    n_per_graph, num_graphs = 10, 3            # N=30, E=270 -> exercises padding + 3-layer grid
    N = n_per_graph * num_graphs

    kp, ka, kpos = jax.random.split(key, 3)
    params = init_params(kp, num_layers, emb_dim, in_dim, out_dim, num_atom_features)

    atoms = jax.random.randint(ka, (N, len(num_atom_features)), 0, in_dim, dtype=jnp.int32)
    pos = jax.random.normal(kpos, (N, 3), jnp.float32)
    edge_index = fully_connected_edges(n_per_graph, num_graphs)
    batch_idx = jnp.repeat(jnp.arange(num_graphs, dtype=jnp.int32), n_per_graph)

    out = egnn_forward(params, atoms, pos, edge_index, batch_idx, num_graphs)
    out = jax.block_until_ready(out)

    ref = egnn_forward_ref(params, atoms, pos, edge_index, batch_idx, num_graphs)
    ref = jax.block_until_ready(ref)

    assert out.shape == (num_graphs, out_dim)
    if not np.allclose(np.asarray(out), np.asarray(ref), rtol=2e-2, atol=2e-2):
        raise AssertionError(f"mismatch: pallas={out}, ref={ref}")
    print("KERNEL_OK")
</pallas_src>

<mosaic_0001>
module attributes {stable_mosaic.version = 11 : i64} {
  func.func @_egnn_fused_kernel(%arg0: i32, %arg1: i32, %arg2: memref<384x1xi32, #tpu.memory_space<vmem>>, %arg3: memref<384x1xi32, #tpu.memory_space<vmem>>, %arg4: memref<1x384xi32, #tpu.memory_space<vmem>>, %arg5: memref<32x128xf32, #tpu.memory_space<vmem>>, %arg6: memref<1x32xi32, #tpu.memory_space<vmem>>, %arg7: memref<32x32xf32, #tpu.memory_space<vmem>>, %arg8: memref<1x32xf32, #tpu.memory_space<vmem>>, %arg9: memref<1x224x32xf32, #tpu.memory_space<vmem>>, %arg10: memref<1x18x32xf32, #tpu.memory_space<vmem>>, %arg11: memref<32x32xf32, #tpu.memory_space<vmem>>, %arg12: memref<1x32xf32, #tpu.memory_space<vmem>>, %arg13: memref<32x1xf32, #tpu.memory_space<vmem>>, %arg14: memref<1x1xf32, #tpu.memory_space<vmem>>, %arg15: memref<3x128xf32, #tpu.memory_space<vmem>>, %arg16: memref<32x128xf32, #tpu.memory_space<vmem>>, %arg17: memref<32x128xf32, #tpu.memory_space<vmem>>) attributes {dimension_semantics = [#tpu.dimension_semantics<arbitrary>, #tpu.dimension_semantics<arbitrary>], iteration_bounds = array<i64: 3, 1>, scalar_prefetch = 0 : i64, scratch_operands = 2 : i64, tpu.core_type = #tpu.core_type<tc>, window_params = [{transform_indices = @transform_0, window_bounds = array<i64: 384, 1>}, {transform_indices = @transform_1, window_bounds = array<i64: 384, 1>}, {transform_indices = @transform_2, window_bounds = array<i64: 1, 384>}, {pipeline_mode = #tpu.pipeline_mode<synchronous>, transform_indices = @transform_3, window_bounds = array<i64: 32, 128>}, {pipeline_mode = #tpu.pipeline_mode<synchronous>, transform_indices = @transform_4, window_bounds = array<i64: 1, 32>}, {pipeline_mode = #tpu.pipeline_mode<synchronous>, transform_indices = @transform_5, window_bounds = array<i64: 32, 32>}, {pipeline_mode = #tpu.pipeline_mode<synchronous>, transform_indices = @transform_6, window_bounds = array<i64: 1, 32>}, {transform_indices = @transform_7, window_bounds = array<i64: 1, 224, 32>}, {transform_indices = @transform_8, window_bounds = array<i64: 1, 18, 32>}, {pipeline_mode = #tpu.pipeline_mode<synchronous>, transform_indices = @transform_9, window_bounds = array<i64: 32, 32>}, {pipeline_mode = #tpu.pipeline_mode<synchronous>, transform_indices = @transform_10, window_bounds = array<i64: 1, 32>}, {pipeline_mode = #tpu.pipeline_mode<synchronous>, transform_indices = @transform_11, window_bounds = array<i64: 32, 1>}, {pipeline_mode = #tpu.pipeline_mode<synchronous>, transform_indices = @transform_12, window_bounds = array<i64: 1, 1>}, {pipeline_mode = #tpu.pipeline_mode<synchronous>, transform_indices = @transform_13, window_bounds = array<i64: 3, 128>}]} {
    %c0_i32 = arith.constant 0 : i32
    %0 = arith.cmpi eq, %arg0, %c0_i32 : i32
    %c0_i32_0 = arith.constant 0 : i32
    %1 = arith.cmpi eq, %arg1, %c0_i32_0 : i32
    %2 = arith.andi %0, %1 : i1
    %3 = arith.extui %2 : i1 to i32
    %c0_i32_1 = arith.constant 0 : i32
    %4 = arith.cmpi ne, %3, %c0_i32_1 : i32
    scf.if %4 {
      %c0_52 = arith.constant 0 : index
      %c0_53 = arith.constant 0 : index
      %166 = vector.load %arg5[%c0_52, %c0_53] : memref<32x128xf32, #tpu.memory_space<vmem>>, vector<32x128xf32>
      %167 = vector.extract_strided_slice %166 {offsets = [0, 0], sizes = [32, 32], strides = [1, 1]} : vector<32x128xf32> to vector<32x32xf32>
      %c0_54 = arith.constant 0 : index
      %c0_55 = arith.constant 0 : index
      %168 = vector.load %arg7[%c0_54, %c0_55] : memref<32x32xf32, #tpu.memory_space<vmem>>, vector<32x32xf32>
      %cst_56 = arith.constant dense<0.000000e+00> : vector<32x32xf32>
      %169 = tpu.matmul %167, %168, %cst_56 {dimension_numbers = #tpu.dot_dimension_numbers<[1], [0], [0], [1], [0, 0, 1, 1], [], []>} : vector<32x32xf32>, vector<32x32xf32>, vector<32x32xf32> -> vector<32x32xf32>
      %c0_57 = arith.constant 0 : index
      %c0_58 = arith.constant 0 : index
      %170 = vector.load %arg8[%c0_57, %c0_58] : memref<1x32xf32, #tpu.memory_space<vmem>>, vector<1x32xf32>
      %171 = vector.broadcast %170 : vector<1x32xf32> to vector<32x32xf32>
      %172 = arith.addf %169, %171 : vector<32x32xf32>
      %173 = vector.extract_strided_slice %166 {offsets = [0, 32], sizes = [32, 3], strides = [1, 1]} : vector<32x128xf32> to vector<32x3xf32>
      %cst_59 = arith.constant 0.000000e+00 : f32
      %174 = vector.broadcast %cst_59 : f32 to vector<32x93xf32>
      %175 = tpu.concatenate %172, %173, %174 in 1 : vector<32x32xf32>, vector<32x3xf32>, vector<32x93xf32> -> vector<32x128xf32>
      %c0_60 = arith.constant 0 : index
      %c0_61 = arith.constant 0 : index
      %176 = vector.load %arg16[%c0_60, %c0_61] : memref<32x128xf32, #tpu.memory_space<vmem>>, vector<32x128xf32>
      tpu.vector_store %arg16[%c0_60, %c0_61], %175 {strides = array<i32>} : memref<32x128xf32, #tpu.memory_space<vmem>>, vector<32x128xf32>,
    } else {
    }
    %c0_i32_2 = arith.constant 0 : i32
    %5 = arith.cmpi eq, %arg1, %c0_i32_2 : i32
    %6 = arith.extui %5 : i1 to i32
    %c0_i32_3 = arith.constant 0 : i32
    %7 = arith.cmpi ne, %6, %c0_i32_3 : i32
    scf.if %7 {
      %cst_52 = arith.constant 0.000000e+00 : f32
      %166 = vector.broadcast %cst_52 : f32 to vector<32x128xf32>
      %c0_53 = arith.constant 0 : index
      %c0_54 = arith.constant 0 : index
      %167 = vector.load %arg17[%c0_53, %c0_54] : memref<32x128xf32, #tpu.memory_space<vmem>>, vector<32x128xf32>
      tpu.vector_store %arg17[%c0_53, %c0_54], %166 {strides = array<i32>} : memref<32x128xf32, #tpu.memory_space<vmem>>, vector<32x128xf32>,
    } else {
    }
    %c0 = arith.constant 0 : index
    %c0_4 = arith.constant 0 : index
    %c0_5 = arith.constant 0 : index
    %8 = vector.load %arg9[%c0, %c0_4, %c0_5] : memref<1x224x32xf32, #tpu.memory_space<vmem>>, vector<1x224x32xf32>
    %9 = vector.shape_cast %8 : vector<1x224x32xf32> to vector<224x32xf32>
    %c0_6 = arith.constant 0 : index
    %c0_7 = arith.constant 0 : index
    %c0_8 = arith.constant 0 : index
    %10 = vector.load %arg10[%c0_6, %c0_7, %c0_8] : memref<1x18x32xf32, #tpu.memory_space<vmem>>, vector<1x18x32xf32>
    %11 = vector.shape_cast %10 : vector<1x18x32xf32> to vector<18x32xf32>
    %c0_9 = arith.constant 0 : index
    %c0_10 = arith.constant 0 : index
    %12 = vector.load %arg16[%c0_9, %c0_10] : memref<32x128xf32, #tpu.memory_space<vmem>>, vector<32x128xf32>
    %13 = tpu.iota {dimensions = array<i32: 1>} : vector<384x32xi32>
    %c0_11 = arith.constant 0 : index
    %c0_12 = arith.constant 0 : index
    %14 = vector.load %arg2[%c0_11, %c0_12] : memref<384x1xi32, #tpu.memory_space<vmem>>, vector<384x1xi32>
    %15 = vector.broadcast %14 : vector<384x1xi32> to vector<384x32xi32>
    %16 = arith.cmpi eq, %15, %13 : vector<384x32xi32>
    %17 = arith.extui %16 : vector<384x32xi1> to vector<384x32xi32>
    %18 = arith.sitofp %17 : vector<384x32xi32> to vector<384x32xf32>
    %c0_13 = arith.constant 0 : index
    %c0_14 = arith.constant 0 : index
    %19 = vector.load %arg3[%c0_13, %c0_14] : memref<384x1xi32, #tpu.memory_space<vmem>>, vector<384x1xi32>
    %20 = vector.broadcast %19 : vector<384x1xi32> to vector<384x32xi32>
    %21 = arith.cmpi eq, %20, %13 : vector<384x32xi32>
    %22 = arith.extui %21 : vector<384x32xi1> to vector<384x32xi32>
    %23 = arith.sitofp %22 : vector<384x32xi32> to vector<384x32xf32>
    %cst = arith.constant dense<0.000000e+00> : vector<384x128xf32>
    %24 = tpu.matmul %18, %12, %cst {dimension_numbers = #tpu.dot_dimension_numbers<[1], [0], [0], [1], [0, 0, 1, 1], [], []>} : vector<384x32xf32>, vector<32x128xf32>, vector<384x128xf32> -> vector<384x128xf32>
    %cst_15 = arith.constant dense<0.000000e+00> : vector<384x128xf32>
    %25 = tpu.matmul %23, %12, %cst_15 {dimension_numbers = #tpu.dot_dimension_numbers<[1], [0], [0], [1], [0, 0, 1, 1], [], []>} : vector<384x32xf32>, vector<32x128xf32>, vector<384x128xf32> -> vector<384x128xf32>
    %26 = vector.extract_strided_slice %25 {offsets = [0, 0], sizes = [384, 32], strides = [1, 1]} : vector<384x128xf32> to vector<384x32xf32>
    %27 = vector.extract_strided_slice %24 {offsets = [0, 0], sizes = [384, 32], strides = [1, 1]} : vector<384x128xf32> to vector<384x32xf32>
    %28 = vector.extract_strided_slice %25 {offsets = [0, 32], sizes = [384, 3], strides = [1, 1]} : vector<384x128xf32> to vector<384x3xf32>
    %29 = vector.extract_strided_slice %24 {offsets = [0, 32], sizes = [384, 3], strides = [1, 1]} : vector<384x128xf32> to vector<384x3xf32>
    %30 = arith.subf %28, %29 : vector<384x3xf32>
    %31 = arith.mulf %30, %30 : vector<384x3xf32>
    %cst_16 = arith.constant dense<0.000000e+00> : vector<384xf32>
    %32 = vector.multi_reduction <add>, %31, %cst_16 [1] : vector<384x3xf32> to vector<384xf32>
    %33 = vector.shape_cast %32 : vector<384xf32> to vector<384x1xf32>
    %34 = math.sqrt %33 : vector<384x1xf32>
    %35 = tpu.concatenate %26, %27 in 1 : vector<384x32xf32>, vector<384x32xf32> -> vector<384x64xf32>
    %36 = vector.extract_strided_slice %9 {offsets = [0, 0], sizes = [64, 32], strides = [1, 1]} : vector<224x32xf32> to vector<64x32xf32>
    %cst_17 = arith.constant dense<0.000000e+00> : vector<384x32xf32>
    %37 = tpu.matmul %35, %36, %cst_17 {dimension_numbers = #tpu.dot_dimension_numbers<[1], [0], [0], [1], [0, 0, 1, 1], [], []>} : vector<384x64xf32>, vector<64x32xf32>, vector<384x32xf32> -> vector<384x32xf32>
    %38 = vector.extract_strided_slice %11 {offsets = [0, 0], sizes = [1, 32], strides = [1, 1]} : vector<18x32xf32> to vector<1x32xf32>
    %39 = vector.broadcast %34 : vector<384x1xf32> to vector<384x32xf32>
    %40 = vector.broadcast %38 : vector<1x32xf32> to vector<384x32xf32>
    %41 = arith.mulf %39, %40 : vector<384x32xf32>
    %42 = arith.addf %37, %41 : vector<384x32xf32>
    %43 = vector.extract_strided_slice %11 {offsets = [1, 0], sizes = [1, 32], strides = [1, 1]} : vector<18x32xf32> to vector<1x32xf32>
    %44 = vector.broadcast %43 : vector<1x32xf32> to vector<384x32xf32>
    %45 = arith.addf %42, %44 : vector<384x32xf32>
    %46 = vector.extract_strided_slice %11 {offsets = [2, 0], sizes = [1, 32], strides = [1, 1]} : vector<18x32xf32> to vector<1x32xf32>
    %47 = vector.extract_strided_slice %11 {offsets = [3, 0], sizes = [1, 32], strides = [1, 1]} : vector<18x32xf32> to vector<1x32xf32>
    %cst_18 = arith.constant dense<0.000000e+00> : vector<384xf32>
    %48 = vector.multi_reduction <add>, %45, %cst_18 [1] : vector<384x32xf32> to vector<384xf32>
    %49 = vector.shape_cast %48 : vector<384xf32> to vector<384x1xf32>
    %cst_19 = arith.constant 3.200000e+01 : f32
    %50 = vector.broadcast %cst_19 : f32 to vector<384x1xf32>
    %51 = arith.divf %49, %50 : vector<384x1xf32>
    %52 = vector.broadcast %51 : vector<384x1xf32> to vector<384x32xf32>
    %53 = arith.subf %45, %52 : vector<384x32xf32>
    %54 = arith.mulf %53, %53 : vector<384x32xf32>
    %cst_20 = arith.constant dense<0.000000e+00> : vector<384xf32>
    %55 = vector.multi_reduction <add>, %54, %cst_20 [1] : vector<384x32xf32> to vector<384xf32>
    %56 = vector.shape_cast %55 : vector<384xf32> to vector<384x1xf32>
    %cst_21 = arith.constant 3.200000e+01 : f32
    %57 = vector.broadcast %cst_21 : f32 to vector<384x1xf32>
    %58 = arith.divf %56, %57 : vector<384x1xf32>
    %59 = vector.broadcast %51 : vector<384x1xf32> to vector<384x32xf32>
    %60 = arith.subf %45, %59 : vector<384x32xf32>
    %cst_22 = arith.constant 9.99999974E-6 : f32
    %61 = vector.broadcast %cst_22 : f32 to vector<384x1xf32>
    %62 = arith.addf %58, %61 : vector<384x1xf32>
    %63 = math.rsqrt %62 : vector<384x1xf32>
    %64 = vector.broadcast %63 : vector<384x1xf32> to vector<384x32xf32>
    %65 = arith.mulf %60, %64 : vector<384x32xf32>
    %66 = vector.broadcast %46 : vector<1x32xf32> to vector<384x32xf32>
    %67 = arith.mulf %65, %66 : vector<384x32xf32>
    %68 = vector.broadcast %47 : vector<1x32xf32> to vector<384x32xf32>
    %69 = arith.addf %67, %68 : vector<384x32xf32>
    %cst_23 = arith.constant 0.000000e+00 : f32
    %70 = vector.broadcast %cst_23 : f32 to vector<384x32xf32>
    %71 = arith.maximumf %69, %70 : vector<384x32xf32>
    %72 = vector.extract_strided_slice %9 {offsets = [64, 0], sizes = [32, 32], strides = [1, 1]} : vector<224x32xf32> to vector<32x32xf32>
    %cst_24 = arith.constant dense<0.000000e+00> : vector<384x32xf32>
    %73 = tpu.matmul %71, %72, %cst_24 {dimension_numbers = #tpu.dot_dimension_numbers<[1], [0], [0], [1], [0, 0, 1, 1], [], []>} : vector<384x32xf32>, vector<32x32xf32>, vector<384x32xf32> -> vector<384x32xf32>
    %74 = vector.extract_strided_slice %11 {offsets = [4, 0], sizes = [1, 32], strides = [1, 1]} : vector<18x32xf32> to vector<1x32xf32>
    %75 = vector.broadcast %74 : vector<1x32xf32> to vector<384x32xf32>
    %76 = arith.addf %73, %75 : vector<384x32xf32>
    %77 = vector.extract_strided_slice %11 {offsets = [5, 0], sizes = [1, 32], strides = [1, 1]} : vector<18x32xf32> to vector<1x32xf32>
    %78 = vector.extract_strided_slice %11 {offsets = [6, 0], sizes = [1, 32], strides = [1, 1]} : vector<18x32xf32> to vector<1x32xf32>
    %cst_25 = arith.constant dense<0.000000e+00> : vector<384xf32>
    %79 = vector.multi_reduction <add>, %76, %cst_25 [1] : vector<384x32xf32> to vector<384xf32>
    %80 = vector.shape_cast %79 : vector<384xf32> to vector<384x1xf32>
    %cst_26 = arith.constant 3.200000e+01 : f32
    %81 = vector.broadcast %cst_26 : f32 to vector<384x1xf32>
    %82 = arith.divf %80, %81 : vector<384x1xf32>
    %83 = vector.broadcast %82 : vector<384x1xf32> to vector<384x32xf32>
    %84 = arith.subf %76, %83 : vector<384x32xf32>
    %85 = arith.mulf %84, %84 : vector<384x32xf32>
    %cst_27 = arith.constant dense<0.000000e+00> : vector<384xf32>
    %86 = vector.multi_reduction <add>, %85, %cst_27 [1] : vector<384x32xf32> to vector<384xf32>
    %87 = vector.shape_cast %86 : vector<384xf32> to vector<384x1xf32>
    %cst_28 = arith.constant 3.200000e+01 : f32
    %88 = vector.broadcast %cst_28 : f32 to vector<384x1xf32>
    %89 = arith.divf %87, %88 : vector<384x1xf32>
    %90 = vector.broadcast %82 : vector<384x1xf32> to vector<384x32xf32>
    %91 = arith.subf %76, %90 : vector<384x32xf32>
    %cst_29 = arith.constant 9.99999974E-6 : f32
    %92 = vector.broadcast %cst_29 : f32 to vector<384x1xf32>
    %93 = arith.addf %89, %92 : vector<384x1xf32>
    %94 = math.rsqrt %93 : vector<384x1xf32>
    %95 = vector.broadcast %94 : vector<384x1xf32> to vector<384x32xf32>
    %96 = arith.mulf %91, %95 : vector<384x32xf32>
    %97 = vector.broadcast %77 : vector<1x32xf32> to vector<384x32xf32>
    %98 = arith.mulf %96, %97 : vector<384x32xf32>
    %99 = vector.broadcast %78 : vector<1x32xf32> to vector<384x32xf32>
    %100 = arith.addf %98, %99 : vector<384x32xf32>
    %cst_30 = arith.constant 0.000000e+00 : f32
    %101 = vector.broadcast %cst_30 : f32 to vector<384x32xf32>
    %102 = arith.maximumf %100, %101 : vector<384x32xf32>
    %103 = vector.extract_strided_slice %9 {offsets = [96, 0], sizes = [32, 32], strides = [1, 1]} : vector<224x32xf32> to vector<32x32xf32>
    %cst_31 = arith.constant dense<0.000000e+00> : vector<384x32xf32>
    %104 = tpu.matmul %102, %103, %cst_31 {dimension_numbers = #tpu.dot_dimension_numbers<[1], [0], [0], [1], [0, 0, 1, 1], [], []>} : vector<384x32xf32>, vector<32x32xf32>, vector<384x32xf32> -> vector<384x32xf32>
    %105 = vector.extract_strided_slice %11 {offsets = [7, 0], sizes = [1, 32], strides = [1, 1]} : vector<18x32xf32> to vector<1x32xf32>
    %106 = vector.broadcast %105 : vector<1x32xf32> to vector<384x32xf32>
    %107 = arith.addf %104, %106 : vector<384x32xf32>
    %108 = vector.extract_strided_slice %11 {offsets = [8, 0], sizes = [1, 32], strides = [1, 1]} : vector<18x32xf32> to vector<1x32xf32>
    %109 = vector.extract_strided_slice %11 {offsets = [9, 0], sizes = [1, 32], strides = [1, 1]} : vector<18x32xf32> to vector<1x32xf32>
    %cst_32 = arith.constant dense<0.000000e+00> : vector<384xf32>
    %110 = vector.multi_reduction <add>, %107, %cst_32 [1] : vector<384x32xf32> to vector<384xf32>
    %111 = vector.shape_cast %110 : vector<384xf32> to vector<384x1xf32>
    %cst_33 = arith.constant 3.200000e+01 : f32
    %112 = vector.broadcast %cst_33 : f32 to vector<384x1xf32>
    %113 = arith.divf %111, %112 : vector<384x1xf32>
    %114 = vector.broadcast %113 : vector<384x1xf32> to vector<384x32xf32>
    %115 = arith.subf %107, %114 : vector<384x32xf32>
    %116 = arith.mulf %115, %115 : vector<384x32xf32>
    %cst_34 = arith.constant dense<0.000000e+00> : vector<384xf32>
    %117 = vector.multi_reduction <add>, %116, %cst_34 [1] : vector<384x32xf32> to vector<384xf32>
    %118 = vector.shape_cast %117 : vector<384xf32> to vector<384x1xf32>
    %cst_35 = arith.constant 3.200000e+01 : f32
    %119 = vector.broadcast %cst_35 : f32 to vector<384x1xf32>
    %120 = arith.divf %118, %119 : vector<384x1xf32>
    %121 = vector.broadcast %113 : vector<384x1xf32> to vector<384x32xf32>
    %122 = arith.subf %107, %121 : vector<384x32xf32>
    %cst_36 = arith.constant 9.99999974E-6 : f32
    %123 = vector.broadcast %cst_36 : f32 to vector<384x1xf32>
    %124 = arith.addf %120, %123 : vector<384x1xf32>
    %125 = math.rsqrt %124 : vector<384x1xf32>
    %126 = vector.broadcast %125 : vector<384x1xf32> to vector<384x32xf32>
    %127 = arith.mulf %122, %126 : vector<384x32xf32>
    %128 = vector.broadcast %108 : vector<1x32xf32> to vector<384x32xf32>
    %129 = arith.mulf %127, %128 : vector<384x32xf32>
    %130 = vector.broadcast %109 : vector<1x32xf32> to vector<384x32xf32>
    %131 = arith.addf %129, %130 : vector<384x32xf32>
    %cst_37 = arith.constant 0.000000e+00 : f32
    %132 = vector.broadcast %cst_37 : f32 to vector<384x32xf32>
    %133 = arith.maximumf %131, %132 : vector<384x32xf32>
    %134 = vector.extract_strided_slice %11 {offsets = [10, 0], sizes = [1, 32], strides = [1, 1]} : vector<18x32xf32> to vector<1x32xf32>
    %135 = vector.broadcast %134 : vector<1x32xf32> to vector<384x32xf32>
    %136 = arith.mulf %133, %135 : vector<384x32xf32>
    %cst_38 = arith.constant dense<0.000000e+00> : vector<384xf32>
    %137 = vector.multi_reduction <add>, %136, %cst_38 [1] : vector<384x32xf32> to vector<384xf32>
    %138 = vector.shape_cast %137 : vector<384xf32> to vector<384x1xf32>
    %139 = vector.extract_strided_slice %11 {offsets = [11, 0], sizes = [1, 1], strides = [1, 1]} : vector<18x32xf32> to vector<1x1xf32>
    %140 = vector.broadcast %139 : vector<1x1xf32> to vector<384x1xf32>
    %141 = arith.addf %138, %140 : vector<384x1xf32>
    %142 = vector.broadcast %141 : vector<384x1xf32> to vector<384x3xf32>
    %143 = arith.mulf %30, %142 : vector<384x3xf32>
    %cst_39 = arith.constant 1.000000e+00 : f32
    %144 = vector.broadcast %cst_39 : f32 to vector<384x1xf32>
    %cst_40 = arith.constant 0.000000e+00 : f32
    %145 = vector.broadcast %cst_40 : f32 to vector<384x92xf32>
    %146 = tpu.concatenate %102, %143, %144, %145 in 1 : vector<384x32xf32>, vector<384x3xf32>, vector<384x1xf32>, vector<384x92xf32> -> vector<384x128xf32>
    %147 = tpu.iota {dimensions = array<i32: 0>} : vector<32x1xi32>
    %c0_41 = arith.constant 0 : index
    %c0_42 = arith.constant 0 : index
    %148 = vector.load %arg4[%c0_41, %c0_42] : memref<1x384xi32, #tpu.memory_space<vmem>>, vector<1x384xi32>
    %149 = vector.broadcast %148 : vector<1x384xi32> to vector<32x384xi32>
    %150 = vector.broadcast %147 : vector<32x1xi32> to vector<32x384xi32>
    %151 = arith.cmpi eq, %149, %150 : vector<32x384xi32>
    %152 = arith.extui %151 : vector<32x384xi1> to vector<32x384xi32>
    %153 = arith.sitofp %152 : vector<32x384xi32> to vector<32x384xf32>
    %c0_43 = arith.constant 0 : index
    %c0_44 = arith.constant 0 : index
    %154 = vector.load %arg17[%c0_43, %c0_44] : memref<32x128xf32, #tpu.memory_space<vmem>>, vector<32x128xf32>
    %cst_45 = arith.constant dense<0.000000e+00> : vector<32x128xf32>
    %155 = tpu.matmul %153, %146, %cst_45 {dimension_numbers = #tpu.dot_dimension_numbers<[1], [0], [0], [1], [0, 0, 1, 1], [], []>} : vector<32x384xf32>, vector<384x128xf32>, vector<32x128xf32> -> vector<32x128xf32>
    %156 = arith.addf %154, %155 : vector<32x128xf32>
    %c0_46 = arith.constant 0 : index
    %c0_47 = arith.constant 0 : index
    %157 = vector.load %arg17[%c0_46, %c0_47] : memref<32x128xf32, #tpu.memory_space<vmem>>, vector<32x128xf32>
    tpu.vector_store %arg17[%c0_46, %c0_47], %156 {strides = array<i32>} : memref<32x128xf32, #tpu.memory_space<vmem>>, vector<32x128xf32>,
    %c0_i32_48 = arith.constant 0 : i32
    %158 = arith.cmpi eq, %arg1, %c0_i32_48 : i32
    %159 = arith.extui %158 : i1 to i32
    %c0_i32_49 = arith.constant 0 : i32
    %160 = arith.cmpi ne, %159, %c0_i32_49 : i32
    scf.if %160 {
      %c0_52 = arith.constant 0 : index
      %c0_53 = arith.constant 0 : index
      %166 = vector.load %arg16[%c0_52, %c0_53] : memref<32x128xf32, #tpu.memory_space<vmem>>, vector<32x128xf32>
      %167 = vector.extract_strided_slice %166 {offsets = [0, 0], sizes = [32, 32], strides = [1, 1]} : vector<32x128xf32> to vector<32x32xf32>
      %168 = vector.extract_strided_slice %166 {offsets = [0, 32], sizes = [32, 3], strides = [1, 1]} : vector<32x128xf32> to vector<32x3xf32>
      %c0_54 = arith.constant 0 : index
      %c0_55 = arith.constant 0 : index
      %169 = vector.load %arg17[%c0_54, %c0_55] : memref<32x128xf32, #tpu.memory_space<vmem>>, vector<32x128xf32>
      %170 = vector.extract_strided_slice %169 {offsets = [0, 0], sizes = [32, 32], strides = [1, 1]} : vector<32x128xf32> to vector<32x32xf32>
      %171 = vector.extract_strided_slice %169 {offsets = [0, 35], sizes = [32, 1], strides = [1, 1]} : vector<32x128xf32> to vector<32x1xf32>
      %cst_56 = arith.constant 1.000000e+00 : f32
      %172 = vector.broadcast %cst_56 : f32 to vector<32x1xf32>
      %173 = arith.maximumf %171, %172 : vector<32x1xf32>
      %174 = vector.extract_strided_slice %169 {offsets = [0, 32], sizes = [32, 3], strides = [1, 1]} : vector<32x128xf32> to vector<32x3xf32>
      %175 = vector.broadcast %173 : vector<32x1xf32> to vector<32x3xf32>
      %176 = arith.divf %174, %175 : vector<32x3xf32>
      %177 = arith.addf %168, %176 : vector<32x3xf32>
      %178 = tpu.concatenate %167, %170 in 1 : vector<32x32xf32>, vector<32x32xf32> -> vector<32x64xf32>
      %179 = vector.extract_strided_slice %9 {offsets = [128, 0], sizes = [64, 32], strides = [1, 1]} : vector<224x32xf32> to vector<64x32xf32>
      %cst_57 = arith.constant dense<0.000000e+00> : vector<32x32xf32>
      %180 = tpu.matmul %178, %179, %cst_57 {dimension_numbers = #tpu.dot_dimension_numbers<[1], [0], [0], [1], [0, 0, 1, 1], [], []>} : vector<32x64xf32>, vector<64x32xf32>, vector<32x32xf32> -> vector<32x32xf32>
      %181 = vector.extract_strided_slice %11 {offsets = [12, 0], sizes = [1, 32], strides = [1, 1]} : vector<18x32xf32> to vector<1x32xf32>
      %182 = vector.broadcast %181 : vector<1x32xf32> to vector<32x32xf32>
      %183 = arith.addf %180, %182 : vector<32x32xf32>
      %184 = vector.extract_strided_slice %11 {offsets = [13, 0], sizes = [1, 32], strides = [1, 1]} : vector<18x32xf32> to vector<1x32xf32>
      %185 = vector.extract_strided_slice %11 {offsets = [14, 0], sizes = [1, 32], strides = [1, 1]} : vector<18x32xf32> to vector<1x32xf32>
      %cst_58 = arith.constant dense<0.000000e+00> : vector<32xf32>
      %186 = vector.multi_reduction <add>, %183, %cst_58 [1] : vector<32x32xf32> to vector<32xf32>
      %187 = vector.shape_cast %186 : vector<32xf32> to vector<32x1xf32>
      %cst_59 = arith.constant 3.200000e+01 : f32
      %188 = vector.broadcast %cst_59 : f32 to vector<32x1xf32>
      %189 = arith.divf %187, %188 : vector<32x1xf32>
      %190 = vector.broadcast %189 : vector<32x1xf32> to vector<32x32xf32>
      %191 = arith.subf %183, %190 : vector<32x32xf32>
      %192 = arith.mulf %191, %191 : vector<32x32xf32>
      %cst_60 = arith.constant dense<0.000000e+00> : vector<32xf32>
      %193 = vector.multi_reduction <add>, %192, %cst_60 [1] : vector<32x32xf32> to vector<32xf32>
      %194 = vector.shape_cast %193 : vector<32xf32> to vector<32x1xf32>
      %cst_61 = arith.constant 3.200000e+01 : f32
      %195 = vector.broadcast %cst_61 : f32 to vector<32x1xf32>
      %196 = arith.divf %194, %195 : vector<32x1xf32>
      %197 = vector.broadcast %189 : vector<32x1xf32> to vector<32x32xf32>
      %198 = arith.subf %183, %197 : vector<32x32xf32>
      %cst_62 = arith.constant 9.99999974E-6 : f32
      %199 = vector.broadcast %cst_62 : f32 to vector<32x1xf32>
      %200 = arith.addf %196, %199 : vector<32x1xf32>
      %201 = math.rsqrt %200 : vector<32x1xf32>
      %202 = vector.broadcast %201 : vector<32x1xf32> to vector<32x32xf32>
      %203 = arith.mulf %198, %202 : vector<32x32xf32>
      %204 = vector.broadcast %184 : vector<1x32xf32> to vector<32x32xf32>
      %205 = arith.mulf %203, %204 : vector<32x32xf32>
      %206 = vector.broadcast %185 : vector<1x32xf32> to vector<32x32xf32>
      %207 = arith.addf %205, %206 : vector<32x32xf32>
      %cst_63 = arith.constant 0.000000e+00 : f32
      %208 = vector.broadcast %cst_63 : f32 to vector<32x32xf32>
      %209 = arith.maximumf %207, %208 : vector<32x32xf32>
      %210 = vector.extract_strided_slice %9 {offsets = [192, 0], sizes = [32, 32], strides = [1, 1]} : vector<224x32xf32> to vector<32x32xf32>
      %cst_64 = arith.constant dense<0.000000e+00> : vector<32x32xf32>
      %211 = tpu.matmul %209, %210, %cst_64 {dimension_numbers = #tpu.dot_dimension_numbers<[1], [0], [0], [1], [0, 0, 1, 1], [], []>} : vector<32x32xf32>, vector<32x32xf32>, vector<32x32xf32> -> vector<32x32xf32>
      %212 = vector.extract_strided_slice %11 {offsets = [15, 0], sizes = [1, 32], strides = [1, 1]} : vector<18x32xf32> to vector<1x32xf32>
      %213 = vector.broadcast %212 : vector<1x32xf32> to vector<32x32xf32>
      %214 = arith.addf %211, %213 : vector<32x32xf32>
      %215 = vector.extract_strided_slice %11 {offsets = [16, 0], sizes = [1, 32], strides = [1, 1]} : vector<18x32xf32> to vector<1x32xf32>
      %216 = vector.extract_strided_slice %11 {offsets = [17, 0], sizes = [1, 32], strides = [1, 1]} : vector<18x32xf32> to vector<1x32xf32>
      %cst_65 = arith.constant dense<0.000000e+00> : vector<32xf32>
      %217 = vector.multi_reduction <add>, %214, %cst_65 [1] : vector<32x32xf32> to vector<32xf32>
      %218 = vector.shape_cast %217 : vector<32xf32> to vector<32x1xf32>
      %cst_66 = arith.constant 3.200000e+01 : f32
      %219 = vector.broadcast %cst_66 : f32 to vector<32x1xf32>
      %220 = arith.divf %218, %219 : vector<32x1xf32>
      %221 = vector.broadcast %220 : vector<32x1xf32> to vector<32x32xf32>
      %222 = arith.subf %214, %221 : vector<32x32xf32>
      %223 = arith.mulf %222, %222 : vector<32x32xf32>
      %cst_67 = arith.constant dense<0.000000e+00> : vector<32xf32>
      %224 = vector.multi_reduction <add>, %223, %cst_67 [1] : vector<32x32xf32> to vector<32xf32>
      %225 = vector.shape_cast %224 : vector<32xf32> to vector<32x1xf32>
      %cst_68 = arith.constant 3.200000e+01 : f32
      %226 = vector.broadcast %cst_68 : f32 to vector<32x1xf32>
      %227 = arith.divf %225, %226 : vector<32x1xf32>
      %228 = vector.broadcast %220 : vector<32x1xf32> to vector<32x32xf32>
      %229 = arith.subf %214, %228 : vector<32x32xf32>
      %cst_69 = arith.constant 9.99999974E-6 : f32
      %230 = vector.broadcast %cst_69 : f32 to vector<32x1xf32>
      %231 = arith.addf %227, %230 : vector<32x1xf32>
      %232 = math.rsqrt %231 : vector<32x1xf32>
      %233 = vector.broadcast %232 : vector<32x1xf32> to vector<32x32xf32>
      %234 = arith.mulf %229, %233 : vector<32x32xf32>
      %235 = vector.broadcast %215 : vector<1x32xf32> to vector<32x32xf32>
      %236 = arith.mulf %234, %235 : vector<32x32xf32>
      %237 = vector.broadcast %216 : vector<1x32xf32> to vector<32x32xf32>
      %238 = arith.addf %236, %237 : vector<32x32xf32>
      %cst_70 = arith.constant 0.000000e+00 : f32
      %239 = vector.broadcast %cst_70 : f32 to vector<32x32xf32>
      %240 = arith.maximumf %238, %239 : vector<32x32xf32>
      %241 = arith.addf %167, %240 : vector<32x32xf32>
      %cst_71 = arith.constant 0.000000e+00 : f32
      %242 = vector.broadcast %cst_71 : f32 to vector<32x93xf32>
      %243 = tpu.concatenate %241, %177, %242 in 1 : vector<32x32xf32>, vector<32x3xf32>, vector<32x93xf32> -> vector<32x128xf32>
      %c0_72 = arith.constant 0 : index
      %c0_73 = arith.constant 0 : index
      %244 = vector.load %arg16[%c0_72, %c0_73] : memref<32x128xf32, #tpu.memory_space<vmem>>, vector<32x128xf32>
      tpu.vector_store %arg16[%c0_72, %c0_73], %243 {strides = array<i32>} : memref<32x128xf32, #tpu.memory_space<vmem>>, vector<32x128xf32>,
    } else {
    }
    %c2_i32 = arith.constant 2 : i32
    %161 = arith.cmpi eq, %arg0, %c2_i32 : i32
    %c0_i32_50 = arith.constant 0 : i32
    %162 = arith.cmpi eq, %arg1, %c0_i32_50 : i32
    %163 = arith.andi %161, %162 : i1
    %164 = arith.extui %163 : i1 to i32
    %c0_i32_51 = arith.constant 0 : i32
    %165 = arith.cmpi ne, %164, %c0_i32_51 : i32
    scf.if %165 {
      %c0_52 = arith.constant 0 : index
      %c0_53 = arith.constant 0 : index
      %166 = vector.load %arg16[%c0_52, %c0_53] : memref<32x128xf32, #tpu.memory_space<vmem>>, vector<32x128xf32>
      %167 = vector.extract_strided_slice %166 {offsets = [0, 0], sizes = [32, 32], strides = [1, 1]} : vector<32x128xf32> to vector<32x32xf32>
      %168 = tpu.iota {dimensions = array<i32: 0>} : vector<3x1xi32>
      %c0_54 = arith.constant 0 : index
      %c0_55 = arith.constant 0 : index
      %169 = vector.load %arg6[%c0_54, %c0_55] : memref<1x32xi32, #tpu.memory_space<vmem>>, vector<1x32xi32>
      %170 = vector.broadcast %169 : vector<1x32xi32> to vector<3x32xi32>
      %171 = vector.broadcast %168 : vector<3x1xi32> to vector<3x32xi32>
      %172 = arith.cmpi eq, %170, %171 : vector<3x32xi32>
      %173 = arith.extui %172 : vector<3x32xi1> to vector<3x32xi32>
      %174 = arith.sitofp %173 : vector<3x32xi32> to vector<3x32xf32>
      %cst_56 = arith.constant dense<0.000000e+00> : vector<3x32xf32>
      %175 = tpu.matmul %174, %167, %cst_56 {dimension_numbers = #tpu.dot_dimension_numbers<[1], [0], [0], [1], [0, 0, 1, 1], [], []>} : vector<3x32xf32>, vector<32x32xf32>, vector<3x32xf32> -> vector<3x32xf32>
      %c0_57 = arith.constant 0 : index
      %c0_58 = arith.constant 0 : index
      %176 = vector.load %arg11[%c0_57, %c0_58] : memref<32x32xf32, #tpu.memory_space<vmem>>, vector<32x32xf32>
      %cst_59 = arith.constant dense<0.000000e+00> : vector<3x32xf32>
      %177 = tpu.matmul %175, %176, %cst_59 {dimension_numbers = #tpu.dot_dimension_numbers<[1], [0], [0], [1], [0, 0, 1, 1], [], []>} : vector<3x32xf32>, vector<32x32xf32>, vector<3x32xf32> -> vector<3x32xf32>
      %c0_60 = arith.constant 0 : index
      %c0_61 = arith.constant 0 : index
      %178 = vector.load %arg12[%c0_60, %c0_61] : memref<1x32xf32, #tpu.memory_space<vmem>>, vector<1x32xf32>
      %179 = vector.broadcast %178 : vector<1x32xf32> to vector<3x32xf32>
      %180 = arith.addf %177, %179 : vector<3x32xf32>
      %cst_62 = arith.constant 0.000000e+00 : f32
      %181 = vector.broadcast %cst_62 : f32 to vector<3x32xf32>
      %182 = arith.maximumf %180, %181 : vector<3x32xf32>
      %c0_63 = arith.constant 0 : index
      %c0_64 = arith.constant 0 : index
      %183 = vector.load %arg13[%c0_63, %c0_64] : memref<32x1xf32, #tpu.memory_space<vmem>>, vector<32x1xf32>
      %cst_65 = arith.constant dense<0.000000e+00> : vector<3x1xf32>
      %184 = tpu.matmul %182, %183, %cst_65 {dimension_numbers = #tpu.dot_dimension_numbers<[1], [0], [0], [1], [0, 0, 1, 1], [], []>} : vector<3x32xf32>, vector<32x1xf32>, vector<3x1xf32> -> vector<3x1xf32>
      %c0_66 = arith.constant 0 : index
      %c0_67 = arith.constant 0 : index
      %185 = vector.load %arg14[%c0_66, %c0_67] : memref<1x1xf32, #tpu.memory_space<vmem>>, vector<1x1xf32>
      %186 = vector.broadcast %185 : vector<1x1xf32> to vector<3x1xf32>
      %187 = arith.addf %184, %186 : vector<3x1xf32>
      %cst_68 = arith.constant 0.000000e+00 : f32
      %188 = vector.broadcast %cst_68 : f32 to vector<3x127xf32>
      %189 = tpu.concatenate %187, %188 in 1 : vector<3x1xf32>, vector<3x127xf32> -> vector<3x128xf32>
      %c0_69 = arith.constant 0 : index
      %c0_70 = arith.constant 0 : index
      %190 = vector.load %arg15[%c0_69, %c0_70] : memref<3x128xf32, #tpu.memory_space<vmem>>, vector<3x128xf32>
      tpu.vector_store %arg15[%c0_69, %c0_70], %189 {strides = array<i32>} : memref<3x128xf32, #tpu.memory_space<vmem>>, vector<3x128xf32>,
    } else {
    }
    return
  }
  func.func @transform_0(%arg0: i32, %arg1: i32) -> (i32, i32) {
    %c0_i32 = arith.constant 0 : i32
    %c0_i32_0 = arith.constant 0 : i32
    return %arg1, %c0_i32 : i32, i32
  }
  func.func @transform_1(%arg0: i32, %arg1: i32) -> (i32, i32) {
    %c0_i32 = arith.constant 0 : i32
    %c0_i32_0 = arith.constant 0 : i32
    return %arg1, %c0_i32 : i32, i32
  }
  func.func @transform_2(%arg0: i32, %arg1: i32) -> (i32, i32) {
    %c0_i32 = arith.constant 0 : i32
    %c0_i32_0 = arith.constant 0 : i32
    return %c0_i32, %arg1 : i32, i32
  }
  func.func @transform_3(%arg0: i32, %arg1: i32) -> (i32, i32) {
    %c0_i32 = arith.constant 0 : i32
    %c0_i32_0 = arith.constant 0 : i32
    %c0_i32_1 = arith.constant 0 : i32
    return %c0_i32, %c0_i32_0 : i32, i32
  }
  func.func @transform_4(%arg0: i32, %arg1: i32) -> (i32, i32) {
    %c0_i32 = arith.constant 0 : i32
    %c0_i32_0 = arith.constant 0 : i32
    %c0_i32_1 = arith.constant 0 : i32
    return %c0_i32, %c0_i32_0 : i32, i32
  }
  func.func @transform_5(%arg0: i32, %arg1: i32) -> (i32, i32) {
    %c0_i32 = arith.constant 0 : i32
    %c0_i32_0 = arith.constant 0 : i32
    %c0_i32_1 = arith.constant 0 : i32
    return %c0_i32, %c0_i32_0 : i32, i32
  }
  func.func @transform_6(%arg0: i32, %arg1: i32) -> (i32, i32) {
    %c0_i32 = arith.constant 0 : i32
    %c0_i32_0 = arith.constant 0 : i32
    %c0_i32_1 = arith.constant 0 : i32
    return %c0_i32, %c0_i32_0 : i32, i32
  }
  func.func @transform_7(%arg0: i32, %arg1: i32) -> (i32, i32, i32) {
    %c0_i32 = arith.constant 0 : i32
    %c0_i32_0 = arith.constant 0 : i32
    %c0_i32_1 = arith.constant 0 : i32
    return %arg0, %c0_i32, %c0_i32_0 : i32, i32, i32
  }
  func.func @transform_8(%arg0: i32, %arg1: i32) -> (i32, i32, i32) {
    %c0_i32 = arith.constant 0 : i32
    %c0_i32_0 = arith.constant 0 : i32
    %c0_i32_1 = arith.constant 0 : i32
    return %arg0, %c0_i32, %c0_i32_0 : i32, i32, i32
  }
  func.func @transform_9(%arg0: i32, %arg1: i32) -> (i32, i32) {
    %c0_i32 = arith.constant 0 : i32
    %c0_i32_0 = arith.constant 0 : i32
    %c0_i32_1 = arith.constant 0 : i32
    return %c0_i32, %c0_i32_0 : i32, i32
  }
  func.func @transform_10(%arg0: i32, %arg1: i32) -> (i32, i32) {
    %c0_i32 = arith.constant 0 : i32
    %c0_i32_0 = arith.constant 0 : i32
    %c0_i32_1 = arith.constant 0 : i32
    return %c0_i32, %c0_i32_0 : i32, i32
  }
  func.func @transform_11(%arg0: i32, %arg1: i32) -> (i32, i32) {
    %c0_i32 = arith.constant 0 : i32
    %c0_i32_0 = arith.constant 0 : i32
    %c0_i32_1 = arith.constant 0 : i32
    return %c0_i32, %c0_i32_0 : i32, i32
  }
  func.func @transform_12(%arg0: i32, %arg1: i32) -> (i32, i32) {
    %c0_i32 = arith.constant 0 : i32
    %c0_i32_0 = arith.constant 0 : i32
    %c0_i32_1 = arith.constant 0 : i32
    return %c0_i32, %c0_i32_0 : i32, i32
  }
  func.func @transform_13(%arg0: i32, %arg1: i32) -> (i32, i32) {
    %c0_i32 = arith.constant 0 : i32
    %c0_i32_0 = arith.constant 0 : i32
    %c0_i32_1 = arith.constant 0 : i32
    return %c0_i32, %c0_i32_0 : i32, i32
  }
}

</mosaic_0001>

<llo_original>
// kernel: tpu_custom_call.1
$region0: #{tpu_custom_call.1}
  #allocation0 [shape = 'u32[]', space=smem, size = 0x4, offset = 0x4, fixed_abs, tag = 'smem constant byte address 0x4 - core index']
  #allocation1 [shape = 'u32[144,128]{1,0:T(1,128)}', space=vmem, size = 0x12000, scoped, tag = 'internal scratch']
  #allocation2 [shape = 'f32[32,128]{1,0:T(8,128)}', space=vmem, size = 0x4000, scoped, tag = 'scratch operand']
  #allocation3 [shape = 'f32[32,128]{1,0:T(8,128)}', space=vmem, size = 0x4000, scoped, tag = 'scratch operand']
  #allocation4 [shape = 'f32[1,1]{1,0:T(1,128)S(1)}', space=vmem, size = 0x200, scoped, tag = 'scoped memory for tpu_custom_call.1']
  %s0 = inlined_call_operand.vmem [shape: s32[384,1], index: 0, kind: input, shape index: {}]
  %s1 = inlined_call_operand.vmem [shape: s32[384,1], index: 1, kind: input, shape index: {}]
  %s2 = inlined_call_operand.vmem [shape: s32[1,384], index: 2, kind: input, shape index: {}]
  %s3 = inlined_call_operand.vmem [shape: f32[32,128], index: 3, kind: input, shape index: {}]
  %s4 = inlined_call_operand.vmem [shape: s32[1,32], index: 4, kind: input, shape index: {}]
  %s5 = inlined_call_operand.vmem [shape: f32[32,32], index: 5, kind: input, shape index: {}]
  %s6 = inlined_call_operand.vmem [shape: f32[1,32], index: 6, kind: input, shape index: {}]
  %s7 = inlined_call_operand.vmem [shape: f32[3,224,32], index: 7, kind: input, shape index: {}]
  %s8 = inlined_call_operand.vmem [shape: f32[3,18,32], index: 8, kind: input, shape index: {}]
  %s9 = inlined_call_operand.vmem [shape: f32[32,32], index: 9, kind: input, shape index: {}]
  %s10 = inlined_call_operand.vmem [shape: f32[1,32], index: 10, kind: input, shape index: {}]
  %s11 = inlined_call_operand.vmem [shape: f32[32,1], index: 11, kind: input, shape index: {}]
  %s12 = inlined_call_operand.<no memory space> [shape: f32[1,1], index: 12, kind: input, shape index: {}]
  %s13 = inlined_call_operand.hbm [shape: f32[3,128], index: 13, kind: output, shape index: {}]
  %s14 = sld [smem:[#allocation0]]
  $region101: #{tpu_custom_call.1} parent=0
    _
  %s16 = ssub.s32 1, %s14
  %s17 = scalar_select 0, %s16, %s14
  %v18 = vstv %s12
  %19 = vst [vmem:[#allocation4] sm:$0x1] %v18
  $region1: #{tpu_custom_call.1} parent=0
    #allocation5 [shape = 'u8[2048]{0}', space=vmem, size = 0x800, scoped, tag = 'output window, operand 0, single buffered']
    #allocation6 [shape = 's32[2]{0}', space=sflag, size = 0x8, scoped, tag = 'scoped memory for tpu_custom_call.1']
    %20 = vsyncpa [#allocation6], 0
    loop: start=0, step=1, limit=5
    $region2: #{tpu_custom_call.1} parent=1 // loop_pre_header
      _
    $region3: #{tpu_custom_call.1} parent=1 // loop_header
      %s22 = sphi 0, %s26
      %p23 = scmp.ge.s32.totalorder %s22, 5
      %s29 = sphi 0, %s41
      %s30 = sphi 0, %s37
      %s31 = sphi 0, %s29
      %s32 = sphi 0, %s30
      %s33 = sphi 0, %s31
      %s34 = sphi 0, %s32
      %s44 = sphi 0, %s46
      %s47 = sphi 0, %s44
      %s48 = sphi 0, %s47
      %s64 = sphi 0, %s48
      %s70 = sphi 0, %s72
      %s73 = sphi 0, %s70
      %s74 = sphi 0, %s73
      %s90 = sphi 0, %s74
      %s96 = sphi 0, %s98
      %s99 = sphi 0, %s96
      %s100 = sphi 0, %s99
      %s116 = sphi 0, %s100
      %s120 = sphi 0, %s120
      %s122 = sphi 0, %s120
      %s123 = sphi 0, %s122
      %s137 = sphi 0, %s123
      %s141 = sphi 0, %s141
      %s143 = sphi 0, %s141
      %s144 = sphi 0, %s143
      %s158 = sphi 0, %s144
      %s162 = sphi 0, %s162
      %s164 = sphi 0, %s162
      %s165 = sphi 0, %s164
      %s179 = sphi 0, %s165
      %s183 = sphi 0, %s183
      %s185 = sphi 0, %s183
      %s186 = sphi 0, %s185
      %s200 = sphi 0, %s186
      %s206 = sphi 0, %s208
      %s209 = sphi 0, %s206
      %s210 = sphi 0, %s209
      %s226 = sphi 0, %s210
      %s232 = sphi 0, %s234
      %s235 = sphi 0, %s232
      %s236 = sphi 0, %s235
      %s252 = sphi 0, %s236
      %s256 = sphi 0, %s256
      %s258 = sphi 0, %s256
      %s259 = sphi 0, %s258
      %s273 = sphi 0, %s259
      %s277 = sphi 0, %s277
      %s279 = sphi 0, %s277
      %s280 = sphi 0, %s279
      %s294 = sphi 0, %s280
      %s298 = sphi 0, %s298
      %s300 = sphi 0, %s298
      %s301 = sphi 0, %s300
      %s315 = sphi 0, %s301
      %s319 = sphi 0, %s319
      %s321 = sphi 0, %s319
      %s322 = sphi 0, %s321
      %s336 = sphi 0, %s322
      %s340 = sphi 0, %s340
      %s342 = sphi 0, %s340
      %s343 = sphi 0, %s342
      %s357 = sphi 0, %s343
    $region4: #{tpu_custom_call.1} parent=1 // loop_header_branch
      %25 = sbr.rel (%p23) target = $region8
    $region5: #{tpu_custom_call.1} parent=1 // loop_body
      %s27 = ssub.s32 %s22, 1
      %s28 = ssub.s32 %s22, 2
      %s35 = sadd.s32 1, %s30
      %p36 = scmp.ge.s32.totalorder %s35, 1
      %s37 = scalar_select %p36, 0, %s35
      %s38 = sadd.s32 1, %s29
      %s39 = scalar_select %p36, %s38, %s29
      %p40 = scmp.ge.s32.totalorder %s39, 3
      %s41 = scalar_select %p40, 0, %s39
      %s42 = ssub.s32 %s30, %s37
      %p43 = scmp.eq.s32.totalorder %s42, 0
      %s45 = sadd.s32 %s44, 1
      %s46 = scalar_select %p43, %s44, %s45
      %p49 = pneg %p43
      %p50 = scmp.eq.s32.totalorder %s22, 2
      %p51 = por %p49, %p50
      %p52 = scmp.ne.s32.totalorder %s44, %s47
      %p53 = scmp.eq.s32.totalorder %s22, 0
      %p54 = por %p52, %p53
      %p55 = scmp.ne.s32.totalorder %s44, %s47
      %p56 = scmp.eq.s32.totalorder %s27, 2
      %p57 = por %p55, %p56
      %p58 = scmp.ne.s32.totalorder %s47, %s48
      %p59 = scmp.eq.s32.totalorder %s27, 0
      %p60 = por %p58, %p59
      %p61 = scmp.ne.s32.totalorder %s47, %s48
      %p62 = scmp.eq.s32.totalorder %s28, 2
      %p63 = por %p61, %p62
      %p65 = scmp.ne.s32.totalorder %s48, %s64
      %p66 = scmp.eq.s32.totalorder %s28, 0
      %p67 = por %p65, %p66
      %s68 = ssub.s32 %s30, %s37
      %p69 = scmp.eq.s32.totalorder %s68, 0
      %s71 = sadd.s32 %s70, 1
      %s72 = scalar_select %p69, %s70, %s71
      %p75 = pneg %p69
      %p76 = scmp.eq.s32.totalorder %s22, 2
      %p77 = por %p75, %p76
      %p78 = scmp.ne.s32.totalorder %s70, %s73
      %p79 = scmp.eq.s32.totalorder %s22, 0
      %p80 = por %p78, %p79
      %p81 = scmp.ne.s32.totalorder %s70, %s73
      %p82 = scmp.eq.s32.totalorder %s27, 2
      %p83 = por %p81, %p82
      %p84 = scmp.ne.s32.totalorder %s73, %s74
      %p85 = scmp.eq.s32.totalorder %s27, 0
      %p86 = por %p84, %p85
      %p87 = scmp.ne.s32.totalorder %s73, %s74
      %p88 = scmp.eq.s32.totalorder %s28, 2
      %p89 = por %p87, %p88
      %p91 = scmp.ne.s32.totalorder %s74, %s90
      %p92 = scmp.eq.s32.totalorder %s28, 0
      %p93 = por %p91, %p92
      %s94 = ssub.s32 %s30, %s37
      %p95 = scmp.eq.s32.totalorder %s94, 0
      %s97 = sadd.s32 %s96, 1
      %s98 = scalar_select %p95, %s96, %s97
      %p101 = pneg %p95
      %p102 = scmp.eq.s32.totalorder %s22, 2
      %p103 = por %p101, %p102
      %p104 = scmp.ne.s32.totalorder %s96, %s99
      %p105 = scmp.eq.s32.totalorder %s22, 0
      %p106 = por %p104, %p105
      %p107 = scmp.ne.s32.totalorder %s96, %s99
      %p108 = scmp.eq.s32.totalorder %s27, 2
      %p109 = por %p107, %p108
      %p110 = scmp.ne.s32.totalorder %s99, %s100
      %p111 = scmp.eq.s32.totalorder %s27, 0
      %p112 = por %p110, %p111
      %p113 = scmp.ne.s32.totalorder %s99, %s100
      %p114 = scmp.eq.s32.totalorder %s28, 2
      %p115 = por %p113, %p114
      %p117 = scmp.ne.s32.totalorder %s100, %s116
      %p118 = scmp.eq.s32.totalorder %s28, 0
      %p119 = por %p117, %p118
      %s121 = sadd.s32 %s120, 1
      %p124 = scmp.eq.s32.totalorder %s22, 2
      %p125 = scmp.ne.s32.totalorder %s120, %s122
      %p126 = scmp.eq.s32.totalorder %s22, 0
      %p127 = por %p125, %p126
      %p128 = scmp.ne.s32.totalorder %s120, %s122
      %p129 = scmp.eq.s32.totalorder %s27, 2
      %p130 = por %p128, %p129
      %p131 = scmp.ne.s32.totalorder %s122, %s123
      %p132 = scmp.eq.s32.totalorder %s27, 0
      %p133 = por %p131, %p132
      %p134 = scmp.ne.s32.totalorder %s122, %s123
      %p135 = scmp.eq.s32.totalorder %s28, 2
      %p136 = por %p134, %p135
      %p138 = scmp.ne.s32.totalorder %s123, %s137
      %p139 = scmp.eq.s32.totalorder %s28, 0
      %p140 = por %p138, %p139
      %s142 = sadd.s32 %s141, 1
      %p145 = scmp.eq.s32.totalorder %s22, 2
      %p146 = scmp.ne.s32.totalorder %s141, %s143
      %p147 = scmp.eq.s32.totalorder %s22, 0
      %p148 = por %p146, %p147
      %p149 = scmp.ne.s32.totalorder %s141, %s143
      %p150 = scmp.eq.s32.totalorder %s27, 2
      %p151 = por %p149, %p150
      %p152 = scmp.ne.s32.totalorder %s143, %s144
      %p153 = scmp.eq.s32.totalorder %s27, 0
      %p154 = por %p152, %p153
      %p155 = scmp.ne.s32.totalorder %s143, %s144
      %p156 = scmp.eq.s32.totalorder %s28, 2
      %p157 = por %p155, %p156
      %p159 = scmp.ne.s32.totalorder %s144, %s158
      %p160 = scmp.eq.s32.totalorder %s28, 0
      %p161 = por %p159, %p160
      %s163 = sadd.s32 %s162, 1
      %p166 = scmp.eq.s32.totalorder %s22, 2
      %p167 = scmp.ne.s32.totalorder %s162, %s164
      %p168 = scmp.eq.s32.totalorder %s22, 0
      %p169 = por %p167, %p168
      %p170 = scmp.ne.s32.totalorder %s162, %s164
      %p171 = scmp.eq.s32.totalorder %s27, 2
      %p172 = por %p170, %p171
      %p173 = scmp.ne.s32.totalorder %s164, %s165
      %p174 = scmp.eq.s32.totalorder %s27, 0
      %p175 = por %p173, %p174
      %p176 = scmp.ne.s32.totalorder %s164, %s165
      %p177 = scmp.eq.s32.totalorder %s28, 2
      %p178 = por %p176, %p177
      %p180 = scmp.ne.s32.totalorder %s165, %s179
      %p181 = scmp.eq.s32.totalorder %s28, 0
      %p182 = por %p180, %p181
      %s184 = sadd.s32 %s183, 1
      %p187 = scmp.eq.s32.totalorder %s22, 2
      %p188 = scmp.ne.s32.totalorder %s183, %s185
      %p189 = scmp.eq.s32.totalorder %s22, 0
      %p190 = por %p188, %p189
      %p191 = scmp.ne.s32.totalorder %s183, %s185
      %p192 = scmp.eq.s32.totalorder %s27, 2
      %p193 = por %p191, %p192
      %p194 = scmp.ne.s32.totalorder %s185, %s186
      %p195 = scmp.eq.s32.totalorder %s27, 0
      %p196 = por %p194, %p195
      %p197 = scmp.ne.s32.totalorder %s185, %s186
      %p198 = scmp.eq.s32.totalorder %s28, 2
      %p199 = por %p197, %p198
      %p201 = scmp.ne.s32.totalorder %s186, %s200
      %p202 = scmp.eq.s32.totalorder %s28, 0
      %p203 = por %p201, %p202
      %s204 = ssub.s32 %s29, %s41
      %p205 = scmp.eq.s32.totalorder %s204, 0
      %s207 = sadd.s32 %s206, 1
      %s208 = scalar_select %p205, %s206, %s207
      %p211 = pneg %p205
      %p212 = scmp.eq.s32.totalorder %s22, 2
      %p213 = por %p211, %p212
      %p214 = scmp.ne.s32.totalorder %s206, %s209
      %p215 = scmp.eq.s32.totalorder %s22, 0
      %p216 = por %p214, %p215
      %p217 = scmp.ne.s32.totalorder %s206, %s209
      %p218 = scmp.eq.s32.totalorder %s27, 2
      %p219 = por %p217, %p218
      %p220 = scmp.ne.s32.totalorder %s209, %s210
      %p221 = scmp.eq.s32.totalorder %s27, 0
      %p222 = por %p220, %p221
      %p223 = scmp.ne.s32.totalorder %s209, %s210
      %p224 = scmp.eq.s32.totalorder %s28, 2
      %p225 = por %p223, %p224
      %p227 = scmp.ne.s32.totalorder %s210, %s226
      %p228 = scmp.eq.s32.totalorder %s28, 0
      %p229 = por %p227, %p228
      %s230 = ssub.s32 %s29, %s41
      %p231 = scmp.eq.s32.totalorder %s230, 0
      %s233 = sadd.s32 %s232, 1
      %s234 = scalar_select %p231, %s232, %s233
      %p237 = pneg %p231
      %p238 = scmp.eq.s32.totalorder %s22, 2
      %p239 = por %p237, %p238
      %p240 = scmp.ne.s32.totalorder %s232, %s235
      %p241 = scmp.eq.s32.totalorder %s22, 0
      %p242 = por %p240, %p241
      %p243 = scmp.ne.s32.totalorder %s232, %s235
      %p244 = scmp.eq.s32.totalorder %s27, 2
      %p245 = por %p243, %p244
      %p246 = scmp.ne.s32.totalorder %s235, %s236
      %p247 = scmp.eq.s32.totalorder %s27, 0
      %p248 = por %p246, %p247
      %p249 = scmp.ne.s32.totalorder %s235, %s236
      %p250 = scmp.eq.s32.totalorder %s28, 2
      %p251 = por %p249, %p250
      %p253 = scmp.ne.s32.totalorder %s236, %s252
      %p254 = scmp.eq.s32.totalorder %s28, 0
      %p255 = por %p253, %p254
      %s257 = sadd.s32 %s256, 1
      %p260 = scmp.eq.s32.totalorder %s22, 2
      %p261 = scmp.ne.s32.totalorder %s256, %s258
      %p262 = scmp.eq.s32.totalorder %s22, 0
      %p263 = por %p261, %p262
      %p264 = scmp.ne.s32.totalorder %s256, %s258
      %p265 = scmp.eq.s32.totalorder %s27, 2
      %p266 = por %p264, %p265
      %p267 = scmp.ne.s32.totalorder %s258, %s259
      %p268 = scmp.eq.s32.totalorder %s27, 0
      %p269 = por %p267, %p268
      %p270 = scmp.ne.s32.totalorder %s258, %s259
      %p271 = scmp.eq.s32.totalorder %s28, 2
      %p272 = por %p270, %p271
      %p274 = scmp.ne.s32.totalorder %s259, %s273
      %p275 = scmp.eq.s32.totalorder %s28, 0
      %p276 = por %p274, %p275
      %s278 = sadd.s32 %s277, 1
      %p281 = scmp.eq.s32.totalorder %s22, 2
      %p282 = scmp.ne.s32.totalorder %s277, %s279
      %p283 = scmp.eq.s32.totalorder %s22, 0
      %p284 = por %p282, %p283
      %p285 = scmp.ne.s32.totalorder %s277, %s279
      %p286 = scmp.eq.s32.totalorder %s27, 2
      %p287 = por %p285, %p286
      %p288 = scmp.ne.s32.totalorder %s279, %s280
      %p289 = scmp.eq.s32.totalorder %s27, 0
      %p290 = por %p288, %p289
      %p291 = scmp.ne.s32.totalorder %s279, %s280
      %p292 = scmp.eq.s32.totalorder %s28, 2
      %p293 = por %p291, %p292
      %p295 = scmp.ne.s32.totalorder %s280, %s294
      %p296 = scmp.eq.s32.totalorder %s28, 0
      %p297 = por %p295, %p296
      %s299 = sadd.s32 %s298, 1
      %p302 = scmp.eq.s32.totalorder %s22, 2
      %p303 = scmp.ne.s32.totalorder %s298, %s300
      %p304 = scmp.eq.s32.totalorder %s22, 0
      %p305 = por %p303, %p304
      %p306 = scmp.ne.s32.totalorder %s298, %s300
      %p307 = scmp.eq.s32.totalorder %s27, 2
      %p308 = por %p306, %p307
      %p309 = scmp.ne.s32.totalorder %s300, %s301
      %p310 = scmp.eq.s32.totalorder %s27, 0
      %p311 = por %p309, %p310
      %p312 = scmp.ne.s32.totalorder %s300, %s301
      %p313 = scmp.eq.s32.totalorder %s28, 2
      %p314 = por %p312, %p313
      %p316 = scmp.ne.s32.totalorder %s301, %s315
      %p317 = scmp.eq.s32.totalorder %s28, 0
      %p318 = por %p316, %p317
      %s320 = sadd.s32 %s319, 1
      %p323 = scmp.eq.s32.totalorder %s22, 2
      %p324 = scmp.ne.s32.totalorder %s319, %s321
      %p325 = scmp.eq.s32.totalorder %s22, 0
      %p326 = por %p324, %p325
      %p327 = scmp.ne.s32.totalorder %s319, %s321
      %p328 = scmp.eq.s32.totalorder %s27, 2
      %p329 = por %p327, %p328
      %p330 = scmp.ne.s32.totalorder %s321, %s322
      %p331 = scmp.eq.s32.totalorder %s27, 0
      %p332 = por %p330, %p331
      %p333 = scmp.ne.s32.totalorder %s321, %s322
      %p334 = scmp.eq.s32.totalorder %s28, 2
      %p335 = por %p333, %p334
      %p337 = scmp.ne.s32.totalorder %s322, %s336
      %p338 = scmp.eq.s32.totalorder %s28, 0
      %p339 = por %p337, %p338
      %s341 = sadd.s32 %s340, 1
      %p344 = scmp.eq.s32.totalorder %s22, 2
      %p345 = scmp.ne.s32.totalorder %s340, %s342
      %p346 = scmp.eq.s32.totalorder %s22, 0
      %p347 = por %p345, %p346
      %p348 = scmp.ne.s32.totalorder %s340, %s342
      %p349 = scmp.eq.s32.totalorder %s27, 2
      %p350 = por %p348, %p349
      %p351 = scmp.ne.s32.totalorder %s342, %s343
      %p352 = scmp.eq.s32.totalorder %s27, 0
      %p353 = por %p351, %p352
      %p354 = scmp.ne.s32.totalorder %s342, %s343
      %p355 = scmp.eq.s32.totalorder %s28, 2
      %p356 = por %p354, %p355
      %p358 = scmp.ne.s32.totalorder %s343, %s357
      %p359 = scmp.eq.s32.totalorder %s28, 0
      %p360 = por %p358, %p359
      %p361 = scmp.le.s32.totalorder 1, %s22
      %p362 = scmp.lt.s32.totalorder %s22, 4
      %p363 = pnand %p361, %p362
      %p364 = pneg %p363
      // Predicated region
      $region9: #{tpu_custom_call.1} parent=5 // pred_check
        _
      $region10: #{tpu_custom_call.1} parent=5 // pred_check_branch
        %366 = sbr.rel (%p363) target = $region12
      $region11: #{tpu_custom_call.1} parent=5 // pred_region
        %s367 = ssub.s32 %s22, 1
        // Predicated region
        $region13: #{tpu_custom_call.1} parent=11 // pred_check
          %p368 = pneg %p60
        $region14: #{tpu_custom_call.1} parent=11 // pred_check_branch
          %370 = sbr.rel (%p368) target = $region16
        $region15: #{tpu_custom_call.1} parent=11 // pred_region
          %s371 = smul.u32 48, %s32
          %p372 = scmp.lt.s32.totalorder %s371, 47
          %s373 = scalar_select %p372, %s371, 47
          %s374 = smul.addr %s373, 8
          %s375 = scalar_lea.vmem %s0, %s374
          %s376 = smul.u32 48, %s32
        $region16: #{tpu_custom_call.1} parent=11 // pred_fallthru
          _
        // Predicated region
        $region17: #{tpu_custom_call.1} parent=11 // pred_check
          %p377 = pneg %p86
        $region18: #{tpu_custom_call.1} parent=11 // pred_check_branch
          %379 = sbr.rel (%p377) target = $region20
        $region19: #{tpu_custom_call.1} parent=11 // pred_region
          %s380 = smul.u32 48, %s32
          %p381 = scmp.lt.s32.totalorder %s380, 47
          %s382 = scalar_select %p381, %s380, 47
          %s383 = smul.addr %s382, 8
          %s384 = scalar_lea.vmem %s1, %s383
          %s385 = smul.u32 48, %s32
        $region20: #{tpu_custom_call.1} parent=11 // pred_fallthru
          _
        // Predicated region
        $region21: #{tpu_custom_call.1} parent=11 // pred_check
          %p386 = pneg %p112
        $region22: #{tpu_custom_call.1} parent=11 // pred_check_branch
          %388 = sbr.rel (%p386) target = $region24
        $region23: #{tpu_custom_call.1} parent=11 // pred_region
          %s389 = smul.u32 3, %s32
          %p390 = scmp.lt.s32.totalorder %s389, 2
          %s391 = scalar_select %p390, %s389, 2
          %s392 = scalar_lea.vmem %s2, %s391
          %s393 = smul.u32 3, %s32
        $region24: #{tpu_custom_call.1} parent=11 // pred_fallthru
          _
        // Predicated region
        $region25: #{tpu_custom_call.1} parent=11 // pred_check
          %p394 = pneg %p133
        $region26: #{tpu_custom_call.1} parent=11 // pred_check_branch
          %396 = sbr.rel (%p394) target = $region28
        $region27: #{tpu_custom_call.1} parent=11 // pred_region
          _
        $region28: #{tpu_custom_call.1} parent=11 // pred_fallthru
          _
        // Predicated region
        $region29: #{tpu_custom_call.1} parent=11 // pred_check
          %p397 = pneg %p154
        $region30: #{tpu_custom_call.1} parent=11 // pred_check_branch
          %399 = sbr.rel (%p397) target = $region32
        $region31: #{tpu_custom_call.1} parent=11 // pred_region
          _
        $region32: #{tpu_custom_call.1} parent=11 // pred_fallthru
          _
        // Predicated region
        $region33: #{tpu_custom_call.1} parent=11 // pred_check
          %p400 = pneg %p175
        $region34: #{tpu_custom_call.1} parent=11 // pred_check_branch
          %402 = sbr.rel (%p400) target = $region36
        $region35: #{tpu_custom_call.1} parent=11 // pred_region
          _
        $region36: #{tpu_custom_call.1} parent=11 // pred_fallthru
          _
        // Predicated region
        $region37: #{tpu_custom_call.1} parent=11 // pred_check
          %p403 = pneg %p196
        $region38: #{tpu_custom_call.1} parent=11 // pred_check_branch
          %405 = sbr.rel (%p403) target = $region40
        $region39: #{tpu_custom_call.1} parent=11 // pred_region
          _
        $region40: #{tpu_custom_call.1} parent=11 // pred_fallthru
          _
        // Predicated region
        $region41: #{tpu_custom_call.1} parent=11 // pred_check
          %p406 = pneg %p269
        $region42: #{tpu_custom_call.1} parent=11 // pred_check_branch
          %408 = sbr.rel (%p406) target = $region44
        $region43: #{tpu_custom_call.1} parent=11 // pred_region
          _
        $region44: #{tpu_custom_call.1} parent=11 // pred_fallthru
          _
        // Predicated region
        $region45: #{tpu_custom_call.1} parent=11 // pred_check
          %p409 = pneg %p290
        $region46: #{tpu_custom_call.1} parent=11 // pred_check_branch
          %411 = sbr.rel (%p409) target = $region48
        $region47: #{tpu_custom_call.1} parent=11 // pred_region
          _
        $region48: #{tpu_custom_call.1} parent=11 // pred_fallthru
          _
        // Predicated region
        $region49: #{tpu_custom_call.1} parent=11 // pred_check
          %p412 = pneg %p311
        $region50: #{tpu_custom_call.1} parent=11 // pred_check_branch
          %414 = sbr.rel (%p412) target = $region52
        $region51: #{tpu_custom_call.1} parent=11 // pred_region
          _
        $region52: #{tpu_custom_call.1} parent=11 // pred_fallthru
          _
        // Predicated region
        $region53: #{tpu_custom_call.1} parent=11 // pred_check
          %p415 = pneg %p332
        $region54: #{tpu_custom_call.1} parent=11 // pred_check_branch
          %417 = sbr.rel (%p415) target = $region56
        $region55: #{tpu_custom_call.1} parent=11 // pred_region
          _
        $region56: #{tpu_custom_call.1} parent=11 // pred_fallthru
          _
      $region12: #{tpu_custom_call.1} parent=5 // pred_fallthru
        _
      %p418 = scmp.lt.s32.totalorder %s22, 3
      // Predicated region
      $region57: #{tpu_custom_call.1} parent=5 // pred_check
        %p419 = pneg %p418
      $region58: #{tpu_custom_call.1} parent=5 // pred_check_branch
        %421 = sbr.rel (%p419) target = $region60
      $region59: #{tpu_custom_call.1} parent=5 // pred_region
        // Predicated region
        $region61: #{tpu_custom_call.1} parent=59 // pred_check
          %p422 = pneg %p216
        $region62: #{tpu_custom_call.1} parent=59 // pred_check_branch
          %424 = sbr.rel (%p422) target = $region64
        $region63: #{tpu_custom_call.1} parent=59 // pred_region
          %p425 = scmp.lt.s32.totalorder %s29, 2
          %s426 = scalar_select %p425, %s29, 2
          %s427 = smul.addr %s426, 28
          %s428 = smul.addr %s427, 8
          %s429 = scalar_lea.vmem %s7, %s428
        $region64: #{tpu_custom_call.1} parent=59 // pred_fallthru
          _
        // Predicated region
        $region65: #{tpu_custom_call.1} parent=59 // pred_check
          %p430 = pneg %p242
        $region66: #{tpu_custom_call.1} parent=59 // pred_check_branch
          %432 = sbr.rel (%p430) target = $region68
        $region67: #{tpu_custom_call.1} parent=59 // pred_region
          %p433 = scmp.lt.s32.totalorder %s29, 2
          %s434 = scalar_select %p433, %s29, 2
          %s435 = smul.addr %s434, 3
          %s436 = smul.addr %s435, 8
          %s437 = scalar_lea.vmem %s8, %s436
        $region68: #{tpu_custom_call.1} parent=59 // pred_fallthru
          _
      $region60: #{tpu_custom_call.1} parent=5 // pred_fallthru
        _
      %p438 = scmp.le.s32.totalorder 1, %s22
      %p439 = scmp.lt.s32.totalorder %s22, 4
      %p440 = pnand %p438, %p439
      %p441 = pneg %p440
      // Predicated region
      $region69: #{tpu_custom_call.1} parent=5 // pred_check
        _
      $region70: #{tpu_custom_call.1} parent=5 // pred_check_branch
        %443 = sbr.rel (%p440) target = $region72
      $region71: #{tpu_custom_call.1} parent=5 // pred_region
        %s444 = ssub.s32 %s22, 1
        %s445 = smul.u32 48, %s32
        %p446 = scmp.lt.s32.totalorder %s445, 47
        %s447 = scalar_select %p446, %s445, 47
        %s448 = smul.addr %s447, 8
        %s449 = scalar_lea.vmem %s0, %s448
        %p450 = pneg %p60
        %p451 = pneg %p57
        %s452 = smul.u32 48, %s32
        %p453 = scmp.lt.s32.totalorder %s452, 47
        %s454 = scalar_select %p453, %s452, 47
        %s455 = smul.addr %s454, 8
        %s456 = scalar_lea.vmem %s1, %s455
        %p457 = pneg %p86
        %p458 = pneg %p83
        %s459 = smul.u32 3, %s32
        %p460 = scmp.lt.s32.totalorder %s459, 2
        %s461 = scalar_select %p460, %s459, 2
        %s462 = scalar_lea.vmem %s2, %s461
        %p463 = pneg %p112
        %p464 = pneg %p109
        %p465 = pneg %p133
        %p466 = pneg %p130
        %p467 = pneg %p154
        %p468 = pneg %p151
        %p469 = pneg %p175
        %p470 = pneg %p172
        %p471 = pneg %p196
        %p472 = pneg %p193
        %p473 = scmp.lt.s32.totalorder %s31, 2
        %s474 = scalar_select %p473, %s31, 2
        %s475 = smul.addr %s474, 28
        %s476 = smul.addr %s475, 8
        %s477 = scalar_lea.vmem %s7, %s476
        %p478 = pneg %p222
        %p479 = pneg %p219
        %p480 = scmp.lt.s32.totalorder %s31, 2
        %s481 = scalar_select %p480, %s31, 2
        %s482 = smul.addr %s481, 3
        %s483 = smul.addr %s482, 8
        %s484 = scalar_lea.vmem %s8, %s483
        %p485 = pneg %p248
        %p486 = pneg %p245
        %p487 = pneg %p269
        %p488 = pneg %p266
        %p489 = pneg %p290
        %p490 = pneg %p287
        %p491 = pneg %p311
        %p492 = pneg %p308
        %p493 = pneg %p332
        %p494 = pneg %p329
        %p495 = pneg %p353
        %p496 = pneg %p350
        %s497 = smul.u32 48, %s32
        %p498 = scmp.lt.s32.totalorder %s497, 47
        %s499 = scalar_select %p498, %s497, 47
        %s500 = smul.addr %s499, 8
        %s501 = scalar_lea.vmem %s0, %s500
        %s502 = smul.u32 48, %s32
        %s503 = smul.u32 48, %s32
        %p504 = scmp.lt.s32.totalorder %s503, 47
        %s505 = scalar_select %p504, %s503, 47
        %s506 = smul.addr %s505, 8
        %s507 = scalar_lea.vmem %s1, %s506
        %s508 = smul.u32 48, %s32
        %s509 = smul.u32 3, %s32
        %p510 = scmp.lt.s32.totalorder %s509, 2
        %s511 = scalar_select %p510, %s509, 2
        %s512 = scalar_lea.vmem %s2, %s511
        %s513 = smul.u32 3, %s32
        %p514 = scmp.lt.s32.totalorder %s31, 2
        %s515 = scalar_select %p514, %s31, 2
        %s516 = smul.addr %s515, 28
        %s517 = smul.addr %s516, 8
        %s518 = scalar_lea.vmem %s7, %s517
        %p519 = scmp.lt.s32.totalorder %s31, 2
        %s520 = scalar_select %p519, %s31, 2
        %s521 = smul.addr %s520, 3
        %s522 = smul.addr %s521, 8
        %s523 = scalar_lea.vmem %s8, %s522
        %p524 = scmp.eq.s32.totalorder %s31, 0
        %p525 = scmp.eq.s32.totalorder %s32, 0
        %p526 = pnand %p524, %p525
        %p527 = pneg %p526
        // Predicated region
        $region73: #{tpu_custom_call.1} parent=71 // pred_check
          _
        $region74: #{tpu_custom_call.1} parent=71 // pred_check_branch
          %529 = sbr.rel (%p526) target = $region76
        $region75: #{tpu_custom_call.1} parent=71 // pred_region
          %v530 = vld [vmem:[%s3] sm:$0xff]
          %v531 = vld [vmem:[%s3 + $0x8] sm:$0xff]
          %v532 = vld [vmem:[%s3 + $0x10] sm:$0xff]
          %v533 = vld [vmem:[%s3 + $0x18] sm:$0xff]
          %v534 = vld [vmem:[%s5] sm:$0xff]
          %v535 = vld [vmem:[%s5 + $0x8] sm:$0xff]
          %v536 = vld [vmem:[%s5 + $0x10] sm:$0xff]
          %v537 = vld [vmem:[%s5 + $0x18] sm:$0xff]
          %v538 = vld [vmem:[%s6] sm:$0x1]
          %v540 = vlaneseq
          %v541 = vshrl.u32 %v540, 7
          %v542 = vsub.s32 0, %v541
          %v543 = vrot.slane %v538, %v542
          %vm545 = vcmask 261120
          %v547 = vsel %vm545, %v530, 0
          %v550 = vsel %vm545, %v531, 0
          %v553 = vsel %vm545, %v532, 0
          %v556 = vsel %vm545, %v533, 0
          %558 = vmatprep.subr.mxu0 0.0
          %559 = vmatpush1.msra.mxu0 %v534
          %560 = vmatprep.subr.mxu0 0.0
          %561 = vmatpush1.msra.mxu0 %v535
          %562 = vmatprep.subr.mxu0 0.0
          %563 = vmatpush1.msra.mxu0 %v536
          %564 = vmatprep.subr.mxu0 0.0
          %565 = vmatpush1.msra.mxu0 %v537
          %566 = vmatprep.subr.mxu0 0.0
          %567 = vmatpush1.msra.mxu0 0.0
          %568 = vmatprep.subr.mxu0 0.0
          %569 = vmatpush1.msra.mxu0 0.0
          %570 = vmatprep.subr.mxu0 0.0
          %571 = vmatpush1.msra.mxu0 0.0
          %572 = vmatprep.subr.mxu0 0.0
          %573 = vmatpush1.msra.mxu0 0.0
          %574 = vmatprep.subr.mxu0 0.0
          %575 = vmatpush1.msra.mxu0 0.0
          %576 = vmatprep.subr.mxu0 0.0
          %577 = vmatpush1.msra.mxu0 0.0
          %578 = vmatprep.subr.mxu0 0.0
          %579 = vmatpush1.msra.mxu0 0.0
          %580 = vmatprep.subr.mxu0 0.0
          %581 = vmatpush1.msra.mxu0 0.0
          %582 = vmatprep.subr.mxu0 0.0
          %583 = vmatpush1.msra.mxu0 0.0
          %584 = vmatprep.subr.mxu0 0.0
          %585 = vmatpush1.msra.mxu0 0.0
          %586 = vmatprep.subr.mxu0 0.0
          %587 = vmatpush1.msra.mxu0 0.0
          %588 = vmatprep.subr.mxu0 0.0
          %589 = vmatpush1.msra.mxu0 0.0
          %590 = vmatprep.subr.mxu0 0.0
          %591 = vmatpush1.msra.mxu0 0.0
          %592 = vmatprep.subr.mxu0 0.0
          %593 = vmatpush1.msra.mxu0 0.0
          %594 = vmatprep.subr.mxu0 0.0
          %595 = vmatpush1.msra.mxu0 0.0
          %596 = vmatprep.subr.mxu0 0.0
          %597 = vmatpush1.msra.mxu0 0.0
          %598 = vmatprep.subr.mxu0 0.0
          %599 = vmatpush1.msra.mxu0 0.0
          %600 = vmatprep.subr.mxu0 0.0
          %601 = vmatpush1.msra.mxu0 0.0
          %602 = vmatprep.subr.mxu0 0.0
          %603 = vmatpush1.msra.mxu0 0.0
          %604 = vmatprep.subr.mxu0 0.0
          %605 = vmatpush1.msra.mxu0 0.0
          %606 = vmatprep.subr.mxu0 0.0
          %607 = vmatpush1.msra.mxu0 0.0
          %608 = vmatprep.subr.mxu0 0.0
          %609 = vmatpush1.msra.mxu0 0.0
          %610 = vmatprep.subr.mxu0 0.0
          %611 = vmatpush1.msra.mxu0 0.0
          %612 = vmatprep.subr.mxu0 0.0
          %613 = vmatpush1.msra.mxu0 0.0
          %614 = vmatprep.subr.mxu0 0.0
          %615 = vmatpush1.msra.mxu0 0.0
          %616 = vmatprep.subr.mxu0 0.0
          %617 = vmatpush1.msra.mxu0 0.0
          %618 = vmatprep.subr.mxu0 0.0
          %619 = vmatpush1.msra.mxu0 0.0
          %620 = vmatprep.subr.mxu0 0.0
          %621 = vmatpush1.msra.mxu0 0.0
          %622 = vmatprep.mubr.f32.mxu0 0.0
          %623 = vmatmul.mubr.f32.gmra.mrb[0].mxu0 %v547
          %v624 = vpop.f32.mrb[0].mxu0
          %v625 = vadd.f32 %v543, %v624
          %v626 = vpop.f32.mrb[0].mxu0
          %627 = vmatprep.mubr.f32.mxu0 0.0
          %628 = vmatmul.mubr.f32.gmra.mrb[0].mxu0 %v550
          %v629 = vpop.f32.mrb[0].mxu0
          %v630 = vadd.f32 %v543, %v629
          %v631 = vpop.f32.mrb[0].mxu0
          %632 = vmatprep.mubr.f32.mxu0 0.0
          %633 = vmatmul.mubr.f32.gmra.mrb[0].mxu0 %v553
          %v634 = vpop.f32.mrb[0].mxu0
          %v635 = vadd.f32 %v543, %v634
          %v636 = vpop.f32.mrb[0].mxu0
          %637 = vmatprep.mubr.f32.mxu0 0.0
          %638 = vmatmul.mubr.f32.gmra.mrb[0].mxu0 %v556
          %v639 = vpop.f32.mrb[0].mxu0
          %v640 = vadd.f32 %v543, %v639
          %v641 = vpop.f32.mrb[0].mxu0
          %642 = vdwg.mxu0
          %v643 = vsel %vm545, %v625, %v530
          %v644 = vsel %vm545, %v630, %v531
          %v645 = vsel %vm545, %v635, %v532
          %v646 = vsel %vm545, %v640, %v533
          %vm647 = vcmask 285696
          %v648 = vsel %vm647, %v643, 0.0
          %v649 = vsel %vm647, %v644, 0.0
          %v650 = vsel %vm647, %v645, 0.0
          %v651 = vsel %vm647, %v646, 0.0
          %652 = vst [vmem:[#allocation2] sm:$0xff] %v648
          %653 = vst [vmem:[#allocation2 + $0x8] sm:$0xff] %v649
          %654 = vst [vmem:[#allocation2 + $0x10] sm:$0xff] %v650
          %655 = vst [vmem:[#allocation2 + $0x18] sm:$0xff] %v651
        $region76: #{tpu_custom_call.1} parent=71 // pred_fallthru
          _
        // Predicated region
        $region77: #{tpu_custom_call.1} parent=71 // pred_check
          %p656 = pneg %p525
        $region78: #{tpu_custom_call.1} parent=71 // pred_check_branch
          %658 = sbr.rel (%p656) target = $region80
        $region79: #{tpu_custom_call.1} parent=71 // pred_region
          %659 = vst [vmem:[#allocation3] sm:$0xff] 0.0
          %660 = vst [vmem:[#allocation3 + $0x8] sm:$0xff] 0.0
          %661 = vst [vmem:[#allocation3 + $0x10] sm:$0xff] 0.0
          %662 = vst [vmem:[#allocation3 + $0x18] sm:$0xff] 0.0
        $region80: #{tpu_custom_call.1} parent=71 // pred_fallthru
          _
        %v663 = vld [vmem:[%s518] sm:$0xff]
        %v664 = vld [vmem:[%s518 + $0x8] sm:$0xff]
        %v665 = vld [vmem:[%s518 + $0x10] sm:$0xff]
        %v666 = vld [vmem:[%s518 + $0x18] sm:$0xff]
        %v667 = vld [vmem:[%s518 + $0x20] sm:$0xff]
        %v668 = vld [vmem:[%s518 + $0x28] sm:$0xff]
        %v669 = vld [vmem:[%s518 + $0x30] sm:$0xff]
        %v670 = vld [vmem:[%s518 + $0x38] sm:$0xff]
        %v671 = vld [vmem:[%s518 + $0x40] sm:$0xff]
        %v672 = vld [vmem:[%s518 + $0x48] sm:$0xff]
        %v673 = vld [vmem:[%s518 + $0x50] sm:$0xff]
        %v674 = vld [vmem:[%s518 + $0x58] sm:$0xff]
        %v675 = vld [vmem:[%s518 + $0x60] sm:$0xff]
        %v676 = vld [vmem:[%s518 + $0x68] sm:$0xff]
        %v677 = vld [vmem:[%s518 + $0x70] sm:$0xff]
        %v678 = vld [vmem:[%s518 + $0x78] sm:$0xff]
        %v679 = vld [vmem:[%s518 + $0x80] sm:$0xff]
        %v680 = vld [vmem:[%s518 + $0x88] sm:$0xff]
        %v681 = vld [vmem:[%s518 + $0x90] sm:$0xff]
        %v682 = vld [vmem:[%s518 + $0x98] sm:$0xff]
        %v683 = vld [vmem:[%s518 + $0xa0] sm:$0xff]
        %v684 = vld [vmem:[%s518 + $0xa8] sm:$0xff]
        %v685 = vld [vmem:[%s518 + $0xb0] sm:$0xff]
        %v686 = vld [vmem:[%s518 + $0xb8] sm:$0xff]
        %v687 = vld [vmem:[%s518 + $0xc0] sm:$0xff]
        %v688 = vld [vmem:[%s518 + $0xc8] sm:$0xff]
        %v689 = vld [vmem:[%s518 + $0xd0] sm:$0xff]
        %v690 = vld [vmem:[%s518 + $0xd8] sm:$0xff]
        %v691 = vld [vmem:[%s523] sm:$0xff]
        %v692 = vld [vmem:[%s523 + $0x8] sm:$0xff]
        %v693 = vld [vmem:[%s523 + $0x10] sm:$0x3]
        %v694 = vld [vmem:[#allocation2] sm:$0xff]
        %v695 = vld [vmem:[#allocation2 + $0x8] sm:$0xff]
        %v696 = vld [vmem:[#allocation2 + $0x10] sm:$0xff]
        %v697 = vld [vmem:[#allocation2 + $0x18] sm:$0xff]
        %v698 = vlaneseq
        %v699 = vand.u32 %v698, 127
        %v700 = vld [vmem:[%s501] sm:$0xff]
        %v701 = vld [vmem:[%s501 + $0x8] sm:$0xff]
        %v702 = vld [vmem:[%s501 + $0x10] sm:$0xff]
        %v703 = vld [vmem:[%s501 + $0x18] sm:$0xff]
        %v704 = vld [vmem:[%s501 + $0x20] sm:$0xff]
        %v705 = vld [vmem:[%s501 + $0x28] sm:$0xff]
        %v706 = vld [vmem:[%s501 + $0x30] sm:$0xff]
        %v707 = vld [vmem:[%s501 + $0x38] sm:$0xff]
        %v708 = vld [vmem:[%s501 + $0x40] sm:$0xff]
        %v709 = vld [vmem:[%s501 + $0x48] sm:$0xff]
        %v710 = vld [vmem:[%s501 + $0x50] sm:$0xff]
        %v711 = vld [vmem:[%s501 + $0x58] sm:$0xff]
        %v712 = vld [vmem:[%s501 + $0x60] sm:$0xff]
        %v713 = vld [vmem:[%s501 + $0x68] sm:$0xff]
        %v714 = vld [vmem:[%s501 + $0x70] sm:$0xff]
        %v715 = vld [vmem:[%s501 + $0x78] sm:$0xff]
        %v716 = vld [vmem:[%s501 + $0x80] sm:$0xff]
        %v717 = vld [vmem:[%s501 + $0x88] sm:$0xff]
        %v718 = vld [vmem:[%s501 + $0x90] sm:$0xff]
        %v719 = vld [vmem:[%s501 + $0x98] sm:$0xff]
        %v720 = vld [vmem:[%s501 + $0xa0] sm:$0xff]
        %v721 = vld [vmem:[%s501 + $0xa8] sm:$0xff]
        %v722 = vld [vmem:[%s501 + $0xb0] sm:$0xff]
        %v723 = vld [vmem:[%s501 + $0xb8] sm:$0xff]
        %v724 = vld [vmem:[%s501 + $0xc0] sm:$0xff]
        %v725 = vld [vmem:[%s501 + $0xc8] sm:$0xff]
        %v726 = vld [vmem:[%s501 + $0xd0] sm:$0xff]
        %v727 = vld [vmem:[%s501 + $0xd8] sm:$0xff]
        %v728 = vld [vmem:[%s501 + $0xe0] sm:$0xff]
        %v729 = vld [vmem:[%s501 + $0xe8] sm:$0xff]
        %v730 = vld [vmem:[%s501 + $0xf0] sm:$0xff]
        %v731 = vld [vmem:[%s501 + $0xf8] sm:$0xff]
        %v732 = vld [vmem:[%s501 + $0x100] sm:$0xff]
        %v733 = vld [vmem:[%s501 + $0x108] sm:$0xff]
        %v734 = vld [vmem:[%s501 + $0x110] sm:$0xff]
        %v735 = vld [vmem:[%s501 + $0x118] sm:$0xff]
        %v736 = vld [vmem:[%s501 + $0x120] sm:$0xff]
        %v737 = vld [vmem:[%s501 + $0x128] sm:$0xff]
        %v738 = vld [vmem:[%s501 + $0x130] sm:$0xff]
        %v739 = vld [vmem:[%s501 + $0x138] sm:$0xff]
        %v740 = vld [vmem:[%s501 + $0x140] sm:$0xff]
        %v741 = vld [vmem:[%s501 + $0x148] sm:$0xff]
        %v742 = vld [vmem:[%s501 + $0x150] sm:$0xff]
        %v743 = vld [vmem:[%s501 + $0x158] sm:$0xff]
        %v744 = vld [vmem:[%s501 + $0x160] sm:$0xff]
        %v745 = vld [vmem:[%s501 + $0x168] sm:$0xff]
        %v746 = vld [vmem:[%s501 + $0x170] sm:$0xff]
        %v747 = vld [vmem:[%s501 + $0x178] sm:$0xff]
        %748 = vset.pattern.permute.xlu0 0
        %749 = vperm.xlu0 %748, %v700
        %v750 = vpop.permute.xlu0 %749
        %751 = vset.pattern.permute.xlu0 0
        %752 = vperm.xlu0 %751, %v701
        %v753 = vpop.permute.xlu0 %752
        %754 = vset.pattern.permute.xlu0 0
        %755 = vperm.xlu0 %754, %v702
        %v756 = vpop.permute.xlu0 %755
        %757 = vset.pattern.permute.xlu0 0
        %758 = vperm.xlu0 %757, %v703
        %v759 = vpop.permute.xlu0 %758
        %760 = vset.pattern.permute.xlu0 0
        %761 = vperm.xlu0 %760, %v704
        %v762 = vpop.permute.xlu0 %761
        %763 = vset.pattern.permute.xlu0 0
        %764 = vperm.xlu0 %763, %v705
        %v765 = vpop.permute.xlu0 %764
        %766 = vset.pattern.permute.xlu0 0
        %767 = vperm.xlu0 %766, %v706
        %v768 = vpop.permute.xlu0 %767
        %769 = vset.pattern.permute.xlu0 0
        %770 = vperm.xlu0 %769, %v707
        %v771 = vpop.permute.xlu0 %770
        %772 = vset.pattern.permute.xlu0 0
        %773 = vperm.xlu0 %772, %v708
        %v774 = vpop.permute.xlu0 %773
        %775 = vset.pattern.permute.xlu0 0
        %776 = vperm.xlu0 %775, %v709
        %v777 = vpop.permute.xlu0 %776
        %778 = vset.pattern.permute.xlu0 0
        %779 = vperm.xlu0 %778, %v710
        %v780 = vpop.permute.xlu0 %779
        %781 = vset.pattern.permute.xlu0 0
        %782 = vperm.xlu0 %781, %v711
        %v783 = vpop.permute.xlu0 %782
        %784 = vset.pattern.permute.xlu0 0
        %785 = vperm.xlu0 %784, %v712
        %v786 = vpop.permute.xlu0 %785
        %787 = vset.pattern.permute.xlu0 0
        %788 = vperm.xlu0 %787, %v713
        %v789 = vpop.permute.xlu0 %788
        %790 = vset.pattern.permute.xlu0 0
        %791 = vperm.xlu0 %790, %v714
        %v792 = vpop.permute.xlu0 %791
        %793 = vset.pattern.permute.xlu0 0
        %794 = vperm.xlu0 %793, %v715
        %v795 = vpop.permute.xlu0 %794
        %796 = vset.pattern.permute.xlu0 0
        %797 = vperm.xlu0 %796, %v716
        %v798 = vpop.permute.xlu0 %797
        %799 = vset.pattern.permute.xlu0 0
        %800 = vperm.xlu0 %799, %v717
        %v801 = vpop.permute.xlu0 %800
        %802 = vset.pattern.permute.xlu0 0
        %803 = vperm.xlu0 %802, %v718
        %v804 = vpop.permute.xlu0 %803
        %805 = vset.pattern.permute.xlu0 0
        %806 = vperm.xlu0 %805, %v719
        %v807 = vpop.permute.xlu0 %806
        %808 = vset.pattern.permute.xlu0 0
        %809 = vperm.xlu0 %808, %v720
        %v810 = vpop.permute.xlu0 %809
        %811 = vset.pattern.permute.xlu0 0
        %812 = vperm.xlu0 %811, %v721
        %v813 = vpop.permute.xlu0 %812
        %814 = vset.pattern.permute.xlu0 0
        %815 = vperm.xlu0 %814, %v722
        %v816 = vpop.permute.xlu0 %815
        %817 = vset.pattern.permute.xlu0 0
        %818 = vperm.xlu0 %817, %v723
        %v819 = vpop.permute.xlu0 %818
        %820 = vset.pattern.permute.xlu0 0
        %821 = vperm.xlu0 %820, %v724
        %v822 = vpop.permute.xlu0 %821
        %823 = vset.pattern.permute.xlu0 0
        %824 = vperm.xlu0 %823, %v725
        %v825 = vpop.permute.xlu0 %824
        %826 = vset.pattern.permute.xlu0 0
        %827 = vperm.xlu0 %826, %v726
        %v828 = vpop.permute.xlu0 %827
        %829 = vset.pattern.permute.xlu0 0
        %830 = vperm.xlu0 %829, %v727
        %v831 = vpop.permute.xlu0 %830
        %832 = vset.pattern.permute.xlu0 0
        %833 = vperm.xlu0 %832, %v728
        %v834 = vpop.permute.xlu0 %833
        %835 = vset.pattern.permute.xlu0 0
        %836 = vperm.xlu0 %835, %v729
        %v837 = vpop.permute.xlu0 %836
        %838 = vset.pattern.permute.xlu0 0
        %839 = vperm.xlu0 %838, %v730
        %v840 = vpop.permute.xlu0 %839
        %841 = vset.pattern.permute.xlu0 0
        %842 = vperm.xlu0 %841, %v731
        %v843 = vpop.permute.xlu0 %842
        %844 = vset.pattern.permute.xlu0 0
        %845 = vperm.xlu0 %844, %v732
        %v846 = vpop.permute.xlu0 %845
        %847 = vset.pattern.permute.xlu0 0
        %848 = vperm.xlu0 %847, %v733
        %v849 = vpop.permute.xlu0 %848
        %850 = vset.pattern.permute.xlu0 0
        %851 = vperm.xlu0 %850, %v734
        %v852 = vpop.permute.xlu0 %851
        %853 = vset.pattern.permute.xlu0 0
        %854 = vperm.xlu0 %853, %v735
        %v855 = vpop.permute.xlu0 %854
        %856 = vset.pattern.permute.xlu0 0
        %857 = vperm.xlu0 %856, %v736
        %v858 = vpop.permute.xlu0 %857
        %859 = vset.pattern.permute.xlu0 0
        %860 = vperm.xlu0 %859, %v737
        %v861 = vpop.permute.xlu0 %860
        %862 = vset.pattern.permute.xlu0 0
        %863 = vperm.xlu0 %862, %v738
        %v864 = vpop.permute.xlu0 %863
        %865 = vset.pattern.permute.xlu0 0
        %866 = vperm.xlu0 %865, %v739
        %v867 = vpop.permute.xlu0 %866
        %868 = vset.pattern.permute.xlu0 0
        %869 = vperm.xlu0 %868, %v740
        %v870 = vpop.permute.xlu0 %869
        %871 = vset.pattern.permute.xlu0 0
        %872 = vperm.xlu0 %871, %v741
        %v873 = vpop.permute.xlu0 %872
        %874 = vset.pattern.permute.xlu0 0
        %875 = vperm.xlu0 %874, %v742
        %v876 = vpop.permute.xlu0 %875
        %877 = vset.pattern.permute.xlu0 0
        %878 = vperm.xlu0 %877, %v743
        %v879 = vpop.permute.xlu0 %878
        %880 = vset.pattern.permute.xlu0 0
        %881 = vperm.xlu0 %880, %v744
        %v882 = vpop.permute.xlu0 %881
        %883 = vset.pattern.permute.xlu0 0
        %884 = vperm.xlu0 %883, %v745
        %v885 = vpop.permute.xlu0 %884
        %886 = vset.pattern.permute.xlu0 0
        %887 = vperm.xlu0 %886, %v746
        %v888 = vpop.permute.xlu0 %887
        %889 = vset.pattern.permute.xlu0 0
        %890 = vperm.xlu0 %889, %v747
        %v891 = vpop.permute.xlu0 %890
        %vm892 = vcmp.eq.s32.totalorder %v750, %v699
        %vm893 = vcmp.eq.s32.totalorder %v753, %v699
        %vm894 = vcmp.eq.s32.totalorder %v756, %v699
        %vm895 = vcmp.eq.s32.totalorder %v759, %v699
        %vm896 = vcmp.eq.s32.totalorder %v762, %v699
        %vm897 = vcmp.eq.s32.totalorder %v765, %v699
        %vm898 = vcmp.eq.s32.totalorder %v768, %v699
        %vm899 = vcmp.eq.s32.totalorder %v771, %v699
        %vm900 = vcmp.eq.s32.totalorder %v774, %v699
        %vm901 = vcmp.eq.s32.totalorder %v777, %v699
        %vm902 = vcmp.eq.s32.totalorder %v780, %v699
        %vm903 = vcmp.eq.s32.totalorder %v783, %v699
        %vm904 = vcmp.eq.s32.totalorder %v786, %v699
        %vm905 = vcmp.eq.s32.totalorder %v789, %v699
        %vm906 = vcmp.eq.s32.totalorder %v792, %v699
        %vm907 = vcmp.eq.s32.totalorder %v795, %v699
        %vm908 = vcmp.eq.s32.totalorder %v798, %v699
        %vm909 = vcmp.eq.s32.totalorder %v801, %v699
        %vm910 = vcmp.eq.s32.totalorder %v804, %v699
        %vm911 = vcmp.eq.s32.totalorder %v807, %v699
        %vm912 = vcmp.eq.s32.totalorder %v810, %v699
        %vm913 = vcmp.eq.s32.totalorder %v813, %v699
        %vm914 = vcmp.eq.s32.totalorder %v816, %v699
        %vm915 = vcmp.eq.s32.totalorder %v819, %v699
        %vm916 = vcmp.eq.s32.totalorder %v822, %v699
        %vm917 = vcmp.eq.s32.totalorder %v825, %v699
        %vm918 = vcmp.eq.s32.totalorder %v828, %v699
        %vm919 = vcmp.eq.s32.totalorder %v831, %v699
        %vm920 = vcmp.eq.s32.totalorder %v834, %v699
        %vm921 = vcmp.eq.s32.totalorder %v837, %v699
        %vm922 = vcmp.eq.s32.totalorder %v840, %v699
        %vm923 = vcmp.eq.s32.totalorder %v843, %v699
        %vm924 = vcmp.eq.s32.totalorder %v846, %v699
        %vm925 = vcmp.eq.s32.totalorder %v849, %v699
        %vm926 = vcmp.eq.s32.totalorder %v852, %v699
        %vm927 = vcmp.eq.s32.totalorder %v855, %v699
        %vm928 = vcmp.eq.s32.totalorder %v858, %v699
        %vm929 = vcmp.eq.s32.totalorder %v861, %v699
        %vm930 = vcmp.eq.s32.totalorder %v864, %v699
        %vm931 = vcmp.eq.s32.totalorder %v867, %v699
        %vm932 = vcmp.eq.s32.totalorder %v870, %v699
        %vm933 = vcmp.eq.s32.totalorder %v873, %v699
        %vm934 = vcmp.eq.s32.totalorder %v876, %v699
        %vm935 = vcmp.eq.s32.totalorder %v879, %v699
        %vm936 = vcmp.eq.s32.totalorder %v882, %v699
        %vm937 = vcmp.eq.s32.totalorder %v885, %v699
        %vm938 = vcmp.eq.s32.totalorder %v888, %v699
        %vm939 = vcmp.eq.s32.totalorder %v891, %v699
        %v940 = vsel %vm892, 1, 0
        %v941 = vsel %vm893, 1, 0
        %v942 = vsel %vm894, 1, 0
        %v943 = vsel %vm895, 1, 0
        %v944 = vsel %vm896, 1, 0
        %v945 = vsel %vm897, 1, 0
        %v946 = vsel %vm898, 1, 0
        %v947 = vsel %vm899, 1, 0
        %v948 = vsel %vm900, 1, 0
        %v949 = vsel %vm901, 1, 0
        %v950 = vsel %vm902, 1, 0
        %v951 = vsel %vm903, 1, 0
        %v952 = vsel %vm904, 1, 0
        %v953 = vsel %vm905, 1, 0
        %v954 = vsel %vm906, 1, 0
        %v955 = vsel %vm907, 1, 0
        %v956 = vsel %vm908, 1, 0
        %v957 = vsel %vm909, 1, 0
        %v958 = vsel %vm910, 1, 0
        %v959 = vsel %vm911, 1, 0
        %v960 = vsel %vm912, 1, 0
        %v961 = vsel %vm913, 1, 0
        %v962 = vsel %vm914, 1, 0
        %v963 = vsel %vm915, 1, 0
        %v964 = vsel %vm916, 1, 0
        %v965 = vsel %vm917, 1, 0
        %v966 = vsel %vm918, 1, 0
        %v967 = vsel %vm919, 1, 0
        %v968 = vsel %vm920, 1, 0
        %v969 = vsel %vm921, 1, 0
        %v970 = vsel %vm922, 1, 0
        %v971 = vsel %vm923, 1, 0
        %v972 = vsel %vm924, 1, 0
        %v973 = vsel %vm925, 1, 0
        %v974 = vsel %vm926, 1, 0
        %v975 = vsel %vm927, 1, 0
        %v976 = vsel %vm928, 1, 0
        %v977 = vsel %vm929, 1, 0
        %v978 = vsel %vm930, 1, 0
        %v979 = vsel %vm931, 1, 0
        %v980 = vsel %vm932, 1, 0
        %v981 = vsel %vm933, 1, 0
        %v982 = vsel %vm934, 1, 0
        %v983 = vsel %vm935, 1, 0
        %v984 = vsel %vm936, 1, 0
        %v985 = vsel %vm937, 1, 0
        %v986 = vsel %vm938, 1, 0
        %v987 = vsel %vm939, 1, 0
        %v988 = vcvt.s32.f32 %v940
        %v989 = vcvt.s32.f32 %v941
        %v990 = vcvt.s32.f32 %v942
        %v991 = vcvt.s32.f32 %v943
        %v992 = vcvt.s32.f32 %v944
        %v993 = vcvt.s32.f32 %v945
        %v994 = vcvt.s32.f32 %v946
        %v995 = vcvt.s32.f32 %v947
        %v996 = vcvt.s32.f32 %v948
        %v997 = vcvt.s32.f32 %v949
        %v998 = vcvt.s32.f32 %v950
        %v999 = vcvt.s32.f32 %v951
        %v1000 = vcvt.s32.f32 %v952
        %v1001 = vcvt.s32.f32 %v953
        %v1002 = vcvt.s32.f32 %v954
        %v1003 = vcvt.s32.f32 %v955
        %v1004 = vcvt.s32.f32 %v956
        %v1005 = vcvt.s32.f32 %v957
        %v1006 = vcvt.s32.f32 %v958
        %v1007 = vcvt.s32.f32 %v959
        %v1008 = vcvt.s32.f32 %v960
        %v1009 = vcvt.s32.f32 %v961
        %v1010 = vcvt.s32.f32 %v962
        %v1011 = vcvt.s32.f32 %v963
        %v1012 = vcvt.s32.f32 %v964
        %v1013 = vcvt.s32.f32 %v965
        %v1014 = vcvt.s32.f32 %v966
        %v1015 = vcvt.s32.f32 %v967
        %v1016 = vcvt.s32.f32 %v968
        %v1017 = vcvt.s32.f32 %v969
        %v1018 = vcvt.s32.f32 %v970
        %v1019 = vcvt.s32.f32 %v971
        %v1020 = vcvt.s32.f32 %v972
        %v1021 = vcvt.s32.f32 %v973
        %v1022 = vcvt.s32.f32 %v974
        %v1023 = vcvt.s32.f32 %v975
        %v1024 = vcvt.s32.f32 %v976
        %v1025 = vcvt.s32.f32 %v977
        %v1026 = vcvt.s32.f32 %v978
        %v1027 = vcvt.s32.f32 %v979
        %v1028 = vcvt.s32.f32 %v980
        %v1029 = vcvt.s32.f32 %v981
        %v1030 = vcvt.s32.f32 %v982
        %v1031 = vcvt.s32.f32 %v983
        %v1032 = vcvt.s32.f32 %v984
        %v1033 = vcvt.s32.f32 %v985
        %v1034 = vcvt.s32.f32 %v986
        %v1035 = vcvt.s32.f32 %v987
        %v1036 = vld [vmem:[%s507] sm:$0xff]
        %v1037 = vld [vmem:[%s507 + $0x8] sm:$0xff]
        %v1038 = vld [vmem:[%s507 + $0x10] sm:$0xff]
        %v1039 = vld [vmem:[%s507 + $0x18] sm:$0xff]
        %v1040 = vld [vmem:[%s507 + $0x20] sm:$0xff]
        %v1041 = vld [vmem:[%s507 + $0x28] sm:$0xff]
        %v1042 = vld [vmem:[%s507 + $0x30] sm:$0xff]
        %v1043 = vld [vmem:[%s507 + $0x38] sm:$0xff]
        %v1044 = vld [vmem:[%s507 + $0x40] sm:$0xff]
        %v1045 = vld [vmem:[%s507 + $0x48] sm:$0xff]
        %v1046 = vld [vmem:[%s507 + $0x50] sm:$0xff]
        %v1047 = vld [vmem:[%s507 + $0x58] sm:$0xff]
        %v1048 = vld [vmem:[%s507 + $0x60] sm:$0xff]
        %v1049 = vld [vmem:[%s507 + $0x68] sm:$0xff]
        %v1050 = vld [vmem:[%s507 + $0x70] sm:$0xff]
        %v1051 = vld [vmem:[%s507 + $0x78] sm:$0xff]
        %v1052 = vld [vmem:[%s507 + $0x80] sm:$0xff]
        %v1053 = vld [vmem:[%s507 + $0x88] sm:$0xff]
        %v1054 = vld [vmem:[%s507 + $0x90] sm:$0xff]
        %v1055 = vld [vmem:[%s507 + $0x98] sm:$0xff]
        %v1056 = vld [vmem:[%s507 + $0xa0] sm:$0xff]
        %v1057 = vld [vmem:[%s507 + $0xa8] sm:$0xff]
        %v1058 = vld [vmem:[%s507 + $0xb0] sm:$0xff]
        %v1059 = vld [vmem:[%s507 + $0xb8] sm:$0xff]
        %v1060 = vld [vmem:[%s507 + $0xc0] sm:$0xff]
        %v1061 = vld [vmem:[%s507 + $0xc8] sm:$0xff]
        %v1062 = vld [vmem:[%s507 + $0xd0] sm:$0xff]
        %v1063 = vld [vmem:[%s507 + $0xd8] sm:$0xff]
        %v1064 = vld [vmem:[%s507 + $0xe0] sm:$0xff]
        %v1065 = vld [vmem:[%s507 + $0xe8] sm:$0xff]
        %v1066 = vld [vmem:[%s507 + $0xf0] sm:$0xff]
        %v1067 = vld [vmem:[%s507 + $0xf8] sm:$0xff]
        %v1068 = vld [vmem:[%s507 + $0x100] sm:$0xff]
        %v1069 = vld [vmem:[%s507 + $0x108] sm:$0xff]
        %v1070 = vld [vmem:[%s507 + $0x110] sm:$0xff]
        %v1071 = vld [vmem:[%s507 + $0x118] sm:$0xff]
        %v1072 = vld [vmem:[%s507 + $0x120] sm:$0xff]
        %v1073 = vld [vmem:[%s507 + $0x128] sm:$0xff]
        %v1074 = vld [vmem:[%s507 + $0x130] sm:$0xff]
        %v1075 = vld [vmem:[%s507 + $0x138] sm:$0xff]
        %v1076 = vld [vmem:[%s507 + $0x140] sm:$0xff]
        %v1077 = vld [vmem:[%s507 + $0x148] sm:$0xff]
        %v1078 = vld [vmem:[%s507 + $0x150] sm:$0xff]
        %v1079 = vld [vmem:[%s507 + $0x158] sm:$0xff]
        %v1080 = vld [vmem:[%s507 + $0x160] sm:$0xff]
        %v1081 = vld [vmem:[%s507 + $0x168] sm:$0xff]
        %v1082 = vld [vmem:[%s507 + $0x170] sm:$0xff]
        %v1083 = vld [vmem:[%s507 + $0x178] sm:$0xff]
        %1084 = vset.pattern.permute.xlu0 0
        %1085 = vperm.xlu0 %1084, %v1036
        %v1086 = vpop.permute.xlu0 %1085
        %1087 = vset.pattern.permute.xlu0 0
        %1088 = vperm.xlu0 %1087, %v1037
        %v1089 = vpop.permute.xlu0 %1088
        %1090 = vset.pattern.permute.xlu0 0
        %1091 = vperm.xlu0 %1090, %v1038
        %v1092 = vpop.permute.xlu0 %1091
        %1093 = vset.pattern.permute.xlu0 0
        %1094 = vperm.xlu0 %1093, %v1039
        %v1095 = vpop.permute.xlu0 %1094
        %1096 = vset.pattern.permute.xlu0 0
        %1097 = vperm.xlu0 %1096, %v1040
        %v1098 = vpop.permute.xlu0 %1097
        %1099 = vset.pattern.permute.xlu0 0
        %1100 = vperm.xlu0 %1099, %v1041
        %v1101 = vpop.permute.xlu0 %1100
        %1102 = vset.pattern.permute.xlu0 0
        %1103 = vperm.xlu0 %1102, %v1042
        %v1104 = vpop.permute.xlu0 %1103
        %1105 = vset.pattern.permute.xlu0 0
        %1106 = vperm.xlu0 %1105, %v1043
        %v1107 = vpop.permute.xlu0 %1106
        %1108 = vset.pattern.permute.xlu0 0
        %1109 = vperm.xlu0 %1108, %v1044
        %v1110 = vpop.permute.xlu0 %1109
        %1111 = vset.pattern.permute.xlu0 0
        %1112 = vperm.xlu0 %1111, %v1045
        %v1113 = vpop.permute.xlu0 %1112
        %1114 = vset.pattern.permute.xlu0 0
        %1115 = vperm.xlu0 %1114, %v1046
        %v1116 = vpop.permute.xlu0 %1115
        %1117 = vset.pattern.permute.xlu0 0
        %1118 = vperm.xlu0 %1117, %v1047
        %v1119 = vpop.permute.xlu0 %1118
        %1120 = vset.pattern.permute.xlu0 0
        %1121 = vperm.xlu0 %1120, %v1048
        %v1122 = vpop.permute.xlu0 %1121
        %1123 = vset.pattern.permute.xlu0 0
        %1124 = vperm.xlu0 %1123, %v1049
        %v1125 = vpop.permute.xlu0 %1124
        %1126 = vset.pattern.permute.xlu0 0
        %1127 = vperm.xlu0 %1126, %v1050
        %v1128 = vpop.permute.xlu0 %1127
        %1129 = vset.pattern.permute.xlu0 0
        %1130 = vperm.xlu0 %1129, %v1051
        %v1131 = vpop.permute.xlu0 %1130
        %1132 = vset.pattern.permute.xlu0 0
        %1133 = vperm.xlu0 %1132, %v1052
        %v1134 = vpop.permute.xlu0 %1133
        %1135 = vset.pattern.permute.xlu0 0
        %1136 = vperm.xlu0 %1135, %v1053
        %v1137 = vpop.permute.xlu0 %1136
        %1138 = vset.pattern.permute.xlu0 0
        %1139 = vperm.xlu0 %1138, %v1054
        %v1140 = vpop.permute.xlu0 %1139
        %1141 = vset.pattern.permute.xlu0 0
        %1142 = vperm.xlu0 %1141, %v1055
        %v1143 = vpop.permute.xlu0 %1142
        %1144 = vset.pattern.permute.xlu0 0
        %1145 = vperm.xlu0 %1144, %v1056
        %v1146 = vpop.permute.xlu0 %1145
        %1147 = vset.pattern.permute.xlu0 0
        %1148 = vperm.xlu0 %1147, %v1057
        %v1149 = vpop.permute.xlu0 %1148
        %1150 = vset.pattern.permute.xlu0 0
        %1151 = vperm.xlu0 %1150, %v1058
        %v1152 = vpop.permute.xlu0 %1151
        %1153 = vset.pattern.permute.xlu0 0
        %1154 = vperm.xlu0 %1153, %v1059
        %v1155 = vpop.permute.xlu0 %1154
        %1156 = vset.pattern.permute.xlu0 0
        %1157 = vperm.xlu0 %1156, %v1060
        %v1158 = vpop.permute.xlu0 %1157
        %1159 = vset.pattern.permute.xlu0 0
        %1160 = vperm.xlu0 %1159, %v1061
        %v1161 = vpop.permute.xlu0 %1160
        %1162 = vset.pattern.permute.xlu0 0
        %1163 = vperm.xlu0 %1162, %v1062
        %v1164 = vpop.permute.xlu0 %1163
        %1165 = vset.pattern.permute.xlu0 0
        %1166 = vperm.xlu0 %1165, %v1063
        %v1167 = vpop.permute.xlu0 %1166
        %1168 = vset.pattern.permute.xlu0 0
        %1169 = vperm.xlu0 %1168, %v1064
        %v1170 = vpop.permute.xlu0 %1169
        %1171 = vset.pattern.permute.xlu0 0
        %1172 = vperm.xlu0 %1171, %v1065
        %v1173 = vpop.permute.xlu0 %1172
        %1174 = vset.pattern.permute.xlu0 0
        %1175 = vperm.xlu0 %1174, %v1066
        %v1176 = vpop.permute.xlu0 %1175
        %1177 = vset.pattern.permute.xlu0 0
        %1178 = vperm.xlu0 %1177, %v1067
        %v1179 = vpop.permute.xlu0 %1178
        %1180 = vset.pattern.permute.xlu0 0
        %1181 = vperm.xlu0 %1180, %v1068
        %v1182 = vpop.permute.xlu0 %1181
        %1183 = vset.pattern.permute.xlu0 0
        %1184 = vperm.xlu0 %1183, %v1069
        %v1185 = vpop.permute.xlu0 %1184
        %1186 = vset.pattern.permute.xlu0 0
        %1187 = vperm.xlu0 %1186, %v1070
        %v1188 = vpop.permute.xlu0 %1187
        %1189 = vset.pattern.permute.xlu0 0
        %1190 = vperm.xlu0 %1189, %v1071
        %v1191 = vpop.permute.xlu0 %1190
        %1192 = vset.pattern.permute.xlu0 0
        %1193 = vperm.xlu0 %1192, %v1072
        %v1194 = vpop.permute.xlu0 %1193
        %1195 = vset.pattern.permute.xlu0 0
        %1196 = vperm.xlu0 %1195, %v1073
        %v1197 = vpop.permute.xlu0 %1196
        %1198 = vset.pattern.permute.xlu0 0
        %1199 = vperm.xlu0 %1198, %v1074
        %v1200 = vpop.permute.xlu0 %1199
        %1201 = vset.pattern.permute.xlu0 0
        %1202 = vperm.xlu0 %1201, %v1075
        %v1203 = vpop.permute.xlu0 %1202
        %1204 = vset.pattern.permute.xlu0 0
        %1205 = vperm.xlu0 %1204, %v1076
        %v1206 = vpop.permute.xlu0 %1205
        %1207 = vset.pattern.permute.xlu0 0
        %1208 = vperm.xlu0 %1207, %v1077
        %v1209 = vpop.permute.xlu0 %1208
        %1210 = vset.pattern.permute.xlu0 0
        %1211 = vperm.xlu0 %1210, %v1078
        %v1212 = vpop.permute.xlu0 %1211
        %1213 = vset.pattern.permute.xlu0 0
        %1214 = vperm.xlu0 %1213, %v1079
        %v1215 = vpop.permute.xlu0 %1214
        %1216 = vset.pattern.permute.xlu0 0
        %1217 = vperm.xlu0 %1216, %v1080
        %v1218 = vpop.permute.xlu0 %1217
        %1219 = vset.pattern.permute.xlu0 0
        %1220 = vperm.xlu0 %1219, %v1081
        %v1221 = vpop.permute.xlu0 %1220
        %1222 = vset.pattern.permute.xlu0 0
        %1223 = vperm.xlu0 %1222, %v1082
        %v1224 = vpop.permute.xlu0 %1223
        %1225 = vset.pattern.permute.xlu0 0
        %1226 = vperm.xlu0 %1225, %v1083
        %v1227 = vpop.permute.xlu0 %1226
        %vm1228 = vcmp.eq.s32.totalorder %v1086, %v699
        %vm1229 = vcmp.eq.s32.totalorder %v1089, %v699
        %vm1230 = vcmp.eq.s32.totalorder %v1092, %v699
        %vm1231 = vcmp.eq.s32.totalorder %v1095, %v699
        %vm1232 = vcmp.eq.s32.totalorder %v1098, %v699
        %vm1233 = vcmp.eq.s32.totalorder %v1101, %v699
        %vm1234 = vcmp.eq.s32.totalorder %v1104, %v699
        %vm1235 = vcmp.eq.s32.totalorder %v1107, %v699
        %vm1236 = vcmp.eq.s32.totalorder %v1110, %v699
        %vm1237 = vcmp.eq.s32.totalorder %v1113, %v699
        %vm1238 = vcmp.eq.s32.totalorder %v1116, %v699
        %vm1239 = vcmp.eq.s32.totalorder %v1119, %v699
        %vm1240 = vcmp.eq.s32.totalorder %v1122, %v699
        %vm1241 = vcmp.eq.s32.totalorder %v1125, %v699
        %vm1242 = vcmp.eq.s32.totalorder %v1128, %v699
        %vm1243 = vcmp.eq.s32.totalorder %v1131, %v699
        %vm1244 = vcmp.eq.s32.totalorder %v1134, %v699
        %vm1245 = vcmp.eq.s32.totalorder %v1137, %v699
        %vm1246 = vcmp.eq.s32.totalorder %v1140, %v699
        %vm1247 = vcmp.eq.s32.totalorder %v1143, %v699
        %vm1248 = vcmp.eq.s32.totalorder %v1146, %v699
        %vm1249 = vcmp.eq.s32.totalorder %v1149, %v699
        %vm1250 = vcmp.eq.s32.totalorder %v1152, %v699
        %vm1251 = vcmp.eq.s32.totalorder %v1155, %v699
        %vm1252 = vcmp.eq.s32.totalorder %v1158, %v699
        %vm1253 = vcmp.eq.s32.totalorder %v1161, %v699
        %vm1254 = vcmp.eq.s32.totalorder %v1164, %v699
        %vm1255 = vcmp.eq.s32.totalorder %v1167, %v699
        %vm1256 = vcmp.eq.s32.totalorder %v1170, %v699
        %vm1257 = vcmp.eq.s32.totalorder %v1173, %v699
        %vm1258 = vcmp.eq.s32.totalorder %v1176, %v699
        %vm1259 = vcmp.eq.s32.totalorder %v1179, %v699
        %vm1260 = vcmp.eq.s32.totalorder %v1182, %v699
        %vm1261 = vcmp.eq.s32.totalorder %v1185, %v699
        %vm1262 = vcmp.eq.s32.totalorder %v1188, %v699
        %vm1263 = vcmp.eq.s32.totalorder %v1191, %v699
        %vm1264 = vcmp.eq.s32.totalorder %v1194, %v699
        %vm1265 = vcmp.eq.s32.totalorder %v1197, %v699
        %vm1266 = vcmp.eq.s32.totalorder %v1200, %v699
        %vm1267 = vcmp.eq.s32.totalorder %v1203, %v699
        %vm1268 = vcmp.eq.s32.totalorder %v1206, %v699
        %vm1269 = vcmp.eq.s32.totalorder %v1209, %v699
        %vm1270 = vcmp.eq.s32.totalorder %v1212, %v699
        %vm1271 = vcmp.eq.s32.totalorder %v1215, %v699
        %vm1272 = vcmp.eq.s32.totalorder %v1218, %v699
        %vm1273 = vcmp.eq.s32.totalorder %v1221, %v699
        %vm1274 = vcmp.eq.s32.totalorder %v1224, %v699
        %vm1275 = vcmp.eq.s32.totalorder %v1227, %v699
        %v1276 = vsel %vm1228, 1, 0
        %v1277 = vsel %vm1229, 1, 0
        %v1278 = vsel %vm1230, 1, 0
        %v1279 = vsel %vm1231, 1, 0
        %v1280 = vsel %vm1232, 1, 0
        %v1281 = vsel %vm1233, 1, 0
        %v1282 = vsel %vm1234, 1, 0
        %v1283 = vsel %vm1235, 1, 0
        %v1284 = vsel %vm1236, 1, 0
        %v1285 = vsel %vm1237, 1, 0
        %v1286 = vsel %vm1238, 1, 0
        %v1287 = vsel %vm1239, 1, 0
        %v1288 = vsel %vm1240, 1, 0
        %v1289 = vsel %vm1241, 1, 0
        %v1290 = vsel %vm1242, 1, 0
        %v1291 = vsel %vm1243, 1, 0
        %v1292 = vsel %vm1244, 1, 0
        %v1293 = vsel %vm1245, 1, 0
        %v1294 = vsel %vm1246, 1, 0
        %v1295 = vsel %vm1247, 1, 0
        %v1296 = vsel %vm1248, 1, 0
        %v1297 = vsel %vm1249, 1, 0
        %v1298 = vsel %vm1250, 1, 0
        %v1299 = vsel %vm1251, 1, 0
        %v1300 = vsel %vm1252, 1, 0
        %v1301 = vsel %vm1253, 1, 0
        %v1302 = vsel %vm1254, 1, 0
        %v1303 = vsel %vm1255, 1, 0
        %v1304 = vsel %vm1256, 1, 0
        %v1305 = vsel %vm1257, 1, 0
        %v1306 = vsel %vm1258, 1, 0
        %v1307 = vsel %vm1259, 1, 0
        %v1308 = vsel %vm1260, 1, 0
        %v1309 = vsel %vm1261, 1, 0
        %v1310 = vsel %vm1262, 1, 0
        %v1311 = vsel %vm1263, 1, 0
        %v1312 = vsel %vm1264, 1, 0
        %v1313 = vsel %vm1265, 1, 0
        %v1314 = vsel %vm1266, 1, 0
        %v1315 = vsel %vm1267, 1, 0
        %v1316 = vsel %vm1268, 1, 0
        %v1317 = vsel %vm1269, 1, 0
        %v1318 = vsel %vm1270, 1, 0
        %v1319 = vsel %vm1271, 1, 0
        %v1320 = vsel %vm1272, 1, 0
        %v1321 = vsel %vm1273, 1, 0
        %v1322 = vsel %vm1274, 1, 0
        %v1323 = vsel %vm1275, 1, 0
        %v1324 = vcvt.s32.f32 %v1276
        %v1325 = vcvt.s32.f32 %v1277
        %v1326 = vcvt.s32.f32 %v1278
        %v1327 = vcvt.s32.f32 %v1279
        %v1328 = vcvt.s32.f32 %v1280
        %v1329 = vcvt.s32.f32 %v1281
        %v1330 = vcvt.s32.f32 %v1282
        %v1331 = vcvt.s32.f32 %v1283
        %v1332 = vcvt.s32.f32 %v1284
        %v1333 = vcvt.s32.f32 %v1285
        %v1334 = vcvt.s32.f32 %v1286
        %v1335 = vcvt.s32.f32 %v1287
        %v1336 = vcvt.s32.f32 %v1288
        %v1337 = vcvt.s32.f32 %v1289
        %v1338 = vcvt.s32.f32 %v1290
        %v1339 = vcvt.s32.f32 %v1291
        %v1340 = vcvt.s32.f32 %v1292
        %v1341 = vcvt.s32.f32 %v1293
        %v1342 = vcvt.s32.f32 %v1294
        %v1343 = vcvt.s32.f32 %v1295
        %v1344 = vcvt.s32.f32 %v1296
        %v1345 = vcvt.s32.f32 %v1297
        %v1346 = vcvt.s32.f32 %v1298
        %v1347 = vcvt.s32.f32 %v1299
        %v1348 = vcvt.s32.f32 %v1300
        %v1349 = vcvt.s32.f32 %v1301
        %v1350 = vcvt.s32.f32 %v1302
        %v1351 = vcvt.s32.f32 %v1303
        %v1352 = vcvt.s32.f32 %v1304
        %v1353 = vcvt.s32.f32 %v1305
        %v1354 = vcvt.s32.f32 %v1306
        %v1355 = vcvt.s32.f32 %v1307
        %v1356 = vcvt.s32.f32 %v1308
        %v1357 = vcvt.s32.f32 %v1309
        %v1358 = vcvt.s32.f32 %v1310
        %v1359 = vcvt.s32.f32 %v1311
        %v1360 = vcvt.s32.f32 %v1312
        %v1361 = vcvt.s32.f32 %v1313
        %v1362 = vcvt.s32.f32 %v1314
        %v1363 = vcvt.s32.f32 %v1315
        %v1364 = vcvt.s32.f32 %v1316
        %v1365 = vcvt.s32.f32 %v1317
        %v1366 = vcvt.s32.f32 %v1318
        %v1367 = vcvt.s32.f32 %v1319
        %v1368 = vcvt.s32.f32 %v1320
        %v1369 = vcvt.s32.f32 %v1321
        %v1370 = vcvt.s32.f32 %v1322
        %v1371 = vcvt.s32.f32 %v1323
        %vm1372 = vcmask 261120
        %v1374 = vsel %vm1372, %v988, 0
        %v1377 = vsel %vm1372, %v989, 0
        %v1380 = vsel %vm1372, %v990, 0
        %v1383 = vsel %vm1372, %v991, 0
        %v1386 = vsel %vm1372, %v992, 0
        %v1389 = vsel %vm1372, %v993, 0
        %v1392 = vsel %vm1372, %v994, 0
        %v1395 = vsel %vm1372, %v995, 0
        %v1398 = vsel %vm1372, %v996, 0
        %v1401 = vsel %vm1372, %v997, 0
        %v1404 = vsel %vm1372, %v998, 0
        %v1407 = vsel %vm1372, %v999, 0
        %v1410 = vsel %vm1372, %v1000, 0
        %v1413 = vsel %vm1372, %v1001, 0
        %v1416 = vsel %vm1372, %v1002, 0
        %v1419 = vsel %vm1372, %v1003, 0
        %v1422 = vsel %vm1372, %v1004, 0
        %v1425 = vsel %vm1372, %v1005, 0
        %v1428 = vsel %vm1372, %v1006, 0
        %v1431 = vsel %vm1372, %v1007, 0
        %v1434 = vsel %vm1372, %v1008, 0
        %v1437 = vsel %vm1372, %v1009, 0
        %v1440 = vsel %vm1372, %v1010, 0
        %v1443 = vsel %vm1372, %v1011, 0
        %v1446 = vsel %vm1372, %v1012, 0
        %v1449 = vsel %vm1372, %v1013, 0
        %v1452 = vsel %vm1372, %v1014, 0
        %v1455 = vsel %vm1372, %v1015, 0
        %v1458 = vsel %vm1372, %v1016, 0
        %v1461 = vsel %vm1372, %v1017, 0
        %v1464 = vsel %vm1372, %v1018, 0
        %v1467 = vsel %vm1372, %v1019, 0
        %v1470 = vsel %vm1372, %v1020, 0
        %v1473 = vsel %vm1372, %v1021, 0
        %v1476 = vsel %vm1372, %v1022, 0
        %v1479 = vsel %vm1372, %v1023, 0
        %v1482 = vsel %vm1372, %v1024, 0
        %v1485 = vsel %vm1372, %v1025, 0
        %v1488 = vsel %vm1372, %v1026, 0
        %v1491 = vsel %vm1372, %v1027, 0
        %v1494 = vsel %vm1372, %v1028, 0
        %v1497 = vsel %vm1372, %v1029, 0
        %v1500 = vsel %vm1372, %v1030, 0
        %v1503 = vsel %vm1372, %v1031, 0
        %v1506 = vsel %vm1372, %v1032, 0
        %v1509 = vsel %vm1372, %v1033, 0
        %v1512 = vsel %vm1372, %v1034, 0
        %v1515 = vsel %vm1372, %v1035, 0
        %1517 = vmatprep.subr.mxu0 0.0
        %1518 = vmatpush1.msra.mxu0 %v694
        %1519 = vmatprep.subr.mxu0 0.0
        %1520 = vmatpush1.msra.mxu0 %v695
        %1521 = vmatprep.subr.mxu0 0.0
        %1522 = vmatpush1.msra.mxu0 %v696
        %1523 = vmatprep.subr.mxu0 0.0
        %1524 = vmatpush1.msra.mxu0 %v697
        %1525 = vmatprep.subr.mxu0 0.0
        %1526 = vmatpush1.msra.mxu0 0.0
        %1527 = vmatprep.subr.mxu0 0.0
        %1528 = vmatpush1.msra.mxu0 0.0
        %1529 = vmatprep.subr.mxu0 0.0
        %1530 = vmatpush1.msra.mxu0 0.0
        %1531 = vmatprep.subr.mxu0 0.0
        %1532 = vmatpush1.msra.mxu0 0.0
        %1533 = vmatprep.subr.mxu0 0.0
        %1534 = vmatpush1.msra.mxu0 0.0
        %1535 = vmatprep.subr.mxu0 0.0
        %1536 = vmatpush1.msra.mxu0 0.0
        %1537 = vmatprep.subr.mxu0 0.0
        %1538 = vmatpush1.msra.mxu0 0.0
        %1539 = vmatprep.subr.mxu0 0.0
        %1540 = vmatpush1.msra.mxu0 0.0
        %1541 = vmatprep.subr.mxu0 0.0
        %1542 = vmatpush1.msra.mxu0 0.0
        %1543 = vmatprep.subr.mxu0 0.0
        %1544 = vmatpush1.msra.mxu0 0.0
        %1545 = vmatprep.subr.mxu0 0.0
        %1546 = vmatpush1.msra.mxu0 0.0
        %1547 = vmatprep.subr.mxu0 0.0
        %1548 = vmatpush1.msra.mxu0 0.0
        %1549 = vmatprep.subr.mxu0 0.0
        %1550 = vmatpush1.msra.mxu0 0.0
        %1551 = vmatprep.subr.mxu0 0.0
        %1552 = vmatpush1.msra.mxu0 0.0
        %1553 = vmatprep.subr.mxu0 0.0
        %1554 = vmatpush1.msra.mxu0 0.0
        %1555 = vmatprep.subr.mxu0 0.0
        %1556 = vmatpush1.msra.mxu0 0.0
        %1557 = vmatprep.subr.mxu0 0.0
        %1558 = vmatpush1.msra.mxu0 0.0
        %1559 = vmatprep.subr.mxu0 0.0
        %1560 = vmatpush1.msra.mxu0 0.0
        %1561 = vmatprep.subr.mxu0 0.0
        %1562 = vmatpush1.msra.mxu0 0.0
        %1563 = vmatprep.subr.mxu0 0.0
        %1564 = vmatpush1.msra.mxu0 0.0
        %1565 = vmatprep.subr.mxu0 0.0
        %1566 = vmatpush1.msra.mxu0 0.0
        %1567 = vmatprep.subr.mxu0 0.0
        %1568 = vmatpush1.msra.mxu0 0.0
        %1569 = vmatprep.subr.mxu0 0.0
        %1570 = vmatpush1.msra.mxu0 0.0
        %1571 = vmatprep.subr.mxu0 0.0
        %1572 = vmatpush1.msra.mxu0 0.0
        %1573 = vmatprep.subr.mxu0 0.0
        %1574 = vmatpush1.msra.mxu0 0.0
        %1575 = vmatprep.subr.mxu0 0.0
        %1576 = vmatpush1.msra.mxu0 0.0
        %1577 = vmatprep.subr.mxu0 0.0
        %1578 = vmatpush1.msra.mxu0 0.0
        %1579 = vmatprep.subr.mxu0 0.0
        %1580 = vmatpush1.msra.mxu0 0.0
        %1581 = vmatprep.mubr.f32.mxu0 0.0
        %1582 = vmatmul.mubr.f32.gmra.mrb[0].mxu0 %v1374
        %v1583 = vpop.f32.mrb[0].mxu0
        %v1584 = vadd.f32 0.0, %v1583
        %v1585 = vpop.f32.mrb[0].mxu0
        %1586 = vmatprep.mubr.f32.mxu0 0.0
        %1587 = vmatmul.mubr.f32.gmra.mrb[0].mxu0 %v1377
        %v1588 = vpop.f32.mrb[0].mxu0
        %v1589 = vadd.f32 0.0, %v1588
        %v1590 = vpop.f32.mrb[0].mxu0
        %1591 = vmatprep.mubr.f32.mxu0 0.0
        %1592 = vmatmul.mubr.f32.gmra.mrb[0].mxu0 %v1380
        %v1593 = vpop.f32.mrb[0].mxu0
        %v1594 = vadd.f32 0.0, %v1593
        %v1595 = vpop.f32.mrb[0].mxu0
        %1596 = vmatprep.mubr.f32.mxu0 0.0
        %1597 = vmatmul.mubr.f32.gmra.mrb[0].mxu0 %v1383
        %v1598 = vpop.f32.mrb[0].mxu0
        %v1599 = vadd.f32 0.0, %v1598
        %v1600 = vpop.f32.mrb[0].mxu0
        %1601 = vmatprep.mubr.f32.mxu0 0.0
        %1602 = vmatmul.mubr.f32.gmra.mrb[0].mxu0 %v1386
        %v1603 = vpop.f32.mrb[0].mxu0
        %v1604 = vadd.f32 0.0, %v1603
        %v1605 = vpop.f32.mrb[0].mxu0
        %1606 = vmatprep.mubr.f32.mxu0 0.0
        %1607 = vmatmul.mubr.f32.gmra.mrb[0].mxu0 %v1389
        %v1608 = vpop.f32.mrb[0].mxu0
        %v1609 = vadd.f32 0.0, %v1608
        %v1610 = vpop.f32.mrb[0].mxu0
        %1611 = vmatprep.mubr.f32.mxu0 0.0
        %1612 = vmatmul.mubr.f32.gmra.mrb[0].mxu0 %v1392
        %v1613 = vpop.f32.mrb[0].mxu0
        %v1614 = vadd.f32 0.0, %v1613
        %v1615 = vpop.f32.mrb[0].mxu0
        %1616 = vmatprep.mubr.f32.mxu0 0.0
        %1617 = vmatmul.mubr.f32.gmra.mrb[0].mxu0 %v1395
        %v1618 = vpop.f32.mrb[0].mxu0
        %v1619 = vadd.f32 0.0, %v1618
        %v1620 = vpop.f32.mrb[0].mxu0
        %1621 = vmatprep.mubr.f32.mxu0 0.0
        %1622 = vmatmul.mubr.f32.gmra.mrb[0].mxu0 %v1398
        %v1623 = vpop.f32.mrb[0].mxu0
        %v1624 = vadd.f32 0.0, %v1623
        %v1625 = vpop.f32.mrb[0].mxu0
        %1626 = vmatprep.mubr.f32.mxu0 0.0
        %1627 = vmatmul.mubr.f32.gmra.mrb[0].mxu0 %v1401
        %v1628 = vpop.f32.mrb[0].mxu0
        %v1629 = vadd.f32 0.0, %v1628
        %v1630 = vpop.f32.mrb[0].mxu0
        %1631 = vmatprep.mubr.f32.mxu0 0.0
        %1632 = vmatmul.mubr.f32.gmra.mrb[0].mxu0 %v1404
        %v1633 = vpop.f32.mrb[0].mxu0
        %v1634 = vadd.f32 0.0, %v1633
        %v1635 = vpop.f32.mrb[0].mxu0
        %1636 = vmatprep.mubr.f32.mxu0 0.0
        %1637 = vmatmul.mubr.f32.gmra.mrb[0].mxu0 %v1407
        %v1638 = vpop.f32.mrb[0].mxu0
        %v1639 = vadd.f32 0.0, %v1638
        %v1640 = vpop.f32.mrb[0].mxu0
        %1641 = vmatprep.mubr.f32.mxu0 0.0
        %1642 = vmatmul.mubr.f32.gmra.mrb[0].mxu0 %v1410
        %v1643 = vpop.f32.mrb[0].mxu0
        %v1644 = vadd.f32 0.0, %v1643
        %v1645 = vpop.f32.mrb[0].mxu0
        %1646 = vmatprep.mubr.f32.mxu0 0.0
        %1647 = vmatmul.mubr.f32.gmra.mrb[0].mxu0 %v1413
        %v1648 = vpop.f32.mrb[0].mxu0
        %v1649 = vadd.f32 0.0, %v1648
        %v1650 = vpop.f32.mrb[0].mxu0
        %1651 = vmatprep.mubr.f32.mxu0 0.0
        %1652 = vmatmul.mubr.f32.gmra.mrb[0].mxu0 %v1416
        %v1653 = vpop.f32.mrb[0].mxu0
        %v1654 = vadd.f32 0.0, %v1653
        %v1655 = vpop.f32.mrb[0].mxu0
        %1656 = vmatprep.mubr.f32.mxu0 0.0
        %1657 = vmatmul.mubr.f32.gmra.mrb[0].mxu0 %v1419
        %v1658 = vpop.f32.mrb[0].mxu0
        %v1659 = vadd.f32 0.0, %v1658
        %v1660 = vpop.f32.mrb[0].mxu0
        %1661 = vmatprep.mubr.f32.mxu0 0.0
        %1662 = vmatmul.mubr.f32.gmra.mrb[0].mxu0 %v1422
        %v1663 = vpop.f32.mrb[0].mxu0
        %v1664 = vadd.f32 0.0, %v1663
        %v1665 = vpop.f32.mrb[0].mxu0
        %1666 = vmatprep.mubr.f32.mxu0 0.0
        %1667 = vmatmul.mubr.f32.gmra.mrb[0].mxu0 %v1425
        %v1668 = vpop.f32.mrb[0].mxu0
        %v1669 = vadd.f32 0.0, %v1668
        %v1670 = vpop.f32.mrb[0].mxu0
        %1671 = vmatprep.mubr.f32.mxu0 0.0
        %1672 = vmatmul.mubr.f32.gmra.mrb[0].mxu0 %v1428
        %v1673 = vpop.f32.mrb[0].mxu0
        %v1674 = vadd.f32 0.0, %v1673
        %v1675 = vpop.f32.mrb[0].mxu0
        %1676 = vmatprep.mubr.f32.mxu0 0.0
        %1677 = vmatmul.mubr.f32.gmra.mrb[0].mxu0 %v1431
        %v1678 = vpop.f32.mrb[0].mxu0
        %v1679 = vadd.f32 0.0, %v1678
        %v1680 = vpop.f32.mrb[0].mxu0
        %1681 = vmatprep.mubr.f32.mxu0 0.0
        %1682 = vmatmul.mubr.f32.gmra.mrb[0].mxu0 %v1434
        %v1683 = vpop.f32.mrb[0].mxu0
        %v1684 = vadd.f32 0.0, %v1683
        %v1685 = vpop.f32.mrb[0].mxu0
        %1686 = vmatprep.mubr.f32.mxu0 0.0
        %1687 = vmatmul.mubr.f32.gmra.mrb[0].mxu0 %v1437
        %v1688 = vpop.f32.mrb[0].mxu0
        %v1689 = vadd.f32 0.0, %v1688
        %v1690 = vpop.f32.mrb[0].mxu0
        %1691 = vmatprep.mubr.f32.mxu0 0.0
        %1692 = vmatmul.mubr.f32.gmra.mrb[0].mxu0 %v1440
        %v1693 = vpop.f32.mrb[0].mxu0
        %v1694 = vadd.f32 0.0, %v1693
        %v1695 = vpop.f32.mrb[0].mxu0
        %1696 = vmatprep.mubr.f32.mxu0 0.0
        %1697 = vmatmul.mubr.f32.gmra.mrb[0].mxu0 %v1443
        %v1698 = vpop.f32.mrb[0].mxu0
        %v1699 = vadd.f32 0.0, %v1698
        %v1700 = vpop.f32.mrb[0].mxu0
        %1701 = vmatprep.mubr.f32.mxu0 0.0
        %1702 = vmatmul.mubr.f32.gmra.mrb[0].mxu0 %v1446
        %v1703 = vpop.f32.mrb[0].mxu0
        %v1704 = vadd.f32 0.0, %v1703
        %v1705 = vpop.f32.mrb[0].mxu0
        %1706 = vmatprep.mubr.f32.mxu0 0.0
        %1707 = vmatmul.mubr.f32.gmra.mrb[0].mxu0 %v1449
        %v1708 = vpop.f32.mrb[0].mxu0
        %v1709 = vadd.f32 0.0, %v1708
        %v1710 = vpop.f32.mrb[0].mxu0
        %1711 = vmatprep.mubr.f32.mxu0 0.0
        %1712 = vmatmul.mubr.f32.gmra.mrb[0].mxu0 %v1452
        %v1713 = vpop.f32.mrb[0].mxu0
        %v1714 = vadd.f32 0.0, %v1713
        %v1715 = vpop.f32.mrb[0].mxu0
        %1716 = vmatprep.mubr.f32.mxu0 0.0
        %1717 = vmatmul.mubr.f32.gmra.mrb[0].mxu0 %v1455
        %v1718 = vpop.f32.mrb[0].mxu0
        %v1719 = vadd.f32 0.0, %v1718
        %v1720 = vpop.f32.mrb[0].mxu0
        %1721 = vmatprep.mubr.f32.mxu0 0.0
        %1722 = vmatmul.mubr.f32.gmra.mrb[0].mxu0 %v1458
        %v1723 = vpop.f32.mrb[0].mxu0
        %v1724 = vadd.f32 0.0, %v1723
        %v1725 = vpop.f32.mrb[0].mxu0
        %1726 = vmatprep.mubr.f32.mxu0 0.0
        %1727 = vmatmul.mubr.f32.gmra.mrb[0].mxu0 %v1461
        %v1728 = vpop.f32.mrb[0].mxu0
        %v1729 = vadd.f32 0.0, %v1728
        %v1730 = vpop.f32.mrb[0].mxu0
        %1731 = vmatprep.mubr.f32.mxu0 0.0
        %1732 = vmatmul.mubr.f32.gmra.mrb[0].mxu0 %v1464
        %v1733 = vpop.f32.mrb[0].mxu0
        %v1734 = vadd.f32 0.0, %v1733
        %v1735 = vpop.f32.mrb[0].mxu0
        %1736 = vmatprep.mubr.f32.mxu0 0.0
        %1737 = vmatmul.mubr.f32.gmra.mrb[0].mxu0 %v1467
        %v1738 = vpop.f32.mrb[0].mxu0
        %v1739 = vadd.f32 0.0, %v1738
        %v1740 = vpop.f32.mrb[0].mxu0
        %1741 = vmatprep.mubr.f32.mxu0 0.0
        %1742 = vmatmul.mubr.f32.gmra.mrb[0].mxu0 %v1470
        %v1743 = vpop.f32.mrb[0].mxu0
        %v1744 = vadd.f32 0.0, %v1743
        %v1745 = vpop.f32.mrb[0].mxu0
        %1746 = vmatprep.mubr.f32.mxu0 0.0
        %1747 = vmatmul.mubr.f32.gmra.mrb[0].mxu0 %v1473
        %v1748 = vpop.f32.mrb[0].mxu0
        %v1749 = vadd.f32 0.0, %v1748
        %v1750 = vpop.f32.mrb[0].mxu0
        %1751 = vmatprep.mubr.f32.mxu0 0.0
        %1752 = vmatmul.mubr.f32.gmra.mrb[0].mxu0 %v1476
        %v1753 = vpop.f32.mrb[0].mxu0
        %v1754 = vadd.f32 0.0, %v1753
        %v1755 = vpop.f32.mrb[0].mxu0
        %1756 = vmatprep.mubr.f32.mxu0 0.0
        %1757 = vmatmul.mubr.f32.gmra.mrb[0].mxu0 %v1479
        %v1758 = vpop.f32.mrb[0].mxu0
        %v1759 = vadd.f32 0.0, %v1758
        %v1760 = vpop.f32.mrb[0].mxu0
        %1761 = vmatprep.mubr.f32.mxu0 0.0
        %1762 = vmatmul.mubr.f32.gmra.mrb[0].mxu0 %v1482
        %v1763 = vpop.f32.mrb[0].mxu0
        %v1764 = vadd.f32 0.0, %v1763
        %v1765 = vpop.f32.mrb[0].mxu0
        %1766 = vmatprep.mubr.f32.mxu0 0.0
        %1767 = vmatmul.mubr.f32.gmra.mrb[0].mxu0 %v1485
        %v1768 = vpop.f32.mrb[0].mxu0
        %v1769 = vadd.f32 0.0, %v1768
        %v1770 = vpop.f32.mrb[0].mxu0
        %1771 = vmatprep.mubr.f32.mxu0 0.0
        %1772 = vmatmul.mubr.f32.gmra.mrb[0].mxu0 %v1488
        %v1773 = vpop.f32.mrb[0].mxu0
        %v1774 = vadd.f32 0.0, %v1773
        %v1775 = vpop.f32.mrb[0].mxu0
        %1776 = vmatprep.mubr.f32.mxu0 0.0
        %1777 = vmatmul.mubr.f32.gmra.mrb[0].mxu0 %v1491
        %v1778 = vpop.f32.mrb[0].mxu0
        %v1779 = vadd.f32 0.0, %v1778
        %v1780 = vpop.f32.mrb[0].mxu0
        %1781 = vmatprep.mubr.f32.mxu0 0.0
        %1782 = vmatmul.mubr.f32.gmra.mrb[0].mxu0 %v1494
        %v1783 = vpop.f32.mrb[0].mxu0
        %v1784 = vadd.f32 0.0, %v1783
        %v1785 = vpop.f32.mrb[0].mxu0
        %1786 = vmatprep.mubr.f32.mxu0 0.0
        %1787 = vmatmul.mubr.f32.gmra.mrb[0].mxu0 %v1497
        %v1788 = vpop.f32.mrb[0].mxu0
        %v1789 = vadd.f32 0.0, %v1788
        %v1790 = vpop.f32.mrb[0].mxu0
        %1791 = vmatprep.mubr.f32.mxu0 0.0
        %1792 = vmatmul.mubr.f32.gmra.mrb[0].mxu0 %v1500
        %v1793 = vpop.f32.mrb[0].mxu0
        %v1794 = vadd.f32 0.0, %v1793
        %v1795 = vpop.f32.mrb[0].mxu0
        %1796 = vmatprep.mubr.f32.mxu0 0.0
        %1797 = vmatmul.mubr.f32.gmra.mrb[0].mxu0 %v1503
        %v1798 = vpop.f32.mrb[0].mxu0
        %v1799 = vadd.f32 0.0, %v1798
        %v1800 = vpop.f32.mrb[0].mxu0
        %1801 = vmatprep.mubr.f32.mxu0 0.0
        %1802 = vmatmul.mubr.f32.gmra.mrb[0].mxu0 %v1506
        %v1803 = vpop.f32.mrb[0].mxu0
        %v1804 = vadd.f32 0.0, %v1803
        %v1805 = vpop.f32.mrb[0].mxu0
        %1806 = vmatprep.mubr.f32.mxu0 0.0
        %1807 = vmatmul.mubr.f32.gmra.mrb[0].mxu0 %v1509
        %v1808 = vpop.f32.mrb[0].mxu0
        %v1809 = vadd.f32 0.0, %v1808
        %v1810 = vpop.f32.mrb[0].mxu0
        %1811 = vmatprep.mubr.f32.mxu0 0.0
        %1812 = vmatmul.mubr.f32.gmra.mrb[0].mxu0 %v1512
        %v1813 = vpop.f32.mrb[0].mxu0
        %v1814 = vadd.f32 0.0, %v1813
        %v1815 = vpop.f32.mrb[0].mxu0
        %1816 = vmatprep.mubr.f32.mxu0 0.0
        %1817 = vmatmul.mubr.f32.gmra.mrb[0].mxu0 %v1515
        %v1818 = vpop.f32.mrb[0].mxu0
        %v1819 = vadd.f32 0.0, %v1818
        %v1820 = vpop.f32.mrb[0].mxu0
        %1821 = vdwg.mxu0
        %v1823 = vsel %vm1372, %v1324, 0
        %v1826 = vsel %vm1372, %v1325, 0
        %v1829 = vsel %vm1372, %v1326, 0
        %v1832 = vsel %vm1372, %v1327, 0
        %v1835 = vsel %vm1372, %v1328, 0
        %v1838 = vsel %vm1372, %v1329, 0
        %v1841 = vsel %vm1372, %v1330, 0
        %v1844 = vsel %vm1372, %v1331, 0
        %v1847 = vsel %vm1372, %v1332, 0
        %v1850 = vsel %vm1372, %v1333, 0
        %v1853 = vsel %vm1372, %v1334, 0
        %v1856 = vsel %vm1372, %v1335, 0
        %v1859 = vsel %vm1372, %v1336, 0
        %v1862 = vsel %vm1372, %v1337, 0
        %v1865 = vsel %vm1372, %v1338, 0
        %v1868 = vsel %vm1372, %v1339, 0
        %v1871 = vsel %vm1372, %v1340, 0
        %v1874 = vsel %vm1372, %v1341, 0
        %v1877 = vsel %vm1372, %v1342, 0
        %v1880 = vsel %vm1372, %v1343, 0
        %v1883 = vsel %vm1372, %v1344, 0
        %v1886 = vsel %vm1372, %v1345, 0
        %v1889 = vsel %vm1372, %v1346, 0
        %v1892 = vsel %vm1372, %v1347, 0
        %v1895 = vsel %vm1372, %v1348, 0
        %v1898 = vsel %vm1372, %v1349, 0
        %v1901 = vsel %vm1372, %v1350, 0
        %v1904 = vsel %vm1372, %v1351, 0
        %v1907 = vsel %vm1372, %v1352, 0
        %v1910 = vsel %vm1372, %v1353, 0
        %v1913 = vsel %vm1372, %v1354, 0
        %v1916 = vsel %vm1372, %v1355, 0
        %v1919 = vsel %vm1372, %v1356, 0
        %v1922 = vsel %vm1372, %v1357, 0
        %v1925 = vsel %vm1372, %v1358, 0
        %v1928 = vsel %vm1372, %v1359, 0
        %v1931 = vsel %vm1372, %v1360, 0
        %v1934 = vsel %vm1372, %v1361, 0
        %v1937 = vsel %vm1372, %v1362, 0
        %v1940 = vsel %vm1372, %v1363, 0
        %v1943 = vsel %vm1372, %v1364, 0
        %v1946 = vsel %vm1372, %v1365, 0
        %v1949 = vsel %vm1372, %v1366, 0
        %v1952 = vsel %vm1372, %v1367, 0
        %v1955 = vsel %vm1372, %v1368, 0
        %v1958 = vsel %vm1372, %v1369, 0
        %v1961 = vsel %vm1372, %v1370, 0
        %v1964 = vsel %vm1372, %v1371, 0
        %1966 = vmatprep.subr.mxu0 0.0
        %1967 = vmatpush1.msra.mxu0 %v694
        %1968 = vmatprep.subr.mxu0 0.0
        %1969 = vmatpush1.msra.mxu0 %v695
        %1970 = vmatprep.subr.mxu0 0.0
        %1971 = vmatpush1.msra.mxu0 %v696
        %1972 = vmatprep.subr.mxu0 0.0
        %1973 = vmatpush1.msra.mxu0 %v697
        %1974 = vmatprep.subr.mxu0 0.0
        %1975 = vmatpush1.msra.mxu0 0.0
        %1976 = vmatprep.subr.mxu0 0.0
        %1977 = vmatpush1.msra.mxu0 0.0
        %1978 = vmatprep.subr.mxu0 0.0
        %1979 = vmatpush1.msra.mxu0 0.0
        %1980 = vmatprep.subr.mxu0 0.0
        %1981 = vmatpush1.msra.mxu0 0.0
        %1982 = vmatprep.subr.mxu0 0.0
        %1983 = vmatpush1.msra.mxu0 0.0
        %1984 = vmatprep.subr.mxu0 0.0
        %1985 = vmatpush1.msra.mxu0 0.0
        %1986 = vmatprep.subr.mxu0 0.0
        %1987 = vmatpush1.msra.mxu0 0.0
        %1988 = vmatprep.subr.mxu0 0.0
        %1989 = vmatpush1.msra.mxu0 0.0
        %1990 = vmatprep.subr.mxu0 0.0
        %1991 = vmatpush1.msra.mxu0 0.0
        %1992 = vmatprep.subr.mxu0 0.0
        %1993 = vmatpush1.msra.mxu0 0.0
        %1994 = vmatprep.subr.mxu0 0.0
        %1995 = vmatpush1.msra.mxu0 0.0
        %1996 = vmatprep.subr.mxu0 0.0
        %1997 = vmatpush1.msra.mxu0 0.0
        %1998 = vmatprep.subr.mxu0 0.0
        %1999 = vmatpush1.msra.mxu0 0.0
        %2000 = vmatprep.subr.mxu0 0.0
        %2001 = vmatpush1.msra.mxu0 0.0
        %2002 = vmatprep.subr.mxu0 0.0
        %2003 = vmatpush1.msra.mxu0 0.0
        %2004 = vmatprep.subr.mxu0 0.0
        %2005 = vmatpush1.msra.mxu0 0.0
        %2006 = vmatprep.subr.mxu0 0.0
        %2007 = vmatpush1.msra.mxu0 0.0
        %2008 = vmatprep.subr.mxu0 0.0
        %2009 = vmatpush1.msra.mxu0 0.0
        %2010 = vmatprep.subr.mxu0 0.0
        %2011 = vmatpush1.msra.mxu0 0.0
        %2012 = vmatprep.subr.mxu0 0.0
        %2013 = vmatpush1.msra.mxu0 0.0
        %2014 = vmatprep.subr.mxu0 0.0
        %2015 = vmatpush1.msra.mxu0 0.0
        %2016 = vmatprep.subr.mxu0 0.0
        %2017 = vmatpush1.msra.mxu0 0.0
        %2018 = vmatprep.subr.mxu0 0.0
        %2019 = vmatpush1.msra.mxu0 0.0
        %2020 = vmatprep.subr.mxu0 0.0
        %2021 = vmatpush1.msra.mxu0 0.0
        %2022 = vmatprep.subr.mxu0 0.0
        %2023 = vmatpush1.msra.mxu0 0.0
        %2024 = vmatprep.subr.mxu0 0.0
        %2025 = vmatpush1.msra.mxu0 0.0
        %2026 = vmatprep.subr.mxu0 0.0
        %2027 = vmatpush1.msra.mxu0 0.0
        %2028 = vmatprep.subr.mxu0 0.0
        %2029 = vmatpush1.msra.mxu0 0.0
        %2030 = vmatprep.mubr.f32.mxu0 0.0
        %2031 = vmatmul.mubr.f32.gmra.mrb[0].mxu0 %v1823
        %v2032 = vpop.f32.mrb[0].mxu0
        %v2033 = vadd.f32 0.0, %v2032
        %v2034 = vpop.f32.mrb[0].mxu0
        %2035 = vmatprep.mubr.f32.mxu0 0.0
        %2036 = vmatmul.mubr.f32.gmra.mrb[0].mxu0 %v1826
        %v2037 = vpop.f32.mrb[0].mxu0
        %v2038 = vadd.f32 0.0, %v2037
        %v2039 = vpop.f32.mrb[0].mxu0
        %2040 = vmatprep.mubr.f32.mxu0 0.0
        %2041 = vmatmul.mubr.f32.gmra.mrb[0].mxu0 %v1829
        %v2042 = vpop.f32.mrb[0].mxu0
        %v2043 = vadd.f32 0.0, %v2042
        %v2044 = vpop.f32.mrb[0].mxu0
        %2045 = vmatprep.mubr.f32.mxu0 0.0
        %2046 = vmatmul.mubr.f32.gmra.mrb[0].mxu0 %v1832
        %v2047 = vpop.f32.mrb[0].mxu0
        %v2048 = vadd.f32 0.0, %v2047
        %v2049 = vpop.f32.mrb[0].mxu0
        %2050 = vmatprep.mubr.f32.mxu0 0.0
        %2051 = vmatmul.mubr.f32.gmra.mrb[0].mxu0 %v1835
        %v2052 = vpop.f32.mrb[0].mxu0
        %v2053 = vadd.f32 0.0, %v2052
        %v2054 = vpop.f32.mrb[0].mxu0
        %2055 = vmatprep.mubr.f32.mxu0 0.0
        %2056 = vmatmul.mubr.f32.gmra.mrb[0].mxu0 %v1838
        %v2057 = vpop.f32.mrb[0].mxu0
        %v2058 = vadd.f32 0.0, %v2057
        %v2059 = vpop.f32.mrb[0].mxu0
        %2060 = vmatprep.mubr.f32.mxu0 0.0
        %2061 = vmatmul.mubr.f32.gmra.mrb[0].mxu0 %v1841
        %v2062 = vpop.f32.mrb[0].mxu0
        %v2063 = vadd.f32 0.0, %v2062
        %v2064 = vpop.f32.mrb[0].mxu0
        %2065 = vmatprep.mubr.f32.mxu0 0.0
        %2066 = vmatmul.mubr.f32.gmra.mrb[0].mxu0 %v1844
        %v2067 = vpop.f32.mrb[0].mxu0
        %v2068 = vadd.f32 0.0, %v2067
        %v2069 = vpop.f32.mrb[0].mxu0
        %2070 = vmatprep.mubr.f32.mxu0 0.0
        %2071 = vmatmul.mubr.f32.gmra.mrb[0].mxu0 %v1847
        %v2072 = vpop.f32.mrb[0].mxu0
        %v2073 = vadd.f32 0.0, %v2072
        %v2074 = vpop.f32.mrb[0].mxu0
        %2075 = vmatprep.mubr.f32.mxu0 0.0
        %2076 = vmatmul.mubr.f32.gmra.mrb[0].mxu0 %v1850
        %v2077 = vpop.f32.mrb[0].mxu0
        %v2078 = vadd.f32 0.0, %v2077
        %v2079 = vpop.f32.mrb[0].mxu0
        %2080 = vmatprep.mubr.f32.mxu0 0.0
        %2081 = vmatmul.mubr.f32.gmra.mrb[0].mxu0 %v1853
        %v2082 = vpop.f32.mrb[0].mxu0
        %v2083 = vadd.f32 0.0, %v2082
        %v2084 = vpop.f32.mrb[0].mxu0
        %2085 = vmatprep.mubr.f32.mxu0 0.0
        %2086 = vmatmul.mubr.f32.gmra.mrb[0].mxu0 %v1856
        %v2087 = vpop.f32.mrb[0].mxu0
        %v2088 = vadd.f32 0.0, %v2087
        %v2089 = vpop.f32.mrb[0].mxu0
        %2090 = vmatprep.mubr.f32.mxu0 0.0
        %2091 = vmatmul.mubr.f32.gmra.mrb[0].mxu0 %v1859
        %v2092 = vpop.f32.mrb[0].mxu0
        %v2093 = vadd.f32 0.0, %v2092
        %v2094 = vpop.f32.mrb[0].mxu0
        %2095 = vmatprep.mubr.f32.mxu0 0.0
        %2096 = vmatmul.mubr.f32.gmra.mrb[0].mxu0 %v1862
        %v2097 = vpop.f32.mrb[0].mxu0
        %v2098 = vadd.f32 0.0, %v2097
        %v2099 = vpop.f32.mrb[0].mxu0
        %2100 = vmatprep.mubr.f32.mxu0 0.0
        %2101 = vmatmul.mubr.f32.gmra.mrb[0].mxu0 %v1865
        %v2102 = vpop.f32.mrb[0].mxu0
        %v2103 = vadd.f32 0.0, %v2102
        %v2104 = vpop.f32.mrb[0].mxu0
        %2105 = vmatprep.mubr.f32.mxu0 0.0
        %2106 = vmatmul.mubr.f32.gmra.mrb[0].mxu0 %v1868
        %v2107 = vpop.f32.mrb[0].mxu0
        %v2108 = vadd.f32 0.0, %v2107
        %v2109 = vpop.f32.mrb[0].mxu0
        %2110 = vmatprep.mubr.f32.mxu0 0.0
        %2111 = vmatmul.mubr.f32.gmra.mrb[0].mxu0 %v1871
        %v2112 = vpop.f32.mrb[0].mxu0
        %v2113 = vadd.f32 0.0, %v2112
        %v2114 = vpop.f32.mrb[0].mxu0
        %2115 = vmatprep.mubr.f32.mxu0 0.0
        %2116 = vmatmul.mubr.f32.gmra.mrb[0].mxu0 %v1874
        %v2117 = vpop.f32.mrb[0].mxu0
        %v2118 = vadd.f32 0.0, %v2117
        %v2119 = vpop.f32.mrb[0].mxu0
        %2120 = vmatprep.mubr.f32.mxu0 0.0
        %2121 = vmatmul.mubr.f32.gmra.mrb[0].mxu0 %v1877
        %v2122 = vpop.f32.mrb[0].mxu0
        %v2123 = vadd.f32 0.0, %v2122
        %v2124 = vpop.f32.mrb[0].mxu0
        %2125 = vmatprep.mubr.f32.mxu0 0.0
        %2126 = vmatmul.mubr.f32.gmra.mrb[0].mxu0 %v1880
        %v2127 = vpop.f32.mrb[0].mxu0
        %v2128 = vadd.f32 0.0, %v2127
        %v2129 = vpop.f32.mrb[0].mxu0
        %2130 = vmatprep.mubr.f32.mxu0 0.0
        %2131 = vmatmul.mubr.f32.gmra.mrb[0].mxu0 %v1883
        %v2132 = vpop.f32.mrb[0].mxu0
        %v2133 = vadd.f32 0.0, %v2132
        %v2134 = vpop.f32.mrb[0].mxu0
        %2135 = vmatprep.mubr.f32.mxu0 0.0
        %2136 = vmatmul.mubr.f32.gmra.mrb[0].mxu0 %v1886
        %v2137 = vpop.f32.mrb[0].mxu0
        %v2138 = vadd.f32 0.0, %v2137
        %v2139 = vpop.f32.mrb[0].mxu0
        %2140 = vmatprep.mubr.f32.mxu0 0.0
        %2141 = vmatmul.mubr.f32.gmra.mrb[0].mxu0 %v1889
        %v2142 = vpop.f32.mrb[0].mxu0
        %v2143 = vadd.f32 0.0, %v2142
        %v2144 = vpop.f32.mrb[0].mxu0
        %2145 = vmatprep.mubr.f32.mxu0 0.0
        %2146 = vmatmul.mubr.f32.gmra.mrb[0].mxu0 %v1892
        %v2147 = vpop.f32.mrb[0].mxu0
        %v2148 = vadd.f32 0.0, %v2147
        %v2149 = vpop.f32.mrb[0].mxu0
        %2150 = vmatprep.mubr.f32.mxu0 0.0
        %2151 = vmatmul.mubr.f32.gmra.mrb[0].mxu0 %v1895
        %v2152 = vpop.f32.mrb[0].mxu0
        %v2153 = vadd.f32 0.0, %v2152
        %v2154 = vpop.f32.mrb[0].mxu0
        %2155 = vmatprep.mubr.f32.mxu0 0.0
        %2156 = vmatmul.mubr.f32.gmra.mrb[0].mxu0 %v1898
        %v2157 = vpop.f32.mrb[0].mxu0
        %v2158 = vadd.f32 0.0, %v2157
        %v2159 = vpop.f32.mrb[0].mxu0
        %2160 = vmatprep.mubr.f32.mxu0 0.0
        %2161 = vmatmul.mubr.f32.gmra.mrb[0].mxu0 %v1901
        %v2162 = vpop.f32.mrb[0].mxu0
        %v2163 = vadd.f32 0.0, %v2162
        %v2164 = vpop.f32.mrb[0].mxu0
        %2165 = vmatprep.mubr.f32.mxu0 0.0
        %2166 = vmatmul.mubr.f32.gmra.mrb[0].mxu0 %v1904
        %v2167 = vpop.f32.mrb[0].mxu0
        %v2168 = vadd.f32 0.0, %v2167
        %v2169 = vpop.f32.mrb[0].mxu0
        %2170 = vmatprep.mubr.f32.mxu0 0.0
        %2171 = vmatmul.mubr.f32.gmra.mrb[0].mxu0 %v1907
        %v2172 = vpop.f32.mrb[0].mxu0
        %v2173 = vadd.f32 0.0, %v2172
        %v2174 = vpop.f32.mrb[0].mxu0
        %2175 = vmatprep.mubr.f32.mxu0 0.0
        %2176 = vmatmul.mubr.f32.gmra.mrb[0].mxu0 %v1910
        %v2177 = vpop.f32.mrb[0].mxu0
        %v2178 = vadd.f32 0.0, %v2177
        %v2179 = vpop.f32.mrb[0].mxu0
        %2180 = vmatprep.mubr.f32.mxu0 0.0
        %2181 = vmatmul.mubr.f32.gmra.mrb[0].mxu0 %v1913
        %v2182 = vpop.f32.mrb[0].mxu0
        %v2183 = vadd.f32 0.0, %v2182
        %v2184 = vpop.f32.mrb[0].mxu0
        %2185 = vmatprep.mubr.f32.mxu0 0.0
        %2186 = vmatmul.mubr.f32.gmra.mrb[0].mxu0 %v1916
        %v2187 = vpop.f32.mrb[0].mxu0
        %v2188 = vadd.f32 0.0, %v2187
        %v2189 = vpop.f32.mrb[0].mxu0
        %2190 = vmatprep.mubr.f32.mxu0 0.0
        %2191 = vmatmul.mubr.f32.gmra.mrb[0].mxu0 %v1919
        %v2192 = vpop.f32.mrb[0].mxu0
        %v2193 = vadd.f32 0.0, %v2192
        %v2194 = vpop.f32.mrb[0].mxu0
        %2195 = vmatprep.mubr.f32.mxu0 0.0
        %2196 = vmatmul.mubr.f32.gmra.mrb[0].mxu0 %v1922
        %v2197 = vpop.f32.mrb[0].mxu0
        %v2198 = vadd.f32 0.0, %v2197
        %v2199 = vpop.f32.mrb[0].mxu0
        %2200 = vmatprep.mubr.f32.mxu0 0.0
        %2201 = vmatmul.mubr.f32.gmra.mrb[0].mxu0 %v1925
        %v2202 = vpop.f32.mrb[0].mxu0
        %v2203 = vadd.f32 0.0, %v2202
        %v2204 = vpop.f32.mrb[0].mxu0
        %2205 = vmatprep.mubr.f32.mxu0 0.0
        %2206 = vmatmul.mubr.f32.gmra.mrb[0].mxu0 %v1928
        %v2207 = vpop.f32.mrb[0].mxu0
        %v2208 = vadd.f32 0.0, %v2207
        %v2209 = vpop.f32.mrb[0].mxu0
        %2210 = vmatprep.mubr.f32.mxu0 0.0
        %2211 = vmatmul.mubr.f32.gmra.mrb[0].mxu0 %v1931
        %v2212 = vpop.f32.mrb[0].mxu0
        %v2213 = vadd.f32 0.0, %v2212
        %v2214 = vpop.f32.mrb[0].mxu0
        %2215 = vmatprep.mubr.f32.mxu0 0.0
        %2216 = vmatmul.mubr.f32.gmra.mrb[0].mxu0 %v1934
        %v2217 = vpop.f32.mrb[0].mxu0
        %v2218 = vadd.f32 0.0, %v2217
        %v2219 = vpop.f32.mrb[0].mxu0
        %2220 = vmatprep.mubr.f32.mxu0 0.0
        %2221 = vmatmul.mubr.f32.gmra.mrb[0].mxu0 %v1937
        %v2222 = vpop.f32.mrb[0].mxu0
        %v2223 = vadd.f32 0.0, %v2222
        %v2224 = vpop.f32.mrb[0].mxu0
        %2225 = vmatprep.mubr.f32.mxu0 0.0
        %2226 = vmatmul.mubr.f32.gmra.mrb[0].mxu0 %v1940
        %v2227 = vpop.f32.mrb[0].mxu0
        %v2228 = vadd.f32 0.0, %v2227
        %v2229 = vpop.f32.mrb[0].mxu0
        %2230 = vmatprep.mubr.f32.mxu0 0.0
        %2231 = vmatmul.mubr.f32.gmra.mrb[0].mxu0 %v1943
        %v2232 = vpop.f32.mrb[0].mxu0
        %v2233 = vadd.f32 0.0, %v2232
        %v2234 = vpop.f32.mrb[0].mxu0
        %2235 = vmatprep.mubr.f32.mxu0 0.0
        %2236 = vmatmul.mubr.f32.gmra.mrb[0].mxu0 %v1946
        %v2237 = vpop.f32.mrb[0].mxu0
        %v2238 = vadd.f32 0.0, %v2237
        %v2239 = vpop.f32.mrb[0].mxu0
        %2240 = vmatprep.mubr.f32.mxu0 0.0
        %2241 = vmatmul.mubr.f32.gmra.mrb[0].mxu0 %v1949
        %v2242 = vpop.f32.mrb[0].mxu0
        %v2243 = vadd.f32 0.0, %v2242
        %v2244 = vpop.f32.mrb[0].mxu0
        %2245 = vmatprep.mubr.f32.mxu0 0.0
        %2246 = vmatmul.mubr.f32.gmra.mrb[0].mxu0 %v1952
        %v2247 = vpop.f32.mrb[0].mxu0
        %v2248 = vadd.f32 0.0, %v2247
        %v2249 = vpop.f32.mrb[0].mxu0
        %2250 = vmatprep.mubr.f32.mxu0 0.0
        %2251 = vmatmul.mubr.f32.gmra.mrb[0].mxu0 %v1955
        %v2252 = vpop.f32.mrb[0].mxu0
        %v2253 = vadd.f32 0.0, %v2252
        %v2254 = vpop.f32.mrb[0].mxu0
        %2255 = vmatprep.mubr.f32.mxu0 0.0
        %2256 = vmatmul.mubr.f32.gmra.mrb[0].mxu0 %v1958
        %v2257 = vpop.f32.mrb[0].mxu0
        %v2258 = vadd.f32 0.0, %v2257
        %v2259 = vpop.f32.mrb[0].mxu0
        %2260 = vmatprep.mubr.f32.mxu0 0.0
        %2261 = vmatmul.mubr.f32.gmra.mrb[0].mxu0 %v1961
        %v2262 = vpop.f32.mrb[0].mxu0
        %v2263 = vadd.f32 0.0, %v2262
        %v2264 = vpop.f32.mrb[0].mxu0
        %2265 = vmatprep.mubr.f32.mxu0 0.0
        %2266 = vmatmul.mubr.f32.gmra.mrb[0].mxu0 %v1964
        %v2267 = vpop.f32.mrb[0].mxu0
        %v2268 = vadd.f32 0.0, %v2267
        %v2269 = vpop.f32.mrb[0].mxu0
        %2270 = vdwg.mxu0
        %v2271 = vsub.f32 %v2033, %v1584
        %v2272 = vsub.f32 %v2038, %v1589
        %v2273 = vsub.f32 %v2043, %v1594
        %v2274 = vsub.f32 %v2048, %v1599
        %v2275 = vsub.f32 %v2053, %v1604
        %v2276 = vsub.f32 %v2058, %v1609
        %v2277 = vsub.f32 %v2063, %v1614
        %v2278 = vsub.f32 %v2068, %v1619
        %v2279 = vsub.f32 %v2073, %v1624
        %v2280 = vsub.f32 %v2078, %v1629
        %v2281 = vsub.f32 %v2083, %v1634
        %v2282 = vsub.f32 %v2088, %v1639
        %v2283 = vsub.f32 %v2093, %v1644
        %v2284 = vsub.f32 %v2098, %v1649
        %v2285 = vsub.f32 %v2103, %v1654
        %v2286 = vsub.f32 %v2108, %v1659
        %v2287 = vsub.f32 %v2113, %v1664
        %v2288 = vsub.f32 %v2118, %v1669
        %v2289 = vsub.f32 %v2123, %v1674
        %v2290 = vsub.f32 %v2128, %v1679
        %v2291 = vsub.f32 %v2133, %v1684
        %v2292 = vsub.f32 %v2138, %v1689
        %v2293 = vsub.f32 %v2143, %v1694
        %v2294 = vsub.f32 %v2148, %v1699
        %v2295 = vsub.f32 %v2153, %v1704
        %v2296 = vsub.f32 %v2158, %v1709
        %v2297 = vsub.f32 %v2163, %v1714
        %v2298 = vsub.f32 %v2168, %v1719
        %v2299 = vsub.f32 %v2173, %v1724
        %v2300 = vsub.f32 %v2178, %v1729
        %v2301 = vsub.f32 %v2183, %v1734
        %v2302 = vsub.f32 %v2188, %v1739
        %v2303 = vsub.f32 %v2193, %v1744
        %v2304 = vsub.f32 %v2198, %v1749
        %v2305 = vsub.f32 %v2203, %v1754
        %v2306 = vsub.f32 %v2208, %v1759
        %v2307 = vsub.f32 %v2213, %v1764
        %v2308 = vsub.f32 %v2218, %v1769
        %v2309 = vsub.f32 %v2223, %v1774
        %v2310 = vsub.f32 %v2228, %v1779
        %v2311 = vsub.f32 %v2233, %v1784
        %v2312 = vsub.f32 %v2238, %v1789
        %v2313 = vsub.f32 %v2243, %v1794
        %v2314 = vsub.f32 %v2248, %v1799
        %v2315 = vsub.f32 %v2253, %v1804
        %v2316 = vsub.f32 %v2258, %v1809
        %v2317 = vsub.f32 %v2263, %v1814
        %v2318 = vsub.f32 %v2268, %v1819
        %v2319 = vmul.f32 %v2271, %v2271
        %v2320 = vmul.f32 %v2272, %v2272
        %v2321 = vmul.f32 %v2273, %v2273
        %v2322 = vmul.f32 %v2274, %v2274
        %v2323 = vmul.f32 %v2275, %v2275
        %v2324 = vmul.f32 %v2276, %v2276
        %v2325 = vmul.f32 %v2277, %v2277
        %v2326 = vmul.f32 %v2278, %v2278
        %v2327 = vmul.f32 %v2279, %v2279
        %v2328 = vmul.f32 %v2280, %v2280
        %v2329 = vmul.f32 %v2281, %v2281
        %v2330 = vmul.f32 %v2282, %v2282
        %v2331 = vmul.f32 %v2283, %v2283
        %v2332 = vmul.f32 %v2284, %v2284
        %v2333 = vmul.f32 %v2285, %v2285
        %v2334 = vmul.f32 %v2286, %v2286
        %v2335 = vmul.f32 %v2287, %v2287
        %v2336 = vmul.f32 %v2288, %v2288
        %v2337 = vmul.f32 %v2289, %v2289
        %v2338 = vmul.f32 %v2290, %v2290
        %v2339 = vmul.f32 %v2291, %v2291
        %v2340 = vmul.f32 %v2292, %v2292
        %v2341 = vmul.f32 %v2293, %v2293
        %v2342 = vmul.f32 %v2294, %v2294
        %v2343 = vmul.f32 %v2295, %v2295
        %v2344 = vmul.f32 %v2296, %v2296
        %v2345 = vmul.f32 %v2297, %v2297
        %v2346 = vmul.f32 %v2298, %v2298
        %v2347 = vmul.f32 %v2299, %v2299
        %v2348 = vmul.f32 %v2300, %v2300
        %v2349 = vmul.f32 %v2301, %v2301
        %v2350 = vmul.f32 %v2302, %v2302
        %v2351 = vmul.f32 %v2303, %v2303
        %v2352 = vmul.f32 %v2304, %v2304
        %v2353 = vmul.f32 %v2305, %v2305
        %v2354 = vmul.f32 %v2306, %v2306
        %v2355 = vmul.f32 %v2307, %v2307
        %v2356 = vmul.f32 %v2308, %v2308
        %v2357 = vmul.f32 %v2309, %v2309
        %v2358 = vmul.f32 %v2310, %v2310
        %v2359 = vmul.f32 %v2311, %v2311
        %v2360 = vmul.f32 %v2312, %v2312
        %v2361 = vmul.f32 %v2313, %v2313
        %v2362 = vmul.f32 %v2314, %v2314
        %v2363 = vmul.f32 %v2315, %v2315
        %v2364 = vmul.f32 %v2316, %v2316
        %v2365 = vmul.f32 %v2317, %v2317
        %v2366 = vmul.f32 %v2318, %v2318
        %2415 = vrot.lane.b32.xlu0 %v2319, 96
        %v2416 = vpop.permute.xlu0 %2415
        %2417 = vrot.lane.b32.xlu0 %v2320, 96
        %v2418 = vpop.permute.xlu0 %2417
        %2419 = vrot.lane.b32.xlu0 %v2321, 96
        %v2420 = vpop.permute.xlu0 %2419
        %2421 = vrot.lane.b32.xlu0 %v2322, 96
        %v2422 = vpop.permute.xlu0 %2421
        %2423 = vrot.lane.b32.xlu0 %v2323, 96
        %v2424 = vpop.permute.xlu0 %2423
        %2425 = vrot.lane.b32.xlu0 %v2324, 96
        %v2426 = vpop.permute.xlu0 %2425
        %2427 = vrot.lane.b32.xlu0 %v2325, 96
        %v2428 = vpop.permute.xlu0 %2427
        %2429 = vrot.lane.b32.xlu0 %v2326, 96
        %v2430 = vpop.permute.xlu0 %2429
        %2431 = vrot.lane.b32.xlu0 %v2327, 96
        %v2432 = vpop.permute.xlu0 %2431
        %2433 = vrot.lane.b32.xlu0 %v2328, 96
        %v2434 = vpop.permute.xlu0 %2433
        %2435 = vrot.lane.b32.xlu0 %v2329, 96
        %v2436 = vpop.permute.xlu0 %2435
        %2437 = vrot.lane.b32.xlu0 %v2330, 96
        %v2438 = vpop.permute.xlu0 %2437
        %2439 = vrot.lane.b32.xlu0 %v2331, 96
        %v2440 = vpop.permute.xlu0 %2439
        %2441 = vrot.lane.b32.xlu0 %v2332, 96
        %v2442 = vpop.permute.xlu0 %2441
        %2443 = vrot.lane.b32.xlu0 %v2333, 96
        %v2444 = vpop.permute.xlu0 %2443
        %2445 = vrot.lane.b32.xlu0 %v2334, 96
        %v2446 = vpop.permute.xlu0 %2445
        %2447 = vrot.lane.b32.xlu0 %v2335, 96
        %v2448 = vpop.permute.xlu0 %2447
        %2449 = vrot.lane.b32.xlu0 %v2336, 96
        %v2450 = vpop.permute.xlu0 %2449
        %2451 = vrot.lane.b32.xlu0 %v2337, 96
        %v2452 = vpop.permute.xlu0 %2451
        %2453 = vrot.lane.b32.xlu0 %v2338, 96
        %v2454 = vpop.permute.xlu0 %2453
        %2455 = vrot.lane.b32.xlu0 %v2339, 96
        %v2456 = vpop.permute.xlu0 %2455
        %2457 = vrot.lane.b32.xlu0 %v2340, 96
        %v2458 = vpop.permute.xlu0 %2457
        %2459 = vrot.lane.b32.xlu0 %v2341, 96
        %v2460 = vpop.permute.xlu0 %2459
        %2461 = vrot.lane.b32.xlu0 %v2342, 96
        %v2462 = vpop.permute.xlu0 %2461
        %2463 = vrot.lane.b32.xlu0 %v2343, 96
        %v2464 = vpop.permute.xlu0 %2463
        %2465 = vrot.lane.b32.xlu0 %v2344, 96
        %v2466 = vpop.permute.xlu0 %2465
        %2467 = vrot.lane.b32.xlu0 %v2345, 96
        %v2468 = vpop.permute.xlu0 %2467
        %2469 = vrot.lane.b32.xlu0 %v2346, 96
        %v2470 = vpop.permute.xlu0 %2469
        %2471 = vrot.lane.b32.xlu0 %v2347, 96
        %v2472 = vpop.permute.xlu0 %2471
        %2473 = vrot.lane.b32.xlu0 %v2348, 96
        %v2474 = vpop.permute.xlu0 %2473
        %2475 = vrot.lane.b32.xlu0 %v2349, 96
        %v2476 = vpop.permute.xlu0 %2475
        %2477 = vrot.lane.b32.xlu0 %v2350, 96
        %v2478 = vpop.permute.xlu0 %2477
        %2479 = vrot.lane.b32.xlu0 %v2351, 96
        %v2480 = vpop.permute.xlu0 %2479
        %2481 = vrot.lane.b32.xlu0 %v2352, 96
        %v2482 = vpop.permute.xlu0 %2481
        %2483 = vrot.lane.b32.xlu0 %v2353, 96
        %v2484 = vpop.permute.xlu0 %2483
        %2485 = vrot.lane.b32.xlu0 %v2354, 96
        %v2486 = vpop.permute.xlu0 %2485
        %2487 = vrot.lane.b32.xlu0 %v2355, 96
        %v2488 = vpop.permute.xlu0 %2487
        %2489 = vrot.lane.b32.xlu0 %v2356, 96
        %v2490 = vpop.permute.xlu0 %2489
        %2491 = vrot.lane.b32.xlu0 %v2357, 96
        %v2492 = vpop.permute.xlu0 %2491
        %2493 = vrot.lane.b32.xlu0 %v2358, 96
        %v2494 = vpop.permute.xlu0 %2493
        %2495 = vrot.lane.b32.xlu0 %v2359, 96
        %v2496 = vpop.permute.xlu0 %2495
        %2497 = vrot.lane.b32.xlu0 %v2360, 96
        %v2498 = vpop.permute.xlu0 %2497
        %2499 = vrot.lane.b32.xlu0 %v2361, 96
        %v2500 = vpop.permute.xlu0 %2499
        %2501 = vrot.lane.b32.xlu0 %v2362, 96
        %v2502 = vpop.permute.xlu0 %2501
        %2503 = vrot.lane.b32.xlu0 %v2363, 96
        %v2504 = vpop.permute.xlu0 %2503
        %2505 = vrot.lane.b32.xlu0 %v2364, 96
        %v2506 = vpop.permute.xlu0 %2505
        %2507 = vrot.lane.b32.xlu0 %v2365, 96
        %v2508 = vpop.permute.xlu0 %2507
        %2509 = vrot.lane.b32.xlu0 %v2366, 96
        %v2510 = vpop.permute.xlu0 %2509
        %vm2559 = vcmask 23552
        %v2560 = vsel %vm2559, %v2416, 0.0
        %2561 = vadd.xlane.f32.xlu0 %v2560
        %v2562 = vpop.xlane.xlu0 %2561
        %v2563 = vsel %vm2559, %v2418, 0.0
        %2564 = vadd.xlane.f32.xlu0 %v2563
        %v2565 = vpop.xlane.xlu0 %2564
        %v2566 = vsel %vm2559, %v2420, 0.0
        %2567 = vadd.xlane.f32.xlu0 %v2566
        %v2568 = vpop.xlane.xlu0 %2567
        %v2569 = vsel %vm2559, %v2422, 0.0
        %2570 = vadd.xlane.f32.xlu0 %v2569
        %v2571 = vpop.xlane.xlu0 %2570
        %v2572 = vsel %vm2559, %v2424, 0.0
        %2573 = vadd.xlane.f32.xlu0 %v2572
        %v2574 = vpop.xlane.xlu0 %2573
        %v2575 = vsel %vm2559, %v2426, 0.0
        %2576 = vadd.xlane.f32.xlu0 %v2575
        %v2577 = vpop.xlane.xlu0 %2576
        %v2578 = vsel %vm2559, %v2428, 0.0
        %2579 = vadd.xlane.f32.xlu0 %v2578
        %v2580 = vpop.xlane.xlu0 %2579
        %v2581 = vsel %vm2559, %v2430, 0.0
        %2582 = vadd.xlane.f32.xlu0 %v2581
        %v2583 = vpop.xlane.xlu0 %2582
        %v2584 = vsel %vm2559, %v2432, 0.0
        %2585 = vadd.xlane.f32.xlu0 %v2584
        %v2586 = vpop.xlane.xlu0 %2585
        %v2587 = vsel %vm2559, %v2434, 0.0
        %2588 = vadd.xlane.f32.xlu0 %v2587
        %v2589 = vpop.xlane.xlu0 %2588
        %v2590 = vsel %vm2559, %v2436, 0.0
        %2591 = vadd.xlane.f32.xlu0 %v2590
        %v2592 = vpop.xlane.xlu0 %2591
        %v2593 = vsel %vm2559, %v2438, 0.0
        %2594 = vadd.xlane.f32.xlu0 %v2593
        %v2595 = vpop.xlane.xlu0 %2594
        %v2596 = vsel %vm2559, %v2440, 0.0
        %2597 = vadd.xlane.f32.xlu0 %v2596
        %v2598 = vpop.xlane.xlu0 %2597
        %v2599 = vsel %vm2559, %v2442, 0.0
        %2600 = vadd.xlane.f32.xlu0 %v2599
        %v2601 = vpop.xlane.xlu0 %2600
        %v2602 = vsel %vm2559, %v2444, 0.0
        %2603 = vadd.xlane.f32.xlu0 %v2602
        %v2604 = vpop.xlane.xlu0 %2603
        %v2605 = vsel %vm2559, %v2446, 0.0
        %2606 = vadd.xlane.f32.xlu0 %v2605
        %v2607 = vpop.xlane.xlu0 %2606
        %v2608 = vsel %vm2559, %v2448, 0.0
        %2609 = vadd.xlane.f32.xlu0 %v2608
        %v2610 = vpop.xlane.xlu0 %2609
        %v2611 = vsel %vm2559, %v2450, 0.0
        %2612 = vadd.xlane.f32.xlu0 %v2611
        %v2613 = vpop.xlane.xlu0 %2612
        %v2614 = vsel %vm2559, %v2452, 0.0
        %2615 = vadd.xlane.f32.xlu0 %v2614
        %v2616 = vpop.xlane.xlu0 %2615
        %v2617 = vsel %vm2559, %v2454, 0.0
        %2618 = vadd.xlane.f32.xlu0 %v2617
        %v2619 = vpop.xlane.xlu0 %2618
        %v2620 = vsel %vm2559, %v2456, 0.0
        %2621 = vadd.xlane.f32.xlu0 %v2620
        %v2622 = vpop.xlane.xlu0 %2621
        %v2623 = vsel %vm2559, %v2458, 0.0
        %2624 = vadd.xlane.f32.xlu0 %v2623
        %v2625 = vpop.xlane.xlu0 %2624
        %v2626 = vsel %vm2559, %v2460, 0.0
        %2627 = vadd.xlane.f32.xlu0 %v2626
        %v2628 = vpop.xlane.xlu0 %2627
        %v2629 = vsel %vm2559, %v2462, 0.0
        %2630 = vadd.xlane.f32.xlu0 %v2629
        %v2631 = vpop.xlane.xlu0 %2630
        %v2632 = vsel %vm2559, %v2464, 0.0
        %2633 = vadd.xlane.f32.xlu0 %v2632
        %v2634 = vpop.xlane.xlu0 %2633
        %v2635 = vsel %vm2559, %v2466, 0.0
        %2636 = vadd.xlane.f32.xlu0 %v2635
        %v2637 = vpop.xlane.xlu0 %2636
        %v2638 = vsel %vm2559, %v2468, 0.0
        %2639 = vadd.xlane.f32.xlu0 %v2638
        %v2640 = vpop.xlane.xlu0 %2639
        %v2641 = vsel %vm2559, %v2470, 0.0
        %2642 = vadd.xlane.f32.xlu0 %v2641
        %v2643 = vpop.xlane.xlu0 %2642
        %v2644 = vsel %vm2559, %v2472, 0.0
        %2645 = vadd.xlane.f32.xlu0 %v2644
        %v2646 = vpop.xlane.xlu0 %2645
        %v2647 = vsel %vm2559, %v2474, 0.0
        %2648 = vadd.xlane.f32.xlu0 %v2647
        %v2649 = vpop.xlane.xlu0 %2648
        %v2650 = vsel %vm2559, %v2476, 0.0
        %2651 = vadd.xlane.f32.xlu0 %v2650
        %v2652 = vpop.xlane.xlu0 %2651
        %v2653 = vsel %vm2559, %v2478, 0.0
        %2654 = vadd.xlane.f32.xlu0 %v2653
        %v2655 = vpop.xlane.xlu0 %2654
        %v2656 = vsel %vm2559, %v2480, 0.0
        %2657 = vadd.xlane.f32.xlu0 %v2656
        %v2658 = vpop.xlane.xlu0 %2657
        %v2659 = vsel %vm2559, %v2482, 0.0
        %2660 = vadd.xlane.f32.xlu0 %v2659
        %v2661 = vpop.xlane.xlu0 %2660
        %v2662 = vsel %vm2559, %v2484, 0.0
        %2663 = vadd.xlane.f32.xlu0 %v2662
        %v2664 = vpop.xlane.xlu0 %2663
        %v2665 = vsel %vm2559, %v2486, 0.0
        %2666 = vadd.xlane.f32.xlu0 %v2665
        %v2667 = vpop.xlane.xlu0 %2666
        %v2668 = vsel %vm2559, %v2488, 0.0
        %2669 = vadd.xlane.f32.xlu0 %v2668
        %v2670 = vpop.xlane.xlu0 %2669
        %v2671 = vsel %vm2559, %v2490, 0.0
        %2672 = vadd.xlane.f32.xlu0 %v2671
        %v2673 = vpop.xlane.xlu0 %2672
        %v2674 = vsel %vm2559, %v2492, 0.0
        %2675 = vadd.xlane.f32.xlu0 %v2674
        %v2676 = vpop.xlane.xlu0 %2675
        %v2677 = vsel %vm2559, %v2494, 0.0
        %2678 = vadd.xlane.f32.xlu0 %v2677
        %v2679 = vpop.xlane.xlu0 %2678
        %v2680 = vsel %vm2559, %v2496, 0.0
        %2681 = vadd.xlane.f32.xlu0 %v2680
        %v2682 = vpop.xlane.xlu0 %2681
        %v2683 = vsel %vm2559, %v2498, 0.0
        %2684 = vadd.xlane.f32.xlu0 %v2683
        %v2685 = vpop.xlane.xlu0 %2684
        %v2686 = vsel %vm2559, %v2500, 0.0
        %2687 = vadd.xlane.f32.xlu0 %v2686
        %v2688 = vpop.xlane.xlu0 %2687
        %v2689 = vsel %vm2559, %v2502, 0.0
        %2690 = vadd.xlane.f32.xlu0 %v2689
        %v2691 = vpop.xlane.xlu0 %2690
        %v2692 = vsel %vm2559, %v2504, 0.0
        %2693 = vadd.xlane.f32.xlu0 %v2692
        %v2694 = vpop.xlane.xlu0 %2693
        %v2695 = vsel %vm2559, %v2506, 0.0
        %2696 = vadd.xlane.f32.xlu0 %v2695
        %v2697 = vpop.xlane.xlu0 %2696
        %v2698 = vsel %vm2559, %v2508, 0.0
        %2699 = vadd.xlane.f32.xlu0 %v2698
        %v2700 = vpop.xlane.xlu0 %2699
        %v2701 = vsel %vm2559, %v2510, 0.0
        %2702 = vadd.xlane.f32.xlu0 %v2701
        %v2703 = vpop.xlane.xlu0 %2702
        %v2704 = vrsqrt.pop %v2562
        %v2705 = vmul.f32 %v2562, %v2704
        %vm2706 = vcmp.eq.f32.partialorder %v2562, inf
        %v2707 = vsel %vm2706, %v2562, %v2705
        %vm2708 = vcmp.eq.f32.partialorder %v2562, 0.0
        %v2709 = vand.u32 %v2562, 2147483648
        %v2710 = vsel %vm2708, %v2709, %v2707
        %v2711 = vrsqrt.pop %v2565
        %v2712 = vmul.f32 %v2565, %v2711
        %vm2713 = vcmp.eq.f32.partialorder %v2565, inf
        %v2714 = vsel %vm2713, %v2565, %v2712
        %vm2715 = vcmp.eq.f32.partialorder %v2565, 0.0
        %v2716 = vand.u32 %v2565, 2147483648
        %v2717 = vsel %vm2715, %v2716, %v2714
        %v2718 = vrsqrt.pop %v2568
        %v2719 = vmul.f32 %v2568, %v2718
        %vm2720 = vcmp.eq.f32.partialorder %v2568, inf
        %v2721 = vsel %vm2720, %v2568, %v2719
        %vm2722 = vcmp.eq.f32.partialorder %v2568, 0.0
        %v2723 = vand.u32 %v2568, 2147483648
        %v2724 = vsel %vm2722, %v2723, %v2721
        %v2725 = vrsqrt.pop %v2571
        %v2726 = vmul.f32 %v2571, %v2725
        %vm2727 = vcmp.eq.f32.partialorder %v2571, inf
        %v2728 = vsel %vm2727, %v2571, %v2726
        %vm2729 = vcmp.eq.f32.partialorder %v2571, 0.0
        %v2730 = vand.u32 %v2571, 2147483648
        %v2731 = vsel %vm2729, %v2730, %v2728
        %v2732 = vrsqrt.pop %v2574
        %v2733 = vmul.f32 %v2574, %v2732
        %vm2734 = vcmp.eq.f32.partialorder %v2574, inf
        %v2735 = vsel %vm2734, %v2574, %v2733
        %vm2736 = vcmp.eq.f32.partialorder %v2574, 0.0
        %v2737 = vand.u32 %v2574, 2147483648
        %v2738 = vsel %vm2736, %v2737, %v2735
        %v2739 = vrsqrt.pop %v2577
        %v2740 = vmul.f32 %v2577, %v2739
        %vm2741 = vcmp.eq.f32.partialorder %v2577, inf
        %v2742 = vsel %vm2741, %v2577, %v2740
        %vm2743 = vcmp.eq.f32.partialorder %v2577, 0.0
        %v2744 = vand.u32 %v2577, 2147483648
        %v2745 = vsel %vm2743, %v2744, %v2742
        %v2746 = vrsqrt.pop %v2580
        %v2747 = vmul.f32 %v2580, %v2746
        %vm2748 = vcmp.eq.f32.partialorder %v2580, inf
        %v2749 = vsel %vm2748, %v2580, %v2747
        %vm2750 = vcmp.eq.f32.partialorder %v2580, 0.0
        %v2751 = vand.u32 %v2580, 2147483648
        %v2752 = vsel %vm2750, %v2751, %v2749
        %v2753 = vrsqrt.pop %v2583
        %v2754 = vmul.f32 %v2583, %v2753
        %vm2755 = vcmp.eq.f32.partialorder %v2583, inf
        %v2756 = vsel %vm2755, %v2583, %v2754
        %vm2757 = vcmp.eq.f32.partialorder %v2583, 0.0
        %v2758 = vand.u32 %v2583, 2147483648
        %v2759 = vsel %vm2757, %v2758, %v2756
        %v2760 = vrsqrt.pop %v2586
        %v2761 = vmul.f32 %v2586, %v2760
        %vm2762 = vcmp.eq.f32.partialorder %v2586, inf
        %v2763 = vsel %vm2762, %v2586, %v2761
        %vm2764 = vcmp.eq.f32.partialorder %v2586, 0.0
        %v2765 = vand.u32 %v2586, 2147483648
        %v2766 = vsel %vm2764, %v2765, %v2763
        %v2767 = vrsqrt.pop %v2589
        %v2768 = vmul.f32 %v2589, %v2767
        %vm2769 = vcmp.eq.f32.partialorder %v2589, inf
        %v2770 = vsel %vm2769, %v2589, %v2768
        %vm2771 = vcmp.eq.f32.partialorder %v2589, 0.0
        %v2772 = vand.u32 %v2589, 2147483648
        %v2773 = vsel %vm2771, %v2772, %v2770
        %v2774 = vrsqrt.pop %v2592
        %v2775 = vmul.f32 %v2592, %v2774
        %vm2776 = vcmp.eq.f32.partialorder %v2592, inf
        %v2777 = vsel %vm2776, %v2592, %v2775
        %vm2778 = vcmp.eq.f32.partialorder %v2592, 0.0
        %v2779 = vand.u32 %v2592, 2147483648
        %v2780 = vsel %vm2778, %v2779, %v2777
        %v2781 = vrsqrt.pop %v2595
        %v2782 = vmul.f32 %v2595, %v2781
        %vm2783 = vcmp.eq.f32.partialorder %v2595, inf
        %v2784 = vsel %vm2783, %v2595, %v2782
        %vm2785 = vcmp.eq.f32.partialorder %v2595, 0.0
        %v2786 = vand.u32 %v2595, 2147483648
        %v2787 = vsel %vm2785, %v2786, %v2784
        %v2788 = vrsqrt.pop %v2598
        %v2789 = vmul.f32 %v2598, %v2788
        %vm2790 = vcmp.eq.f32.partialorder %v2598, inf
        %v2791 = vsel %vm2790, %v2598, %v2789
        %vm2792 = vcmp.eq.f32.partialorder %v2598, 0.0
        %v2793 = vand.u32 %v2598, 2147483648
        %v2794 = vsel %vm2792, %v2793, %v2791
        %v2795 = vrsqrt.pop %v2601
        %v2796 = vmul.f32 %v2601, %v2795
        %vm2797 = vcmp.eq.f32.partialorder %v2601, inf
        %v2798 = vsel %vm2797, %v2601, %v2796
        %vm2799 = vcmp.eq.f32.partialorder %v2601, 0.0
        %v2800 = vand.u32 %v2601, 2147483648
        %v2801 = vsel %vm2799, %v2800, %v2798
        %v2802 = vrsqrt.pop %v2604
        %v2803 = vmul.f32 %v2604, %v2802
        %vm2804 = vcmp.eq.f32.partialorder %v2604, inf
        %v2805 = vsel %vm2804, %v2604, %v2803
        %vm2806 = vcmp.eq.f32.partialorder %v2604, 0.0
        %v2807 = vand.u32 %v2604, 2147483648
        %v2808 = vsel %vm2806, %v2807, %v2805
        %v2809 = vrsqrt.pop %v2607
        %v2810 = vmul.f32 %v2607, %v2809
        %vm2811 = vcmp.eq.f32.partialorder %v2607, inf
        %v2812 = vsel %vm2811, %v2607, %v2810
        %vm2813 = vcmp.eq.f32.partialorder %v2607, 0.0
        %v2814 = vand.u32 %v2607, 2147483648
        %v2815 = vsel %vm2813, %v2814, %v2812
        %v2816 = vrsqrt.pop %v2610
        %v2817 = vmul.f32 %v2610, %v2816
        %vm2818 = vcmp.eq.f32.partialorder %v2610, inf
        %v2819 = vsel %vm2818, %v2610, %v2817
        %vm2820 = vcmp.eq.f32.partialorder %v2610, 0.0
        %v2821 = vand.u32 %v2610, 2147483648
        %v2822 = vsel %vm2820, %v2821, %v2819
        %v2823 = vrsqrt.pop %v2613
        %v2824 = vmul.f32 %v2613, %v2823
        %vm2825 = vcmp.eq.f32.partialorder %v2613, inf
        %v2826 = vsel %vm2825, %v2613, %v2824
        %vm2827 = vcmp.eq.f32.partialorder %v2613, 0.0
        %v2828 = vand.u32 %v2613, 2147483648
        %v2829 = vsel %vm2827, %v2828, %v2826
        %v2830 = vrsqrt.pop %v2616
        %v2831 = vmul.f32 %v2616, %v2830
        %vm2832 = vcmp.eq.f32.partialorder %v2616, inf
        %v2833 = vsel %vm2832, %v2616, %v2831
        %vm2834 = vcmp.eq.f32.partialorder %v2616, 0.0
        %v2835 = vand.u32 %v2616, 2147483648
        %v2836 = vsel %vm2834, %v2835, %v2833
        %v2837 = vrsqrt.pop %v2619
        %v2838 = vmul.f32 %v2619, %v2837
        %vm2839 = vcmp.eq.f32.partialorder %v2619, inf
        %v2840 = vsel %vm2839, %v2619, %v2838
        %vm2841 = vcmp.eq.f32.partialorder %v2619, 0.0
        %v2842 = vand.u32 %v2619, 2147483648
        %v2843 = vsel %vm2841, %v2842, %v2840
        %v2844 = vrsqrt.pop %v2622
        %v2845 = vmul.f32 %v2622, %v2844
        %vm2846 = vcmp.eq.f32.partialorder %v2622, inf
        %v2847 = vsel %vm2846, %v2622, %v2845
        %vm2848 = vcmp.eq.f32.partialorder %v2622, 0.0
        %v2849 = vand.u32 %v2622, 2147483648
        %v2850 = vsel %vm2848, %v2849, %v2847
        %v2851 = vrsqrt.pop %v2625
        %v2852 = vmul.f32 %v2625, %v2851
        %vm2853 = vcmp.eq.f32.partialorder %v2625, inf
        %v2854 = vsel %vm2853, %v2625, %v2852
        %vm2855 = vcmp.eq.f32.partialorder %v2625, 0.0
        %v2856 = vand.u32 %v2625, 2147483648
        %v2857 = vsel %vm2855, %v2856, %v2854
        %v2858 = vrsqrt.pop %v2628
        %v2859 = vmul.f32 %v2628, %v2858
        %vm2860 = vcmp.eq.f32.partialorder %v2628, inf
        %v2861 = vsel %vm2860, %v2628, %v2859
        %vm2862 = vcmp.eq.f32.partialorder %v2628, 0.0
        %v2863 = vand.u32 %v2628, 2147483648
        %v2864 = vsel %vm2862, %v2863, %v2861
        %v2865 = vrsqrt.pop %v2631
        %v2866 = vmul.f32 %v2631, %v2865
        %vm2867 = vcmp.eq.f32.partialorder %v2631, inf
        %v2868 = vsel %vm2867, %v2631, %v2866
        %vm2869 = vcmp.eq.f32.partialorder %v2631, 0.0
        %v2870 = vand.u32 %v2631, 2147483648
        %v2871 = vsel %vm2869, %v2870, %v2868
        %v2872 = vrsqrt.pop %v2634
        %v2873 = vmul.f32 %v2634, %v2872
        %vm2874 = vcmp.eq.f32.partialorder %v2634, inf
        %v2875 = vsel %vm2874, %v2634, %v2873
        %vm2876 = vcmp.eq.f32.partialorder %v2634, 0.0
        %v2877 = vand.u32 %v2634, 2147483648
        %v2878 = vsel %vm2876, %v2877, %v2875
        %v2879 = vrsqrt.pop %v2637
        %v2880 = vmul.f32 %v2637, %v2879
        %vm2881 = vcmp.eq.f32.partialorder %v2637, inf
        %v2882 = vsel %vm2881, %v2637, %v2880
        %vm2883 = vcmp.eq.f32.partialorder %v2637, 0.0
        %v2884 = vand.u32 %v2637, 2147483648
        %v2885 = vsel %vm2883, %v2884, %v2882
        %v2886 = vrsqrt.pop %v2640
        %v2887 = vmul.f32 %v2640, %v2886
        %vm2888 = vcmp.eq.f32.partialorder %v2640, inf
        %v2889 = vsel %vm2888, %v2640, %v2887
        %vm2890 = vcmp.eq.f32.partialorder %v2640, 0.0
        %v2891 = vand.u32 %v2640, 2147483648
        %v2892 = vsel %vm2890, %v2891, %v2889
        %v2893 = vrsqrt.pop %v2643
        %v2894 = vmul.f32 %v2643, %v2893
        %vm2895 = vcmp.eq.f32.partialorder %v2643, inf
        %v2896 = vsel %vm2895, %v2643, %v2894
        %vm2897 = vcmp.eq.f32.partialorder %v2643, 0.0
        %v2898 = vand.u32 %v2643, 2147483648
        %v2899 = vsel %vm2897, %v2898, %v2896
        %v2900 = vrsqrt.pop %v2646
        %v2901 = vmul.f32 %v2646, %v2900
        %vm2902 = vcmp.eq.f32.partialorder %v2646, inf
        %v2903 = vsel %vm2902, %v2646, %v2901
        %vm2904 = vcmp.eq.f32.partialorder %v2646, 0.0
        %v2905 = vand.u32 %v2646, 2147483648
        %v2906 = vsel %vm2904, %v2905, %v2903
        %v2907 = vrsqrt.pop %v2649
        %v2908 = vmul.f32 %v2649, %v2907
        %vm2909 = vcmp.eq.f32.partialorder %v2649, inf
        %v2910 = vsel %vm2909, %v2649, %v2908
        %vm2911 = vcmp.eq.f32.partialorder %v2649, 0.0
        %v2912 = vand.u32 %v2649, 2147483648
        %v2913 = vsel %vm2911, %v2912, %v2910
        %v2914 = vrsqrt.pop %v2652
        %v2915 = vmul.f32 %v2652, %v2914
        %vm2916 = vcmp.eq.f32.partialorder %v2652, inf
        %v2917 = vsel %vm2916, %v2652, %v2915
        %vm2918 = vcmp.eq.f32.partialorder %v2652, 0.0
        %v2919 = vand.u32 %v2652, 2147483648
        %v2920 = vsel %vm2918, %v2919, %v2917
        %v2921 = vrsqrt.pop %v2655
        %v2922 = vmul.f32 %v2655, %v2921
        %vm2923 = vcmp.eq.f32.partialorder %v2655, inf
        %v2924 = vsel %vm2923, %v2655, %v2922
        %vm2925 = vcmp.eq.f32.partialorder %v2655, 0.0
        %v2926 = vand.u32 %v2655, 2147483648
        %v2927 = vsel %vm2925, %v2926, %v2924
        %v2928 = vrsqrt.pop %v2658
        %v2929 = vmul.f32 %v2658, %v2928
        %vm2930 = vcmp.eq.f32.partialorder %v2658, inf
        %v2931 = vsel %vm2930, %v2658, %v2929
        %vm2932 = vcmp.eq.f32.partialorder %v2658, 0.0
        %v2933 = vand.u32 %v2658, 2147483648
        %v2934 = vsel %vm2932, %v2933, %v2931
        %v2935 = vrsqrt.pop %v2661
        %v2936 = vmul.f32 %v2661, %v2935
        %vm2937 = vcmp.eq.f32.partialorder %v2661, inf
        %v2938 = vsel %vm2937, %v2661, %v2936
        %vm2939 = vcmp.eq.f32.partialorder %v2661, 0.0
        %v2940 = vand.u32 %v2661, 2147483648
        %v2941 = vsel %vm2939, %v2940, %v2938
        %v2942 = vrsqrt.pop %v2664
        %v2943 = vmul.f32 %v2664, %v2942
        %vm2944 = vcmp.eq.f32.partialorder %v2664, inf
        %v2945 = vsel %vm2944, %v2664, %v2943
        %vm2946 = vcmp.eq.f32.partialorder %v2664, 0.0
        %v2947 = vand.u32 %v2664, 2147483648
        %v2948 = vsel %vm2946, %v2947, %v2945
        %v2949 = vrsqrt.pop %v2667
        %v2950 = vmul.f32 %v2667, %v2949
        %vm2951 = vcmp.eq.f32.partialorder %v2667, inf
        %v2952 = vsel %vm2951, %v2667, %v2950
        %vm2953 = vcmp.eq.f32.partialorder %v2667, 0.0
        %v2954 = vand.u32 %v2667, 2147483648
        %v2955 = vsel %vm2953, %v2954, %v2952
        %v2956 = vrsqrt.pop %v2670
        %v2957 = vmul.f32 %v2670, %v2956
        %vm2958 = vcmp.eq.f32.partialorder %v2670, inf
        %v2959 = vsel %vm2958, %v2670, %v2957
        %vm2960 = vcmp.eq.f32.partialorder %v2670, 0.0
        %v2961 = vand.u32 %v2670, 2147483648
        %v2962 = vsel %vm2960, %v2961, %v2959
        %v2963 = vrsqrt.pop %v2673
        %v2964 = vmul.f32 %v2673, %v2963
        %vm2965 = vcmp.eq.f32.partialorder %v2673, inf
        %v2966 = vsel %vm2965, %v2673, %v2964
        %vm2967 = vcmp.eq.f32.partialorder %v2673, 0.0
        %v2968 = vand.u32 %v2673, 2147483648
        %v2969 = vsel %vm2967, %v2968, %v2966
        %v2970 = vrsqrt.pop %v2676
        %v2971 = vmul.f32 %v2676, %v2970
        %vm2972 = vcmp.eq.f32.partialorder %v2676, inf
        %v2973 = vsel %vm2972, %v2676, %v2971
        %vm2974 = vcmp.eq.f32.partialorder %v2676, 0.0
        %v2975 = vand.u32 %v2676, 2147483648
        %v2976 = vsel %vm2974, %v2975, %v2973
        %v2977 = vrsqrt.pop %v2679
        %v2978 = vmul.f32 %v2679, %v2977
        %vm2979 = vcmp.eq.f32.partialorder %v2679, inf
        %v2980 = vsel %vm2979, %v2679, %v2978
        %vm2981 = vcmp.eq.f32.partialorder %v2679, 0.0
        %v2982 = vand.u32 %v2679, 2147483648
        %v2983 = vsel %vm2981, %v2982, %v2980
        %v2984 = vrsqrt.pop %v2682
        %v2985 = vmul.f32 %v2682, %v2984
        %vm2986 = vcmp.eq.f32.partialorder %v2682, inf
        %v2987 = vsel %vm2986, %v2682, %v2985
        %vm2988 = vcmp.eq.f32.partialorder %v2682, 0.0
        %v2989 = vand.u32 %v2682, 2147483648
        %v2990 = vsel %vm2988, %v2989, %v2987
        %v2991 = vrsqrt.pop %v2685
        %v2992 = vmul.f32 %v2685, %v2991
        %vm2993 = vcmp.eq.f32.partialorder %v2685, inf
        %v2994 = vsel %vm2993, %v2685, %v2992
        %vm2995 = vcmp.eq.f32.partialorder %v2685, 0.0
        %v2996 = vand.u32 %v2685, 2147483648
        %v2997 = vsel %vm2995, %v2996, %v2994
        %v2998 = vrsqrt.pop %v2688
        %v2999 = vmul.f32 %v2688, %v2998
        %vm3000 = vcmp.eq.f32.partialorder %v2688, inf
        %v3001 = vsel %vm3000, %v2688, %v2999
        %vm3002 = vcmp.eq.f32.partialorder %v2688, 0.0
        %v3003 = vand.u32 %v2688, 2147483648
        %v3004 = vsel %vm3002, %v3003, %v3001
        %v3005 = vrsqrt.pop %v2691
        %v3006 = vmul.f32 %v2691, %v3005
        %vm3007 = vcmp.eq.f32.partialorder %v2691, inf
        %v3008 = vsel %vm3007, %v2691, %v3006
        %vm3009 = vcmp.eq.f32.partialorder %v2691, 0.0
        %v3010 = vand.u32 %v2691, 2147483648
        %v3011 = vsel %vm3009, %v3010, %v3008
        %v3012 = vrsqrt.pop %v2694
        %v3013 = vmul.f32 %v2694, %v3012
        %vm3014 = vcmp.eq.f32.partialorder %v2694, inf
        %v3015 = vsel %vm3014, %v2694, %v3013
        %vm3016 = vcmp.eq.f32.partialorder %v2694, 0.0
        %v3017 = vand.u32 %v2694, 2147483648
        %v3018 = vsel %vm3016, %v3017, %v3015
        %v3019 = vrsqrt.pop %v2697
        %v3020 = vmul.f32 %v2697, %v3019
        %vm3021 = vcmp.eq.f32.partialorder %v2697, inf
        %v3022 = vsel %vm3021, %v2697, %v3020
        %vm3023 = vcmp.eq.f32.partialorder %v2697, 0.0
        %v3024 = vand.u32 %v2697, 2147483648
        %v3025 = vsel %vm3023, %v3024, %v3022
        %v3026 = vrsqrt.pop %v2700
        %v3027 = vmul.f32 %v2700, %v3026
        %vm3028 = vcmp.eq.f32.partialorder %v2700, inf
        %v3029 = vsel %vm3028, %v2700, %v3027
        %vm3030 = vcmp.eq.f32.partialorder %v2700, 0.0
        %v3031 = vand.u32 %v2700, 2147483648
        %v3032 = vsel %vm3030, %v3031, %v3029
        %v3033 = vrsqrt.pop %v2703
        %v3034 = vmul.f32 %v2703, %v3033
        %vm3035 = vcmp.eq.f32.partialorder %v2703, inf
        %v3036 = vsel %vm3035, %v2703, %v3034
        %vm3037 = vcmp.eq.f32.partialorder %v2703, 0.0
        %v3038 = vand.u32 %v2703, 2147483648
        %v3039 = vsel %vm3037, %v3038, %v3036
        %3088 = vrot.lane.b32.xlu0 %v1584, 32
        %v3089 = vpop.permute.xlu0 %3088
        %3090 = vrot.lane.b32.xlu0 %v1589, 32
        %v3091 = vpop.permute.xlu0 %3090
        %3092 = vrot.lane.b32.xlu0 %v1594, 32
        %v3093 = vpop.permute.xlu0 %3092
        %3094 = vrot.lane.b32.xlu0 %v1599, 32
        %v3095 = vpop.permute.xlu0 %3094
        %3096 = vrot.lane.b32.xlu0 %v1604, 32
        %v3097 = vpop.permute.xlu0 %3096
        %3098 = vrot.lane.b32.xlu0 %v1609, 32
        %v3099 = vpop.permute.xlu0 %3098
        %3100 = vrot.lane.b32.xlu0 %v1614, 32
        %v3101 = vpop.permute.xlu0 %3100
        %3102 = vrot.lane.b32.xlu0 %v1619, 32
        %v3103 = vpop.permute.xlu0 %3102
        %3104 = vrot.lane.b32.xlu0 %v1624, 32
        %v3105 = vpop.permute.xlu0 %3104
        %3106 = vrot.lane.b32.xlu0 %v1629, 32
        %v3107 = vpop.permute.xlu0 %3106
        %3108 = vrot.lane.b32.xlu0 %v1634, 32
        %v3109 = vpop.permute.xlu0 %3108
        %3110 = vrot.lane.b32.xlu0 %v1639, 32
        %v3111 = vpop.permute.xlu0 %3110
        %3112 = vrot.lane.b32.xlu0 %v1644, 32
        %v3113 = vpop.permute.xlu0 %3112
        %3114 = vrot.lane.b32.xlu0 %v1649, 32
        %v3115 = vpop.permute.xlu0 %3114
        %3116 = vrot.lane.b32.xlu0 %v1654, 32
        %v3117 = vpop.permute.xlu0 %3116
        %3118 = vrot.lane.b32.xlu0 %v1659, 32
        %v3119 = vpop.permute.xlu0 %3118
        %3120 = vrot.lane.b32.xlu0 %v1664, 32
        %v3121 = vpop.permute.xlu0 %3120
        %3122 = vrot.lane.b32.xlu0 %v1669, 32
        %v3123 = vpop.permute.xlu0 %3122
        %3124 = vrot.lane.b32.xlu0 %v1674, 32
        %v3125 = vpop.permute.xlu0 %3124
        %3126 = vrot.lane.b32.xlu0 %v1679, 32
        %v3127 = vpop.permute.xlu0 %3126
        %3128 = vrot.lane.b32.xlu0 %v1684, 32
        %v3129 = vpop.permute.xlu0 %3128
        %3130 = vrot.lane.b32.xlu0 %v1689, 32
        %v3131 = vpop.permute.xlu0 %3130
        %3132 = vrot.lane.b32.xlu0 %v1694, 32
        %v3133 = vpop.permute.xlu0 %3132
        %3134 = vrot.lane.b32.xlu0 %v1699, 32
        %v3135 = vpop.permute.xlu0 %3134
        %3136 = vrot.lane.b32.xlu0 %v1704, 32
        %v3137 = vpop.permute.xlu0 %3136
        %3138 = vrot.lane.b32.xlu0 %v1709, 32
        %v3139 = vpop.permute.xlu0 %3138
        %3140 = vrot.lane.b32.xlu0 %v1714, 32
        %v3141 = vpop.permute.xlu0 %3140
        %3142 = vrot.lane.b32.xlu0 %v1719, 32
        %v3143 = vpop.permute.xlu0 %3142
        %3144 = vrot.lane.b32.xlu0 %v1724, 32
        %v3145 = vpop.permute.xlu0 %3144
        %3146 = vrot.lane.b32.xlu0 %v1729, 32
        %v3147 = vpop.permute.xlu0 %3146
        %3148 = vrot.lane.b32.xlu0 %v1734, 32
        %v3149 = vpop.permute.xlu0 %3148
        %3150 = vrot.lane.b32.xlu0 %v1739, 32
        %v3151 = vpop.permute.xlu0 %3150
        %3152 = vrot.lane.b32.xlu0 %v1744, 32
        %v3153 = vpop.permute.xlu0 %3152
        %3154 = vrot.lane.b32.xlu0 %v1749, 32
        %v3155 = vpop.permute.xlu0 %3154
        %3156 = vrot.lane.b32.xlu0 %v1754, 32
        %v3157 = vpop.permute.xlu0 %3156
        %3158 = vrot.lane.b32.xlu0 %v1759, 32
        %v3159 = vpop.permute.xlu0 %3158
        %3160 = vrot.lane.b32.xlu0 %v1764, 32
        %v3161 = vpop.permute.xlu0 %3160
        %3162 = vrot.lane.b32.xlu0 %v1769, 32
        %v3163 = vpop.permute.xlu0 %3162
        %3164 = vrot.lane.b32.xlu0 %v1774, 32
        %v3165 = vpop.permute.xlu0 %3164
        %3166 = vrot.lane.b32.xlu0 %v1779, 32
        %v3167 = vpop.permute.xlu0 %3166
        %3168 = vrot.lane.b32.xlu0 %v1784, 32
        %v3169 = vpop.permute.xlu0 %3168
        %3170 = vrot.lane.b32.xlu0 %v1789, 32
        %v3171 = vpop.permute.xlu0 %3170
        %3172 = vrot.lane.b32.xlu0 %v1794, 32
        %v3173 = vpop.permute.xlu0 %3172
        %3174 = vrot.lane.b32.xlu0 %v1799, 32
        %v3175 = vpop.permute.xlu0 %3174
        %3176 = vrot.lane.b32.xlu0 %v1804, 32
        %v3177 = vpop.permute.xlu0 %3176
        %3178 = vrot.lane.b32.xlu0 %v1809, 32
        %v3179 = vpop.permute.xlu0 %3178
        %3180 = vrot.lane.b32.xlu0 %v1814, 32
        %v3181 = vpop.permute.xlu0 %3180
        %3182 = vrot.lane.b32.xlu0 %v1819, 32
        %v3183 = vpop.permute.xlu0 %3182
        %v3232 = vsel %vm1372, %v2033, %v3089
        %v3233 = vsel %vm1372, %v2038, %v3091
        %v3234 = vsel %vm1372, %v2043, %v3093
        %v3235 = vsel %vm1372, %v2048, %v3095
        %v3236 = vsel %vm1372, %v2053, %v3097
        %v3237 = vsel %vm1372, %v2058, %v3099
        %v3238 = vsel %vm1372, %v2063, %v3101
        %v3239 = vsel %vm1372, %v2068, %v3103
        %v3240 = vsel %vm1372, %v2073, %v3105
        %v3241 = vsel %vm1372, %v2078, %v3107
        %v3242 = vsel %vm1372, %v2083, %v3109
        %v3243 = vsel %vm1372, %v2088, %v3111
        %v3244 = vsel %vm1372, %v2093, %v3113
        %v3245 = vsel %vm1372, %v2098, %v3115
        %v3246 = vsel %vm1372, %v2103, %v3117
        %v3247 = vsel %vm1372, %v2108, %v3119
        %v3248 = vsel %vm1372, %v2113, %v3121
        %v3249 = vsel %vm1372, %v2118, %v3123
        %v3250 = vsel %vm1372, %v2123, %v3125
        %v3251 = vsel %vm1372, %v2128, %v3127
        %v3252 = vsel %vm1372, %v2133, %v3129
        %v3253 = vsel %vm1372, %v2138, %v3131
        %v3254 = vsel %vm1372, %v2143, %v3133
        %v3255 = vsel %vm1372, %v2148, %v3135
        %v3256 = vsel %vm1372, %v2153, %v3137
        %v3257 = vsel %vm1372, %v2158, %v3139
        %v3258 = vsel %vm1372, %v2163, %v3141
        %v3259 = vsel %vm1372, %v2168, %v3143
        %v3260 = vsel %vm1372, %v2173, %v3145
        %v3261 = vsel %vm1372, %v2178, %v3147
        %v3262 = vsel %vm1372, %v2183, %v3149
        %v3263 = vsel %vm1372, %v2188, %v3151
        %v3264 = vsel %vm1372, %v2193, %v3153
        %v3265 = vsel %vm1372, %v2198, %v3155
        %v3266 = vsel %vm1372, %v2203, %v3157
        %v3267 = vsel %vm1372, %v2208, %v3159
        %v3268 = vsel %vm1372, %v2213, %v3161
        %v3269 = vsel %vm1372, %v2218, %v3163
        %v3270 = vsel %vm1372, %v2223, %v3165
        %v3271 = vsel %vm1372, %v2228, %v3167
        %v3272 = vsel %vm1372, %v2233, %v3169
        %v3273 = vsel %vm1372, %v2238, %v3171
        %v3274 = vsel %vm1372, %v2243, %v3173
        %v3275 = vsel %vm1372, %v2248, %v3175
        %v3276 = vsel %vm1372, %v2253, %v3177
        %v3277 = vsel %vm1372, %v2258, %v3179
        %v3278 = vsel %vm1372, %v2263, %v3181
        %v3279 = vsel %vm1372, %v2268, %v3183
        %v3280 = vlaneseq
        %v3281 = vshrl.u32 %v3280, 7
        %v3282 = vsub.s32 0, %v3281
        %v3283 = vrot.slane %v691, %v3282
        %v3284 = vmul.f32 %v2710, %v3283
        %v3285 = vmul.f32 %v2717, %v3283
        %v3286 = vmul.f32 %v2724, %v3283
        %v3287 = vmul.f32 %v2731, %v3283
        %v3288 = vmul.f32 %v2738, %v3283
        %v3289 = vmul.f32 %v2745, %v3283
        %v3290 = vmul.f32 %v2752, %v3283
        %v3291 = vmul.f32 %v2759, %v3283
        %v3292 = vmul.f32 %v2766, %v3283
        %v3293 = vmul.f32 %v2773, %v3283
        %v3294 = vmul.f32 %v2780, %v3283
        %v3295 = vmul.f32 %v2787, %v3283
        %v3296 = vmul.f32 %v2794, %v3283
        %v3297 = vmul.f32 %v2801, %v3283
        %v3298 = vmul.f32 %v2808, %v3283
        %v3299 = vmul.f32 %v2815, %v3283
        %v3300 = vmul.f32 %v2822, %v3283
        %v3301 = vmul.f32 %v2829, %v3283
        %v3302 = vmul.f32 %v2836, %v3283
        %v3303 = vmul.f32 %v2843, %v3283
        %v3304 = vmul.f32 %v2850, %v3283
        %v3305 = vmul.f32 %v2857, %v3283
        %v3306 = vmul.f32 %v2864, %v3283
        %v3307 = vmul.f32 %v2871, %v3283
        %v3308 = vmul.f32 %v2878, %v3283
        %v3309 = vmul.f32 %v2885, %v3283
        %v3310 = vmul.f32 %v2892, %v3283
        %v3311 = vmul.f32 %v2899, %v3283
        %v3312 = vmul.f32 %v2906, %v3283
        %v3313 = vmul.f32 %v2913, %v3283
        %v3314 = vmul.f32 %v2920, %v3283
        %v3315 = vmul.f32 %v2927, %v3283
        %v3316 = vmul.f32 %v2934, %v3283
        %v3317 = vmul.f32 %v2941, %v3283
        %v3318 = vmul.f32 %v2948, %v3283
        %v3319 = vmul.f32 %v2955, %v3283
        %v3320 = vmul.f32 %v2962, %v3283
        %v3321 = vmul.f32 %v2969, %v3283
        %v3322 = vmul.f32 %v2976, %v3283
        %v3323 = vmul.f32 %v2983, %v3283
        %v3324 = vmul.f32 %v2990, %v3283
        %v3325 = vmul.f32 %v2997, %v3283
        %v3326 = vmul.f32 %v3004, %v3283
        %v3327 = vmul.f32 %v3011, %v3283
        %v3328 = vmul.f32 %v3018, %v3283
        %v3329 = vmul.f32 %v3025, %v3283
        %v3330 = vmul.f32 %v3032, %v3283
        %v3331 = vmul.f32 %v3039, %v3283
        %vm3332 = vcmask 523264
        %v3334 = vsel %vm3332, %v3232, 0
        %v3337 = vsel %vm3332, %v3233, 0
        %v3340 = vsel %vm3332, %v3234, 0
        %v3343 = vsel %vm3332, %v3235, 0
        %v3346 = vsel %vm3332, %v3236, 0
        %v3349 = vsel %vm3332, %v3237, 0
        %v3352 = vsel %vm3332, %v3238, 0
        %v3355 = vsel %vm3332, %v3239, 0
        %v3358 = vsel %vm3332, %v3240, 0
        %v3361 = vsel %vm3332, %v3241, 0
        %v3364 = vsel %vm3332, %v3242, 0
        %v3367 = vsel %vm3332, %v3243, 0
        %v3370 = vsel %vm3332, %v3244, 0
        %v3373 = vsel %vm3332, %v3245, 0
        %v3376 = vsel %vm3332, %v3246, 0
        %v3379 = vsel %vm3332, %v3247, 0
        %v3382 = vsel %vm3332, %v3248, 0
        %v3385 = vsel %vm3332, %v3249, 0
        %v3388 = vsel %vm3332, %v3250, 0
        %v3391 = vsel %vm3332, %v3251, 0
        %v3394 = vsel %vm3332, %v3252, 0
        %v3397 = vsel %vm3332, %v3253, 0
        %v3400 = vsel %vm3332, %v3254, 0
        %v3403 = vsel %vm3332, %v3255, 0
        %v3406 = vsel %vm3332, %v3256, 0
        %v3409 = vsel %vm3332, %v3257, 0
        %v3412 = vsel %vm3332, %v3258, 0
        %v3415 = vsel %vm3332, %v3259, 0
        %v3418 = vsel %vm3332, %v3260, 0
        %v3421 = vsel %vm3332, %v3261, 0
        %v3424 = vsel %vm3332, %v3262, 0
        %v3427 = vsel %vm3332, %v3263, 0
        %v3430 = vsel %vm3332, %v3264, 0
        %v3433 = vsel %vm3332, %v3265, 0
        %v3436 = vsel %vm3332, %v3266, 0
        %v3439 = vsel %vm3332, %v3267, 0
        %v3442 = vsel %vm3332, %v3268, 0
        %v3445 = vsel %vm3332, %v3269, 0
        %v3448 = vsel %vm3332, %v3270, 0
        %v3451 = vsel %vm3332, %v3271, 0
        %v3454 = vsel %vm3332, %v3272, 0
        %v3457 = vsel %vm3332, %v3273, 0
        %v3460 = vsel %vm3332, %v3274, 0
        %v3463 = vsel %vm3332, %v3275, 0
        %v3466 = vsel %vm3332, %v3276, 0
        %v3469 = vsel %vm3332, %v3277, 0
        %v3472 = vsel %vm3332, %v3278, 0
        %v3475 = vsel %vm3332, %v3279, 0
        %3477 = vmatprep.subr.mxu0 0.0
        %3478 = vmatpush1.msra.mxu0 %v663
        %3479 = vmatprep.subr.mxu0 0.0
        %3480 = vmatpush1.msra.mxu0 %v664
        %3481 = vmatprep.subr.mxu0 0.0
        %3482 = vmatpush1.msra.mxu0 %v665
        %3483 = vmatprep.subr.mxu0 0.0
        %3484 = vmatpush1.msra.mxu0 %v666
        %3485 = vmatprep.subr.mxu0 0.0
        %3486 = vmatpush1.msra.mxu0 %v667
        %3487 = vmatprep.subr.mxu0 0.0
        %3488 = vmatpush1.msra.mxu0 %v668
        %3489 = vmatprep.subr.mxu0 0.0
        %3490 = vmatpush1.msra.mxu0 %v669
        %3491 = vmatprep.subr.mxu0 0.0
        %3492 = vmatpush1.msra.mxu0 %v670
        %3493 = vmatprep.subr.mxu0 0.0
        %3494 = vmatpush1.msra.mxu0 0.0
        %3495 = vmatprep.subr.mxu0 0.0
        %3496 = vmatpush1.msra.mxu0 0.0
        %3497 = vmatprep.subr.mxu0 0.0
        %3498 = vmatpush1.msra.mxu0 0.0
        %3499 = vmatprep.subr.mxu0 0.0
        %3500 = vmatpush1.msra.mxu0 0.0
        %3501 = vmatprep.subr.mxu0 0.0
        %3502 = vmatpush1.msra.mxu0 0.0
        %3503 = vmatprep.subr.mxu0 0.0
        %3504 = vmatpush1.msra.mxu0 0.0
        %3505 = vmatprep.subr.mxu0 0.0
        %3506 = vmatpush1.msra.mxu0 0.0
        %3507 = vmatprep.subr.mxu0 0.0
        %3508 = vmatpush1.msra.mxu0 0.0
        %3509 = vmatprep.subr.mxu0 0.0
        %3510 = vmatpush1.msra.mxu0 0.0
        %3511 = vmatprep.subr.mxu0 0.0
        %3512 = vmatpush1.msra.mxu0 0.0
        %3513 = vmatprep.subr.mxu0 0.0
        %3514 = vmatpush1.msra.mxu0 0.0
        %3515 = vmatprep.subr.mxu0 0.0
        %3516 = vmatpush1.msra.mxu0 0.0
        %3517 = vmatprep.subr.mxu0 0.0
        %3518 = vmatpush1.msra.mxu0 0.0
        %3519 = vmatprep.subr.mxu0 0.0
        %3520 = vmatpush1.msra.mxu0 0.0
        %3521 = vmatprep.subr.mxu0 0.0
        %3522 = vmatpush1.msra.mxu0 0.0
        %3523 = vmatprep.subr.mxu0 0.0
        %3524 = vmatpush1.msra.mxu0 0.0
        %3525 = vmatprep.subr.mxu0 0.0
        %3526 = vmatpush1.msra.mxu0 0.0
        %3527 = vmatprep.subr.mxu0 0.0
        %3528 = vmatpush1.msra.mxu0 0.0
        %3529 = vmatprep.subr.mxu0 0.0
        %3530 = vmatpush1.msra.mxu0 0.0
        %3531 = vmatprep.subr.mxu0 0.0
        %3532 = vmatpush1.msra.mxu0 0.0
        %3533 = vmatprep.subr.mxu0 0.0
        %3534 = vmatpush1.msra.mxu0 0.0
        %3535 = vmatprep.subr.mxu0 0.0
        %3536 = vmatpush1.msra.mxu0 0.0
        %3537 = vmatprep.subr.mxu0 0.0
        %3538 = vmatpush1.msra.mxu0 0.0
        %3539 = vmatprep.subr.mxu0 0.0
        %3540 = vmatpush1.msra.mxu0 0.0
        %3541 = vmatprep.mubr.f32.mxu0 0.0
        %3542 = vmatmul.mubr.f32.gmra.mrb[0].mxu0 %v3334
        %v3543 = vpop.f32.mrb[0].mxu0
        %v3544 = vadd.f32 %v3284, %v3543
        %v3545 = vpop.f32.mrb[0].mxu0
        %3546 = vmatprep.mubr.f32.mxu0 0.0
        %3547 = vmatmul.mubr.f32.gmra.mrb[0].mxu0 %v3337
        %v3548 = vpop.f32.mrb[0].mxu0
        %v3549 = vadd.f32 %v3285, %v3548
        %v3550 = vpop.f32.mrb[0].mxu0
        %3551 = vmatprep.mubr.f32.mxu0 0.0
        %3552 = vmatmul.mubr.f32.gmra.mrb[0].mxu0 %v3340
        %v3553 = vpop.f32.mrb[0].mxu0
        %v3554 = vadd.f32 %v3286, %v3553
        %v3555 = vpop.f32.mrb[0].mxu0
        %3556 = vmatprep.mubr.f32.mxu0 0.0
        %3557 = vmatmul.mubr.f32.gmra.mrb[0].mxu0 %v3343
        %v3558 = vpop.f32.mrb[0].mxu0
        %v3559 = vadd.f32 %v3287, %v3558
        %v3560 = vpop.f32.mrb[0].mxu0
        %3561 = vmatprep.mubr.f32.mxu0 0.0
        %3562 = vmatmul.mubr.f32.gmra.mrb[0].mxu0 %v3346
        %v3563 = vpop.f32.mrb[0].mxu0
        %v3564 = vadd.f32 %v3288, %v3563
        %v3565 = vpop.f32.mrb[0].mxu0
        %3566 = vmatprep.mubr.f32.mxu0 0.0
        %3567 = vmatmul.mubr.f32.gmra.mrb[0].mxu0 %v3349
        %v3568 = vpop.f32.mrb[0].mxu0
        %v3569 = vadd.f32 %v3289, %v3568
        %v3570 = vpop.f32.mrb[0].mxu0
        %3571 = vmatprep.mubr.f32.mxu0 0.0
        %3572 = vmatmul.mubr.f32.gmra.mrb[0].mxu0 %v3352
        %v3573 = vpop.f32.mrb[0].mxu0
        %v3574 = vadd.f32 %v3290, %v3573
        %v3575 = vpop.f32.mrb[0].mxu0
        %3576 = vmatprep.mubr.f32.mxu0 0.0
        %3577 = vmatmul.mubr.f32.gmra.mrb[0].mxu0 %v3355
        %v3578 = vpop.f32.mrb[0].mxu0
        %v3579 = vadd.f32 %v3291, %v3578
        %v3580 = vpop.f32.mrb[0].mxu0
        %3581 = vmatprep.mubr.f32.mxu0 0.0
        %3582 = vmatmul.mubr.f32.gmra.mrb[0].mxu0 %v3358
        %v3583 = vpop.f32.mrb[0].mxu0
        %v3584 = vadd.f32 %v3292, %v3583
        %v3585 = vpop.f32.mrb[0].mxu0
        %3586 = vmatprep.mubr.f32.mxu0 0.0
        %3587 = vmatmul.mubr.f32.gmra.mrb[0].mxu0 %v3361
        %v3588 = vpop.f32.mrb[0].mxu0
        %v3589 = vadd.f32 %v3293, %v3588
        %v3590 = vpop.f32.mrb[0].mxu0
        %3591 = vmatprep.mubr.f32.mxu0 0.0
        %3592 = vmatmul.mubr.f32.gmra.mrb[0].mxu0 %v3364
        %v3593 = vpop.f32.mrb[0].mxu0
        %v3594 = vadd.f32 %v3294, %v3593
        %v3595 = vpop.f32.mrb[0].mxu0
        %3596 = vmatprep.mubr.f32.mxu0 0.0
        %3597 = vmatmul.mubr.f32.gmra.mrb[0].mxu0 %v3367
        %v3598 = vpop.f32.mrb[0].mxu0
        %v3599 = vadd.f32 %v3295, %v3598
        %v3600 = vpop.f32.mrb[0].mxu0
        %3601 = vmatprep.mubr.f32.mxu0 0.0
        %3602 = vmatmul.mubr.f32.gmra.mrb[0].mxu0 %v3370
        %v3603 = vpop.f32.mrb[0].mxu0
        %v3604 = vadd.f32 %v3296, %v3603
        %v3605 = vpop.f32.mrb[0].mxu0
        %3606 = vmatprep.mubr.f32.mxu0 0.0
        %3607 = vmatmul.mubr.f32.gmra.mrb[0].mxu0 %v3373
        %v3608 = vpop.f32.mrb[0].mxu0
        %v3609 = vadd.f32 %v3297, %v3608
        %v3610 = vpop.f32.mrb[0].mxu0
        %3611 = vmatprep.mubr.f32.mxu0 0.0
        %3612 = vmatmul.mubr.f32.gmra.mrb[0].mxu0 %v3376
        %v3613 = vpop.f32.mrb[0].mxu0
        %v3614 = vadd.f32 %v3298, %v3613
        %v3615 = vpop.f32.mrb[0].mxu0
        %3616 = vmatprep.mubr.f32.mxu0 0.0
        %3617 = vmatmul.mubr.f32.gmra.mrb[0].mxu0 %v3379
        %v3618 = vpop.f32.mrb[0].mxu0
        %v3619 = vadd.f32 %v3299, %v3618
        %v3620 = vpop.f32.mrb[0].mxu0
        %3621 = vmatprep.mubr.f32.mxu0 0.0
        %3622 = vmatmul.mubr.f32.gmra.mrb[0].mxu0 %v3382
        %v3623 = vpop.f32.mrb[0].mxu0
        %v3624 = vadd.f32 %v3300, %v3623
        %v3625 = vpop.f32.mrb[0].mxu0
        %3626 = vmatprep.mubr.f32.mxu0 0.0
        %3627 = vmatmul.mubr.f32.gmra.mrb[0].mxu0 %v3385
        %v3628 = vpop.f32.mrb[0].mxu0
        %v3629 = vadd.f32 %v3301, %v3628
        %v3630 = vpop.f32.mrb[0].mxu0
        %3631 = vmatprep.mubr.f32.mxu0 0.0
        %3632 = vmatmul.mubr.f32.gmra.mrb[0].mxu0 %v3388
        %v3633 = vpop.f32.mrb[0].mxu0
        %v3634 = vadd.f32 %v3302, %v3633
        %v3635 = vpop.f32.mrb[0].mxu0
        %3636 = vmatprep.mubr.f32.mxu0 0.0
        %3637 = vmatmul.mubr.f32.gmra.mrb[0].mxu0 %v3391
        %v3638 = vpop.f32.mrb[0].mxu0
        %v3639 = vadd.f32 %v3303, %v3638
        %v3640 = vpop.f32.mrb[0].mxu0
        %3641 = vmatprep.mubr.f32.mxu0 0.0
        %3642 = vmatmul.mubr.f32.gmra.mrb[0].mxu0 %v3394
        %v3643 = vpop.f32.mrb[0].mxu0
        %v3644 = vadd.f32 %v3304, %v3643
        %v3645 = vpop.f32.mrb[0].mxu0
        %3646 = vmatprep.mubr.f32.mxu0 0.0
        %3647 = vmatmul.mubr.f32.gmra.mrb[0].mxu0 %v3397
        %v3648 = vpop.f32.mrb[0].mxu0
        %v3649 = vadd.f32 %v3305, %v3648
        %v3650 = vpop.f32.mrb[0].mxu0
        %3651 = vmatprep.mubr.f32.mxu0 0.0
        %3652 = vmatmul.mubr.f32.gmra.mrb[0].mxu0 %v3400
        %v3653 = vpop.f32.mrb[0].mxu0
        %v3654 = vadd.f32 %v3306, %v3653
        %v3655 = vpop.f32.mrb[0].mxu0
        %3656 = vmatprep.mubr.f32.mxu0 0.0
        %3657 = vmatmul.mubr.f32.gmra.mrb[0].mxu0 %v3403
        %v3658 = vpop.f32.mrb[0].mxu0
        %v3659 = vadd.f32 %v3307, %v3658
        %v3660 = vpop.f32.mrb[0].mxu0
        %3661 = vmatprep.mubr.f32.mxu0 0.0
        %3662 = vmatmul.mubr.f32.gmra.mrb[0].mxu0 %v3406
        %v3663 = vpop.f32.mrb[0].mxu0
        %v3664 = vadd.f32 %v3308, %v3663
        %v3665 = vpop.f32.mrb[0].mxu0
        %3666 = vmatprep.mubr.f32.mxu0 0.0
        %3667 = vmatmul.mubr.f32.gmra.mrb[0].mxu0 %v3409
        %v3668 = vpop.f32.mrb[0].mxu0
        %v3669 = vadd.f32 %v3309, %v3668
        %v3670 = vpop.f32.mrb[0].mxu0
        %3671 = vmatprep.mubr.f32.mxu0 0.0
        %3672 = vmatmul.mubr.f32.gmra.mrb[0].mxu0 %v3412
        %v3673 = vpop.f32.mrb[0].mxu0
        %v3674 = vadd.f32 %v3310, %v3673
        %v3675 = vpop.f32.mrb[0].mxu0
        %3676 = vmatprep.mubr.f32.mxu0 0.0
        %3677 = vmatmul.mubr.f32.gmra.mrb[0].mxu0 %v3415
        %v3678 = vpop.f32.mrb[0].mxu0
        %v3679 = vadd.f32 %v3311, %v3678
        %v3680 = vpop.f32.mrb[0].mxu0
        %3681 = vmatprep.mubr.f32.mxu0 0.0
        %3682 = vmatmul.mubr.f32.gmra.mrb[0].mxu0 %v3418
        %v3683 = vpop.f32.mrb[0].mxu0
        %v3684 = vadd.f32 %v3312, %v3683
        %v3685 = vpop.f32.mrb[0].mxu0
        %3686 = vmatprep.mubr.f32.mxu0 0.0
        %3687 = vmatmul.mubr.f32.gmra.mrb[0].mxu0 %v3421
        %v3688 = vpop.f32.mrb[0].mxu0
        %v3689 = vadd.f32 %v3313, %v3688
        %v3690 = vpop.f32.mrb[0].mxu0
        %3691 = vmatprep.mubr.f32.mxu0 0.0
        %3692 = vmatmul.mubr.f32.gmra.mrb[0].mxu0 %v3424
        %v3693 = vpop.f32.mrb[0].mxu0
        %v3694 = vadd.f32 %v3314, %v3693
        %v3695 = vpop.f32.mrb[0].mxu0
        %3696 = vmatprep.mubr.f32.mxu0 0.0
        %3697 = vmatmul.mubr.f32.gmra.mrb[0].mxu0 %v3427
        %v3698 = vpop.f32.mrb[0].mxu0
        %v3699 = vadd.f32 %v3315, %v3698
        %v3700 = vpop.f32.mrb[0].mxu0
        %3701 = vmatprep.mubr.f32.mxu0 0.0
        %3702 = vmatmul.mubr.f32.gmra.mrb[0].mxu0 %v3430
        %v3703 = vpop.f32.mrb[0].mxu0
        %v3704 = vadd.f32 %v3316, %v3703
        %v3705 = vpop.f32.mrb[0].mxu0
        %3706 = vmatprep.mubr.f32.mxu0 0.0
        %3707 = vmatmul.mubr.f32.gmra.mrb[0].mxu0 %v3433
        %v3708 = vpop.f32.mrb[0].mxu0
        %v3709 = vadd.f32 %v3317, %v3708
        %v3710 = vpop.f32.mrb[0].mxu0
        %3711 = vmatprep.mubr.f32.mxu0 0.0
        %3712 = vmatmul.mubr.f32.gmra.mrb[0].mxu0 %v3436
        %v3713 = vpop.f32.mrb[0].mxu0
        %v3714 = vadd.f32 %v3318, %v3713
        %v3715 = vpop.f32.mrb[0].mxu0
        %3716 = vmatprep.mubr.f32.mxu0 0.0
        %3717 = vmatmul.mubr.f32.gmra.mrb[0].mxu0 %v3439
        %v3718 = vpop.f32.mrb[0].mxu0
        %v3719 = vadd.f32 %v3319, %v3718
        %v3720 = vpop.f32.mrb[0].mxu0
        %3721 = vmatprep.mubr.f32.mxu0 0.0
        %3722 = vmatmul.mubr.f32.gmra.mrb[0].mxu0 %v3442
        %v3723 = vpop.f32.mrb[0].mxu0
        %v3724 = vadd.f32 %v3320, %v3723
        %v3725 = vpop.f32.mrb[0].mxu0
        %3726 = vmatprep.mubr.f32.mxu0 0.0
        %3727 = vmatmul.mubr.f32.gmra.mrb[0].mxu0 %v3445
        %v3728 = vpop.f32.mrb[0].mxu0
        %v3729 = vadd.f32 %v3321, %v3728
        %v3730 = vpop.f32.mrb[0].mxu0
        %3731 = vmatprep.mubr.f32.mxu0 0.0
        %3732 = vmatmul.mubr.f32.gmra.mrb[0].mxu0 %v3448
        %v3733 = vpop.f32.mrb[0].mxu0
        %v3734 = vadd.f32 %v3322, %v3733
        %v3735 = vpop.f32.mrb[0].mxu0
        %3736 = vmatprep.mubr.f32.mxu0 0.0
        %3737 = vmatmul.mubr.f32.gmra.mrb[0].mxu0 %v3451
        %v3738 = vpop.f32.mrb[0].mxu0
        %v3739 = vadd.f32 %v3323, %v3738
        %v3740 = vpop.f32.mrb[0].mxu0
        %3741 = vmatprep.mubr.f32.mxu0 0.0
        %3742 = vmatmul.mubr.f32.gmra.mrb[0].mxu0 %v3454
        %v3743 = vpop.f32.mrb[0].mxu0
        %v3744 = vadd.f32 %v3324, %v3743
        %v3745 = vpop.f32.mrb[0].mxu0
        %3746 = vmatprep.mubr.f32.mxu0 0.0
        %3747 = vmatmul.mubr.f32.gmra.mrb[0].mxu0 %v3457
        %v3748 = vpop.f32.mrb[0].mxu0
        %v3749 = vadd.f32 %v3325, %v3748
        %v3750 = vpop.f32.mrb[0].mxu0
        %3751 = vmatprep.mubr.f32.mxu0 0.0
        %3752 = vmatmul.mubr.f32.gmra.mrb[0].mxu0 %v3460
        %v3753 = vpop.f32.mrb[0].mxu0
        %v3754 = vadd.f32 %v3326, %v3753
        %v3755 = vpop.f32.mrb[0].mxu0
        %3756 = vmatprep.mubr.f32.mxu0 0.0
        %3757 = vmatmul.mubr.f32.gmra.mrb[0].mxu0 %v3463
        %v3758 = vpop.f32.mrb[0].mxu0
        %v3759 = vadd.f32 %v3327, %v3758
        %v3760 = vpop.f32.mrb[0].mxu0
        %3761 = vmatprep.mubr.f32.mxu0 0.0
        %3762 = vmatmul.mubr.f32.gmra.mrb[0].mxu0 %v3466
        %v3763 = vpop.f32.mrb[0].mxu0
        %v3764 = vadd.f32 %v3328, %v3763
        %v3765 = vpop.f32.mrb[0].mxu0
        %3766 = vmatprep.mubr.f32.mxu0 0.0
        %3767 = vmatmul.mubr.f32.gmra.mrb[0].mxu0 %v3469
        %v3768 = vpop.f32.mrb[0].mxu0
        %v3769 = vadd.f32 %v3329, %v3768
        %v3770 = vpop.f32.mrb[0].mxu0
        %3771 = vmatprep.mubr.f32.mxu0 0.0
        %3772 = vmatmul.mubr.f32.gmra.mrb[0].mxu0 %v3472
        %v3773 = vpop.f32.mrb[0].mxu0
        %v3774 = vadd.f32 %v3330, %v3773
        %v3775 = vpop.f32.mrb[0].mxu0
        %3776 = vmatprep.mubr.f32.mxu0 0.0
        %3777 = vmatmul.mubr.f32.gmra.mrb[0].mxu0 %v3475
        %v3778 = vpop.f32.mrb[0].mxu0
        %v3779 = vadd.f32 %v3331, %v3778
        %v3780 = vpop.f32.mrb[0].mxu0
        %3781 = vdwg.mxu0
        %v3782 = vlaneseq
        %v3783 = vshrl.u32 %v3782, 7
        %v3784 = vsub.s32 1, %v3783
        %v3785 = vrot.slane %v691, %v3784
        %v3786 = vadd.f32 %v3544, %v3785
        %v3787 = vadd.f32 %v3549, %v3785
        %v3788 = vadd.f32 %v3554, %v3785
        %v3789 = vadd.f32 %v3559, %v3785
        %v3790 = vadd.f32 %v3564, %v3785
        %v3791 = vadd.f32 %v3569, %v3785
        %v3792 = vadd.f32 %v3574, %v3785
        %v3793 = vadd.f32 %v3579, %v3785
        %v3794 = vadd.f32 %v3584, %v3785
        %v3795 = vadd.f32 %v3589, %v3785
        %v3796 = vadd.f32 %v3594, %v3785
        %v3797 = vadd.f32 %v3599, %v3785
        %v3798 = vadd.f32 %v3604, %v3785
        %v3799 = vadd.f32 %v3609, %v3785
        %v3800 = vadd.f32 %v3614, %v3785
        %v3801 = vadd.f32 %v3619, %v3785
        %v3802 = vadd.f32 %v3624, %v3785
        %v3803 = vadd.f32 %v3629, %v3785
        %v3804 = vadd.f32 %v3634, %v3785
        %v3805 = vadd.f32 %v3639, %v3785
        %v3806 = vadd.f32 %v3644, %v3785
        %v3807 = vadd.f32 %v3649, %v3785
        %v3808 = vadd.f32 %v3654, %v3785
        %v3809 = vadd.f32 %v3659, %v3785
        %v3810 = vadd.f32 %v3664, %v3785
        %v3811 = vadd.f32 %v3669, %v3785
        %v3812 = vadd.f32 %v3674, %v3785
        %v3813 = vadd.f32 %v3679, %v3785
        %v3814 = vadd.f32 %v3684, %v3785
        %v3815 = vadd.f32 %v3689, %v3785
        %v3816 = vadd.f32 %v3694, %v3785
        %v3817 = vadd.f32 %v3699, %v3785
        %v3818 = vadd.f32 %v3704, %v3785
        %v3819 = vadd.f32 %v3709, %v3785
        %v3820 = vadd.f32 %v3714, %v3785
        %v3821 = vadd.f32 %v3719, %v3785
        %v3822 = vadd.f32 %v3724, %v3785
        %v3823 = vadd.f32 %v3729, %v3785
        %v3824 = vadd.f32 %v3734, %v3785
        %v3825 = vadd.f32 %v3739, %v3785
        %v3826 = vadd.f32 %v3744, %v3785
        %v3827 = vadd.f32 %v3749, %v3785
        %v3828 = vadd.f32 %v3754, %v3785
        %v3829 = vadd.f32 %v3759, %v3785
        %v3830 = vadd.f32 %v3764, %v3785
        %v3831 = vadd.f32 %v3769, %v3785
        %v3832 = vadd.f32 %v3774, %v3785
        %v3833 = vadd.f32 %v3779, %v3785
        %v3834 = vsel %vm1372, %v3786, 0.0
        %3835 = vadd.xlane.f32.xlu0 %v3834
        %v3836 = vpop.xlane.xlu0 %3835
        %v3837 = vsel %vm1372, %v3787, 0.0
        %3838 = vadd.xlane.f32.xlu0 %v3837
        %v3839 = vpop.xlane.xlu0 %3838
        %v3840 = vsel %vm1372, %v3788, 0.0
        %3841 = vadd.xlane.f32.xlu0 %v3840
        %v3842 = vpop.xlane.xlu0 %3841
        %v3843 = vsel %vm1372, %v3789, 0.0
        %3844 = vadd.xlane.f32.xlu0 %v3843
        %v3845 = vpop.xlane.xlu0 %3844
        %v3846 = vsel %vm1372, %v3790, 0.0
        %3847 = vadd.xlane.f32.xlu0 %v3846
        %v3848 = vpop.xlane.xlu0 %3847
        %v3849 = vsel %vm1372, %v3791, 0.0
        %3850 = vadd.xlane.f32.xlu0 %v3849
        %v3851 = vpop.xlane.xlu0 %3850
        %v3852 = vsel %vm1372, %v3792, 0.0
        %3853 = vadd.xlane.f32.xlu0 %v3852
        %v3854 = vpop.xlane.xlu0 %3853
        %v3855 = vsel %vm1372, %v3793, 0.0
        %3856 = vadd.xlane.f32.xlu0 %v3855
        %v3857 = vpop.xlane.xlu0 %3856
        %v3858 = vsel %vm1372, %v3794, 0.0
        %3859 = vadd.xlane.f32.xlu0 %v3858
        %v3860 = vpop.xlane.xlu0 %3859
        %v3861 = vsel %vm1372, %v3795, 0.0
        %3862 = vadd.xlane.f32.xlu0 %v3861
        %v3863 = vpop.xlane.xlu0 %3862
        %v3864 = vsel %vm1372, %v3796, 0.0
        %3865 = vadd.xlane.f32.xlu0 %v3864
        %v3866 = vpop.xlane.xlu0 %3865
        %v3867 = vsel %vm1372, %v3797, 0.0
        %3868 = vadd.xlane.f32.xlu0 %v3867
        %v3869 = vpop.xlane.xlu0 %3868
        %v3870 = vsel %vm1372, %v3798, 0.0
        %3871 = vadd.xlane.f32.xlu0 %v3870
        %v3872 = vpop.xlane.xlu0 %3871
        %v3873 = vsel %vm1372, %v3799, 0.0
        %3874 = vadd.xlane.f32.xlu0 %v3873
        %v3875 = vpop.xlane.xlu0 %3874
        %v3876 = vsel %vm1372, %v3800, 0.0
        %3877 = vadd.xlane.f32.xlu0 %v3876
        %v3878 = vpop.xlane.xlu0 %3877
        %v3879 = vsel %vm1372, %v3801, 0.0
        %3880 = vadd.xlane.f32.xlu0 %v3879
        %v3881 = vpop.xlane.xlu0 %3880
        %v3882 = vsel %vm1372, %v3802, 0.0
        %3883 = vadd.xlane.f32.xlu0 %v3882
        %v3884 = vpop.xlane.xlu0 %3883
        %v3885 = vsel %vm1372, %v3803, 0.0
        %3886 = vadd.xlane.f32.xlu0 %v3885
        %v3887 = vpop.xlane.xlu0 %3886
        %v3888 = vsel %vm1372, %v3804, 0.0
        %3889 = vadd.xlane.f32.xlu0 %v3888
        %v3890 = vpop.xlane.xlu0 %3889
        %v3891 = vsel %vm1372, %v3805, 0.0
        %3892 = vadd.xlane.f32.xlu0 %v3891
        %v3893 = vpop.xlane.xlu0 %3892
        %v3894 = vsel %vm1372, %v3806, 0.0
        %3895 = vadd.xlane.f32.xlu0 %v3894
        %v3896 = vpop.xlane.xlu0 %3895
        %v3897 = vsel %vm1372, %v3807, 0.0
        %3898 = vadd.xlane.f32.xlu0 %v3897
        %v3899 = vpop.xlane.xlu0 %3898
        %v3900 = vsel %vm1372, %v3808, 0.0
        %3901 = vadd.xlane.f32.xlu0 %v3900
        %v3902 = vpop.xlane.xlu0 %3901
        %v3903 = vsel %vm1372, %v3809, 0.0
        %3904 = vadd.xlane.f32.xlu0 %v3903
        %v3905 = vpop.xlane.xlu0 %3904
        %v3906 = vsel %vm1372, %v3810, 0.0
        %3907 = vadd.xlane.f32.xlu0 %v3906
        %v3908 = vpop.xlane.xlu0 %3907
        %v3909 = vsel %vm1372, %v3811, 0.0
        %3910 = vadd.xlane.f32.xlu0 %v3909
        %v3911 = vpop.xlane.xlu0 %3910
        %v3912 = vsel %vm1372, %v3812, 0.0
        %3913 = vadd.xlane.f32.xlu0 %v3912
        %v3914 = vpop.xlane.xlu0 %3913
        %v3915 = vsel %vm1372, %v3813, 0.0
        %3916 = vadd.xlane.f32.xlu0 %v3915
        %v3917 = vpop.xlane.xlu0 %3916
        %v3918 = vsel %vm1372, %v3814, 0.0
        %3919 = vadd.xlane.f32.xlu0 %v3918
        %v3920 = vpop.xlane.xlu0 %3919
        %v3921 = vsel %vm1372, %v3815, 0.0
        %3922 = vadd.xlane.f32.xlu0 %v3921
        %v3923 = vpop.xlane.xlu0 %3922
        %v3924 = vsel %vm1372, %v3816, 0.0
        %3925 = vadd.xlane.f32.xlu0 %v3924
        %v3926 = vpop.xlane.xlu0 %3925
        %v3927 = vsel %vm1372, %v3817, 0.0
        %3928 = vadd.xlane.f32.xlu0 %v3927
        %v3929 = vpop.xlane.xlu0 %3928
        %v3930 = vsel %vm1372, %v3818, 0.0
        %3931 = vadd.xlane.f32.xlu0 %v3930
        %v3932 = vpop.xlane.xlu0 %3931
        %v3933 = vsel %vm1372, %v3819, 0.0
        %3934 = vadd.xlane.f32.xlu0 %v3933
        %v3935 = vpop.xlane.xlu0 %3934
        %v3936 = vsel %vm1372, %v3820, 0.0
        %3937 = vadd.xlane.f32.xlu0 %v3936
        %v3938 = vpop.xlane.xlu0 %3937
        %v3939 = vsel %vm1372, %v3821, 0.0
        %3940 = vadd.xlane.f32.xlu0 %v3939
        %v3941 = vpop.xlane.xlu0 %3940
        %v3942 = vsel %vm1372, %v3822, 0.0
        %3943 = vadd.xlane.f32.xlu0 %v3942
        %v3944 = vpop.xlane.xlu0 %3943
        %v3945 = vsel %vm1372, %v3823, 0.0
        %3946 = vadd.xlane.f32.xlu0 %v3945
        %v3947 = vpop.xlane.xlu0 %3946
        %v3948 = vsel %vm1372, %v3824, 0.0
        %3949 = vadd.xlane.f32.xlu0 %v3948
        %v3950 = vpop.xlane.xlu0 %3949
        %v3951 = vsel %vm1372, %v3825, 0.0
        %3952 = vadd.xlane.f32.xlu0 %v3951
        %v3953 = vpop.xlane.xlu0 %3952
        %v3954 = vsel %vm1372, %v3826, 0.0
        %3955 = vadd.xlane.f32.xlu0 %v3954
        %v3956 = vpop.xlane.xlu0 %3955
        %v3957 = vsel %vm1372, %v3827, 0.0
        %3958 = vadd.xlane.f32.xlu0 %v3957
        %v3959 = vpop.xlane.xlu0 %3958
        %v3960 = vsel %vm1372, %v3828, 0.0
        %3961 = vadd.xlane.f32.xlu0 %v3960
        %v3962 = vpop.xlane.xlu0 %3961
        %v3963 = vsel %vm1372, %v3829, 0.0
        %3964 = vadd.xlane.f32.xlu0 %v3963
        %v3965 = vpop.xlane.xlu0 %3964
        %v3966 = vsel %vm1372, %v3830, 0.0
        %3967 = vadd.xlane.f32.xlu0 %v3966
        %v3968 = vpop.xlane.xlu0 %3967
        %v3969 = vsel %vm1372, %v3831, 0.0
        %3970 = vadd.xlane.f32.xlu0 %v3969
        %v3971 = vpop.xlane.xlu0 %3970
        %v3972 = vsel %vm1372, %v3832, 0.0
        %3973 = vadd.xlane.f32.xlu0 %v3972
        %v3974 = vpop.xlane.xlu0 %3973
        %v3975 = vsel %vm1372, %v3833, 0.0
        %3976 = vadd.xlane.f32.xlu0 %v3975
        %v3977 = vpop.xlane.xlu0 %3976
        %v3978 = vrcp.pop 32.0
        %v3979 = vmul.f32 %v3836, %v3978
        %v3980 = vmul.f32 %v3839, %v3978
        %v3981 = vmul.f32 %v3842, %v3978
        %v3982 = vmul.f32 %v3845, %v3978
        %v3983 = vmul.f32 %v3848, %v3978
        %v3984 = vmul.f32 %v3851, %v3978
        %v3985 = vmul.f32 %v3854, %v3978
        %v3986 = vmul.f32 %v3857, %v3978
        %v3987 = vmul.f32 %v3860, %v3978
        %v3988 = vmul.f32 %v3863, %v3978
        %v3989 = vmul.f32 %v3866, %v3978
        %v3990 = vmul.f32 %v3869, %v3978
        %v3991 = vmul.f32 %v3872, %v3978
        %v3992 = vmul.f32 %v3875, %v3978
        %v3993 = vmul.f32 %v3878, %v3978
        %v3994 = vmul.f32 %v3881, %v3978
        %v3995 = vmul.f32 %v3884, %v3978
        %v3996 = vmul.f32 %v3887, %v3978
        %v3997 = vmul.f32 %v3890, %v3978
        %v3998 = vmul.f32 %v3893, %v3978
        %v3999 = vmul.f32 %v3896, %v3978
        %v4000 = vmul.f32 %v3899, %v3978
        %v4001 = vmul.f32 %v3902, %v3978
        %v4002 = vmul.f32 %v3905, %v3978
        %v4003 = vmul.f32 %v3908, %v3978
        %v4004 = vmul.f32 %v3911, %v3978
        %v4005 = vmul.f32 %v3914, %v3978
        %v4006 = vmul.f32 %v3917, %v3978
        %v4007 = vmul.f32 %v3920, %v3978
        %v4008 = vmul.f32 %v3923, %v3978
        %v4009 = vmul.f32 %v3926, %v3978
        %v4010 = vmul.f32 %v3929, %v3978
        %v4011 = vmul.f32 %v3932, %v3978
        %v4012 = vmul.f32 %v3935, %v3978
        %v4013 = vmul.f32 %v3938, %v3978
        %v4014 = vmul.f32 %v3941, %v3978
        %v4015 = vmul.f32 %v3944, %v3978
        %v4016 = vmul.f32 %v3947, %v3978
        %v4017 = vmul.f32 %v3950, %v3978
        %v4018 = vmul.f32 %v3953, %v3978
        %v4019 = vmul.f32 %v3956, %v3978
        %v4020 = vmul.f32 %v3959, %v3978
        %v4021 = vmul.f32 %v3962, %v3978
        %v4022 = vmul.f32 %v3965, %v3978
        %v4023 = vmul.f32 %v3968, %v3978
        %v4024 = vmul.f32 %v3971, %v3978
        %v4025 = vmul.f32 %v3974, %v3978
        %v4026 = vmul.f32 %v3977, %v3978
        %v4027 = vsub.f32 %v3786, %v3979
        %v4028 = vsub.f32 %v3787, %v3980
        %v4029 = vsub.f32 %v3788, %v3981
        %v4030 = vsub.f32 %v3789, %v3982
        %v4031 = vsub.f32 %v3790, %v3983
        %v4032 = vsub.f32 %v3791, %v3984
        %v4033 = vsub.f32 %v3792, %v3985
        %v4034 = vsub.f32 %v3793, %v3986
        %v4035 = vsub.f32 %v3794, %v3987
        %v4036 = vsub.f32 %v3795, %v3988
        %v4037 = vsub.f32 %v3796, %v3989
        %v4038 = vsub.f32 %v3797, %v3990
        %v4039 = vsub.f32 %v3798, %v3991
        %v4040 = vsub.f32 %v3799, %v3992
        %v4041 = vsub.f32 %v3800, %v3993
        %v4042 = vsub.f32 %v3801, %v3994
        %v4043 = vsub.f32 %v3802, %v3995
        %v4044 = vsub.f32 %v3803, %v3996
        %v4045 = vsub.f32 %v3804, %v3997
        %v4046 = vsub.f32 %v3805, %v3998
        %v4047 = vsub.f32 %v3806, %v3999
        %v4048 = vsub.f32 %v3807, %v4000
        %v4049 = vsub.f32 %v3808, %v4001
        %v4050 = vsub.f32 %v3809, %v4002
        %v4051 = vsub.f32 %v3810, %v4003
        %v4052 = vsub.f32 %v3811, %v4004
        %v4053 = vsub.f32 %v3812, %v4005
        %v4054 = vsub.f32 %v3813, %v4006
        %v4055 = vsub.f32 %v3814, %v4007
        %v4056 = vsub.f32 %v3815, %v4008
        %v4057 = vsub.f32 %v3816, %v4009
        %v4058 = vsub.f32 %v3817, %v4010
        %v4059 = vsub.f32 %v3818, %v4011
        %v4060 = vsub.f32 %v3819, %v4012
        %v4061 = vsub.f32 %v3820, %v4013
        %v4062 = vsub.f32 %v3821, %v4014
        %v4063 = vsub.f32 %v3822, %v4015
        %v4064 = vsub.f32 %v3823, %v4016
        %v4065 = vsub.f32 %v3824, %v4017
        %v4066 = vsub.f32 %v3825, %v4018
        %v4067 = vsub.f32 %v3826, %v4019
        %v4068 = vsub.f32 %v3827, %v4020
        %v4069 = vsub.f32 %v3828, %v4021
        %v4070 = vsub.f32 %v3829, %v4022
        %v4071 = vsub.f32 %v3830, %v4023
        %v4072 = vsub.f32 %v3831, %v4024
        %v4073 = vsub.f32 %v3832, %v4025
        %v4074 = vsub.f32 %v3833, %v4026
        %v4075 = vmul.f32 %v4027, %v4027
        %v4076 = vmul.f32 %v4028, %v4028
        %v4077 = vmul.f32 %v4029, %v4029
        %v4078 = vmul.f32 %v4030, %v4030
        %v4079 = vmul.f32 %v4031, %v4031
        %v4080 = vmul.f32 %v4032, %v4032
        %v4081 = vmul.f32 %v4033, %v4033
        %v4082 = vmul.f32 %v4034, %v4034
        %v4083 = vmul.f32 %v4035, %v4035
        %v4084 = vmul.f32 %v4036, %v4036
        %v4085 = vmul.f32 %v4037, %v4037
        %v4086 = vmul.f32 %v4038, %v4038
        %v4087 = vmul.f32 %v4039, %v4039
        %v4088 = vmul.f32 %v4040, %v4040
        %v4089 = vmul.f32 %v4041, %v4041
        %v4090 = vmul.f32 %v4042, %v4042
        %v4091 = vmul.f32 %v4043, %v4043
        %v4092 = vmul.f32 %v4044, %v4044
        %v4093 = vmul.f32 %v4045, %v4045
        %v4094 = vmul.f32 %v4046, %v4046
        %v4095 = vmul.f32 %v4047, %v4047
        %v4096 = vmul.f32 %v4048, %v4048
        %v4097 = vmul.f32 %v4049, %v4049
        %v4098 = vmul.f32 %v4050, %v4050
        %v4099 = vmul.f32 %v4051, %v4051
        %v4100 = vmul.f32 %v4052, %v4052
        %v4101 = vmul.f32 %v4053, %v4053
        %v4102 = vmul.f32 %v4054, %v4054
        %v4103 = vmul.f32 %v4055, %v4055
        %v4104 = vmul.f32 %v4056, %v4056
        %v4105 = vmul.f32 %v4057, %v4057
        %v4106 = vmul.f32 %v4058, %v4058
        %v4107 = vmul.f32 %v4059, %v4059
        %v4108 = vmul.f32 %v4060, %v4060
        %v4109 = vmul.f32 %v4061, %v4061
        %v4110 = vmul.f32 %v4062, %v4062
        %v4111 = vmul.f32 %v4063, %v4063
        %v4112 = vmul.f32 %v4064, %v4064
        %v4113 = vmul.f32 %v4065, %v4065
        %v4114 = vmul.f32 %v4066, %v4066
        %v4115 = vmul.f32 %v4067, %v4067
        %v4116 = vmul.f32 %v4068, %v4068
        %v4117 = vmul.f32 %v4069, %v4069
        %v4118 = vmul.f32 %v4070, %v4070
        %v4119 = vmul.f32 %v4071, %v4071
        %v4120 = vmul.f32 %v4072, %v4072
        %v4121 = vmul.f32 %v4073, %v4073
        %v4122 = vmul.f32 %v4074, %v4074
        %v4123 = vsel %vm1372, %v4075, 0.0
        %4124 = vadd.xlane.f32.xlu0 %v4123
        %v4125 = vpop.xlane.xlu0 %4124
        %v4126 = vsel %vm1372, %v4076, 0.0
        %4127 = vadd.xlane.f32.xlu0 %v4126
        %v4128 = vpop.xlane.xlu0 %4127
        %v4129 = vsel %vm1372, %v4077, 0.0
        %4130 = vadd.xlane.f32.xlu0 %v4129
        %v4131 = vpop.xlane.xlu0 %4130
        %v4132 = vsel %vm1372, %v4078, 0.0
        %4133 = vadd.xlane.f32.xlu0 %v4132
        %v4134 = vpop.xlane.xlu0 %4133
        %v4135 = vsel %vm1372, %v4079, 0.0
        %4136 = vadd.xlane.f32.xlu0 %v4135
        %v4137 = vpop.xlane.xlu0 %4136
        %v4138 = vsel %vm1372, %v4080, 0.0
        %4139 = vadd.xlane.f32.xlu0 %v4138
        %v4140 = vpop.xlane.xlu0 %4139
        %v4141 = vsel %vm1372, %v4081, 0.0
        %4142 = vadd.xlane.f32.xlu0 %v4141
        %v4143 = vpop.xlane.xlu0 %4142
        %v4144 = vsel %vm1372, %v4082, 0.0
        %4145 = vadd.xlane.f32.xlu0 %v4144
        %v4146 = vpop.xlane.xlu0 %4145
        %v4147 = vsel %vm1372, %v4083, 0.0
        %4148 = vadd.xlane.f32.xlu0 %v4147
        %v4149 = vpop.xlane.xlu0 %4148
        %v4150 = vsel %vm1372, %v4084, 0.0
        %4151 = vadd.xlane.f32.xlu0 %v4150
        %v4152 = vpop.xlane.xlu0 %4151
        %v4153 = vsel %vm1372, %v4085, 0.0
        %4154 = vadd.xlane.f32.xlu0 %v4153
        %v4155 = vpop.xlane.xlu0 %4154
        %v4156 = vsel %vm1372, %v4086, 0.0
        %4157 = vadd.xlane.f32.xlu0 %v4156
        %v4158 = vpop.xlane.xlu0 %4157
        %v4159 = vsel %vm1372, %v4087, 0.0
        %4160 = vadd.xlane.f32.xlu0 %v4159
        %v4161 = vpop.xlane.xlu0 %4160
        %v4162 = vsel %vm1372, %v4088, 0.0
        %4163 = vadd.xlane.f32.xlu0 %v4162
        %v4164 = vpop.xlane.xlu0 %4163
        %v4165 = vsel %vm1372, %v4089, 0.0
        %4166 = vadd.xlane.f32.xlu0 %v4165
        %v4167 = vpop.xlane.xlu0 %4166
        %v4168 = vsel %vm1372, %v4090, 0.0
        %4169 = vadd.xlane.f32.xlu0 %v4168
        %v4170 = vpop.xlane.xlu0 %4169
        %v4171 = vsel %vm1372, %v4091, 0.0
        %4172 = vadd.xlane.f32.xlu0 %v4171
        %v4173 = vpop.xlane.xlu0 %4172
        %v4174 = vsel %vm1372, %v4092, 0.0
        %4175 = vadd.xlane.f32.xlu0 %v4174
        %v4176 = vpop.xlane.xlu0 %4175
        %v4177 = vsel %vm1372, %v4093, 0.0
        %4178 = vadd.xlane.f32.xlu0 %v4177
        %v4179 = vpop.xlane.xlu0 %4178
        %v4180 = vsel %vm1372, %v4094, 0.0
        %4181 = vadd.xlane.f32.xlu0 %v4180
        %v4182 = vpop.xlane.xlu0 %4181
        %v4183 = vsel %vm1372, %v4095, 0.0
        %4184 = vadd.xlane.f32.xlu0 %v4183
        %v4185 = vpop.xlane.xlu0 %4184
        %v4186 = vsel %vm1372, %v4096, 0.0
        %4187 = vadd.xlane.f32.xlu0 %v4186
        %v4188 = vpop.xlane.xlu0 %4187
        %v4189 = vsel %vm1372, %v4097, 0.0
        %4190 = vadd.xlane.f32.xlu0 %v4189
        %v4191 = vpop.xlane.xlu0 %4190
        %v4192 = vsel %vm1372, %v4098, 0.0
        %4193 = vadd.xlane.f32.xlu0 %v4192
        %v4194 = vpop.xlane.xlu0 %4193
        %v4195 = vsel %vm1372, %v4099, 0.0
        %4196 = vadd.xlane.f32.xlu0 %v4195
        %v4197 = vpop.xlane.xlu0 %4196
        %v4198 = vsel %vm1372, %v4100, 0.0
        %4199 = vadd.xlane.f32.xlu0 %v4198
        %v4200 = vpop.xlane.xlu0 %4199
        %v4201 = vsel %vm1372, %v4101, 0.0
        %4202 = vadd.xlane.f32.xlu0 %v4201
        %v4203 = vpop.xlane.xlu0 %4202
        %v4204 = vsel %vm1372, %v4102, 0.0
        %4205 = vadd.xlane.f32.xlu0 %v4204
        %v4206 = vpop.xlane.xlu0 %4205
        %v4207 = vsel %vm1372, %v4103, 0.0
        %4208 = vadd.xlane.f32.xlu0 %v4207
        %v4209 = vpop.xlane.xlu0 %4208
        %v4210 = vsel %vm1372, %v4104, 0.0
        %4211 = vadd.xlane.f32.xlu0 %v4210
        %v4212 = vpop.xlane.xlu0 %4211
        %v4213 = vsel %vm1372, %v4105, 0.0
        %4214 = vadd.xlane.f32.xlu0 %v4213
        %v4215 = vpop.xlane.xlu0 %4214
        %v4216 = vsel %vm1372, %v4106, 0.0
        %4217 = vadd.xlane.f32.xlu0 %v4216
        %v4218 = vpop.xlane.xlu0 %4217
        %v4219 = vsel %vm1372, %v4107, 0.0
        %4220 = vadd.xlane.f32.xlu0 %v4219
        %v4221 = vpop.xlane.xlu0 %4220
        %v4222 = vsel %vm1372, %v4108, 0.0
        %4223 = vadd.xlane.f32.xlu0 %v4222
        %v4224 = vpop.xlane.xlu0 %4223
        %v4225 = vsel %vm1372, %v4109, 0.0
        %4226 = vadd.xlane.f32.xlu0 %v4225
        %v4227 = vpop.xlane.xlu0 %4226
        %v4228 = vsel %vm1372, %v4110, 0.0
        %4229 = vadd.xlane.f32.xlu0 %v4228
        %v4230 = vpop.xlane.xlu0 %4229
        %v4231 = vsel %vm1372, %v4111, 0.0
        %4232 = vadd.xlane.f32.xlu0 %v4231
        %v4233 = vpop.xlane.xlu0 %4232
        %v4234 = vsel %vm1372, %v4112, 0.0
        %4235 = vadd.xlane.f32.xlu0 %v4234
        %v4236 = vpop.xlane.xlu0 %4235
        %v4237 = vsel %vm1372, %v4113, 0.0
        %4238 = vadd.xlane.f32.xlu0 %v4237
        %v4239 = vpop.xlane.xlu0 %4238
        %v4240 = vsel %vm1372, %v4114, 0.0
        %4241 = vadd.xlane.f32.xlu0 %v4240
        %v4242 = vpop.xlane.xlu0 %4241
        %v4243 = vsel %vm1372, %v4115, 0.0
        %4244 = vadd.xlane.f32.xlu0 %v4243
        %v4245 = vpop.xlane.xlu0 %4244
        %v4246 = vsel %vm1372, %v4116, 0.0
        %4247 = vadd.xlane.f32.xlu0 %v4246
        %v4248 = vpop.xlane.xlu0 %4247
        %v4249 = vsel %vm1372, %v4117, 0.0
        %4250 = vadd.xlane.f32.xlu0 %v4249
        %v4251 = vpop.xlane.xlu0 %4250
        %v4252 = vsel %vm1372, %v4118, 0.0
        %4253 = vadd.xlane.f32.xlu0 %v4252
        %v4254 = vpop.xlane.xlu0 %4253
        %v4255 = vsel %vm1372, %v4119, 0.0
        %4256 = vadd.xlane.f32.xlu0 %v4255
        %v4257 = vpop.xlane.xlu0 %4256
        %v4258 = vsel %vm1372, %v4120, 0.0
        %4259 = vadd.xlane.f32.xlu0 %v4258
        %v4260 = vpop.xlane.xlu0 %4259
        %v4261 = vsel %vm1372, %v4121, 0.0
        %4262 = vadd.xlane.f32.xlu0 %v4261
        %v4263 = vpop.xlane.xlu0 %4262
        %v4264 = vsel %vm1372, %v4122, 0.0
        %4265 = vadd.xlane.f32.xlu0 %v4264
        %v4266 = vpop.xlane.xlu0 %4265
        %v4267 = vmul.f32 %v4125, %v3978
        %v4268 = vmul.f32 %v4128, %v3978
        %v4269 = vmul.f32 %v4131, %v3978
        %v4270 = vmul.f32 %v4134, %v3978
        %v4271 = vmul.f32 %v4137, %v3978
        %v4272 = vmul.f32 %v4140, %v3978
        %v4273 = vmul.f32 %v4143, %v3978
        %v4274 = vmul.f32 %v4146, %v3978
        %v4275 = vmul.f32 %v4149, %v3978
        %v4276 = vmul.f32 %v4152, %v3978
        %v4277 = vmul.f32 %v4155, %v3978
        %v4278 = vmul.f32 %v4158, %v3978
        %v4279 = vmul.f32 %v4161, %v3978
        %v4280 = vmul.f32 %v4164, %v3978
        %v4281 = vmul.f32 %v4167, %v3978
        %v4282 = vmul.f32 %v4170, %v3978
        %v4283 = vmul.f32 %v4173, %v3978
        %v4284 = vmul.f32 %v4176, %v3978
        %v4285 = vmul.f32 %v4179, %v3978
        %v4286 = vmul.f32 %v4182, %v3978
        %v4287 = vmul.f32 %v4185, %v3978
        %v4288 = vmul.f32 %v4188, %v3978
        %v4289 = vmul.f32 %v4191, %v3978
        %v4290 = vmul.f32 %v4194, %v3978
        %v4291 = vmul.f32 %v4197, %v3978
        %v4292 = vmul.f32 %v4200, %v3978
        %v4293 = vmul.f32 %v4203, %v3978
        %v4294 = vmul.f32 %v4206, %v3978
        %v4295 = vmul.f32 %v4209, %v3978
        %v4296 = vmul.f32 %v4212, %v3978
        %v4297 = vmul.f32 %v4215, %v3978
        %v4298 = vmul.f32 %v4218, %v3978
        %v4299 = vmul.f32 %v4221, %v3978
        %v4300 = vmul.f32 %v4224, %v3978
        %v4301 = vmul.f32 %v4227, %v3978
        %v4302 = vmul.f32 %v4230, %v3978
        %v4303 = vmul.f32 %v4233, %v3978
        %v4304 = vmul.f32 %v4236, %v3978
        %v4305 = vmul.f32 %v4239, %v3978
        %v4306 = vmul.f32 %v4242, %v3978
        %v4307 = vmul.f32 %v4245, %v3978
        %v4308 = vmul.f32 %v4248, %v3978
        %v4309 = vmul.f32 %v4251, %v3978
        %v4310 = vmul.f32 %v4254, %v3978
        %v4311 = vmul.f32 %v4257, %v3978
        %v4312 = vmul.f32 %v4260, %v3978
        %v4313 = vmul.f32 %v4263, %v3978
        %v4314 = vmul.f32 %v4266, %v3978
        %v4315 = vadd.f32 %v4267, 1e-05
        %v4316 = vadd.f32 %v4268, 1e-05
        %v4317 = vadd.f32 %v4269, 1e-05
        %v4318 = vadd.f32 %v4270, 1e-05
        %v4319 = vadd.f32 %v4271, 1e-05
        %v4320 = vadd.f32 %v4272, 1e-05
        %v4321 = vadd.f32 %v4273, 1e-05
        %v4322 = vadd.f32 %v4274, 1e-05
        %v4323 = vadd.f32 %v4275, 1e-05
        %v4324 = vadd.f32 %v4276, 1e-05
        %v4325 = vadd.f32 %v4277, 1e-05
        %v4326 = vadd.f32 %v4278, 1e-05
        %v4327 = vadd.f32 %v4279, 1e-05
        %v4328 = vadd.f32 %v4280, 1e-05
        %v4329 = vadd.f32 %v4281, 1e-05
        %v4330 = vadd.f32 %v4282, 1e-05
        %v4331 = vadd.f32 %v4283, 1e-05
        %v4332 = vadd.f32 %v4284, 1e-05
        %v4333 = vadd.f32 %v4285, 1e-05
        %v4334 = vadd.f32 %v4286, 1e-05
        %v4335 = vadd.f32 %v4287, 1e-05
        %v4336 = vadd.f32 %v4288, 1e-05
        %v4337 = vadd.f32 %v4289, 1e-05
        %v4338 = vadd.f32 %v4290, 1e-05
        %v4339 = vadd.f32 %v4291, 1e-05
        %v4340 = vadd.f32 %v4292, 1e-05
        %v4341 = vadd.f32 %v4293, 1e-05
        %v4342 = vadd.f32 %v4294, 1e-05
        %v4343 = vadd.f32 %v4295, 1e-05
        %v4344 = vadd.f32 %v4296, 1e-05
        %v4345 = vadd.f32 %v4297, 1e-05
        %v4346 = vadd.f32 %v4298, 1e-05
        %v4347 = vadd.f32 %v4299, 1e-05
        %v4348 = vadd.f32 %v4300, 1e-05
        %v4349 = vadd.f32 %v4301, 1e-05
        %v4350 = vadd.f32 %v4302, 1e-05
        %v4351 = vadd.f32 %v4303, 1e-05
        %v4352 = vadd.f32 %v4304, 1e-05
        %v4353 = vadd.f32 %v4305, 1e-05
        %v4354 = vadd.f32 %v4306, 1e-05
        %v4355 = vadd.f32 %v4307, 1e-05
        %v4356 = vadd.f32 %v4308, 1e-05
        %v4357 = vadd.f32 %v4309, 1e-05
        %v4358 = vadd.f32 %v4310, 1e-05
        %v4359 = vadd.f32 %v4311, 1e-05
        %v4360 = vadd.f32 %v4312, 1e-05
        %v4361 = vadd.f32 %v4313, 1e-05
        %v4362 = vadd.f32 %v4314, 1e-05
        %v4363 = vrsqrt.pop %v4315
        %v4364 = vrsqrt.pop %v4316
        %v4365 = vrsqrt.pop %v4317
        %v4366 = vrsqrt.pop %v4318
        %v4367 = vrsqrt.pop %v4319
        %v4368 = vrsqrt.pop %v4320
        %v4369 = vrsqrt.pop %v4321
        %v4370 = vrsqrt.pop %v4322
        %v4371 = vrsqrt.pop %v4323
        %v4372 = vrsqrt.pop %v4324
        %v4373 = vrsqrt.pop %v4325
        %v4374 = vrsqrt.pop %v4326
        %v4375 = vrsqrt.pop %v4327
        %v4376 = vrsqrt.pop %v4328
        %v4377 = vrsqrt.pop %v4329
        %v4378 = vrsqrt.pop %v4330
        %v4379 = vrsqrt.pop %v4331
        %v4380 = vrsqrt.pop %v4332
        %v4381 = vrsqrt.pop %v4333
        %v4382 = vrsqrt.pop %v4334
        %v4383 = vrsqrt.pop %v4335
        %v4384 = vrsqrt.pop %v4336
        %v4385 = vrsqrt.pop %v4337
        %v4386 = vrsqrt.pop %v4338
        %v4387 = vrsqrt.pop %v4339
        %v4388 = vrsqrt.pop %v4340
        %v4389 = vrsqrt.pop %v4341
        %v4390 = vrsqrt.pop %v4342
        %v4391 = vrsqrt.pop %v4343
        %v4392 = vrsqrt.pop %v4344
        %v4393 = vrsqrt.pop %v4345
        %v4394 = vrsqrt.pop %v4346
        %v4395 = vrsqrt.pop %v4347
        %v4396 = vrsqrt.pop %v4348
        %v4397 = vrsqrt.pop %v4349
        %v4398 = vrsqrt.pop %v4350
        %v4399 = vrsqrt.pop %v4351
        %v4400 = vrsqrt.pop %v4352
        %v4401 = vrsqrt.pop %v4353
        %v4402 = vrsqrt.pop %v4354
        %v4403 = vrsqrt.pop %v4355
        %v4404 = vrsqrt.pop %v4356
        %v4405 = vrsqrt.pop %v4357
        %v4406 = vrsqrt.pop %v4358
        %v4407 = vrsqrt.pop %v4359
        %v4408 = vrsqrt.pop %v4360
        %v4409 = vrsqrt.pop %v4361
        %v4410 = vrsqrt.pop %v4362
        %v4411 = vmul.f32 %v4027, %v4363
        %v4412 = vmul.f32 %v4028, %v4364
        %v4413 = vmul.f32 %v4029, %v4365
        %v4414 = vmul.f32 %v4030, %v4366
        %v4415 = vmul.f32 %v4031, %v4367
        %v4416 = vmul.f32 %v4032, %v4368
        %v4417 = vmul.f32 %v4033, %v4369
        %v4418 = vmul.f32 %v4034, %v4370
        %v4419 = vmul.f32 %v4035, %v4371
        %v4420 = vmul.f32 %v4036, %v4372
        %v4421 = vmul.f32 %v4037, %v4373
        %v4422 = vmul.f32 %v4038, %v4374
        %v4423 = vmul.f32 %v4039, %v4375
        %v4424 = vmul.f32 %v4040, %v4376
        %v4425 = vmul.f32 %v4041, %v4377
        %v4426 = vmul.f32 %v4042, %v4378
        %v4427 = vmul.f32 %v4043, %v4379
        %v4428 = vmul.f32 %v4044, %v4380
        %v4429 = vmul.f32 %v4045, %v4381
        %v4430 = vmul.f32 %v4046, %v4382
        %v4431 = vmul.f32 %v4047, %v4383
        %v4432 = vmul.f32 %v4048, %v4384
        %v4433 = vmul.f32 %v4049, %v4385
        %v4434 = vmul.f32 %v4050, %v4386
        %v4435 = vmul.f32 %v4051, %v4387
        %v4436 = vmul.f32 %v4052, %v4388
        %v4437 = vmul.f32 %v4053, %v4389
        %v4438 = vmul.f32 %v4054, %v4390
        %v4439 = vmul.f32 %v4055, %v4391
        %v4440 = vmul.f32 %v4056, %v4392
        %v4441 = vmul.f32 %v4057, %v4393
        %v4442 = vmul.f32 %v4058, %v4394
        %v4443 = vmul.f32 %v4059, %v4395
        %v4444 = vmul.f32 %v4060, %v4396
        %v4445 = vmul.f32 %v4061, %v4397
        %v4446 = vmul.f32 %v4062, %v4398
        %v4447 = vmul.f32 %v4063, %v4399
        %v4448 = vmul.f32 %v4064, %v4400
        %v4449 = vmul.f32 %v4065, %v4401
        %v4450 = vmul.f32 %v4066, %v4402
        %v4451 = vmul.f32 %v4067, %v4403
        %v4452 = vmul.f32 %v4068, %v4404
        %v4453 = vmul.f32 %v4069, %v4405
        %v4454 = vmul.f32 %v4070, %v4406
        %v4455 = vmul.f32 %v4071, %v4407
        %v4456 = vmul.f32 %v4072, %v4408
        %v4457 = vmul.f32 %v4073, %v4409
        %v4458 = vmul.f32 %v4074, %v4410
        %v4459 = vlaneseq
        %v4460 = vshrl.u32 %v4459, 7
        %v4461 = vsub.s32 2, %v4460
        %v4462 = vrot.slane %v691, %v4461
        %v4463 = vmul.f32 %v4411, %v4462
        %v4464 = vmul.f32 %v4412, %v4462
        %v4465 = vmul.f32 %v4413, %v4462
        %v4466 = vmul.f32 %v4414, %v4462
        %v4467 = vmul.f32 %v4415, %v4462
        %v4468 = vmul.f32 %v4416, %v4462
        %v4469 = vmul.f32 %v4417, %v4462
        %v4470 = vmul.f32 %v4418, %v4462
        %v4471 = vmul.f32 %v4419, %v4462
        %v4472 = vmul.f32 %v4420, %v4462
        %v4473 = vmul.f32 %v4421, %v4462
        %v4474 = vmul.f32 %v4422, %v4462
        %v4475 = vmul.f32 %v4423, %v4462
        %v4476 = vmul.f32 %v4424, %v4462
        %v4477 = vmul.f32 %v4425, %v4462
        %v4478 = vmul.f32 %v4426, %v4462
        %v4479 = vmul.f32 %v4427, %v4462
        %v4480 = vmul.f32 %v4428, %v4462
        %v4481 = vmul.f32 %v4429, %v4462
        %v4482 = vmul.f32 %v4430, %v4462
        %v4483 = vmul.f32 %v4431, %v4462
        %v4484 = vmul.f32 %v4432, %v4462
        %v4485 = vmul.f32 %v4433, %v4462
        %v4486 = vmul.f32 %v4434, %v4462
        %v4487 = vmul.f32 %v4435, %v4462
        %v4488 = vmul.f32 %v4436, %v4462
        %v4489 = vmul.f32 %v4437, %v4462
        %v4490 = vmul.f32 %v4438, %v4462
        %v4491 = vmul.f32 %v4439, %v4462
        %v4492 = vmul.f32 %v4440, %v4462
        %v4493 = vmul.f32 %v4441, %v4462
        %v4494 = vmul.f32 %v4442, %v4462
        %v4495 = vmul.f32 %v4443, %v4462
        %v4496 = vmul.f32 %v4444, %v4462
        %v4497 = vmul.f32 %v4445, %v4462
        %v4498 = vmul.f32 %v4446, %v4462
        %v4499 = vmul.f32 %v4447, %v4462
        %v4500 = vmul.f32 %v4448, %v4462
        %v4501 = vmul.f32 %v4449, %v4462
        %v4502 = vmul.f32 %v4450, %v4462
        %v4503 = vmul.f32 %v4451, %v4462
        %v4504 = vmul.f32 %v4452, %v4462
        %v4505 = vmul.f32 %v4453, %v4462
        %v4506 = vmul.f32 %v4454, %v4462
        %v4507 = vmul.f32 %v4455, %v4462
        %v4508 = vmul.f32 %v4456, %v4462
        %v4509 = vmul.f32 %v4457, %v4462
        %v4510 = vmul.f32 %v4458, %v4462
        %v4511 = vlaneseq
        %v4512 = vshrl.u32 %v4511, 7
        %v4513 = vsub.s32 3, %v4512
        %v4514 = vrot.slane %v691, %v4513
        %v4515 = vadd.f32 %v4463, %v4514
        %v4516 = vadd.f32 %v4464, %v4514
        %v4517 = vadd.f32 %v4465, %v4514
        %v4518 = vadd.f32 %v4466, %v4514
        %v4519 = vadd.f32 %v4467, %v4514
        %v4520 = vadd.f32 %v4468, %v4514
        %v4521 = vadd.f32 %v4469, %v4514
        %v4522 = vadd.f32 %v4470, %v4514
        %v4523 = vadd.f32 %v4471, %v4514
        %v4524 = vadd.f32 %v4472, %v4514
        %v4525 = vadd.f32 %v4473, %v4514
        %v4526 = vadd.f32 %v4474, %v4514
        %v4527 = vadd.f32 %v4475, %v4514
        %v4528 = vadd.f32 %v4476, %v4514
        %v4529 = vadd.f32 %v4477, %v4514
        %v4530 = vadd.f32 %v4478, %v4514
        %v4531 = vadd.f32 %v4479, %v4514
        %v4532 = vadd.f32 %v4480, %v4514
        %v4533 = vadd.f32 %v4481, %v4514
        %v4534 = vadd.f32 %v4482, %v4514
        %v4535 = vadd.f32 %v4483, %v4514
        %v4536 = vadd.f32 %v4484, %v4514
        %v4537 = vadd.f32 %v4485, %v4514
        %v4538 = vadd.f32 %v4486, %v4514
        %v4539 = vadd.f32 %v4487, %v4514
        %v4540 = vadd.f32 %v4488, %v4514
        %v4541 = vadd.f32 %v4489, %v4514
        %v4542 = vadd.f32 %v4490, %v4514
        %v4543 = vadd.f32 %v4491, %v4514
        %v4544 = vadd.f32 %v4492, %v4514
        %v4545 = vadd.f32 %v4493, %v4514
        %v4546 = vadd.f32 %v4494, %v4514
        %v4547 = vadd.f32 %v4495, %v4514
        %v4548 = vadd.f32 %v4496, %v4514
        %v4549 = vadd.f32 %v4497, %v4514
        %v4550 = vadd.f32 %v4498, %v4514
        %v4551 = vadd.f32 %v4499, %v4514
        %v4552 = vadd.f32 %v4500, %v4514
        %v4553 = vadd.f32 %v4501, %v4514
        %v4554 = vadd.f32 %v4502, %v4514
        %v4555 = vadd.f32 %v4503, %v4514
        %v4556 = vadd.f32 %v4504, %v4514
        %v4557 = vadd.f32 %v4505, %v4514
        %v4558 = vadd.f32 %v4506, %v4514
        %v4559 = vadd.f32 %v4507, %v4514
        %v4560 = vadd.f32 %v4508, %v4514
        %v4561 = vadd.f32 %v4509, %v4514
        %v4562 = vadd.f32 %v4510, %v4514
        %v4563 = vmax.f32 %v4515, 0.0
        %v4564 = vmax.f32 %v4516, 0.0
        %v4565 = vmax.f32 %v4517, 0.0
        %v4566 = vmax.f32 %v4518, 0.0
        %v4567 = vmax.f32 %v4519, 0.0
        %v4568 = vmax.f32 %v4520, 0.0
        %v4569 = vmax.f32 %v4521, 0.0
        %v4570 = vmax.f32 %v4522, 0.0
        %v4571 = vmax.f32 %v4523, 0.0
        %v4572 = vmax.f32 %v4524, 0.0
        %v4573 = vmax.f32 %v4525, 0.0
        %v4574 = vmax.f32 %v4526, 0.0
        %v4575 = vmax.f32 %v4527, 0.0
        %v4576 = vmax.f32 %v4528, 0.0
        %v4577 = vmax.f32 %v4529, 0.0
        %v4578 = vmax.f32 %v4530, 0.0
        %v4579 = vmax.f32 %v4531, 0.0
        %v4580 = vmax.f32 %v4532, 0.0
        %v4581 = vmax.f32 %v4533, 0.0
        %v4582 = vmax.f32 %v4534, 0.0
        %v4583 = vmax.f32 %v4535, 0.0
        %v4584 = vmax.f32 %v4536, 0.0
        %v4585 = vmax.f32 %v4537, 0.0
        %v4586 = vmax.f32 %v4538, 0.0
        %v4587 = vmax.f32 %v4539, 0.0
        %v4588 = vmax.f32 %v4540, 0.0
        %v4589 = vmax.f32 %v4541, 0.0
        %v4590 = vmax.f32 %v4542, 0.0
        %v4591 = vmax.f32 %v4543, 0.0
        %v4592 = vmax.f32 %v4544, 0.0
        %v4593 = vmax.f32 %v4545, 0.0
        %v4594 = vmax.f32 %v4546, 0.0
        %v4595 = vmax.f32 %v4547, 0.0
        %v4596 = vmax.f32 %v4548, 0.0
        %v4597 = vmax.f32 %v4549, 0.0
        %v4598 = vmax.f32 %v4550, 0.0
        %v4599 = vmax.f32 %v4551, 0.0
        %v4600 = vmax.f32 %v4552, 0.0
        %v4601 = vmax.f32 %v4553, 0.0
        %v4602 = vmax.f32 %v4554, 0.0
        %v4603 = vmax.f32 %v4555, 0.0
        %v4604 = vmax.f32 %v4556, 0.0
        %v4605 = vmax.f32 %v4557, 0.0
        %v4606 = vmax.f32 %v4558, 0.0
        %v4607 = vmax.f32 %v4559, 0.0
        %v4608 = vmax.f32 %v4560, 0.0
        %v4609 = vmax.f32 %v4561, 0.0
        %v4610 = vmax.f32 %v4562, 0.0
        %v4611 = vlaneseq
        %v4612 = vshrl.u32 %v4611, 7
        %v4613 = vsub.s32 4, %v4612
        %v4614 = vrot.slane %v691, %v4613
        %v4616 = vsel %vm1372, %v4563, 0
        %v4619 = vsel %vm1372, %v4564, 0
        %v4622 = vsel %vm1372, %v4565, 0
        %v4625 = vsel %vm1372, %v4566, 0
        %v4628 = vsel %vm1372, %v4567, 0
        %v4631 = vsel %vm1372, %v4568, 0
        %v4634 = vsel %vm1372, %v4569, 0
        %v4637 = vsel %vm1372, %v4570, 0
        %v4640 = vsel %vm1372, %v4571, 0
        %v4643 = vsel %vm1372, %v4572, 0
        %v4646 = vsel %vm1372, %v4573, 0
        %v4649 = vsel %vm1372, %v4574, 0
        %v4652 = vsel %vm1372, %v4575, 0
        %v4655 = vsel %vm1372, %v4576, 0
        %v4658 = vsel %vm1372, %v4577, 0
        %v4661 = vsel %vm1372, %v4578, 0
        %v4664 = vsel %vm1372, %v4579, 0
        %v4667 = vsel %vm1372, %v4580, 0
        %v4670 = vsel %vm1372, %v4581, 0
        %v4673 = vsel %vm1372, %v4582, 0
        %v4676 = vsel %vm1372, %v4583, 0
        %v4679 = vsel %vm1372, %v4584, 0
        %v4682 = vsel %vm1372, %v4585, 0
        %v4685 = vsel %vm1372, %v4586, 0
        %v4688 = vsel %vm1372, %v4587, 0
        %v4691 = vsel %vm1372, %v4588, 0
        %v4694 = vsel %vm1372, %v4589, 0
        %v4697 = vsel %vm1372, %v4590, 0
        %v4700 = vsel %vm1372, %v4591, 0
        %v4703 = vsel %vm1372, %v4592, 0
        %v4706 = vsel %vm1372, %v4593, 0
        %v4709 = vsel %vm1372, %v4594, 0
        %v4712 = vsel %vm1372, %v4595, 0
        %v4715 = vsel %vm1372, %v4596, 0
        %v4718 = vsel %vm1372, %v4597, 0
        %v4721 = vsel %vm1372, %v4598, 0
        %v4724 = vsel %vm1372, %v4599, 0
        %v4727 = vsel %vm1372, %v4600, 0
        %v4730 = vsel %vm1372, %v4601, 0
        %v4733 = vsel %vm1372, %v4602, 0
        %v4736 = vsel %vm1372, %v4603, 0
        %v4739 = vsel %vm1372, %v4604, 0
        %v4742 = vsel %vm1372, %v4605, 0
        %v4745 = vsel %vm1372, %v4606, 0
        %v4748 = vsel %vm1372, %v4607, 0
        %v4751 = vsel %vm1372, %v4608, 0
        %v4754 = vsel %vm1372, %v4609, 0
        %v4757 = vsel %vm1372, %v4610, 0
        %4759 = vmatprep.subr.mxu0 0.0
        %4760 = vmatpush1.msra.mxu0 %v671
        %4761 = vmatprep.subr.mxu0 0.0
        %4762 = vmatpush1.msra.mxu0 %v672
        %4763 = vmatprep.subr.mxu0 0.0
        %4764 = vmatpush1.msra.mxu0 %v673
        %4765 = vmatprep.subr.mxu0 0.0
        %4766 = vmatpush1.msra.mxu0 %v674
        %4767 = vmatprep.subr.mxu0 0.0
        %4768 = vmatpush1.msra.mxu0 0.0
        %4769 = vmatprep.subr.mxu0 0.0
        %4770 = vmatpush1.msra.mxu0 0.0
        %4771 = vmatprep.subr.mxu0 0.0
        %4772 = vmatpush1.msra.mxu0 0.0
        %4773 = vmatprep.subr.mxu0 0.0
        %4774 = vmatpush1.msra.mxu0 0.0
        %4775 = vmatprep.subr.mxu0 0.0
        %4776 = vmatpush1.msra.mxu0 0.0
        %4777 = vmatprep.subr.mxu0 0.0
        %4778 = vmatpush1.msra.mxu0 0.0
        %4779 = vmatprep.subr.mxu0 0.0
        %4780 = vmatpush1.msra.mxu0 0.0
        %4781 = vmatprep.subr.mxu0 0.0
        %4782 = vmatpush1.msra.mxu0 0.0
        %4783 = vmatprep.subr.mxu0 0.0
        %4784 = vmatpush1.msra.mxu0 0.0
        %4785 = vmatprep.subr.mxu0 0.0
        %4786 = vmatpush1.msra.mxu0 0.0
        %4787 = vmatprep.subr.mxu0 0.0
        %4788 = vmatpush1.msra.mxu0 0.0
        %4789 = vmatprep.subr.mxu0 0.0
        %4790 = vmatpush1.msra.mxu0 0.0
        %4791 = vmatprep.subr.mxu0 0.0
        %4792 = vmatpush1.msra.mxu0 0.0
        %4793 = vmatprep.subr.mxu0 0.0
        %4794 = vmatpush1.msra.mxu0 0.0
        %4795 = vmatprep.subr.mxu0 0.0
        %4796 = vmatpush1.msra.mxu0 0.0
        %4797 = vmatprep.subr.mxu0 0.0
        %4798 = vmatpush1.msra.mxu0 0.0
        %4799 = vmatprep.subr.mxu0 0.0
        %4800 = vmatpush1.msra.mxu0 0.0
        %4801 = vmatprep.subr.mxu0 0.0
        %4802 = vmatpush1.msra.mxu0 0.0
        %4803 = vmatprep.subr.mxu0 0.0
        %4804 = vmatpush1.msra.mxu0 0.0
        %4805 = vmatprep.subr.mxu0 0.0
        %4806 = vmatpush1.msra.mxu0 0.0
        %4807 = vmatprep.subr.mxu0 0.0
        %4808 = vmatpush1.msra.mxu0 0.0
        %4809 = vmatprep.subr.mxu0 0.0
        %4810 = vmatpush1.msra.mxu0 0.0
        %4811 = vmatprep.subr.mxu0 0.0
        %4812 = vmatpush1.msra.mxu0 0.0
        %4813 = vmatprep.subr.mxu0 0.0
        %4814 = vmatpush1.msra.mxu0 0.0
        %4815 = vmatprep.subr.mxu0 0.0
        %4816 = vmatpush1.msra.mxu0 0.0
        %4817 = vmatprep.subr.mxu0 0.0
        %4818 = vmatpush1.msra.mxu0 0.0
        %4819 = vmatprep.subr.mxu0 0.0
        %4820 = vmatpush1.msra.mxu0 0.0
        %4821 = vmatprep.subr.mxu0 0.0
        %4822 = vmatpush1.msra.mxu0 0.0
        %4823 = vmatprep.mubr.f32.mxu0 0.0
        %4824 = vmatmul.mubr.f32.gmra.mrb[0].mxu0 %v4616
        %v4825 = vpop.f32.mrb[0].mxu0
        %v4826 = vadd.f32 %v4614, %v4825
        %v4827 = vpop.f32.mrb[0].mxu0
        %4828 = vmatprep.mubr.f32.mxu0 0.0
        %4829 = vmatmul.mubr.f32.gmra.mrb[0].mxu0 %v4619
        %v4830 = vpop.f32.mrb[0].mxu0
        %v4831 = vadd.f32 %v4614, %v4830
        %v4832 = vpop.f32.mrb[0].mxu0
        %4833 = vmatprep.mubr.f32.mxu0 0.0
        %4834 = vmatmul.mubr.f32.gmra.mrb[0].mxu0 %v4622
        %v4835 = vpop.f32.mrb[0].mxu0
        %v4836 = vadd.f32 %v4614, %v4835
        %v4837 = vpop.f32.mrb[0].mxu0
        %4838 = vmatprep.mubr.f32.mxu0 0.0
        %4839 = vmatmul.mubr.f32.gmra.mrb[0].mxu0 %v4625
        %v4840 = vpop.f32.mrb[0].mxu0
        %v4841 = vadd.f32 %v4614, %v4840
        %v4842 = vpop.f32.mrb[0].mxu0
        %4843 = vmatprep.mubr.f32.mxu0 0.0
        %4844 = vmatmul.mubr.f32.gmra.mrb[0].mxu0 %v4628
        %v4845 = vpop.f32.mrb[0].mxu0
        %v4846 = vadd.f32 %v4614, %v4845
        %v4847 = vpop.f32.mrb[0].mxu0
        %4848 = vmatprep.mubr.f32.mxu0 0.0
        %4849 = vmatmul.mubr.f32.gmra.mrb[0].mxu0 %v4631
        %v4850 = vpop.f32.mrb[0].mxu0
        %v4851 = vadd.f32 %v4614, %v4850
        %v4852 = vpop.f32.mrb[0].mxu0
        %4853 = vmatprep.mubr.f32.mxu0 0.0
        %4854 = vmatmul.mubr.f32.gmra.mrb[0].mxu0 %v4634
        %v4855 = vpop.f32.mrb[0].mxu0
        %v4856 = vadd.f32 %v4614, %v4855
        %v4857 = vpop.f32.mrb[0].mxu0
        %4858 = vmatprep.mubr.f32.mxu0 0.0
        %4859 = vmatmul.mubr.f32.gmra.mrb[0].mxu0 %v4637
        %v4860 = vpop.f32.mrb[0].mxu0
        %v4861 = vadd.f32 %v4614, %v4860
        %v4862 = vpop.f32.mrb[0].mxu0
        %4863 = vmatprep.mubr.f32.mxu0 0.0
        %4864 = vmatmul.mubr.f32.gmra.mrb[0].mxu0 %v4640
        %v4865 = vpop.f32.mrb[0].mxu0
        %v4866 = vadd.f32 %v4614, %v4865
        %v4867 = vpop.f32.mrb[0].mxu0
        %4868 = vmatprep.mubr.f32.mxu0 0.0
        %4869 = vmatmul.mubr.f32.gmra.mrb[0].mxu0 %v4643
        %v4870 = vpop.f32.mrb[0].mxu0
        %v4871 = vadd.f32 %v4614, %v4870
        %v4872 = vpop.f32.mrb[0].mxu0
        %4873 = vmatprep.mubr.f32.mxu0 0.0
        %4874 = vmatmul.mubr.f32.gmra.mrb[0].mxu0 %v4646
        %v4875 = vpop.f32.mrb[0].mxu0
        %v4876 = vadd.f32 %v4614, %v4875
        %v4877 = vpop.f32.mrb[0].mxu0
        %4878 = vmatprep.mubr.f32.mxu0 0.0
        %4879 = vmatmul.mubr.f32.gmra.mrb[0].mxu0 %v4649
        %v4880 = vpop.f32.mrb[0].mxu0
        %v4881 = vadd.f32 %v4614, %v4880
        %v4882 = vpop.f32.mrb[0].mxu0
        %4883 = vmatprep.mubr.f32.mxu0 0.0
        %4884 = vmatmul.mubr.f32.gmra.mrb[0].mxu0 %v4652
        %v4885 = vpop.f32.mrb[0].mxu0
        %v4886 = vadd.f32 %v4614, %v4885
        %v4887 = vpop.f32.mrb[0].mxu0
        %4888 = vmatprep.mubr.f32.mxu0 0.0
        %4889 = vmatmul.mubr.f32.gmra.mrb[0].mxu0 %v4655
        %v4890 = vpop.f32.mrb[0].mxu0
        %v4891 = vadd.f32 %v4614, %v4890
        %v4892 = vpop.f32.mrb[0].mxu0
        %4893 = vmatprep.mubr.f32.mxu0 0.0
        %4894 = vmatmul.mubr.f32.gmra.mrb[0].mxu0 %v4658
        %v4895 = vpop.f32.mrb[0].mxu0
        %v4896 = vadd.f32 %v4614, %v4895
        %v4897 = vpop.f32.mrb[0].mxu0
        %4898 = vmatprep.mubr.f32.mxu0 0.0
        %4899 = vmatmul.mubr.f32.gmra.mrb[0].mxu0 %v4661
        %v4900 = vpop.f32.mrb[0].mxu0
        %v4901 = vadd.f32 %v4614, %v4900
        %v4902 = vpop.f32.mrb[0].mxu0
        %4903 = vmatprep.mubr.f32.mxu0 0.0
        %4904 = vmatmul.mubr.f32.gmra.mrb[0].mxu0 %v4664
        %v4905 = vpop.f32.mrb[0].mxu0
        %v4906 = vadd.f32 %v4614, %v4905
        %v4907 = vpop.f32.mrb[0].mxu0
        %4908 = vmatprep.mubr.f32.mxu0 0.0
        %4909 = vmatmul.mubr.f32.gmra.mrb[0].mxu0 %v4667
        %v4910 = vpop.f32.mrb[0].mxu0
        %v4911 = vadd.f32 %v4614, %v4910
        %v4912 = vpop.f32.mrb[0].mxu0
        %4913 = vmatprep.mubr.f32.mxu0 0.0
        %4914 = vmatmul.mubr.f32.gmra.mrb[0].mxu0 %v4670
        %v4915 = vpop.f32.mrb[0].mxu0
        %v4916 = vadd.f32 %v4614, %v4915
        %v4917 = vpop.f32.mrb[0].mxu0
        %4918 = vmatprep.mubr.f32.mxu0 0.0
        %4919 = vmatmul.mubr.f32.gmra.mrb[0].mxu0 %v4673
        %v4920 = vpop.f32.mrb[0].mxu0
        %v4921 = vadd.f32 %v4614, %v4920
        %v4922 = vpop.f32.mrb[0].mxu0
        %4923 = vmatprep.mubr.f32.mxu0 0.0
        %4924 = vmatmul.mubr.f32.gmra.mrb[0].mxu0 %v4676
        %v4925 = vpop.f32.mrb[0].mxu0
        %v4926 = vadd.f32 %v4614, %v4925
        %v4927 = vpop.f32.mrb[0].mxu0
        %4928 = vmatprep.mubr.f32.mxu0 0.0
        %4929 = vmatmul.mubr.f32.gmra.mrb[0].mxu0 %v4679
        %v4930 = vpop.f32.mrb[0].mxu0
        %v4931 = vadd.f32 %v4614, %v4930
        %v4932 = vpop.f32.mrb[0].mxu0
        %4933 = vmatprep.mubr.f32.mxu0 0.0
        %4934 = vmatmul.mubr.f32.gmra.mrb[0].mxu0 %v4682
        %v4935 = vpop.f32.mrb[0].mxu0
        %v4936 = vadd.f32 %v4614, %v4935
        %v4937 = vpop.f32.mrb[0].mxu0
        %4938 = vmatprep.mubr.f32.mxu0 0.0
        %4939 = vmatmul.mubr.f32.gmra.mrb[0].mxu0 %v4685
        %v4940 = vpop.f32.mrb[0].mxu0
        %v4941 = vadd.f32 %v4614, %v4940
        %v4942 = vpop.f32.mrb[0].mxu0
        %4943 = vmatprep.mubr.f32.mxu0 0.0
        %4944 = vmatmul.mubr.f32.gmra.mrb[0].mxu0 %v4688
        %v4945 = vpop.f32.mrb[0].mxu0
        %v4946 = vadd.f32 %v4614, %v4945
        %v4947 = vpop.f32.mrb[0].mxu0
        %4948 = vmatprep.mubr.f32.mxu0 0.0
        %4949 = vmatmul.mubr.f32.gmra.mrb[0].mxu0 %v4691
        %v4950 = vpop.f32.mrb[0].mxu0
        %v4951 = vadd.f32 %v4614, %v4950
        %v4952 = vpop.f32.mrb[0].mxu0
        %4953 = vmatprep.mubr.f32.mxu0 0.0
        %4954 = vmatmul.mubr.f32.gmra.mrb[0].mxu0 %v4694
        %v4955 = vpop.f32.mrb[0].mxu0
        %v4956 = vadd.f32 %v4614, %v4955
        %v4957 = vpop.f32.mrb[0].mxu0
        %4958 = vmatprep.mubr.f32.mxu0 0.0
        %4959 = vmatmul.mubr.f32.gmra.mrb[0].mxu0 %v4697
        %v4960 = vpop.f32.mrb[0].mxu0
        %v4961 = vadd.f32 %v4614, %v4960
        %v4962 = vpop.f32.mrb[0].mxu0
        %4963 = vmatprep.mubr.f32.mxu0 0.0
        %4964 = vmatmul.mubr.f32.gmra.mrb[0].mxu0 %v4700
        %v4965 = vpop.f32.mrb[0].mxu0
        %v4966 = vadd.f32 %v4614, %v4965
        %v4967 = vpop.f32.mrb[0].mxu0
        %4968 = vmatprep.mubr.f32.mxu0 0.0
        %4969 = vmatmul.mubr.f32.gmra.mrb[0].mxu0 %v4703
        %v4970 = vpop.f32.mrb[0].mxu0
        %v4971 = vadd.f32 %v4614, %v4970
        %v4972 = vpop.f32.mrb[0].mxu0
        %4973 = vmatprep.mubr.f32.mxu0 0.0
        %4974 = vmatmul.mubr.f32.gmra.mrb[0].mxu0 %v4706
        %v4975 = vpop.f32.mrb[0].mxu0
        %v4976 = vadd.f32 %v4614, %v4975
        %v4977 = vpop.f32.mrb[0].mxu0
        %4978 = vmatprep.mubr.f32.mxu0 0.0
        %4979 = vmatmul.mubr.f32.gmra.mrb[0].mxu0 %v4709
        %v4980 = vpop.f32.mrb[0].mxu0
        %v4981 = vadd.f32 %v4614, %v4980
        %v4982 = vpop.f32.mrb[0].mxu0
        %4983 = vmatprep.mubr.f32.mxu0 0.0
        %4984 = vmatmul.mubr.f32.gmra.mrb[0].mxu0 %v4712
        %v4985 = vpop.f32.mrb[0].mxu0
        %v4986 = vadd.f32 %v4614, %v4985
        %v4987 = vpop.f32.mrb[0].mxu0
        %4988 = vmatprep.mubr.f32.mxu0 0.0
        %4989 = vmatmul.mubr.f32.gmra.mrb[0].mxu0 %v4715
        %v4990 = vpop.f32.mrb[0].mxu0
        %v4991 = vadd.f32 %v4614, %v4990
        %v4992 = vpop.f32.mrb[0].mxu0
        %4993 = vmatprep.mubr.f32.mxu0 0.0
        %4994 = vmatmul.mubr.f32.gmra.mrb[0].mxu0 %v4718
        %v4995 = vpop.f32.mrb[0].mxu0
        %v4996 = vadd.f32 %v4614, %v4995
        %v4997 = vpop.f32.mrb[0].mxu0
        %4998 = vmatprep.mubr.f32.mxu0 0.0
        %4999 = vmatmul.mubr.f32.gmra.mrb[0].mxu0 %v4721
        %v5000 = vpop.f32.mrb[0].mxu0
        %v5001 = vadd.f32 %v4614, %v5000
        %v5002 = vpop.f32.mrb[0].mxu0
        %5003 = vmatprep.mubr.f32.mxu0 0.0
        %5004 = vmatmul.mubr.f32.gmra.mrb[0].mxu0 %v4724
        %v5005 = vpop.f32.mrb[0].mxu0
        %v5006 = vadd.f32 %v4614, %v5005
        %v5007 = vpop.f32.mrb[0].mxu0
        %5008 = vmatprep.mubr.f32.mxu0 0.0
        %5009 = vmatmul.mubr.f32.gmra.mrb[0].mxu0 %v4727
        %v5010 = vpop.f32.mrb[0].mxu0
        %v5011 = vadd.f32 %v4614, %v5010
        %v5012 = vpop.f32.mrb[0].mxu0
        %5013 = vmatprep.mubr.f32.mxu0 0.0
        %5014 = vmatmul.mubr.f32.gmra.mrb[0].mxu0 %v4730
        %v5015 = vpop.f32.mrb[0].mxu0
        %v5016 = vadd.f32 %v4614, %v5015
        %v5017 = vpop.f32.mrb[0].mxu0
        %5018 = vmatprep.mubr.f32.mxu0 0.0
        %5019 = vmatmul.mubr.f32.gmra.mrb[0].mxu0 %v4733
        %v5020 = vpop.f32.mrb[0].mxu0
        %v5021 = vadd.f32 %v4614, %v5020
        %v5022 = vpop.f32.mrb[0].mxu0
        %5023 = vmatprep.mubr.f32.mxu0 0.0
        %5024 = vmatmul.mubr.f32.gmra.mrb[0].mxu0 %v4736
        %v5025 = vpop.f32.mrb[0].mxu0
        %v5026 = vadd.f32 %v4614, %v5025
        %v5027 = vpop.f32.mrb[0].mxu0
        %5028 = vmatprep.mubr.f32.mxu0 0.0
        %5029 = vmatmul.mubr.f32.gmra.mrb[0].mxu0 %v4739
        %v5030 = vpop.f32.mrb[0].mxu0
        %v5031 = vadd.f32 %v4614, %v5030
        %v5032 = vpop.f32.mrb[0].mxu0
        %5033 = vmatprep.mubr.f32.mxu0 0.0
        %5034 = vmatmul.mubr.f32.gmra.mrb[0].mxu0 %v4742
        %v5035 = vpop.f32.mrb[0].mxu0
        %v5036 = vadd.f32 %v4614, %v5035
        %v5037 = vpop.f32.mrb[0].mxu0
        %5038 = vmatprep.mubr.f32.mxu0 0.0
        %5039 = vmatmul.mubr.f32.gmra.mrb[0].mxu0 %v4745
        %v5040 = vpop.f32.mrb[0].mxu0
        %v5041 = vadd.f32 %v4614, %v5040
        %v5042 = vpop.f32.mrb[0].mxu0
        %5043 = vmatprep.mubr.f32.mxu0 0.0
        %5044 = vmatmul.mubr.f32.gmra.mrb[0].mxu0 %v4748
        %v5045 = vpop.f32.mrb[0].mxu0
        %v5046 = vadd.f32 %v4614, %v5045
        %v5047 = vpop.f32.mrb[0].mxu0
        %5048 = vmatprep.mubr.f32.mxu0 0.0
        %5049 = vmatmul.mubr.f32.gmra.mrb[0].mxu0 %v4751
        %v5050 = vpop.f32.mrb[0].mxu0
        %v5051 = vadd.f32 %v4614, %v5050
        %v5052 = vpop.f32.mrb[0].mxu0
        %5053 = vmatprep.mubr.f32.mxu0 0.0
        %5054 = vmatmul.mubr.f32.gmra.mrb[0].mxu0 %v4754
        %v5055 = vpop.f32.mrb[0].mxu0
        %v5056 = vadd.f32 %v4614, %v5055
        %v5057 = vpop.f32.mrb[0].mxu0
        %5058 = vmatprep.mubr.f32.mxu0 0.0
        %5059 = vmatmul.mubr.f32.gmra.mrb[0].mxu0 %v4757
        %v5060 = vpop.f32.mrb[0].mxu0
        %v5061 = vadd.f32 %v4614, %v5060
        %v5062 = vpop.f32.mrb[0].mxu0
        %5063 = vdwg.mxu0
        %v5064 = vsel %vm1372, %v4826, 0.0
        %5065 = vadd.xlane.f32.xlu0 %v5064
        %v5066 = vpop.xlane.xlu0 %5065
        %v5067 = vsel %vm1372, %v4831, 0.0
        %5068 = vadd.xlane.f32.xlu0 %v5067
        %v5069 = vpop.xlane.xlu0 %5068
        %v5070 = vsel %vm1372, %v4836, 0.0
        %5071 = vadd.xlane.f32.xlu0 %v5070
        %v5072 = vpop.xlane.xlu0 %5071
        %v5073 = vsel %vm1372, %v4841, 0.0
        %5074 = vadd.xlane.f32.xlu0 %v5073
        %v5075 = vpop.xlane.xlu0 %5074
        %v5076 = vsel %vm1372, %v4846, 0.0
        %5077 = vadd.xlane.f32.xlu0 %v5076
        %v5078 = vpop.xlane.xlu0 %5077
        %v5079 = vsel %vm1372, %v4851, 0.0
        %5080 = vadd.xlane.f32.xlu0 %v5079
        %v5081 = vpop.xlane.xlu0 %5080
        %v5082 = vsel %vm1372, %v4856, 0.0
        %5083 = vadd.xlane.f32.xlu0 %v5082
        %v5084 = vpop.xlane.xlu0 %5083
        %v5085 = vsel %vm1372, %v4861, 0.0
        %5086 = vadd.xlane.f32.xlu0 %v5085
        %v5087 = vpop.xlane.xlu0 %5086
        %v5088 = vsel %vm1372, %v4866, 0.0
        %5089 = vadd.xlane.f32.xlu0 %v5088
        %v5090 = vpop.xlane.xlu0 %5089
        %v5091 = vsel %vm1372, %v4871, 0.0
        %5092 = vadd.xlane.f32.xlu0 %v5091
        %v5093 = vpop.xlane.xlu0 %5092
        %v5094 = vsel %vm1372, %v4876, 0.0
        %5095 = vadd.xlane.f32.xlu0 %v5094
        %v5096 = vpop.xlane.xlu0 %5095
        %v5097 = vsel %vm1372, %v4881, 0.0
        %5098 = vadd.xlane.f32.xlu0 %v5097
        %v5099 = vpop.xlane.xlu0 %5098
        %v5100 = vsel %vm1372, %v4886, 0.0
        %5101 = vadd.xlane.f32.xlu0 %v5100
        %v5102 = vpop.xlane.xlu0 %5101
        %v5103 = vsel %vm1372, %v4891, 0.0
        %5104 = vadd.xlane.f32.xlu0 %v5103
        %v5105 = vpop.xlane.xlu0 %5104
        %v5106 = vsel %vm1372, %v4896, 0.0
        %5107 = vadd.xlane.f32.xlu0 %v5106
        %v5108 = vpop.xlane.xlu0 %5107
        %v5109 = vsel %vm1372, %v4901, 0.0
        %5110 = vadd.xlane.f32.xlu0 %v5109
        %v5111 = vpop.xlane.xlu0 %5110
        %v5112 = vsel %vm1372, %v4906, 0.0
        %5113 = vadd.xlane.f32.xlu0 %v5112
        %v5114 = vpop.xlane.xlu0 %5113
        %v5115 = vsel %vm1372, %v4911, 0.0
        %5116 = vadd.xlane.f32.xlu0 %v5115
        %v5117 = vpop.xlane.xlu0 %5116
        %v5118 = vsel %vm1372, %v4916, 0.0
        %5119 = vadd.xlane.f32.xlu0 %v5118
        %v5120 = vpop.xlane.xlu0 %5119
        %v5121 = vsel %vm1372, %v4921, 0.0
        %5122 = vadd.xlane.f32.xlu0 %v5121
        %v5123 = vpop.xlane.xlu0 %5122
        %v5124 = vsel %vm1372, %v4926, 0.0
        %5125 = vadd.xlane.f32.xlu0 %v5124
        %v5126 = vpop.xlane.xlu0 %5125
        %v5127 = vsel %vm1372, %v4931, 0.0
        %5128 = vadd.xlane.f32.xlu0 %v5127
        %v5129 = vpop.xlane.xlu0 %5128
        %v5130 = vsel %vm1372, %v4936, 0.0
        %5131 = vadd.xlane.f32.xlu0 %v5130
        %v5132 = vpop.xlane.xlu0 %5131
        %v5133 = vsel %vm1372, %v4941, 0.0
        %5134 = vadd.xlane.f32.xlu0 %v5133
        %v5135 = vpop.xlane.xlu0 %5134
        %v5136 = vsel %vm1372, %v4946, 0.0
        %5137 = vadd.xlane.f32.xlu0 %v5136
        %v5138 = vpop.xlane.xlu0 %5137
        %v5139 = vsel %vm1372, %v4951, 0.0
        %5140 = vadd.xlane.f32.xlu0 %v5139
        %v5141 = vpop.xlane.xlu0 %5140
        %v5142 = vsel %vm1372, %v4956, 0.0
        %5143 = vadd.xlane.f32.xlu0 %v5142
        %v5144 = vpop.xlane.xlu0 %5143
        %v5145 = vsel %vm1372, %v4961, 0.0
        %5146 = vadd.xlane.f32.xlu0 %v5145
        %v5147 = vpop.xlane.xlu0 %5146
        %v5148 = vsel %vm1372, %v4966, 0.0
        %5149 = vadd.xlane.f32.xlu0 %v5148
        %v5150 = vpop.xlane.xlu0 %5149
        %v5151 = vsel %vm1372, %v4971, 0.0
        %5152 = vadd.xlane.f32.xlu0 %v5151
        %v5153 = vpop.xlane.xlu0 %5152
        %v5154 = vsel %vm1372, %v4976, 0.0
        %5155 = vadd.xlane.f32.xlu0 %v5154
        %v5156 = vpop.xlane.xlu0 %5155
        %v5157 = vsel %vm1372, %v4981, 0.0
        %5158 = vadd.xlane.f32.xlu0 %v5157
        %v5159 = vpop.xlane.xlu0 %5158
        %v5160 = vsel %vm1372, %v4986, 0.0
        %5161 = vadd.xlane.f32.xlu0 %v5160
        %v5162 = vpop.xlane.xlu0 %5161
        %v5163 = vsel %vm1372, %v4991, 0.0
        %5164 = vadd.xlane.f32.xlu0 %v5163
        %v5165 = vpop.xlane.xlu0 %5164
        %v5166 = vsel %vm1372, %v4996, 0.0
        %5167 = vadd.xlane.f32.xlu0 %v5166
        %v5168 = vpop.xlane.xlu0 %5167
        %v5169 = vsel %vm1372, %v5001, 0.0
        %5170 = vadd.xlane.f32.xlu0 %v5169
        %v5171 = vpop.xlane.xlu0 %5170
        %v5172 = vsel %vm1372, %v5006, 0.0
        %5173 = vadd.xlane.f32.xlu0 %v5172
        %v5174 = vpop.xlane.xlu0 %5173
        %v5175 = vsel %vm1372, %v5011, 0.0
        %5176 = vadd.xlane.f32.xlu0 %v5175
        %v5177 = vpop.xlane.xlu0 %5176
        %v5178 = vsel %vm1372, %v5016, 0.0
        %5179 = vadd.xlane.f32.xlu0 %v5178
        %v5180 = vpop.xlane.xlu0 %5179
        %v5181 = vsel %vm1372, %v5021, 0.0
        %5182 = vadd.xlane.f32.xlu0 %v5181
        %v5183 = vpop.xlane.xlu0 %5182
        %v5184 = vsel %vm1372, %v5026, 0.0
        %5185 = vadd.xlane.f32.xlu0 %v5184
        %v5186 = vpop.xlane.xlu0 %5185
        %v5187 = vsel %vm1372, %v5031, 0.0
        %5188 = vadd.xlane.f32.xlu0 %v5187
        %v5189 = vpop.xlane.xlu0 %5188
        %v5190 = vsel %vm1372, %v5036, 0.0
        %5191 = vadd.xlane.f32.xlu0 %v5190
        %v5192 = vpop.xlane.xlu0 %5191
        %v5193 = vsel %vm1372, %v5041, 0.0
        %5194 = vadd.xlane.f32.xlu0 %v5193
        %v5195 = vpop.xlane.xlu0 %5194
        %v5196 = vsel %vm1372, %v5046, 0.0
        %5197 = vadd.xlane.f32.xlu0 %v5196
        %v5198 = vpop.xlane.xlu0 %5197
        %v5199 = vsel %vm1372, %v5051, 0.0
        %5200 = vadd.xlane.f32.xlu0 %v5199
        %v5201 = vpop.xlane.xlu0 %5200
        %v5202 = vsel %vm1372, %v5056, 0.0
        %5203 = vadd.xlane.f32.xlu0 %v5202
        %v5204 = vpop.xlane.xlu0 %5203
        %v5205 = vsel %vm1372, %v5061, 0.0
        %5206 = vadd.xlane.f32.xlu0 %v5205
        %v5207 = vpop.xlane.xlu0 %5206
        %v5208 = vmul.f32 %v5066, %v3978
        %v5209 = vmul.f32 %v5069, %v3978
        %v5210 = vmul.f32 %v5072, %v3978
        %v5211 = vmul.f32 %v5075, %v3978
        %v5212 = vmul.f32 %v5078, %v3978
        %v5213 = vmul.f32 %v5081, %v3978
        %v5214 = vmul.f32 %v5084, %v3978
        %v5215 = vmul.f32 %v5087, %v3978
        %v5216 = vmul.f32 %v5090, %v3978
        %v5217 = vmul.f32 %v5093, %v3978
        %v5218 = vmul.f32 %v5096, %v3978
        %v5219 = vmul.f32 %v5099, %v3978
        %v5220 = vmul.f32 %v5102, %v3978
        %v5221 = vmul.f32 %v5105, %v3978
        %v5222 = vmul.f32 %v5108, %v3978
        %v5223 = vmul.f32 %v5111, %v3978
        %v5224 = vmul.f32 %v5114, %v3978
        %v5225 = vmul.f32 %v5117, %v3978
        %v5226 = vmul.f32 %v5120, %v3978
        %v5227 = vmul.f32 %v5123, %v3978
        %v5228 = vmul.f32 %v5126, %v3978
        %v5229 = vmul.f32 %v5129, %v3978
        %v5230 = vmul.f32 %v5132, %v3978
        %v5231 = vmul.f32 %v5135, %v3978
        %v5232 = vmul.f32 %v5138, %v3978
        %v5233 = vmul.f32 %v5141, %v3978
        %v5234 = vmul.f32 %v5144, %v3978
        %v5235 = vmul.f32 %v5147, %v3978
        %v5236 = vmul.f32 %v5150, %v3978
        %v5237 = vmul.f32 %v5153, %v3978
        %v5238 = vmul.f32 %v5156, %v3978
        %v5239 = vmul.f32 %v5159, %v3978
        %v5240 = vmul.f32 %v5162, %v3978
        %v5241 = vmul.f32 %v5165, %v3978
        %v5242 = vmul.f32 %v5168, %v3978
        %v5243 = vmul.f32 %v5171, %v3978
        %v5244 = vmul.f32 %v5174, %v3978
        %v5245 = vmul.f32 %v5177, %v3978
        %v5246 = vmul.f32 %v5180, %v3978
        %v5247 = vmul.f32 %v5183, %v3978
        %v5248 = vmul.f32 %v5186, %v3978
        %v5249 = vmul.f32 %v5189, %v3978
        %v5250 = vmul.f32 %v5192, %v3978
        %v5251 = vmul.f32 %v5195, %v3978
        %v5252 = vmul.f32 %v5198, %v3978
        %v5253 = vmul.f32 %v5201, %v3978
        %v5254 = vmul.f32 %v5204, %v3978
        %v5255 = vmul.f32 %v5207, %v3978
        %v5256 = vsub.f32 %v4826, %v5208
        %v5257 = vsub.f32 %v4831, %v5209
        %v5258 = vsub.f32 %v4836, %v5210
        %v5259 = vsub.f32 %v4841, %v5211
        %v5260 = vsub.f32 %v4846, %v5212
        %v5261 = vsub.f32 %v4851, %v5213
        %v5262 = vsub.f32 %v4856, %v5214
        %v5263 = vsub.f32 %v4861, %v5215
        %v5264 = vsub.f32 %v4866, %v5216
        %v5265 = vsub.f32 %v4871, %v5217
        %v5266 = vsub.f32 %v4876, %v5218
        %v5267 = vsub.f32 %v4881, %v5219
        %v5268 = vsub.f32 %v4886, %v5220
        %v5269 = vsub.f32 %v4891, %v5221
        %v5270 = vsub.f32 %v4896, %v5222
        %v5271 = vsub.f32 %v4901, %v5223
        %v5272 = vsub.f32 %v4906, %v5224
        %v5273 = vsub.f32 %v4911, %v5225
        %v5274 = vsub.f32 %v4916, %v5226
        %v5275 = vsub.f32 %v4921, %v5227
        %v5276 = vsub.f32 %v4926, %v5228
        %v5277 = vsub.f32 %v4931, %v5229
        %v5278 = vsub.f32 %v4936, %v5230
        %v5279 = vsub.f32 %v4941, %v5231
        %v5280 = vsub.f32 %v4946, %v5232
        %v5281 = vsub.f32 %v4951, %v5233
        %v5282 = vsub.f32 %v4956, %v5234
        %v5283 = vsub.f32 %v4961, %v5235
        %v5284 = vsub.f32 %v4966, %v5236
        %v5285 = vsub.f32 %v4971, %v5237
        %v5286 = vsub.f32 %v4976, %v5238
        %v5287 = vsub.f32 %v4981, %v5239
        %v5288 = vsub.f32 %v4986, %v5240
        %v5289 = vsub.f32 %v4991, %v5241
        %v5290 = vsub.f32 %v4996, %v5242
        %v5291 = vsub.f32 %v5001, %v5243
        %v5292 = vsub.f32 %v5006, %v5244
        %v5293 = vsub.f32 %v5011, %v5245
        %v5294 = vsub.f32 %v5016, %v5246
        %v5295 = vsub.f32 %v5021, %v5247
        %v5296 = vsub.f32 %v5026, %v5248
        %v5297 = vsub.f32 %v5031, %v5249
        %v5298 = vsub.f32 %v5036, %v5250
        %v5299 = vsub.f32 %v5041, %v5251
        %v5300 = vsub.f32 %v5046, %v5252
        %v5301 = vsub.f32 %v5051, %v5253
        %v5302 = vsub.f32 %v5056, %v5254
        %v5303 = vsub.f32 %v5061, %v5255
        %v5304 = vmul.f32 %v5256, %v5256
        %v5305 = vmul.f32 %v5257, %v5257
        %v5306 = vmul.f32 %v5258, %v5258
        %v5307 = vmul.f32 %v5259, %v5259
        %v5308 = vmul.f32 %v5260, %v5260
        %v5309 = vmul.f32 %v5261, %v5261
        %v5310 = vmul.f32 %v5262, %v5262
        %v5311 = vmul.f32 %v5263, %v5263
        %v5312 = vmul.f32 %v5264, %v5264
        %v5313 = vmul.f32 %v5265, %v5265
        %v5314 = vmul.f32 %v5266, %v5266
        %v5315 = vmul.f32 %v5267, %v5267
        %v5316 = vmul.f32 %v5268, %v5268
        %v5317 = vmul.f32 %v5269, %v5269
        %v5318 = vmul.f32 %v5270, %v5270
        %v5319 = vmul.f32 %v5271, %v5271
        %v5320 = vmul.f32 %v5272, %v5272
        %v5321 = vmul.f32 %v5273, %v5273
        %v5322 = vmul.f32 %v5274, %v5274
        %v5323 = vmul.f32 %v5275, %v5275
        %v5324 = vmul.f32 %v5276, %v5276
        %v5325 = vmul.f32 %v5277, %v5277
        %v5326 = vmul.f32 %v5278, %v5278
        %v5327 = vmul.f32 %v5279, %v5279
        %v5328 = vmul.f32 %v5280, %v5280
        %v5329 = vmul.f32 %v5281, %v5281
        %v5330 = vmul.f32 %v5282, %v5282
        %v5331 = vmul.f32 %v5283, %v5283
        %v5332 = vmul.f32 %v5284, %v5284
        %v5333 = vmul.f32 %v5285, %v5285
        %v5334 = vmul.f32 %v5286, %v5286
        %v5335 = vmul.f32 %v5287, %v5287
        %v5336 = vmul.f32 %v5288, %v5288
        %v5337 = vmul.f32 %v5289, %v5289
        %v5338 = vmul.f32 %v5290, %v5290
        %v5339 = vmul.f32 %v5291, %v5291
        %v5340 = vmul.f32 %v5292, %v5292
        %v5341 = vmul.f32 %v5293, %v5293
        %v5342 = vmul.f32 %v5294, %v5294
        %v5343 = vmul.f32 %v5295, %v5295
        %v5344 = vmul.f32 %v5296, %v5296
        %v5345 = vmul.f32 %v5297, %v5297
        %v5346 = vmul.f32 %v5298, %v5298
        %v5347 = vmul.f32 %v5299, %v5299
        %v5348 = vmul.f32 %v5300, %v5300
        %v5349 = vmul.f32 %v5301, %v5301
        %v5350 = vmul.f32 %v5302, %v5302
        %v5351 = vmul.f32 %v5303, %v5303
        %v5352 = vsel %vm1372, %v5304, 0.0
        %5353 = vadd.xlane.f32.xlu0 %v5352
        %v5354 = vpop.xlane.xlu0 %5353
        %v5355 = vsel %vm1372, %v5305, 0.0
        %5356 = vadd.xlane.f32.xlu0 %v5355
        %v5357 = vpop.xlane.xlu0 %5356
        %v5358 = vsel %vm1372, %v5306, 0.0
        %5359 = vadd.xlane.f32.xlu0 %v5358
        %v5360 = vpop.xlane.xlu0 %5359
        %v5361 = vsel %vm1372, %v5307, 0.0
        %5362 = vadd.xlane.f32.xlu0 %v5361
        %v5363 = vpop.xlane.xlu0 %5362
        %v5364 = vsel %vm1372, %v5308, 0.0
        %5365 = vadd.xlane.f32.xlu0 %v5364
        %v5366 = vpop.xlane.xlu0 %5365
        %v5367 = vsel %vm1372, %v5309, 0.0
        %5368 = vadd.xlane.f32.xlu0 %v5367
        %v5369 = vpop.xlane.xlu0 %5368
        %v5370 = vsel %vm1372, %v5310, 0.0
        %5371 = vadd.xlane.f32.xlu0 %v5370
        %v5372 = vpop.xlane.xlu0 %5371
        %v5373 = vsel %vm1372, %v5311, 0.0
        %5374 = vadd.xlane.f32.xlu0 %v5373
        %v5375 = vpop.xlane.xlu0 %5374
        %v5376 = vsel %vm1372, %v5312, 0.0
        %5377 = vadd.xlane.f32.xlu0 %v5376
        %v5378 = vpop.xlane.xlu0 %5377
        %v5379 = vsel %vm1372, %v5313, 0.0
        %5380 = vadd.xlane.f32.xlu0 %v5379
        %v5381 = vpop.xlane.xlu0 %5380
        %v5382 = vsel %vm1372, %v5314, 0.0
        %5383 = vadd.xlane.f32.xlu0 %v5382
        %v5384 = vpop.xlane.xlu0 %5383
        %v5385 = vsel %vm1372, %v5315, 0.0
        %5386 = vadd.xlane.f32.xlu0 %v5385
        %v5387 = vpop.xlane.xlu0 %5386
        %v5388 = vsel %vm1372, %v5316, 0.0
        %5389 = vadd.xlane.f32.xlu0 %v5388
        %v5390 = vpop.xlane.xlu0 %5389
        %v5391 = vsel %vm1372, %v5317, 0.0
        %5392 = vadd.xlane.f32.xlu0 %v5391
        %v5393 = vpop.xlane.xlu0 %5392
        %v5394 = vsel %vm1372, %v5318, 0.0
        %5395 = vadd.xlane.f32.xlu0 %v5394
        %v5396 = vpop.xlane.xlu0 %5395
        %v5397 = vsel %vm1372, %v5319, 0.0
        %5398 = vadd.xlane.f32.xlu0 %v5397
        %v5399 = vpop.xlane.xlu0 %5398
        %v5400 = vsel %vm1372, %v5320, 0.0
        %5401 = vadd.xlane.f32.xlu0 %v5400
        %v5402 = vpop.xlane.xlu0 %5401
        %v5403 = vsel %vm1372, %v5321, 0.0
        %5404 = vadd.xlane.f32.xlu0 %v5403
        %v5405 = vpop.xlane.xlu0 %5404
        %v5406 = vsel %vm1372, %v5322, 0.0
        %5407 = vadd.xlane.f32.xlu0 %v5406
        %v5408 = vpop.xlane.xlu0 %5407
        %v5409 = vsel %vm1372, %v5323, 0.0
        %5410 = vadd.xlane.f32.xlu0 %v5409
        %v5411 = vpop.xlane.xlu0 %5410
        %v5412 = vsel %vm1372, %v5324, 0.0
        %5413 = vadd.xlane.f32.xlu0 %v5412
        %v5414 = vpop.xlane.xlu0 %5413
        %v5415 = vsel %vm1372, %v5325, 0.0
        %5416 = vadd.xlane.f32.xlu0 %v5415
        %v5417 = vpop.xlane.xlu0 %5416
        %v5418 = vsel %vm1372, %v5326, 0.0
        %5419 = vadd.xlane.f32.xlu0 %v5418
        %v5420 = vpop.xlane.xlu0 %5419
        %v5421 = vsel %vm1372, %v5327, 0.0
        %5422 = vadd.xlane.f32.xlu0 %v5421
        %v5423 = vpop.xlane.xlu0 %5422
        %v5424 = vsel %vm1372, %v5328, 0.0
        %5425 = vadd.xlane.f32.xlu0 %v5424
        %v5426 = vpop.xlane.xlu0 %5425
        %v5427 = vsel %vm1372, %v5329, 0.0
        %5428 = vadd.xlane.f32.xlu0 %v5427
        %v5429 = vpop.xlane.xlu0 %5428
        %v5430 = vsel %vm1372, %v5330, 0.0
        %5431 = vadd.xlane.f32.xlu0 %v5430
        %v5432 = vpop.xlane.xlu0 %5431
        %v5433 = vsel %vm1372, %v5331, 0.0
        %5434 = vadd.xlane.f32.xlu0 %v5433
        %v5435 = vpop.xlane.xlu0 %5434
        %v5436 = vsel %vm1372, %v5332, 0.0
        %5437 = vadd.xlane.f32.xlu0 %v5436
        %v5438 = vpop.xlane.xlu0 %5437
        %v5439 = vsel %vm1372, %v5333, 0.0
        %5440 = vadd.xlane.f32.xlu0 %v5439
        %v5441 = vpop.xlane.xlu0 %5440
        %v5442 = vsel %vm1372, %v5334, 0.0
        %5443 = vadd.xlane.f32.xlu0 %v5442
        %v5444 = vpop.xlane.xlu0 %5443
        %v5445 = vsel %vm1372, %v5335, 0.0
        %5446 = vadd.xlane.f32.xlu0 %v5445
        %v5447 = vpop.xlane.xlu0 %5446
        %v5448 = vsel %vm1372, %v5336, 0.0
        %5449 = vadd.xlane.f32.xlu0 %v5448
        %v5450 = vpop.xlane.xlu0 %5449
        %v5451 = vsel %vm1372, %v5337, 0.0
        %5452 = vadd.xlane.f32.xlu0 %v5451
        %v5453 = vpop.xlane.xlu0 %5452
        %v5454 = vsel %vm1372, %v5338, 0.0
        %5455 = vadd.xlane.f32.xlu0 %v5454
        %v5456 = vpop.xlane.xlu0 %5455
        %v5457 = vsel %vm1372, %v5339, 0.0
        %5458 = vadd.xlane.f32.xlu0 %v5457
        %v5459 = vpop.xlane.xlu0 %5458
        %v5460 = vsel %vm1372, %v5340, 0.0
        %5461 = vadd.xlane.f32.xlu0 %v5460
        %v5462 = vpop.xlane.xlu0 %5461
        %v5463 = vsel %vm1372, %v5341, 0.0
        %5464 = vadd.xlane.f32.xlu0 %v5463
        %v5465 = vpop.xlane.xlu0 %5464
        %v5466 = vsel %vm1372, %v5342, 0.0
        %5467 = vadd.xlane.f32.xlu0 %v5466
        %v5468 = vpop.xlane.xlu0 %5467
        %v5469 = vsel %vm1372, %v5343, 0.0
        %5470 = vadd.xlane.f32.xlu0 %v5469
        %v5471 = vpop.xlane.xlu0 %5470
        %v5472 = vsel %vm1372, %v5344, 0.0
        %5473 = vadd.xlane.f32.xlu0 %v5472
        %v5474 = vpop.xlane.xlu0 %5473
        %v5475 = vsel %vm1372, %v5345, 0.0
        %5476 = vadd.xlane.f32.xlu0 %v5475
        %v5477 = vpop.xlane.xlu0 %5476
        %v5478 = vsel %vm1372, %v5346, 0.0
        %5479 = vadd.xlane.f32.xlu0 %v5478
        %v5480 = vpop.xlane.xlu0 %5479
        %v5481 = vsel %vm1372, %v5347, 0.0
        %5482 = vadd.xlane.f32.xlu0 %v5481
        %v5483 = vpop.xlane.xlu0 %5482
        %v5484 = vsel %vm1372, %v5348, 0.0
        %5485 = vadd.xlane.f32.xlu0 %v5484
        %v5486 = vpop.xlane.xlu0 %5485
        %v5487 = vsel %vm1372, %v5349, 0.0
        %5488 = vadd.xlane.f32.xlu0 %v5487
        %v5489 = vpop.xlane.xlu0 %5488
        %v5490 = vsel %vm1372, %v5350, 0.0
        %5491 = vadd.xlane.f32.xlu0 %v5490
        %v5492 = vpop.xlane.xlu0 %5491
        %v5493 = vsel %vm1372, %v5351, 0.0
        %5494 = vadd.xlane.f32.xlu0 %v5493
        %v5495 = vpop.xlane.xlu0 %5494
        %v5496 = vmul.f32 %v5354, %v3978
        %v5497 = vmul.f32 %v5357, %v3978
        %v5498 = vmul.f32 %v5360, %v3978
        %v5499 = vmul.f32 %v5363, %v3978
        %v5500 = vmul.f32 %v5366, %v3978
        %v5501 = vmul.f32 %v5369, %v3978
        %v5502 = vmul.f32 %v5372, %v3978
        %v5503 = vmul.f32 %v5375, %v3978
        %v5504 = vmul.f32 %v5378, %v3978
        %v5505 = vmul.f32 %v5381, %v3978
        %v5506 = vmul.f32 %v5384, %v3978
        %v5507 = vmul.f32 %v5387, %v3978
        %v5508 = vmul.f32 %v5390, %v3978
        %v5509 = vmul.f32 %v5393, %v3978
        %v5510 = vmul.f32 %v5396, %v3978
        %v5511 = vmul.f32 %v5399, %v3978
        %v5512 = vmul.f32 %v5402, %v3978
        %v5513 = vmul.f32 %v5405, %v3978
        %v5514 = vmul.f32 %v5408, %v3978
        %v5515 = vmul.f32 %v5411, %v3978
        %v5516 = vmul.f32 %v5414, %v3978
        %v5517 = vmul.f32 %v5417, %v3978
        %v5518 = vmul.f32 %v5420, %v3978
        %v5519 = vmul.f32 %v5423, %v3978
        %v5520 = vmul.f32 %v5426, %v3978
        %v5521 = vmul.f32 %v5429, %v3978
        %v5522 = vmul.f32 %v5432, %v3978
        %v5523 = vmul.f32 %v5435, %v3978
        %v5524 = vmul.f32 %v5438, %v3978
        %v5525 = vmul.f32 %v5441, %v3978
        %v5526 = vmul.f32 %v5444, %v3978
        %v5527 = vmul.f32 %v5447, %v3978
        %v5528 = vmul.f32 %v5450, %v3978
        %v5529 = vmul.f32 %v5453, %v3978
        %v5530 = vmul.f32 %v5456, %v3978
        %v5531 = vmul.f32 %v5459, %v3978
        %v5532 = vmul.f32 %v5462, %v3978
        %v5533 = vmul.f32 %v5465, %v3978
        %v5534 = vmul.f32 %v5468, %v3978
        %v5535 = vmul.f32 %v5471, %v3978
        %v5536 = vmul.f32 %v5474, %v3978
        %v5537 = vmul.f32 %v5477, %v3978
        %v5538 = vmul.f32 %v5480, %v3978
        %v5539 = vmul.f32 %v5483, %v3978
        %v5540 = vmul.f32 %v5486, %v3978
        %v5541 = vmul.f32 %v5489, %v3978
        %v5542 = vmul.f32 %v5492, %v3978
        %v5543 = vmul.f32 %v5495, %v3978
        %v5544 = vadd.f32 %v5496, 1e-05
        %v5545 = vadd.f32 %v5497, 1e-05
        %v5546 = vadd.f32 %v5498, 1e-05
        %v5547 = vadd.f32 %v5499, 1e-05
        %v5548 = vadd.f32 %v5500, 1e-05
        %v5549 = vadd.f32 %v5501, 1e-05
        %v5550 = vadd.f32 %v5502, 1e-05
        %v5551 = vadd.f32 %v5503, 1e-05
        %v5552 = vadd.f32 %v5504, 1e-05
        %v5553 = vadd.f32 %v5505, 1e-05
        %v5554 = vadd.f32 %v5506, 1e-05
        %v5555 = vadd.f32 %v5507, 1e-05
        %v5556 = vadd.f32 %v5508, 1e-05
        %v5557 = vadd.f32 %v5509, 1e-05
        %v5558 = vadd.f32 %v5510, 1e-05
        %v5559 = vadd.f32 %v5511, 1e-05
        %v5560 = vadd.f32 %v5512, 1e-05
        %v5561 = vadd.f32 %v5513, 1e-05
        %v5562 = vadd.f32 %v5514, 1e-05
        %v5563 = vadd.f32 %v5515, 1e-05
        %v5564 = vadd.f32 %v5516, 1e-05
        %v5565 = vadd.f32 %v5517, 1e-05
        %v5566 = vadd.f32 %v5518, 1e-05
        %v5567 = vadd.f32 %v5519, 1e-05
        %v5568 = vadd.f32 %v5520, 1e-05
        %v5569 = vadd.f32 %v5521, 1e-05
        %v5570 = vadd.f32 %v5522, 1e-05
        %v5571 = vadd.f32 %v5523, 1e-05
        %v5572 = vadd.f32 %v5524, 1e-05
        %v5573 = vadd.f32 %v5525, 1e-05
        %v5574 = vadd.f32 %v5526, 1e-05
        %v5575 = vadd.f32 %v5527, 1e-05
        %v5576 = vadd.f32 %v5528, 1e-05
        %v5577 = vadd.f32 %v5529, 1e-05
        %v5578 = vadd.f32 %v5530, 1e-05
        %v5579 = vadd.f32 %v5531, 1e-05
        %v5580 = vadd.f32 %v5532, 1e-05
        %v5581 = vadd.f32 %v5533, 1e-05
        %v5582 = vadd.f32 %v5534, 1e-05
        %v5583 = vadd.f32 %v5535, 1e-05
        %v5584 = vadd.f32 %v5536, 1e-05
        %v5585 = vadd.f32 %v5537, 1e-05
        %v5586 = vadd.f32 %v5538, 1e-05
        %v5587 = vadd.f32 %v5539, 1e-05
        %v5588 = vadd.f32 %v5540, 1e-05
        %v5589 = vadd.f32 %v5541, 1e-05
        %v5590 = vadd.f32 %v5542, 1e-05
        %v5591 = vadd.f32 %v5543, 1e-05
        %v5592 = vrsqrt.pop %v5544
        %v5593 = vrsqrt.pop %v5545
        %v5594 = vrsqrt.pop %v5546
        %v5595 = vrsqrt.pop %v5547
        %v5596 = vrsqrt.pop %v5548
        %v5597 = vrsqrt.pop %v5549
        %v5598 = vrsqrt.pop %v5550
        %v5599 = vrsqrt.pop %v5551
        %v5600 = vrsqrt.pop %v5552
        %v5601 = vrsqrt.pop %v5553
        %v5602 = vrsqrt.pop %v5554
        %v5603 = vrsqrt.pop %v5555
        %v5604 = vrsqrt.pop %v5556
        %v5605 = vrsqrt.pop %v5557
        %v5606 = vrsqrt.pop %v5558
        %v5607 = vrsqrt.pop %v5559
        %v5608 = vrsqrt.pop %v5560
        %v5609 = vrsqrt.pop %v5561
        %v5610 = vrsqrt.pop %v5562
        %v5611 = vrsqrt.pop %v5563
        %v5612 = vrsqrt.pop %v5564
        %v5613 = vrsqrt.pop %v5565
        %v5614 = vrsqrt.pop %v5566
        %v5615 = vrsqrt.pop %v5567
        %v5616 = vrsqrt.pop %v5568
        %v5617 = vrsqrt.pop %v5569
        %v5618 = vrsqrt.pop %v5570
        %v5619 = vrsqrt.pop %v5571
        %v5620 = vrsqrt.pop %v5572
        %v5621 = vrsqrt.pop %v5573
        %v5622 = vrsqrt.pop %v5574
        %v5623 = vrsqrt.pop %v5575
        %v5624 = vrsqrt.pop %v5576
        %v5625 = vrsqrt.pop %v5577
        %v5626 = vrsqrt.pop %v5578
        %v5627 = vrsqrt.pop %v5579
        %v5628 = vrsqrt.pop %v5580
        %v5629 = vrsqrt.pop %v5581
        %v5630 = vrsqrt.pop %v5582
        %v5631 = vrsqrt.pop %v5583
        %v5632 = vrsqrt.pop %v5584
        %v5633 = vrsqrt.pop %v5585
        %v5634 = vrsqrt.pop %v5586
        %v5635 = vrsqrt.pop %v5587
        %v5636 = vrsqrt.pop %v5588
        %v5637 = vrsqrt.pop %v5589
        %v5638 = vrsqrt.pop %v5590
        %v5639 = vrsqrt.pop %v5591
        %v5640 = vmul.f32 %v5256, %v5592
        %v5641 = vmul.f32 %v5257, %v5593
        %v5642 = vmul.f32 %v5258, %v5594
        %v5643 = vmul.f32 %v5259, %v5595
        %v5644 = vmul.f32 %v5260, %v5596
        %v5645 = vmul.f32 %v5261, %v5597
        %v5646 = vmul.f32 %v5262, %v5598
        %v5647 = vmul.f32 %v5263, %v5599
        %v5648 = vmul.f32 %v5264, %v5600
        %v5649 = vmul.f32 %v5265, %v5601
        %v5650 = vmul.f32 %v5266, %v5602
        %v5651 = vmul.f32 %v5267, %v5603
        %v5652 = vmul.f32 %v5268, %v5604
        %v5653 = vmul.f32 %v5269, %v5605
        %v5654 = vmul.f32 %v5270, %v5606
        %v5655 = vmul.f32 %v5271, %v5607
        %v5656 = vmul.f32 %v5272, %v5608
        %v5657 = vmul.f32 %v5273, %v5609
        %v5658 = vmul.f32 %v5274, %v5610
        %v5659 = vmul.f32 %v5275, %v5611
        %v5660 = vmul.f32 %v5276, %v5612
        %v5661 = vmul.f32 %v5277, %v5613
        %v5662 = vmul.f32 %v5278, %v5614
        %v5663 = vmul.f32 %v5279, %v5615
        %v5664 = vmul.f32 %v5280, %v5616
        %v5665 = vmul.f32 %v5281, %v5617
        %v5666 = vmul.f32 %v5282, %v5618
        %v5667 = vmul.f32 %v5283, %v5619
        %v5668 = vmul.f32 %v5284, %v5620
        %v5669 = vmul.f32 %v5285, %v5621
        %v5670 = vmul.f32 %v5286, %v5622
        %v5671 = vmul.f32 %v5287, %v5623
        %v5672 = vmul.f32 %v5288, %v5624
        %v5673 = vmul.f32 %v5289, %v5625
        %v5674 = vmul.f32 %v5290, %v5626
        %v5675 = vmul.f32 %v5291, %v5627
        %v5676 = vmul.f32 %v5292, %v5628
        %v5677 = vmul.f32 %v5293, %v5629
        %v5678 = vmul.f32 %v5294, %v5630
        %v5679 = vmul.f32 %v5295, %v5631
        %v5680 = vmul.f32 %v5296, %v5632
        %v5681 = vmul.f32 %v5297, %v5633
        %v5682 = vmul.f32 %v5298, %v5634
        %v5683 = vmul.f32 %v5299, %v5635
        %v5684 = vmul.f32 %v5300, %v5636
        %v5685 = vmul.f32 %v5301, %v5637
        %v5686 = vmul.f32 %v5302, %v5638
        %v5687 = vmul.f32 %v5303, %v5639
        %v5688 = vlaneseq
        %v5689 = vshrl.u32 %v5688, 7
        %v5690 = vsub.s32 5, %v5689
        %v5691 = vrot.slane %v691, %v5690
        %v5692 = vmul.f32 %v5640, %v5691
        %v5693 = vmul.f32 %v5641, %v5691
        %v5694 = vmul.f32 %v5642, %v5691
        %v5695 = vmul.f32 %v5643, %v5691
        %v5696 = vmul.f32 %v5644, %v5691
        %v5697 = vmul.f32 %v5645, %v5691
        %v5698 = vmul.f32 %v5646, %v5691
        %v5699 = vmul.f32 %v5647, %v5691
        %v5700 = vmul.f32 %v5648, %v5691
        %v5701 = vmul.f32 %v5649, %v5691
        %v5702 = vmul.f32 %v5650, %v5691
        %v5703 = vmul.f32 %v5651, %v5691
        %v5704 = vmul.f32 %v5652, %v5691
        %v5705 = vmul.f32 %v5653, %v5691
        %v5706 = vmul.f32 %v5654, %v5691
        %v5707 = vmul.f32 %v5655, %v5691
        %v5708 = vmul.f32 %v5656, %v5691
        %v5709 = vmul.f32 %v5657, %v5691
        %v5710 = vmul.f32 %v5658, %v5691
        %v5711 = vmul.f32 %v5659, %v5691
        %v5712 = vmul.f32 %v5660, %v5691
        %v5713 = vmul.f32 %v5661, %v5691
        %v5714 = vmul.f32 %v5662, %v5691
        %v5715 = vmul.f32 %v5663, %v5691
        %v5716 = vmul.f32 %v5664, %v5691
        %v5717 = vmul.f32 %v5665, %v5691
        %v5718 = vmul.f32 %v5666, %v5691
        %v5719 = vmul.f32 %v5667, %v5691
        %v5720 = vmul.f32 %v5668, %v5691
        %v5721 = vmul.f32 %v5669, %v5691
        %v5722 = vmul.f32 %v5670, %v5691
        %v5723 = vmul.f32 %v5671, %v5691
        %v5724 = vmul.f32 %v5672, %v5691
        %v5725 = vmul.f32 %v5673, %v5691
        %v5726 = vmul.f32 %v5674, %v5691
        %v5727 = vmul.f32 %v5675, %v5691
        %v5728 = vmul.f32 %v5676, %v5691
        %v5729 = vmul.f32 %v5677, %v5691
        %v5730 = vmul.f32 %v5678, %v5691
        %v5731 = vmul.f32 %v5679, %v5691
        %v5732 = vmul.f32 %v5680, %v5691
        %v5733 = vmul.f32 %v5681, %v5691
        %v5734 = vmul.f32 %v5682, %v5691
        %v5735 = vmul.f32 %v5683, %v5691
        %v5736 = vmul.f32 %v5684, %v5691
        %v5737 = vmul.f32 %v5685, %v5691
        %v5738 = vmul.f32 %v5686, %v5691
        %v5739 = vmul.f32 %v5687, %v5691
        %v5740 = vlaneseq
        %v5741 = vshrl.u32 %v5740, 7
        %v5742 = vsub.s32 6, %v5741
        %v5743 = vrot.slane %v691, %v5742
        %v5744 = vadd.f32 %v5692, %v5743
        %v5745 = vadd.f32 %v5693, %v5743
        %v5746 = vadd.f32 %v5694, %v5743
        %v5747 = vadd.f32 %v5695, %v5743
        %v5748 = vadd.f32 %v5696, %v5743
        %v5749 = vadd.f32 %v5697, %v5743
        %v5750 = vadd.f32 %v5698, %v5743
        %v5751 = vadd.f32 %v5699, %v5743
        %v5752 = vadd.f32 %v5700, %v5743
        %v5753 = vadd.f32 %v5701, %v5743
        %v5754 = vadd.f32 %v5702, %v5743
        %v5755 = vadd.f32 %v5703, %v5743
        %v5756 = vadd.f32 %v5704, %v5743
        %v5757 = vadd.f32 %v5705, %v5743
        %v5758 = vadd.f32 %v5706, %v5743
        %v5759 = vadd.f32 %v5707, %v5743
        %v5760 = vadd.f32 %v5708, %v5743
        %v5761 = vadd.f32 %v5709, %v5743
        %v5762 = vadd.f32 %v5710, %v5743
        %v5763 = vadd.f32 %v5711, %v5743
        %v5764 = vadd.f32 %v5712, %v5743
        %v5765 = vadd.f32 %v5713, %v5743
        %v5766 = vadd.f32 %v5714, %v5743
        %v5767 = vadd.f32 %v5715, %v5743
        %v5768 = vadd.f32 %v5716, %v5743
        %v5769 = vadd.f32 %v5717, %v5743
        %v5770 = vadd.f32 %v5718, %v5743
        %v5771 = vadd.f32 %v5719, %v5743
        %v5772 = vadd.f32 %v5720, %v5743
        %v5773 = vadd.f32 %v5721, %v5743
        %v5774 = vadd.f32 %v5722, %v5743
        %v5775 = vadd.f32 %v5723, %v5743
        %v5776 = vadd.f32 %v5724, %v5743
        %v5777 = vadd.f32 %v5725, %v5743
        %v5778 = vadd.f32 %v5726, %v5743
        %v5779 = vadd.f32 %v5727, %v5743
        %v5780 = vadd.f32 %v5728, %v5743
        %v5781 = vadd.f32 %v5729, %v5743
        %v5782 = vadd.f32 %v5730, %v5743
        %v5783 = vadd.f32 %v5731, %v5743
        %v5784 = vadd.f32 %v5732, %v5743
        %v5785 = vadd.f32 %v5733, %v5743
        %v5786 = vadd.f32 %v5734, %v5743
        %v5787 = vadd.f32 %v5735, %v5743
        %v5788 = vadd.f32 %v5736, %v5743
        %v5789 = vadd.f32 %v5737, %v5743
        %v5790 = vadd.f32 %v5738, %v5743
        %v5791 = vadd.f32 %v5739, %v5743
        %v5792 = vmax.f32 %v5744, 0.0
        %v5793 = vmax.f32 %v5745, 0.0
        %v5794 = vmax.f32 %v5746, 0.0
        %v5795 = vmax.f32 %v5747, 0.0
        %v5796 = vmax.f32 %v5748, 0.0
        %v5797 = vmax.f32 %v5749, 0.0
        %v5798 = vmax.f32 %v5750, 0.0
        %v5799 = vmax.f32 %v5751, 0.0
        %v5800 = vmax.f32 %v5752, 0.0
        %v5801 = vmax.f32 %v5753, 0.0
        %v5802 = vmax.f32 %v5754, 0.0
        %v5803 = vmax.f32 %v5755, 0.0
        %v5804 = vmax.f32 %v5756, 0.0
        %v5805 = vmax.f32 %v5757, 0.0
        %v5806 = vmax.f32 %v5758, 0.0
        %v5807 = vmax.f32 %v5759, 0.0
        %v5808 = vmax.f32 %v5760, 0.0
        %v5809 = vmax.f32 %v5761, 0.0
        %v5810 = vmax.f32 %v5762, 0.0
        %v5811 = vmax.f32 %v5763, 0.0
        %v5812 = vmax.f32 %v5764, 0.0
        %v5813 = vmax.f32 %v5765, 0.0
        %v5814 = vmax.f32 %v5766, 0.0
        %v5815 = vmax.f32 %v5767, 0.0
        %v5816 = vmax.f32 %v5768, 0.0
        %v5817 = vmax.f32 %v5769, 0.0
        %v5818 = vmax.f32 %v5770, 0.0
        %v5819 = vmax.f32 %v5771, 0.0
        %v5820 = vmax.f32 %v5772, 0.0
        %v5821 = vmax.f32 %v5773, 0.0
        %v5822 = vmax.f32 %v5774, 0.0
        %v5823 = vmax.f32 %v5775, 0.0
        %v5824 = vmax.f32 %v5776, 0.0
        %v5825 = vmax.f32 %v5777, 0.0
        %v5826 = vmax.f32 %v5778, 0.0
        %v5827 = vmax.f32 %v5779, 0.0
        %v5828 = vmax.f32 %v5780, 0.0
        %v5829 = vmax.f32 %v5781, 0.0
        %v5830 = vmax.f32 %v5782, 0.0
        %v5831 = vmax.f32 %v5783, 0.0
        %v5832 = vmax.f32 %v5784, 0.0
        %v5833 = vmax.f32 %v5785, 0.0
        %v5834 = vmax.f32 %v5786, 0.0
        %v5835 = vmax.f32 %v5787, 0.0
        %v5836 = vmax.f32 %v5788, 0.0
        %v5837 = vmax.f32 %v5789, 0.0
        %v5838 = vmax.f32 %v5790, 0.0
        %v5839 = vmax.f32 %v5791, 0.0
        %v5840 = vlaneseq
        %v5841 = vshrl.u32 %v5840, 7
        %v5842 = vsub.s32 7, %v5841
        %v5843 = vrot.slane %v691, %v5842
        %v5845 = vsel %vm1372, %v5792, 0
        %v5848 = vsel %vm1372, %v5793, 0
        %v5851 = vsel %vm1372, %v5794, 0
        %v5854 = vsel %vm1372, %v5795, 0
        %v5857 = vsel %vm1372, %v5796, 0
        %v5860 = vsel %vm1372, %v5797, 0
        %v5863 = vsel %vm1372, %v5798, 0
        %v5866 = vsel %vm1372, %v5799, 0
        %v5869 = vsel %vm1372, %v5800, 0
        %v5872 = vsel %vm1372, %v5801, 0
        %v5875 = vsel %vm1372, %v5802, 0
        %v5878 = vsel %vm1372, %v5803, 0
        %v5881 = vsel %vm1372, %v5804, 0
        %v5884 = vsel %vm1372, %v5805, 0
        %v5887 = vsel %vm1372, %v5806, 0
        %v5890 = vsel %vm1372, %v5807, 0
        %v5893 = vsel %vm1372, %v5808, 0
        %v5896 = vsel %vm1372, %v5809, 0
        %v5899 = vsel %vm1372, %v5810, 0
        %v5902 = vsel %vm1372, %v5811, 0
        %v5905 = vsel %vm1372, %v5812, 0
        %v5908 = vsel %vm1372, %v5813, 0
        %v5911 = vsel %vm1372, %v5814, 0
        %v5914 = vsel %vm1372, %v5815, 0
        %v5917 = vsel %vm1372, %v5816, 0
        %v5920 = vsel %vm1372, %v5817, 0
        %v5923 = vsel %vm1372, %v5818, 0
        %v5926 = vsel %vm1372, %v5819, 0
        %v5929 = vsel %vm1372, %v5820, 0
        %v5932 = vsel %vm1372, %v5821, 0
        %v5935 = vsel %vm1372, %v5822, 0
        %v5938 = vsel %vm1372, %v5823, 0
        %v5941 = vsel %vm1372, %v5824, 0
        %v5944 = vsel %vm1372, %v5825, 0
        %v5947 = vsel %vm1372, %v5826, 0
        %v5950 = vsel %vm1372, %v5827, 0
        %v5953 = vsel %vm1372, %v5828, 0
        %v5956 = vsel %vm1372, %v5829, 0
        %v5959 = vsel %vm1372, %v5830, 0
        %v5962 = vsel %vm1372, %v5831, 0
        %v5965 = vsel %vm1372, %v5832, 0
        %v5968 = vsel %vm1372, %v5833, 0
        %v5971 = vsel %vm1372, %v5834, 0
        %v5974 = vsel %vm1372, %v5835, 0
        %v5977 = vsel %vm1372, %v5836, 0
        %v5980 = vsel %vm1372, %v5837, 0
        %v5983 = vsel %vm1372, %v5838, 0
        %v5986 = vsel %vm1372, %v5839, 0
        %5988 = vmatprep.subr.mxu0 0.0
        %5989 = vmatpush1.msra.mxu0 %v675
        %5990 = vmatprep.subr.mxu0 0.0
        %5991 = vmatpush1.msra.mxu0 %v676
        %5992 = vmatprep.subr.mxu0 0.0
        %5993 = vmatpush1.msra.mxu0 %v677
        %5994 = vmatprep.subr.mxu0 0.0
        %5995 = vmatpush1.msra.mxu0 %v678
        %5996 = vmatprep.subr.mxu0 0.0
        %5997 = vmatpush1.msra.mxu0 0.0
        %5998 = vmatprep.subr.mxu0 0.0
        %5999 = vmatpush1.msra.mxu0 0.0
        %6000 = vmatprep.subr.mxu0 0.0
        %6001 = vmatpush1.msra.mxu0 0.0
        %6002 = vmatprep.subr.mxu0 0.0
        %6003 = vmatpush1.msra.mxu0 0.0
        %6004 = vmatprep.subr.mxu0 0.0
        %6005 = vmatpush1.msra.mxu0 0.0
        %6006 = vmatprep.subr.mxu0 0.0
        %6007 = vmatpush1.msra.mxu0 0.0
        %6008 = vmatprep.subr.mxu0 0.0
        %6009 = vmatpush1.msra.mxu0 0.0
        %6010 = vmatprep.subr.mxu0 0.0
        %6011 = vmatpush1.msra.mxu0 0.0
        %6012 = vmatprep.subr.mxu0 0.0
        %6013 = vmatpush1.msra.mxu0 0.0
        %6014 = vmatprep.subr.mxu0 0.0
        %6015 = vmatpush1.msra.mxu0 0.0
        %6016 = vmatprep.subr.mxu0 0.0
        %6017 = vmatpush1.msra.mxu0 0.0
        %6018 = vmatprep.subr.mxu0 0.0
        %6019 = vmatpush1.msra.mxu0 0.0
        %6020 = vmatprep.subr.mxu0 0.0
        %6021 = vmatpush1.msra.mxu0 0.0
        %6022 = vmatprep.subr.mxu0 0.0
        %6023 = vmatpush1.msra.mxu0 0.0
        %6024 = vmatprep.subr.mxu0 0.0
        %6025 = vmatpush1.msra.mxu0 0.0
        %6026 = vmatprep.subr.mxu0 0.0
        %6027 = vmatpush1.msra.mxu0 0.0
        %6028 = vmatprep.subr.mxu0 0.0
        %6029 = vmatpush1.msra.mxu0 0.0
        %6030 = vmatprep.subr.mxu0 0.0
        %6031 = vmatpush1.msra.mxu0 0.0
        %6032 = vmatprep.subr.mxu0 0.0
        %6033 = vmatpush1.msra.mxu0 0.0
        %6034 = vmatprep.subr.mxu0 0.0
        %6035 = vmatpush1.msra.mxu0 0.0
        %6036 = vmatprep.subr.mxu0 0.0
        %6037 = vmatpush1.msra.mxu0 0.0
        %6038 = vmatprep.subr.mxu0 0.0
        %6039 = vmatpush1.msra.mxu0 0.0
        %6040 = vmatprep.subr.mxu0 0.0
        %6041 = vmatpush1.msra.mxu0 0.0
        %6042 = vmatprep.subr.mxu0 0.0
        %6043 = vmatpush1.msra.mxu0 0.0
        %6044 = vmatprep.subr.mxu0 0.0
        %6045 = vmatpush1.msra.mxu0 0.0
        %6046 = vmatprep.subr.mxu0 0.0
        %6047 = vmatpush1.msra.mxu0 0.0
        %6048 = vmatprep.subr.mxu0 0.0
        %6049 = vmatpush1.msra.mxu0 0.0
        %6050 = vmatprep.subr.mxu0 0.0
        %6051 = vmatpush1.msra.mxu0 0.0
        %6052 = vmatprep.mubr.f32.mxu0 0.0
        %6053 = vmatmul.mubr.f32.gmra.mrb[0].mxu0 %v5845
        %v6054 = vpop.f32.mrb[0].mxu0
        %v6055 = vadd.f32 %v5843, %v6054
        %v6056 = vpop.f32.mrb[0].mxu0
        %6057 = vmatprep.mubr.f32.mxu0 0.0
        %6058 = vmatmul.mubr.f32.gmra.mrb[0].mxu0 %v5848
        %v6059 = vpop.f32.mrb[0].mxu0
        %v6060 = vadd.f32 %v5843, %v6059
        %v6061 = vpop.f32.mrb[0].mxu0
        %6062 = vmatprep.mubr.f32.mxu0 0.0
        %6063 = vmatmul.mubr.f32.gmra.mrb[0].mxu0 %v5851
        %v6064 = vpop.f32.mrb[0].mxu0
        %v6065 = vadd.f32 %v5843, %v6064
        %v6066 = vpop.f32.mrb[0].mxu0
        %6067 = vmatprep.mubr.f32.mxu0 0.0
        %6068 = vmatmul.mubr.f32.gmra.mrb[0].mxu0 %v5854
        %v6069 = vpop.f32.mrb[0].mxu0
        %v6070 = vadd.f32 %v5843, %v6069
        %v6071 = vpop.f32.mrb[0].mxu0
        %6072 = vmatprep.mubr.f32.mxu0 0.0
        %6073 = vmatmul.mubr.f32.gmra.mrb[0].mxu0 %v5857
        %v6074 = vpop.f32.mrb[0].mxu0
        %v6075 = vadd.f32 %v5843, %v6074
        %v6076 = vpop.f32.mrb[0].mxu0
        %6077 = vmatprep.mubr.f32.mxu0 0.0
        %6078 = vmatmul.mubr.f32.gmra.mrb[0].mxu0 %v5860
        %v6079 = vpop.f32.mrb[0].mxu0
        %v6080 = vadd.f32 %v5843, %v6079
        %v6081 = vpop.f32.mrb[0].mxu0
        %6082 = vmatprep.mubr.f32.mxu0 0.0
        %6083 = vmatmul.mubr.f32.gmra.mrb[0].mxu0 %v5863
        %v6084 = vpop.f32.mrb[0].mxu0
        %v6085 = vadd.f32 %v5843, %v6084
        %v6086 = vpop.f32.mrb[0].mxu0
        %6087 = vmatprep.mubr.f32.mxu0 0.0
        %6088 = vmatmul.mubr.f32.gmra.mrb[0].mxu0 %v5866
        %v6089 = vpop.f32.mrb[0].mxu0
        %v6090 = vadd.f32 %v5843, %v6089
        %v6091 = vpop.f32.mrb[0].mxu0
        %6092 = vmatprep.mubr.f32.mxu0 0.0
        %6093 = vmatmul.mubr.f32.gmra.mrb[0].mxu0 %v5869
        %v6094 = vpop.f32.mrb[0].mxu0
        %v6095 = vadd.f32 %v5843, %v6094
        %v6096 = vpop.f32.mrb[0].mxu0
        %6097 = vmatprep.mubr.f32.mxu0 0.0
        %6098 = vmatmul.mubr.f32.gmra.mrb[0].mxu0 %v5872
        %v6099 = vpop.f32.mrb[0].mxu0
        %v6100 = vadd.f32 %v5843, %v6099
        %v6101 = vpop.f32.mrb[0].mxu0
        %6102 = vmatprep.mubr.f32.mxu0 0.0
        %6103 = vmatmul.mubr.f32.gmra.mrb[0].mxu0 %v5875
        %v6104 = vpop.f32.mrb[0].mxu0
        %v6105 = vadd.f32 %v5843, %v6104
        %v6106 = vpop.f32.mrb[0].mxu0
        %6107 = vmatprep.mubr.f32.mxu0 0.0
        %6108 = vmatmul.mubr.f32.gmra.mrb[0].mxu0 %v5878
        %v6109 = vpop.f32.mrb[0].mxu0
        %v6110 = vadd.f32 %v5843, %v6109
        %v6111 = vpop.f32.mrb[0].mxu0
        %6112 = vmatprep.mubr.f32.mxu0 0.0
        %6113 = vmatmul.mubr.f32.gmra.mrb[0].mxu0 %v5881
        %v6114 = vpop.f32.mrb[0].mxu0
        %v6115 = vadd.f32 %v5843, %v6114
        %v6116 = vpop.f32.mrb[0].mxu0
        %6117 = vmatprep.mubr.f32.mxu0 0.0
        %6118 = vmatmul.mubr.f32.gmra.mrb[0].mxu0 %v5884
        %v6119 = vpop.f32.mrb[0].mxu0
        %v6120 = vadd.f32 %v5843, %v6119
        %v6121 = vpop.f32.mrb[0].mxu0
        %6122 = vmatprep.mubr.f32.mxu0 0.0
        %6123 = vmatmul.mubr.f32.gmra.mrb[0].mxu0 %v5887
        %v6124 = vpop.f32.mrb[0].mxu0
        %v6125 = vadd.f32 %v5843, %v6124
        %v6126 = vpop.f32.mrb[0].mxu0
        %6127 = vmatprep.mubr.f32.mxu0 0.0
        %6128 = vmatmul.mubr.f32.gmra.mrb[0].mxu0 %v5890
        %v6129 = vpop.f32.mrb[0].mxu0
        %v6130 = vadd.f32 %v5843, %v6129
        %v6131 = vpop.f32.mrb[0].mxu0
        %6132 = vmatprep.mubr.f32.mxu0 0.0
        %6133 = vmatmul.mubr.f32.gmra.mrb[0].mxu0 %v5893
        %v6134 = vpop.f32.mrb[0].mxu0
        %v6135 = vadd.f32 %v5843, %v6134
        %v6136 = vpop.f32.mrb[0].mxu0
        %6137 = vmatprep.mubr.f32.mxu0 0.0
        %6138 = vmatmul.mubr.f32.gmra.mrb[0].mxu0 %v5896
        %v6139 = vpop.f32.mrb[0].mxu0
        %v6140 = vadd.f32 %v5843, %v6139
        %v6141 = vpop.f32.mrb[0].mxu0
        %6142 = vmatprep.mubr.f32.mxu0 0.0
        %6143 = vmatmul.mubr.f32.gmra.mrb[0].mxu0 %v5899
        %v6144 = vpop.f32.mrb[0].mxu0
        %v6145 = vadd.f32 %v5843, %v6144
        %v6146 = vpop.f32.mrb[0].mxu0
        %6147 = vmatprep.mubr.f32.mxu0 0.0
        %6148 = vmatmul.mubr.f32.gmra.mrb[0].mxu0 %v5902
        %v6149 = vpop.f32.mrb[0].mxu0
        %v6150 = vadd.f32 %v5843, %v6149
        %v6151 = vpop.f32.mrb[0].mxu0
        %6152 = vmatprep.mubr.f32.mxu0 0.0
        %6153 = vmatmul.mubr.f32.gmra.mrb[0].mxu0 %v5905
        %v6154 = vpop.f32.mrb[0].mxu0
        %v6155 = vadd.f32 %v5843, %v6154
        %v6156 = vpop.f32.mrb[0].mxu0
        %6157 = vmatprep.mubr.f32.mxu0 0.0
        %6158 = vmatmul.mubr.f32.gmra.mrb[0].mxu0 %v5908
        %v6159 = vpop.f32.mrb[0].mxu0
        %v6160 = vadd.f32 %v5843, %v6159
        %v6161 = vpop.f32.mrb[0].mxu0
        %6162 = vmatprep.mubr.f32.mxu0 0.0
        %6163 = vmatmul.mubr.f32.gmra.mrb[0].mxu0 %v5911
        %v6164 = vpop.f32.mrb[0].mxu0
        %v6165 = vadd.f32 %v5843, %v6164
        %v6166 = vpop.f32.mrb[0].mxu0
        %6167 = vmatprep.mubr.f32.mxu0 0.0
        %6168 = vmatmul.mubr.f32.gmra.mrb[0].mxu0 %v5914
        %v6169 = vpop.f32.mrb[0].mxu0
        %v6170 = vadd.f32 %v5843, %v6169
        %v6171 = vpop.f32.mrb[0].mxu0
        %6172 = vmatprep.mubr.f32.mxu0 0.0
        %6173 = vmatmul.mubr.f32.gmra.mrb[0].mxu0 %v5917
        %v6174 = vpop.f32.mrb[0].mxu0
        %v6175 = vadd.f32 %v5843, %v6174
        %v6176 = vpop.f32.mrb[0].mxu0
        %6177 = vmatprep.mubr.f32.mxu0 0.0
        %6178 = vmatmul.mubr.f32.gmra.mrb[0].mxu0 %v5920
        %v6179 = vpop.f32.mrb[0].mxu0
        %v6180 = vadd.f32 %v5843, %v6179
        %v6181 = vpop.f32.mrb[0].mxu0
        %6182 = vmatprep.mubr.f32.mxu0 0.0
        %6183 = vmatmul.mubr.f32.gmra.mrb[0].mxu0 %v5923
        %v6184 = vpop.f32.mrb[0].mxu0
        %v6185 = vadd.f32 %v5843, %v6184
        %v6186 = vpop.f32.mrb[0].mxu0
        %6187 = vmatprep.mubr.f32.mxu0 0.0
        %6188 = vmatmul.mubr.f32.gmra.mrb[0].mxu0 %v5926
        %v6189 = vpop.f32.mrb[0].mxu0
        %v6190 = vadd.f32 %v5843, %v6189
        %v6191 = vpop.f32.mrb[0].mxu0
        %6192 = vmatprep.mubr.f32.mxu0 0.0
        %6193 = vmatmul.mubr.f32.gmra.mrb[0].mxu0 %v5929
        %v6194 = vpop.f32.mrb[0].mxu0
        %v6195 = vadd.f32 %v5843, %v6194
        %v6196 = vpop.f32.mrb[0].mxu0
        %6197 = vmatprep.mubr.f32.mxu0 0.0
        %6198 = vmatmul.mubr.f32.gmra.mrb[0].mxu0 %v5932
        %v6199 = vpop.f32.mrb[0].mxu0
        %v6200 = vadd.f32 %v5843, %v6199
        %v6201 = vpop.f32.mrb[0].mxu0
        %6202 = vmatprep.mubr.f32.mxu0 0.0
        %6203 = vmatmul.mubr.f32.gmra.mrb[0].mxu0 %v5935
        %v6204 = vpop.f32.mrb[0].mxu0
        %v6205 = vadd.f32 %v5843, %v6204
        %v6206 = vpop.f32.mrb[0].mxu0
        %6207 = vmatprep.mubr.f32.mxu0 0.0
        %6208 = vmatmul.mubr.f32.gmra.mrb[0].mxu0 %v5938
        %v6209 = vpop.f32.mrb[0].mxu0
        %v6210 = vadd.f32 %v5843, %v6209
        %v6211 = vpop.f32.mrb[0].mxu0
        %6212 = vmatprep.mubr.f32.mxu0 0.0
        %6213 = vmatmul.mubr.f32.gmra.mrb[0].mxu0 %v5941
        %v6214 = vpop.f32.mrb[0].mxu0
        %v6215 = vadd.f32 %v5843, %v6214
        %v6216 = vpop.f32.mrb[0].mxu0
        %6217 = vmatprep.mubr.f32.mxu0 0.0
        %6218 = vmatmul.mubr.f32.gmra.mrb[0].mxu0 %v5944
        %v6219 = vpop.f32.mrb[0].mxu0
        %v6220 = vadd.f32 %v5843, %v6219
        %v6221 = vpop.f32.mrb[0].mxu0
        %6222 = vmatprep.mubr.f32.mxu0 0.0
        %6223 = vmatmul.mubr.f32.gmra.mrb[0].mxu0 %v5947
        %v6224 = vpop.f32.mrb[0].mxu0
        %v6225 = vadd.f32 %v5843, %v6224
        %v6226 = vpop.f32.mrb[0].mxu0
        %6227 = vmatprep.mubr.f32.mxu0 0.0
        %6228 = vmatmul.mubr.f32.gmra.mrb[0].mxu0 %v5950
        %v6229 = vpop.f32.mrb[0].mxu0
        %v6230 = vadd.f32 %v5843, %v6229
        %v6231 = vpop.f32.mrb[0].mxu0
        %6232 = vmatprep.mubr.f32.mxu0 0.0
        %6233 = vmatmul.mubr.f32.gmra.mrb[0].mxu0 %v5953
        %v6234 = vpop.f32.mrb[0].mxu0
        %v6235 = vadd.f32 %v5843, %v6234
        %v6236 = vpop.f32.mrb[0].mxu0
        %6237 = vmatprep.mubr.f32.mxu0 0.0
        %6238 = vmatmul.mubr.f32.gmra.mrb[0].mxu0 %v5956
        %v6239 = vpop.f32.mrb[0].mxu0
        %v6240 = vadd.f32 %v5843, %v6239
        %v6241 = vpop.f32.mrb[0].mxu0
        %6242 = vmatprep.mubr.f32.mxu0 0.0
        %6243 = vmatmul.mubr.f32.gmra.mrb[0].mxu0 %v5959
        %v6244 = vpop.f32.mrb[0].mxu0
        %v6245 = vadd.f32 %v5843, %v6244
        %v6246 = vpop.f32.mrb[0].mxu0
        %6247 = vmatprep.mubr.f32.mxu0 0.0
        %6248 = vmatmul.mubr.f32.gmra.mrb[0].mxu0 %v5962
        %v6249 = vpop.f32.mrb[0].mxu0
        %v6250 = vadd.f32 %v5843, %v6249
        %v6251 = vpop.f32.mrb[0].mxu0
        %6252 = vmatprep.mubr.f32.mxu0 0.0
        %6253 = vmatmul.mubr.f32.gmra.mrb[0].mxu0 %v5965
        %v6254 = vpop.f32.mrb[0].mxu0
        %v6255 = vadd.f32 %v5843, %v6254
        %v6256 = vpop.f32.mrb[0].mxu0
        %6257 = vmatprep.mubr.f32.mxu0 0.0
        %6258 = vmatmul.mubr.f32.gmra.mrb[0].mxu0 %v5968
        %v6259 = vpop.f32.mrb[0].mxu0
        %v6260 = vadd.f32 %v5843, %v6259
        %v6261 = vpop.f32.mrb[0].mxu0
        %6262 = vmatprep.mubr.f32.mxu0 0.0
        %6263 = vmatmul.mubr.f32.gmra.mrb[0].mxu0 %v5971
        %v6264 = vpop.f32.mrb[0].mxu0
        %v6265 = vadd.f32 %v5843, %v6264
        %v6266 = vpop.f32.mrb[0].mxu0
        %6267 = vmatprep.mubr.f32.mxu0 0.0
        %6268 = vmatmul.mubr.f32.gmra.mrb[0].mxu0 %v5974
        %v6269 = vpop.f32.mrb[0].mxu0
        %v6270 = vadd.f32 %v5843, %v6269
        %v6271 = vpop.f32.mrb[0].mxu0
        %6272 = vmatprep.mubr.f32.mxu0 0.0
        %6273 = vmatmul.mubr.f32.gmra.mrb[0].mxu0 %v5977
        %v6274 = vpop.f32.mrb[0].mxu0
        %v6275 = vadd.f32 %v5843, %v6274
        %v6276 = vpop.f32.mrb[0].mxu0
        %6277 = vmatprep.mubr.f32.mxu0 0.0
        %6278 = vmatmul.mubr.f32.gmra.mrb[0].mxu0 %v5980
        %v6279 = vpop.f32.mrb[0].mxu0
        %v6280 = vadd.f32 %v5843, %v6279
        %v6281 = vpop.f32.mrb[0].mxu0
        %6282 = vmatprep.mubr.f32.mxu0 0.0
        %6283 = vmatmul.mubr.f32.gmra.mrb[0].mxu0 %v5983
        %v6284 = vpop.f32.mrb[0].mxu0
        %v6285 = vadd.f32 %v5843, %v6284
        %v6286 = vpop.f32.mrb[0].mxu0
        %6287 = vmatprep.mubr.f32.mxu0 0.0
        %6288 = vmatmul.mubr.f32.gmra.mrb[0].mxu0 %v5986
        %v6289 = vpop.f32.mrb[0].mxu0
        %v6290 = vadd.f32 %v5843, %v6289
        %v6291 = vpop.f32.mrb[0].mxu0
        %6292 = vdwg.mxu0
        %v6293 = vsel %vm1372, %v6055, 0.0
        %6294 = vadd.xlane.f32.xlu0 %v6293
        %v6295 = vpop.xlane.xlu0 %6294
        %v6296 = vsel %vm1372, %v6060, 0.0
        %6297 = vadd.xlane.f32.xlu0 %v6296
        %v6298 = vpop.xlane.xlu0 %6297
        %v6299 = vsel %vm1372, %v6065, 0.0
        %6300 = vadd.xlane.f32.xlu0 %v6299
        %v6301 = vpop.xlane.xlu0 %6300
        %v6302 = vsel %vm1372, %v6070, 0.0
        %6303 = vadd.xlane.f32.xlu0 %v6302
        %v6304 = vpop.xlane.xlu0 %6303
        %v6305 = vsel %vm1372, %v6075, 0.0
        %6306 = vadd.xlane.f32.xlu0 %v6305
        %v6307 = vpop.xlane.xlu0 %6306
        %v6308 = vsel %vm1372, %v6080, 0.0
        %6309 = vadd.xlane.f32.xlu0 %v6308
        %v6310 = vpop.xlane.xlu0 %6309
        %v6311 = vsel %vm1372, %v6085, 0.0
        %6312 = vadd.xlane.f32.xlu0 %v6311
        %v6313 = vpop.xlane.xlu0 %6312
        %v6314 = vsel %vm1372, %v6090, 0.0
        %6315 = vadd.xlane.f32.xlu0 %v6314
        %v6316 = vpop.xlane.xlu0 %6315
        %v6317 = vsel %vm1372, %v6095, 0.0
        %6318 = vadd.xlane.f32.xlu0 %v6317
        %v6319 = vpop.xlane.xlu0 %6318
        %v6320 = vsel %vm1372, %v6100, 0.0
        %6321 = vadd.xlane.f32.xlu0 %v6320
        %v6322 = vpop.xlane.xlu0 %6321
        %v6323 = vsel %vm1372, %v6105, 0.0
        %6324 = vadd.xlane.f32.xlu0 %v6323
        %v6325 = vpop.xlane.xlu0 %6324
        %v6326 = vsel %vm1372, %v6110, 0.0
        %6327 = vadd.xlane.f32.xlu0 %v6326
        %v6328 = vpop.xlane.xlu0 %6327
        %v6329 = vsel %vm1372, %v6115, 0.0
        %6330 = vadd.xlane.f32.xlu0 %v6329
        %v6331 = vpop.xlane.xlu0 %6330
        %v6332 = vsel %vm1372, %v6120, 0.0
        %6333 = vadd.xlane.f32.xlu0 %v6332
        %v6334 = vpop.xlane.xlu0 %6333
        %v6335 = vsel %vm1372, %v6125, 0.0
        %6336 = vadd.xlane.f32.xlu0 %v6335
        %v6337 = vpop.xlane.xlu0 %6336
        %v6338 = vsel %vm1372, %v6130, 0.0
        %6339 = vadd.xlane.f32.xlu0 %v6338
        %v6340 = vpop.xlane.xlu0 %6339
        %v6341 = vsel %vm1372, %v6135, 0.0
        %6342 = vadd.xlane.f32.xlu0 %v6341
        %v6343 = vpop.xlane.xlu0 %6342
        %v6344 = vsel %vm1372, %v6140, 0.0
        %6345 = vadd.xlane.f32.xlu0 %v6344
        %v6346 = vpop.xlane.xlu0 %6345
        %v6347 = vsel %vm1372, %v6145, 0.0
        %6348 = vadd.xlane.f32.xlu0 %v6347
        %v6349 = vpop.xlane.xlu0 %6348
        %v6350 = vsel %vm1372, %v6150, 0.0
        %6351 = vadd.xlane.f32.xlu0 %v6350
        %v6352 = vpop.xlane.xlu0 %6351
        %v6353 = vsel %vm1372, %v6155, 0.0
        %6354 = vadd.xlane.f32.xlu0 %v6353
        %v6355 = vpop.xlane.xlu0 %6354
        %v6356 = vsel %vm1372, %v6160, 0.0
        %6357 = vadd.xlane.f32.xlu0 %v6356
        %v6358 = vpop.xlane.xlu0 %6357
        %v6359 = vsel %vm1372, %v6165, 0.0
        %6360 = vadd.xlane.f32.xlu0 %v6359
        %v6361 = vpop.xlane.xlu0 %6360
        %v6362 = vsel %vm1372, %v6170, 0.0
        %6363 = vadd.xlane.f32.xlu0 %v6362
        %v6364 = vpop.xlane.xlu0 %6363
        %v6365 = vsel %vm1372, %v6175, 0.0
        %6366 = vadd.xlane.f32.xlu0 %v6365
        %v6367 = vpop.xlane.xlu0 %6366
        %v6368 = vsel %vm1372, %v6180, 0.0
        %6369 = vadd.xlane.f32.xlu0 %v6368
        %v6370 = vpop.xlane.xlu0 %6369
        %v6371 = vsel %vm1372, %v6185, 0.0
        %6372 = vadd.xlane.f32.xlu0 %v6371
        %v6373 = vpop.xlane.xlu0 %6372
        %v6374 = vsel %vm1372, %v6190, 0.0
        %6375 = vadd.xlane.f32.xlu0 %v6374
        %v6376 = vpop.xlane.xlu0 %6375
        %v6377 = vsel %vm1372, %v6195, 0.0
        %6378 = vadd.xlane.f32.xlu0 %v6377
        %v6379 = vpop.xlane.xlu0 %6378
        %v6380 = vsel %vm1372, %v6200, 0.0
        %6381 = vadd.xlane.f32.xlu0 %v6380
        %v6382 = vpop.xlane.xlu0 %6381
        %v6383 = vsel %vm1372, %v6205, 0.0
        %6384 = vadd.xlane.f32.xlu0 %v6383
        %v6385 = vpop.xlane.xlu0 %6384
        %v6386 = vsel %vm1372, %v6210, 0.0
        %6387 = vadd.xlane.f32.xlu0 %v6386
        %v6388 = vpop.xlane.xlu0 %6387
        %v6389 = vsel %vm1372, %v6215, 0.0
        %6390 = vadd.xlane.f32.xlu0 %v6389
        %v6391 = vpop.xlane.xlu0 %6390
        %v6392 = vsel %vm1372, %v6220, 0.0
        %6393 = vadd.xlane.f32.xlu0 %v6392
        %v6394 = vpop.xlane.xlu0 %6393
        %v6395 = vsel %vm1372, %v6225, 0.0
        %6396 = vadd.xlane.f32.xlu0 %v6395
        %v6397 = vpop.xlane.xlu0 %6396
        %v6398 = vsel %vm1372, %v6230, 0.0
        %6399 = vadd.xlane.f32.xlu0 %v6398
        %v6400 = vpop.xlane.xlu0 %6399
        %v6401 = vsel %vm1372, %v6235, 0.0
        %6402 = vadd.xlane.f32.xlu0 %v6401
        %v6403 = vpop.xlane.xlu0 %6402
        %v6404 = vsel %vm1372, %v6240, 0.0
        %6405 = vadd.xlane.f32.xlu0 %v6404
        %v6406 = vpop.xlane.xlu0 %6405
        %v6407 = vsel %vm1372, %v6245, 0.0
        %6408 = vadd.xlane.f32.xlu0 %v6407
        %v6409 = vpop.xlane.xlu0 %6408
        %v6410 = vsel %vm1372, %v6250, 0.0
        %6411 = vadd.xlane.f32.xlu0 %v6410
        %v6412 = vpop.xlane.xlu0 %6411
        %v6413 = vsel %vm1372, %v6255, 0.0
        %6414 = vadd.xlane.f32.xlu0 %v6413
        %v6415 = vpop.xlane.xlu0 %6414
        %v6416 = vsel %vm1372, %v6260, 0.0
        %6417 = vadd.xlane.f32.xlu0 %v6416
        %v6418 = vpop.xlane.xlu0 %6417
        %v6419 = vsel %vm1372, %v6265, 0.0
        %6420 = vadd.xlane.f32.xlu0 %v6419
        %v6421 = vpop.xlane.xlu0 %6420
        %v6422 = vsel %vm1372, %v6270, 0.0
        %6423 = vadd.xlane.f32.xlu0 %v6422
        %v6424 = vpop.xlane.xlu0 %6423
        %v6425 = vsel %vm1372, %v6275, 0.0
        %6426 = vadd.xlane.f32.xlu0 %v6425
        %v6427 = vpop.xlane.xlu0 %6426
        %v6428 = vsel %vm1372, %v6280, 0.0
        %6429 = vadd.xlane.f32.xlu0 %v6428
        %v6430 = vpop.xlane.xlu0 %6429
        %v6431 = vsel %vm1372, %v6285, 0.0
        %6432 = vadd.xlane.f32.xlu0 %v6431
        %v6433 = vpop.xlane.xlu0 %6432
        %v6434 = vsel %vm1372, %v6290, 0.0
        %6435 = vadd.xlane.f32.xlu0 %v6434
        %v6436 = vpop.xlane.xlu0 %6435
        %v6437 = vmul.f32 %v6295, %v3978
        %v6438 = vmul.f32 %v6298, %v3978
        %v6439 = vmul.f32 %v6301, %v3978
        %v6440 = vmul.f32 %v6304, %v3978
        %v6441 = vmul.f32 %v6307, %v3978
        %v6442 = vmul.f32 %v6310, %v3978
        %v6443 = vmul.f32 %v6313, %v3978
        %v6444 = vmul.f32 %v6316, %v3978
        %v6445 = vmul.f32 %v6319, %v3978
        %v6446 = vmul.f32 %v6322, %v3978
        %v6447 = vmul.f32 %v6325, %v3978
        %v6448 = vmul.f32 %v6328, %v3978
        %v6449 = vmul.f32 %v6331, %v3978
        %v6450 = vmul.f32 %v6334, %v3978
        %v6451 = vmul.f32 %v6337, %v3978
        %v6452 = vmul.f32 %v6340, %v3978
        %v6453 = vmul.f32 %v6343, %v3978
        %v6454 = vmul.f32 %v6346, %v3978
        %v6455 = vmul.f32 %v6349, %v3978
        %v6456 = vmul.f32 %v6352, %v3978
        %v6457 = vmul.f32 %v6355, %v3978
        %v6458 = vmul.f32 %v6358, %v3978
        %v6459 = vmul.f32 %v6361, %v3978
        %v6460 = vmul.f32 %v6364, %v3978
        %v6461 = vmul.f32 %v6367, %v3978
        %v6462 = vmul.f32 %v6370, %v3978
        %v6463 = vmul.f32 %v6373, %v3978
        %v6464 = vmul.f32 %v6376, %v3978
        %v6465 = vmul.f32 %v6379, %v3978
        %v6466 = vmul.f32 %v6382, %v3978
        %v6467 = vmul.f32 %v6385, %v3978
        %v6468 = vmul.f32 %v6388, %v3978
        %v6469 = vmul.f32 %v6391, %v3978
        %v6470 = vmul.f32 %v6394, %v3978
        %v6471 = vmul.f32 %v6397, %v3978
        %v6472 = vmul.f32 %v6400, %v3978
        %v6473 = vmul.f32 %v6403, %v3978
        %v6474 = vmul.f32 %v6406, %v3978
        %v6475 = vmul.f32 %v6409, %v3978
        %v6476 = vmul.f32 %v6412, %v3978
        %v6477 = vmul.f32 %v6415, %v3978
        %v6478 = vmul.f32 %v6418, %v3978
        %v6479 = vmul.f32 %v6421, %v3978
        %v6480 = vmul.f32 %v6424, %v3978
        %v6481 = vmul.f32 %v6427, %v3978
        %v6482 = vmul.f32 %v6430, %v3978
        %v6483 = vmul.f32 %v6433, %v3978
        %v6484 = vmul.f32 %v6436, %v3978
        %v6485 = vsub.f32 %v6055, %v6437
        %v6486 = vsub.f32 %v6060, %v6438
        %v6487 = vsub.f32 %v6065, %v6439
        %v6488 = vsub.f32 %v6070, %v6440
        %v6489 = vsub.f32 %v6075, %v6441
        %v6490 = vsub.f32 %v6080, %v6442
        %v6491 = vsub.f32 %v6085, %v6443
        %v6492 = vsub.f32 %v6090, %v6444
        %v6493 = vsub.f32 %v6095, %v6445
        %v6494 = vsub.f32 %v6100, %v6446
        %v6495 = vsub.f32 %v6105, %v6447
        %v6496 = vsub.f32 %v6110, %v6448
        %v6497 = vsub.f32 %v6115, %v6449
        %v6498 = vsub.f32 %v6120, %v6450
        %v6499 = vsub.f32 %v6125, %v6451
        %v6500 = vsub.f32 %v6130, %v6452
        %v6501 = vsub.f32 %v6135, %v6453
        %v6502 = vsub.f32 %v6140, %v6454
        %v6503 = vsub.f32 %v6145, %v6455
        %v6504 = vsub.f32 %v6150, %v6456
        %v6505 = vsub.f32 %v6155, %v6457
        %v6506 = vsub.f32 %v6160, %v6458
        %v6507 = vsub.f32 %v6165, %v6459
        %v6508 = vsub.f32 %v6170, %v6460
        %v6509 = vsub.f32 %v6175, %v6461
        %v6510 = vsub.f32 %v6180, %v6462
        %v6511 = vsub.f32 %v6185, %v6463
        %v6512 = vsub.f32 %v6190, %v6464
        %v6513 = vsub.f32 %v6195, %v6465
        %v6514 = vsub.f32 %v6200, %v6466
        %v6515 = vsub.f32 %v6205, %v6467
        %v6516 = vsub.f32 %v6210, %v6468
        %v6517 = vsub.f32 %v6215, %v6469
        %v6518 = vsub.f32 %v6220, %v6470
        %v6519 = vsub.f32 %v6225, %v6471
        %v6520 = vsub.f32 %v6230, %v6472
        %v6521 = vsub.f32 %v6235, %v6473
        %v6522 = vsub.f32 %v6240, %v6474
        %v6523 = vsub.f32 %v6245, %v6475
        %v6524 = vsub.f32 %v6250, %v6476
        %v6525 = vsub.f32 %v6255, %v6477
        %v6526 = vsub.f32 %v6260, %v6478
        %v6527 = vsub.f32 %v6265, %v6479
        %v6528 = vsub.f32 %v6270, %v6480
        %v6529 = vsub.f32 %v6275, %v6481
        %v6530 = vsub.f32 %v6280, %v6482
        %v6531 = vsub.f32 %v6285, %v6483
        %v6532 = vsub.f32 %v6290, %v6484
        %v6533 = vmul.f32 %v6485, %v6485
        %v6534 = vmul.f32 %v6486, %v6486
        %v6535 = vmul.f32 %v6487, %v6487
        %v6536 = vmul.f32 %v6488, %v6488
        %v6537 = vmul.f32 %v6489, %v6489
        %v6538 = vmul.f32 %v6490, %v6490
        %v6539 = vmul.f32 %v6491, %v6491
        %v6540 = vmul.f32 %v6492, %v6492
        %v6541 = vmul.f32 %v6493, %v6493
        %v6542 = vmul.f32 %v6494, %v6494
        %v6543 = vmul.f32 %v6495, %v6495
        %v6544 = vmul.f32 %v6496, %v6496
        %v6545 = vmul.f32 %v6497, %v6497
        %v6546 = vmul.f32 %v6498, %v6498
        %v6547 = vmul.f32 %v6499, %v6499
        %v6548 = vmul.f32 %v6500, %v6500
        %v6549 = vmul.f32 %v6501, %v6501
        %v6550 = vmul.f32 %v6502, %v6502
        %v6551 = vmul.f32 %v6503, %v6503
        %v6552 = vmul.f32 %v6504, %v6504
        %v6553 = vmul.f32 %v6505, %v6505
        %v6554 = vmul.f32 %v6506, %v6506
        %v6555 = vmul.f32 %v6507, %v6507
        %v6556 = vmul.f32 %v6508, %v6508
        %v6557 = vmul.f32 %v6509, %v6509
        %v6558 = vmul.f32 %v6510, %v6510
        %v6559 = vmul.f32 %v6511, %v6511
        %v6560 = vmul.f32 %v6512, %v6512
        %v6561 = vmul.f32 %v6513, %v6513
        %v6562 = vmul.f32 %v6514, %v6514
        %v6563 = vmul.f32 %v6515, %v6515
        %v6564 = vmul.f32 %v6516, %v6516
        %v6565 = vmul.f32 %v6517, %v6517
        %v6566 = vmul.f32 %v6518, %v6518
        %v6567 = vmul.f32 %v6519, %v6519
        %v6568 = vmul.f32 %v6520, %v6520
        %v6569 = vmul.f32 %v6521, %v6521
        %v6570 = vmul.f32 %v6522, %v6522
        %v6571 = vmul.f32 %v6523, %v6523
        %v6572 = vmul.f32 %v6524, %v6524
        %v6573 = vmul.f32 %v6525, %v6525
        %v6574 = vmul.f32 %v6526, %v6526
        %v6575 = vmul.f32 %v6527, %v6527
        %v6576 = vmul.f32 %v6528, %v6528
        %v6577 = vmul.f32 %v6529, %v6529
        %v6578 = vmul.f32 %v6530, %v6530
        %v6579 = vmul.f32 %v6531, %v6531
        %v6580 = vmul.f32 %v6532, %v6532
        %v6581 = vsel %vm1372, %v6533, 0.0
        %6582 = vadd.xlane.f32.xlu0 %v6581
        %v6583 = vpop.xlane.xlu0 %6582
        %v6584 = vsel %vm1372, %v6534, 0.0
        %6585 = vadd.xlane.f32.xlu0 %v6584
        %v6586 = vpop.xlane.xlu0 %6585
        %v6587 = vsel %vm1372, %v6535, 0.0
        %6588 = vadd.xlane.f32.xlu0 %v6587
        %v6589 = vpop.xlane.xlu0 %6588
        %v6590 = vsel %vm1372, %v6536, 0.0
        %6591 = vadd.xlane.f32.xlu0 %v6590
        %v6592 = vpop.xlane.xlu0 %6591
        %v6593 = vsel %vm1372, %v6537, 0.0
        %6594 = vadd.xlane.f32.xlu0 %v6593
        %v6595 = vpop.xlane.xlu0 %6594
        %v6596 = vsel %vm1372, %v6538, 0.0
        %6597 = vadd.xlane.f32.xlu0 %v6596
        %v6598 = vpop.xlane.xlu0 %6597
        %v6599 = vsel %vm1372, %v6539, 0.0
        %6600 = vadd.xlane.f32.xlu0 %v6599
        %v6601 = vpop.xlane.xlu0 %6600
        %v6602 = vsel %vm1372, %v6540, 0.0
        %6603 = vadd.xlane.f32.xlu0 %v6602
        %v6604 = vpop.xlane.xlu0 %6603
        %v6605 = vsel %vm1372, %v6541, 0.0
        %6606 = vadd.xlane.f32.xlu0 %v6605
        %v6607 = vpop.xlane.xlu0 %6606
        %v6608 = vsel %vm1372, %v6542, 0.0
        %6609 = vadd.xlane.f32.xlu0 %v6608
        %v6610 = vpop.xlane.xlu0 %6609
        %v6611 = vsel %vm1372, %v6543, 0.0
        %6612 = vadd.xlane.f32.xlu0 %v6611
        %v6613 = vpop.xlane.xlu0 %6612
        %v6614 = vsel %vm1372, %v6544, 0.0
        %6615 = vadd.xlane.f32.xlu0 %v6614
        %v6616 = vpop.xlane.xlu0 %6615
        %v6617 = vsel %vm1372, %v6545, 0.0
        %6618 = vadd.xlane.f32.xlu0 %v6617
        %v6619 = vpop.xlane.xlu0 %6618
        %v6620 = vsel %vm1372, %v6546, 0.0
        %6621 = vadd.xlane.f32.xlu0 %v6620
        %v6622 = vpop.xlane.xlu0 %6621
        %v6623 = vsel %vm1372, %v6547, 0.0
        %6624 = vadd.xlane.f32.xlu0 %v6623
        %v6625 = vpop.xlane.xlu0 %6624
        %v6626 = vsel %vm1372, %v6548, 0.0
        %6627 = vadd.xlane.f32.xlu0 %v6626
        %v6628 = vpop.xlane.xlu0 %6627
        %v6629 = vsel %vm1372, %v6549, 0.0
        %6630 = vadd.xlane.f32.xlu0 %v6629
        %v6631 = vpop.xlane.xlu0 %6630
        %v6632 = vsel %vm1372, %v6550, 0.0
        %6633 = vadd.xlane.f32.xlu0 %v6632
        %v6634 = vpop.xlane.xlu0 %6633
        %v6635 = vsel %vm1372, %v6551, 0.0
        %6636 = vadd.xlane.f32.xlu0 %v6635
        %v6637 = vpop.xlane.xlu0 %6636
        %v6638 = vsel %vm1372, %v6552, 0.0
        %6639 = vadd.xlane.f32.xlu0 %v6638
        %v6640 = vpop.xlane.xlu0 %6639
        %v6641 = vsel %vm1372, %v6553, 0.0
        %6642 = vadd.xlane.f32.xlu0 %v6641
        %v6643 = vpop.xlane.xlu0 %6642
        %v6644 = vsel %vm1372, %v6554, 0.0
        %6645 = vadd.xlane.f32.xlu0 %v6644
        %v6646 = vpop.xlane.xlu0 %6645
        %v6647 = vsel %vm1372, %v6555, 0.0
        %6648 = vadd.xlane.f32.xlu0 %v6647
        %v6649 = vpop.xlane.xlu0 %6648
        %v6650 = vsel %vm1372, %v6556, 0.0
        %6651 = vadd.xlane.f32.xlu0 %v6650
        %v6652 = vpop.xlane.xlu0 %6651
        %v6653 = vsel %vm1372, %v6557, 0.0
        %6654 = vadd.xlane.f32.xlu0 %v6653
        %v6655 = vpop.xlane.xlu0 %6654
        %v6656 = vsel %vm1372, %v6558, 0.0
        %6657 = vadd.xlane.f32.xlu0 %v6656
        %v6658 = vpop.xlane.xlu0 %6657
        %v6659 = vsel %vm1372, %v6559, 0.0
        %6660 = vadd.xlane.f32.xlu0 %v6659
        %v6661 = vpop.xlane.xlu0 %6660
        %v6662 = vsel %vm1372, %v6560, 0.0
        %6663 = vadd.xlane.f32.xlu0 %v6662
        %v6664 = vpop.xlane.xlu0 %6663
        %v6665 = vsel %vm1372, %v6561, 0.0
        %6666 = vadd.xlane.f32.xlu0 %v6665
        %v6667 = vpop.xlane.xlu0 %6666
        %v6668 = vsel %vm1372, %v6562, 0.0
        %6669 = vadd.xlane.f32.xlu0 %v6668
        %v6670 = vpop.xlane.xlu0 %6669
        %v6671 = vsel %vm1372, %v6563, 0.0
        %6672 = vadd.xlane.f32.xlu0 %v6671
        %v6673 = vpop.xlane.xlu0 %6672
        %v6674 = vsel %vm1372, %v6564, 0.0
        %6675 = vadd.xlane.f32.xlu0 %v6674
        %v6676 = vpop.xlane.xlu0 %6675
        %v6677 = vsel %vm1372, %v6565, 0.0
        %6678 = vadd.xlane.f32.xlu0 %v6677
        %v6679 = vpop.xlane.xlu0 %6678
        %v6680 = vsel %vm1372, %v6566, 0.0
        %6681 = vadd.xlane.f32.xlu0 %v6680
        %v6682 = vpop.xlane.xlu0 %6681
        %v6683 = vsel %vm1372, %v6567, 0.0
        %6684 = vadd.xlane.f32.xlu0 %v6683
        %v6685 = vpop.xlane.xlu0 %6684
        %v6686 = vsel %vm1372, %v6568, 0.0
        %6687 = vadd.xlane.f32.xlu0 %v6686
        %v6688 = vpop.xlane.xlu0 %6687
        %v6689 = vsel %vm1372, %v6569, 0.0
        %6690 = vadd.xlane.f32.xlu0 %v6689
        %v6691 = vpop.xlane.xlu0 %6690
        %v6692 = vsel %vm1372, %v6570, 0.0
        %6693 = vadd.xlane.f32.xlu0 %v6692
        %v6694 = vpop.xlane.xlu0 %6693
        %v6695 = vsel %vm1372, %v6571, 0.0
        %6696 = vadd.xlane.f32.xlu0 %v6695
        %v6697 = vpop.xlane.xlu0 %6696
        %v6698 = vsel %vm1372, %v6572, 0.0
        %6699 = vadd.xlane.f32.xlu0 %v6698
        %v6700 = vpop.xlane.xlu0 %6699
        %v6701 = vsel %vm1372, %v6573, 0.0
        %6702 = vadd.xlane.f32.xlu0 %v6701
        %v6703 = vpop.xlane.xlu0 %6702
        %v6704 = vsel %vm1372, %v6574, 0.0
        %6705 = vadd.xlane.f32.xlu0 %v6704
        %v6706 = vpop.xlane.xlu0 %6705
        %v6707 = vsel %vm1372, %v6575, 0.0
        %6708 = vadd.xlane.f32.xlu0 %v6707
        %v6709 = vpop.xlane.xlu0 %6708
        %v6710 = vsel %vm1372, %v6576, 0.0
        %6711 = vadd.xlane.f32.xlu0 %v6710
        %v6712 = vpop.xlane.xlu0 %6711
        %v6713 = vsel %vm1372, %v6577, 0.0
        %6714 = vadd.xlane.f32.xlu0 %v6713
        %v6715 = vpop.xlane.xlu0 %6714
        %v6716 = vsel %vm1372, %v6578, 0.0
        %6717 = vadd.xlane.f32.xlu0 %v6716
        %v6718 = vpop.xlane.xlu0 %6717
        %v6719 = vsel %vm1372, %v6579, 0.0
        %6720 = vadd.xlane.f32.xlu0 %v6719
        %v6721 = vpop.xlane.xlu0 %6720
        %v6722 = vsel %vm1372, %v6580, 0.0
        %6723 = vadd.xlane.f32.xlu0 %v6722
        %v6724 = vpop.xlane.xlu0 %6723
        %v6725 = vmul.f32 %v6583, %v3978
        %v6726 = vmul.f32 %v6586, %v3978
        %v6727 = vmul.f32 %v6589, %v3978
        %v6728 = vmul.f32 %v6592, %v3978
        %v6729 = vmul.f32 %v6595, %v3978
        %v6730 = vmul.f32 %v6598, %v3978
        %v6731 = vmul.f32 %v6601, %v3978
        %v6732 = vmul.f32 %v6604, %v3978
        %v6733 = vmul.f32 %v6607, %v3978
        %v6734 = vmul.f32 %v6610, %v3978
        %v6735 = vmul.f32 %v6613, %v3978
        %v6736 = vmul.f32 %v6616, %v3978
        %v6737 = vmul.f32 %v6619, %v3978
        %v6738 = vmul.f32 %v6622, %v3978
        %v6739 = vmul.f32 %v6625, %v3978
        %v6740 = vmul.f32 %v6628, %v3978
        %v6741 = vmul.f32 %v6631, %v3978
        %v6742 = vmul.f32 %v6634, %v3978
        %v6743 = vmul.f32 %v6637, %v3978
        %v6744 = vmul.f32 %v6640, %v3978
        %v6745 = vmul.f32 %v6643, %v3978
        %v6746 = vmul.f32 %v6646, %v3978
        %v6747 = vmul.f32 %v6649, %v3978
        %v6748 = vmul.f32 %v6652, %v3978
        %v6749 = vmul.f32 %v6655, %v3978
        %v6750 = vmul.f32 %v6658, %v3978
        %v6751 = vmul.f32 %v6661, %v3978
        %v6752 = vmul.f32 %v6664, %v3978
        %v6753 = vmul.f32 %v6667, %v3978
        %v6754 = vmul.f32 %v6670, %v3978
        %v6755 = vmul.f32 %v6673, %v3978
        %v6756 = vmul.f32 %v6676, %v3978
        %v6757 = vmul.f32 %v6679, %v3978
        %v6758 = vmul.f32 %v6682, %v3978
        %v6759 = vmul.f32 %v6685, %v3978
        %v6760 = vmul.f32 %v6688, %v3978
        %v6761 = vmul.f32 %v6691, %v3978
        %v6762 = vmul.f32 %v6694, %v3978
        %v6763 = vmul.f32 %v6697, %v3978
        %v6764 = vmul.f32 %v6700, %v3978
        %v6765 = vmul.f32 %v6703, %v3978
        %v6766 = vmul.f32 %v6706, %v3978
        %v6767 = vmul.f32 %v6709, %v3978
        %v6768 = vmul.f32 %v6712, %v3978
        %v6769 = vmul.f32 %v6715, %v3978
        %v6770 = vmul.f32 %v6718, %v3978
        %v6771 = vmul.f32 %v6721, %v3978
        %v6772 = vmul.f32 %v6724, %v3978
        %v6773 = vadd.f32 %v6725, 1e-05
        %v6774 = vadd.f32 %v6726, 1e-05
        %v6775 = vadd.f32 %v6727, 1e-05
        %v6776 = vadd.f32 %v6728, 1e-05
        %v6777 = vadd.f32 %v6729, 1e-05
        %v6778 = vadd.f32 %v6730, 1e-05
        %v6779 = vadd.f32 %v6731, 1e-05
        %v6780 = vadd.f32 %v6732, 1e-05
        %v6781 = vadd.f32 %v6733, 1e-05
        %v6782 = vadd.f32 %v6734, 1e-05
        %v6783 = vadd.f32 %v6735, 1e-05
        %v6784 = vadd.f32 %v6736, 1e-05
        %v6785 = vadd.f32 %v6737, 1e-05
        %v6786 = vadd.f32 %v6738, 1e-05
        %v6787 = vadd.f32 %v6739, 1e-05
        %v6788 = vadd.f32 %v6740, 1e-05
        %v6789 = vadd.f32 %v6741, 1e-05
        %v6790 = vadd.f32 %v6742, 1e-05
        %v6791 = vadd.f32 %v6743, 1e-05
        %v6792 = vadd.f32 %v6744, 1e-05
        %v6793 = vadd.f32 %v6745, 1e-05
        %v6794 = vadd.f32 %v6746, 1e-05
        %v6795 = vadd.f32 %v6747, 1e-05
        %v6796 = vadd.f32 %v6748, 1e-05
        %v6797 = vadd.f32 %v6749, 1e-05
        %v6798 = vadd.f32 %v6750, 1e-05
        %v6799 = vadd.f32 %v6751, 1e-05
        %v6800 = vadd.f32 %v6752, 1e-05
        %v6801 = vadd.f32 %v6753, 1e-05
        %v6802 = vadd.f32 %v6754, 1e-05
        %v6803 = vadd.f32 %v6755, 1e-05
        %v6804 = vadd.f32 %v6756, 1e-05
        %v6805 = vadd.f32 %v6757, 1e-05
        %v6806 = vadd.f32 %v6758, 1e-05
        %v6807 = vadd.f32 %v6759, 1e-05
        %v6808 = vadd.f32 %v6760, 1e-05
        %v6809 = vadd.f32 %v6761, 1e-05
        %v6810 = vadd.f32 %v6762, 1e-05
        %v6811 = vadd.f32 %v6763, 1e-05
        %v6812 = vadd.f32 %v6764, 1e-05
        %v6813 = vadd.f32 %v6765, 1e-05
        %v6814 = vadd.f32 %v6766, 1e-05
        %v6815 = vadd.f32 %v6767, 1e-05
        %v6816 = vadd.f32 %v6768, 1e-05
        %v6817 = vadd.f32 %v6769, 1e-05
        %v6818 = vadd.f32 %v6770, 1e-05
        %v6819 = vadd.f32 %v6771, 1e-05
        %v6820 = vadd.f32 %v6772, 1e-05
        %v6821 = vrsqrt.pop %v6773
        %v6822 = vrsqrt.pop %v6774
        %v6823 = vrsqrt.pop %v6775
        %v6824 = vrsqrt.pop %v6776
        %v6825 = vrsqrt.pop %v6777
        %v6826 = vrsqrt.pop %v6778
        %v6827 = vrsqrt.pop %v6779
        %v6828 = vrsqrt.pop %v6780
        %v6829 = vrsqrt.pop %v6781
        %v6830 = vrsqrt.pop %v6782
        %v6831 = vrsqrt.pop %v6783
        %v6832 = vrsqrt.pop %v6784
        %v6833 = vrsqrt.pop %v6785
        %v6834 = vrsqrt.pop %v6786
        %v6835 = vrsqrt.pop %v6787
        %v6836 = vrsqrt.pop %v6788
        %v6837 = vrsqrt.pop %v6789
        %v6838 = vrsqrt.pop %v6790
        %v6839 = vrsqrt.pop %v6791
        %v6840 = vrsqrt.pop %v6792
        %v6841 = vrsqrt.pop %v6793
        %v6842 = vrsqrt.pop %v6794
        %v6843 = vrsqrt.pop %v6795
        %v6844 = vrsqrt.pop %v6796
        %v6845 = vrsqrt.pop %v6797
        %v6846 = vrsqrt.pop %v6798
        %v6847 = vrsqrt.pop %v6799
        %v6848 = vrsqrt.pop %v6800
        %v6849 = vrsqrt.pop %v6801
        %v6850 = vrsqrt.pop %v6802
        %v6851 = vrsqrt.pop %v6803
        %v6852 = vrsqrt.pop %v6804
        %v6853 = vrsqrt.pop %v6805
        %v6854 = vrsqrt.pop %v6806
        %v6855 = vrsqrt.pop %v6807
        %v6856 = vrsqrt.pop %v6808
        %v6857 = vrsqrt.pop %v6809
        %v6858 = vrsqrt.pop %v6810
        %v6859 = vrsqrt.pop %v6811
        %v6860 = vrsqrt.pop %v6812
        %v6861 = vrsqrt.pop %v6813
        %v6862 = vrsqrt.pop %v6814
        %v6863 = vrsqrt.pop %v6815
        %v6864 = vrsqrt.pop %v6816
        %v6865 = vrsqrt.pop %v6817
        %v6866 = vrsqrt.pop %v6818
        %v6867 = vrsqrt.pop %v6819
        %v6868 = vrsqrt.pop %v6820
        %v6869 = vmul.f32 %v6485, %v6821
        %v6870 = vmul.f32 %v6486, %v6822
        %v6871 = vmul.f32 %v6487, %v6823
        %v6872 = vmul.f32 %v6488, %v6824
        %v6873 = vmul.f32 %v6489, %v6825
        %v6874 = vmul.f32 %v6490, %v6826
        %v6875 = vmul.f32 %v6491, %v6827
        %v6876 = vmul.f32 %v6492, %v6828
        %v6877 = vmul.f32 %v6493, %v6829
        %v6878 = vmul.f32 %v6494, %v6830
        %v6879 = vmul.f32 %v6495, %v6831
        %v6880 = vmul.f32 %v6496, %v6832
        %v6881 = vmul.f32 %v6497, %v6833
        %v6882 = vmul.f32 %v6498, %v6834
        %v6883 = vmul.f32 %v6499, %v6835
        %v6884 = vmul.f32 %v6500, %v6836
        %v6885 = vmul.f32 %v6501, %v6837
        %v6886 = vmul.f32 %v6502, %v6838
        %v6887 = vmul.f32 %v6503, %v6839
        %v6888 = vmul.f32 %v6504, %v6840
        %v6889 = vmul.f32 %v6505, %v6841
        %v6890 = vmul.f32 %v6506, %v6842
        %v6891 = vmul.f32 %v6507, %v6843
        %v6892 = vmul.f32 %v6508, %v6844
        %v6893 = vmul.f32 %v6509, %v6845
        %v6894 = vmul.f32 %v6510, %v6846
        %v6895 = vmul.f32 %v6511, %v6847
        %v6896 = vmul.f32 %v6512, %v6848
        %v6897 = vmul.f32 %v6513, %v6849
        %v6898 = vmul.f32 %v6514, %v6850
        %v6899 = vmul.f32 %v6515, %v6851
        %v6900 = vmul.f32 %v6516, %v6852
        %v6901 = vmul.f32 %v6517, %v6853
        %v6902 = vmul.f32 %v6518, %v6854
        %v6903 = vmul.f32 %v6519, %v6855
        %v6904 = vmul.f32 %v6520, %v6856
        %v6905 = vmul.f32 %v6521, %v6857
        %v6906 = vmul.f32 %v6522, %v6858
        %v6907 = vmul.f32 %v6523, %v6859
        %v6908 = vmul.f32 %v6524, %v6860
        %v6909 = vmul.f32 %v6525, %v6861
        %v6910 = vmul.f32 %v6526, %v6862
        %v6911 = vmul.f32 %v6527, %v6863
        %v6912 = vmul.f32 %v6528, %v6864
        %v6913 = vmul.f32 %v6529, %v6865
        %v6914 = vmul.f32 %v6530, %v6866
        %v6915 = vmul.f32 %v6531, %v6867
        %v6916 = vmul.f32 %v6532, %v6868
        %v6917 = vlaneseq
        %v6918 = vshrl.u32 %v6917, 7
        %v6919 = vsub.s32 0, %v6918
        %v6920 = vrot.slane %v692, %v6919
        %v6921 = vmul.f32 %v6869, %v6920
        %v6922 = vmul.f32 %v6870, %v6920
        %v6923 = vmul.f32 %v6871, %v6920
        %v6924 = vmul.f32 %v6872, %v6920
        %v6925 = vmul.f32 %v6873, %v6920
        %v6926 = vmul.f32 %v6874, %v6920
        %v6927 = vmul.f32 %v6875, %v6920
        %v6928 = vmul.f32 %v6876, %v6920
        %v6929 = vmul.f32 %v6877, %v6920
        %v6930 = vmul.f32 %v6878, %v6920
        %v6931 = vmul.f32 %v6879, %v6920
        %v6932 = vmul.f32 %v6880, %v6920
        %v6933 = vmul.f32 %v6881, %v6920
        %v6934 = vmul.f32 %v6882, %v6920
        %v6935 = vmul.f32 %v6883, %v6920
        %v6936 = vmul.f32 %v6884, %v6920
        %v6937 = vmul.f32 %v6885, %v6920
        %v6938 = vmul.f32 %v6886, %v6920
        %v6939 = vmul.f32 %v6887, %v6920
        %v6940 = vmul.f32 %v6888, %v6920
        %v6941 = vmul.f32 %v6889, %v6920
        %v6942 = vmul.f32 %v6890, %v6920
        %v6943 = vmul.f32 %v6891, %v6920
        %v6944 = vmul.f32 %v6892, %v6920
        %v6945 = vmul.f32 %v6893, %v6920
        %v6946 = vmul.f32 %v6894, %v6920
        %v6947 = vmul.f32 %v6895, %v6920
        %v6948 = vmul.f32 %v6896, %v6920
        %v6949 = vmul.f32 %v6897, %v6920
        %v6950 = vmul.f32 %v6898, %v6920
        %v6951 = vmul.f32 %v6899, %v6920
        %v6952 = vmul.f32 %v6900, %v6920
        %v6953 = vmul.f32 %v6901, %v6920
        %v6954 = vmul.f32 %v6902, %v6920
        %v6955 = vmul.f32 %v6903, %v6920
        %v6956 = vmul.f32 %v6904, %v6920
        %v6957 = vmul.f32 %v6905, %v6920
        %v6958 = vmul.f32 %v6906, %v6920
        %v6959 = vmul.f32 %v6907, %v6920
        %v6960 = vmul.f32 %v6908, %v6920
        %v6961 = vmul.f32 %v6909, %v6920
        %v6962 = vmul.f32 %v6910, %v6920
        %v6963 = vmul.f32 %v6911, %v6920
        %v6964 = vmul.f32 %v6912, %v6920
        %v6965 = vmul.f32 %v6913, %v6920
        %v6966 = vmul.f32 %v6914, %v6920
        %v6967 = vmul.f32 %v6915, %v6920
        %v6968 = vmul.f32 %v6916, %v6920
        %v6969 = vlaneseq
        %v6970 = vshrl.u32 %v6969, 7
        %v6971 = vsub.s32 1, %v6970
        %v6972 = vrot.slane %v692, %v6971
        %v6973 = vadd.f32 %v6921, %v6972
        %v6974 = vadd.f32 %v6922, %v6972
        %v6975 = vadd.f32 %v6923, %v6972
        %v6976 = vadd.f32 %v6924, %v6972
        %v6977 = vadd.f32 %v6925, %v6972
        %v6978 = vadd.f32 %v6926, %v6972
        %v6979 = vadd.f32 %v6927, %v6972
        %v6980 = vadd.f32 %v6928, %v6972
        %v6981 = vadd.f32 %v6929, %v6972
        %v6982 = vadd.f32 %v6930, %v6972
        %v6983 = vadd.f32 %v6931, %v6972
        %v6984 = vadd.f32 %v6932, %v6972
        %v6985 = vadd.f32 %v6933, %v6972
        %v6986 = vadd.f32 %v6934, %v6972
        %v6987 = vadd.f32 %v6935, %v6972
        %v6988 = vadd.f32 %v6936, %v6972
        %v6989 = vadd.f32 %v6937, %v6972
        %v6990 = vadd.f32 %v6938, %v6972
        %v6991 = vadd.f32 %v6939, %v6972
        %v6992 = vadd.f32 %v6940, %v6972
        %v6993 = vadd.f32 %v6941, %v6972
        %v6994 = vadd.f32 %v6942, %v6972
        %v6995 = vadd.f32 %v6943, %v6972
        %v6996 = vadd.f32 %v6944, %v6972
        %v6997 = vadd.f32 %v6945, %v6972
        %v6998 = vadd.f32 %v6946, %v6972
        %v6999 = vadd.f32 %v6947, %v6972
        %v7000 = vadd.f32 %v6948, %v6972
        %v7001 = vadd.f32 %v6949, %v6972
        %v7002 = vadd.f32 %v6950, %v6972
        %v7003 = vadd.f32 %v6951, %v6972
        %v7004 = vadd.f32 %v6952, %v6972
        %v7005 = vadd.f32 %v6953, %v6972
        %v7006 = vadd.f32 %v6954, %v6972
        %v7007 = vadd.f32 %v6955, %v6972
        %v7008 = vadd.f32 %v6956, %v6972
        %v7009 = vadd.f32 %v6957, %v6972
        %v7010 = vadd.f32 %v6958, %v6972
        %v7011 = vadd.f32 %v6959, %v6972
        %v7012 = vadd.f32 %v6960, %v6972
        %v7013 = vadd.f32 %v6961, %v6972
        %v7014 = vadd.f32 %v6962, %v6972
        %v7015 = vadd.f32 %v6963, %v6972
        %v7016 = vadd.f32 %v6964, %v6972
        %v7017 = vadd.f32 %v6965, %v6972
        %v7018 = vadd.f32 %v6966, %v6972
        %v7019 = vadd.f32 %v6967, %v6972
        %v7020 = vadd.f32 %v6968, %v6972
        %v7021 = vmax.f32 %v6973, 0.0
        %v7022 = vmax.f32 %v6974, 0.0
        %v7023 = vmax.f32 %v6975, 0.0
        %v7024 = vmax.f32 %v6976, 0.0
        %v7025 = vmax.f32 %v6977, 0.0
        %v7026 = vmax.f32 %v6978, 0.0
        %v7027 = vmax.f32 %v6979, 0.0
        %v7028 = vmax.f32 %v6980, 0.0
        %v7029 = vmax.f32 %v6981, 0.0
        %v7030 = vmax.f32 %v6982, 0.0
        %v7031 = vmax.f32 %v6983, 0.0
        %v7032 = vmax.f32 %v6984, 0.0
        %v7033 = vmax.f32 %v6985, 0.0
        %v7034 = vmax.f32 %v6986, 0.0
        %v7035 = vmax.f32 %v6987, 0.0
        %v7036 = vmax.f32 %v6988, 0.0
        %v7037 = vmax.f32 %v6989, 0.0
        %v7038 = vmax.f32 %v6990, 0.0
        %v7039 = vmax.f32 %v6991, 0.0
        %v7040 = vmax.f32 %v6992, 0.0
        %v7041 = vmax.f32 %v6993, 0.0
        %v7042 = vmax.f32 %v6994, 0.0
        %v7043 = vmax.f32 %v6995, 0.0
        %v7044 = vmax.f32 %v6996, 0.0
        %v7045 = vmax.f32 %v6997, 0.0
        %v7046 = vmax.f32 %v6998, 0.0
        %v7047 = vmax.f32 %v6999, 0.0
        %v7048 = vmax.f32 %v7000, 0.0
        %v7049 = vmax.f32 %v7001, 0.0
        %v7050 = vmax.f32 %v7002, 0.0
        %v7051 = vmax.f32 %v7003, 0.0
        %v7052 = vmax.f32 %v7004, 0.0
        %v7053 = vmax.f32 %v7005, 0.0
        %v7054 = vmax.f32 %v7006, 0.0
        %v7055 = vmax.f32 %v7007, 0.0
        %v7056 = vmax.f32 %v7008, 0.0
        %v7057 = vmax.f32 %v7009, 0.0
        %v7058 = vmax.f32 %v7010, 0.0
        %v7059 = vmax.f32 %v7011, 0.0
        %v7060 = vmax.f32 %v7012, 0.0
        %v7061 = vmax.f32 %v7013, 0.0
        %v7062 = vmax.f32 %v7014, 0.0
        %v7063 = vmax.f32 %v7015, 0.0
        %v7064 = vmax.f32 %v7016, 0.0
        %v7065 = vmax.f32 %v7017, 0.0
        %v7066 = vmax.f32 %v7018, 0.0
        %v7067 = vmax.f32 %v7019, 0.0
        %v7068 = vmax.f32 %v7020, 0.0
        %v7069 = vlaneseq
        %v7070 = vshrl.u32 %v7069, 7
        %v7071 = vsub.s32 2, %v7070
        %v7072 = vrot.slane %v692, %v7071
        %v7073 = vmul.f32 %v7021, %v7072
        %v7074 = vmul.f32 %v7022, %v7072
        %v7075 = vmul.f32 %v7023, %v7072
        %v7076 = vmul.f32 %v7024, %v7072
        %v7077 = vmul.f32 %v7025, %v7072
        %v7078 = vmul.f32 %v7026, %v7072
        %v7079 = vmul.f32 %v7027, %v7072
        %v7080 = vmul.f32 %v7028, %v7072
        %v7081 = vmul.f32 %v7029, %v7072
        %v7082 = vmul.f32 %v7030, %v7072
        %v7083 = vmul.f32 %v7031, %v7072
        %v7084 = vmul.f32 %v7032, %v7072
        %v7085 = vmul.f32 %v7033, %v7072
        %v7086 = vmul.f32 %v7034, %v7072
        %v7087 = vmul.f32 %v7035, %v7072
        %v7088 = vmul.f32 %v7036, %v7072
        %v7089 = vmul.f32 %v7037, %v7072
        %v7090 = vmul.f32 %v7038, %v7072
        %v7091 = vmul.f32 %v7039, %v7072
        %v7092 = vmul.f32 %v7040, %v7072
        %v7093 = vmul.f32 %v7041, %v7072
        %v7094 = vmul.f32 %v7042, %v7072
        %v7095 = vmul.f32 %v7043, %v7072
        %v7096 = vmul.f32 %v7044, %v7072
        %v7097 = vmul.f32 %v7045, %v7072
        %v7098 = vmul.f32 %v7046, %v7072
        %v7099 = vmul.f32 %v7047, %v7072
        %v7100 = vmul.f32 %v7048, %v7072
        %v7101 = vmul.f32 %v7049, %v7072
        %v7102 = vmul.f32 %v7050, %v7072
        %v7103 = vmul.f32 %v7051, %v7072
        %v7104 = vmul.f32 %v7052, %v7072
        %v7105 = vmul.f32 %v7053, %v7072
        %v7106 = vmul.f32 %v7054, %v7072
        %v7107 = vmul.f32 %v7055, %v7072
        %v7108 = vmul.f32 %v7056, %v7072
        %v7109 = vmul.f32 %v7057, %v7072
        %v7110 = vmul.f32 %v7058, %v7072
        %v7111 = vmul.f32 %v7059, %v7072
        %v7112 = vmul.f32 %v7060, %v7072
        %v7113 = vmul.f32 %v7061, %v7072
        %v7114 = vmul.f32 %v7062, %v7072
        %v7115 = vmul.f32 %v7063, %v7072
        %v7116 = vmul.f32 %v7064, %v7072
        %v7117 = vmul.f32 %v7065, %v7072
        %v7118 = vmul.f32 %v7066, %v7072
        %v7119 = vmul.f32 %v7067, %v7072
        %v7120 = vmul.f32 %v7068, %v7072
        %v7121 = vsel %vm1372, %v7073, 0.0
        %7122 = vadd.xlane.f32.xlu0 %v7121
        %v7123 = vpop.xlane.xlu0 %7122
        %v7124 = vsel %vm1372, %v7074, 0.0
        %7125 = vadd.xlane.f32.xlu0 %v7124
        %v7126 = vpop.xlane.xlu0 %7125
        %v7127 = vsel %vm1372, %v7075, 0.0
        %7128 = vadd.xlane.f32.xlu0 %v7127
        %v7129 = vpop.xlane.xlu0 %7128
        %v7130 = vsel %vm1372, %v7076, 0.0
        %7131 = vadd.xlane.f32.xlu0 %v7130
        %v7132 = vpop.xlane.xlu0 %7131
        %v7133 = vsel %vm1372, %v7077, 0.0
        %7134 = vadd.xlane.f32.xlu0 %v7133
        %v7135 = vpop.xlane.xlu0 %7134
        %v7136 = vsel %vm1372, %v7078, 0.0
        %7137 = vadd.xlane.f32.xlu0 %v7136
        %v7138 = vpop.xlane.xlu0 %7137
        %v7139 = vsel %vm1372, %v7079, 0.0
        %7140 = vadd.xlane.f32.xlu0 %v7139
        %v7141 = vpop.xlane.xlu0 %7140
        %v7142 = vsel %vm1372, %v7080, 0.0
        %7143 = vadd.xlane.f32.xlu0 %v7142
        %v7144 = vpop.xlane.xlu0 %7143
        %v7145 = vsel %vm1372, %v7081, 0.0
        %7146 = vadd.xlane.f32.xlu0 %v7145
        %v7147 = vpop.xlane.xlu0 %7146
        %v7148 = vsel %vm1372, %v7082, 0.0
        %7149 = vadd.xlane.f32.xlu0 %v7148
        %v7150 = vpop.xlane.xlu0 %7149
        %v7151 = vsel %vm1372, %v7083, 0.0
        %7152 = vadd.xlane.f32.xlu0 %v7151
        %v7153 = vpop.xlane.xlu0 %7152
        %v7154 = vsel %vm1372, %v7084, 0.0
        %7155 = vadd.xlane.f32.xlu0 %v7154
        %v7156 = vpop.xlane.xlu0 %7155
        %v7157 = vsel %vm1372, %v7085, 0.0
        %7158 = vadd.xlane.f32.xlu0 %v7157
        %v7159 = vpop.xlane.xlu0 %7158
        %v7160 = vsel %vm1372, %v7086, 0.0
        %7161 = vadd.xlane.f32.xlu0 %v7160
        %v7162 = vpop.xlane.xlu0 %7161
        %v7163 = vsel %vm1372, %v7087, 0.0
        %7164 = vadd.xlane.f32.xlu0 %v7163
        %v7165 = vpop.xlane.xlu0 %7164
        %v7166 = vsel %vm1372, %v7088, 0.0
        %7167 = vadd.xlane.f32.xlu0 %v7166
        %v7168 = vpop.xlane.xlu0 %7167
        %v7169 = vsel %vm1372, %v7089, 0.0
        %7170 = vadd.xlane.f32.xlu0 %v7169
        %v7171 = vpop.xlane.xlu0 %7170
        %v7172 = vsel %vm1372, %v7090, 0.0
        %7173 = vadd.xlane.f32.xlu0 %v7172
        %v7174 = vpop.xlane.xlu0 %7173
        %v7175 = vsel %vm1372, %v7091, 0.0
        %7176 = vadd.xlane.f32.xlu0 %v7175
        %v7177 = vpop.xlane.xlu0 %7176
        %v7178 = vsel %vm1372, %v7092, 0.0
        %7179 = vadd.xlane.f32.xlu0 %v7178
        %v7180 = vpop.xlane.xlu0 %7179
        %v7181 = vsel %vm1372, %v7093, 0.0
        %7182 = vadd.xlane.f32.xlu0 %v7181
        %v7183 = vpop.xlane.xlu0 %7182
        %v7184 = vsel %vm1372, %v7094, 0.0
        %7185 = vadd.xlane.f32.xlu0 %v7184
        %v7186 = vpop.xlane.xlu0 %7185
        %v7187 = vsel %vm1372, %v7095, 0.0
        %7188 = vadd.xlane.f32.xlu0 %v7187
        %v7189 = vpop.xlane.xlu0 %7188
        %v7190 = vsel %vm1372, %v7096, 0.0
        %7191 = vadd.xlane.f32.xlu0 %v7190
        %v7192 = vpop.xlane.xlu0 %7191
        %v7193 = vsel %vm1372, %v7097, 0.0
        %7194 = vadd.xlane.f32.xlu0 %v7193
        %v7195 = vpop.xlane.xlu0 %7194
        %v7196 = vsel %vm1372, %v7098, 0.0
        %7197 = vadd.xlane.f32.xlu0 %v7196
        %v7198 = vpop.xlane.xlu0 %7197
        %v7199 = vsel %vm1372, %v7099, 0.0
        %7200 = vadd.xlane.f32.xlu0 %v7199
        %v7201 = vpop.xlane.xlu0 %7200
        %v7202 = vsel %vm1372, %v7100, 0.0
        %7203 = vadd.xlane.f32.xlu0 %v7202
        %v7204 = vpop.xlane.xlu0 %7203
        %v7205 = vsel %vm1372, %v7101, 0.0
        %7206 = vadd.xlane.f32.xlu0 %v7205
        %v7207 = vpop.xlane.xlu0 %7206
        %v7208 = vsel %vm1372, %v7102, 0.0
        %7209 = vadd.xlane.f32.xlu0 %v7208
        %v7210 = vpop.xlane.xlu0 %7209
        %v7211 = vsel %vm1372, %v7103, 0.0
        %7212 = vadd.xlane.f32.xlu0 %v7211
        %v7213 = vpop.xlane.xlu0 %7212
        %v7214 = vsel %vm1372, %v7104, 0.0
        %7215 = vadd.xlane.f32.xlu0 %v7214
        %v7216 = vpop.xlane.xlu0 %7215
        %v7217 = vsel %vm1372, %v7105, 0.0
        %7218 = vadd.xlane.f32.xlu0 %v7217
        %v7219 = vpop.xlane.xlu0 %7218
        %v7220 = vsel %vm1372, %v7106, 0.0
        %7221 = vadd.xlane.f32.xlu0 %v7220
        %v7222 = vpop.xlane.xlu0 %7221
        %v7223 = vsel %vm1372, %v7107, 0.0
        %7224 = vadd.xlane.f32.xlu0 %v7223
        %v7225 = vpop.xlane.xlu0 %7224
        %v7226 = vsel %vm1372, %v7108, 0.0
        %7227 = vadd.xlane.f32.xlu0 %v7226
        %v7228 = vpop.xlane.xlu0 %7227
        %v7229 = vsel %vm1372, %v7109, 0.0
        %7230 = vadd.xlane.f32.xlu0 %v7229
        %v7231 = vpop.xlane.xlu0 %7230
        %v7232 = vsel %vm1372, %v7110, 0.0
        %7233 = vadd.xlane.f32.xlu0 %v7232
        %v7234 = vpop.xlane.xlu0 %7233
        %v7235 = vsel %vm1372, %v7111, 0.0
        %7236 = vadd.xlane.f32.xlu0 %v7235
        %v7237 = vpop.xlane.xlu0 %7236
        %v7238 = vsel %vm1372, %v7112, 0.0
        %7239 = vadd.xlane.f32.xlu0 %v7238
        %v7240 = vpop.xlane.xlu0 %7239
        %v7241 = vsel %vm1372, %v7113, 0.0
        %7242 = vadd.xlane.f32.xlu0 %v7241
        %v7243 = vpop.xlane.xlu0 %7242
        %v7244 = vsel %vm1372, %v7114, 0.0
        %7245 = vadd.xlane.f32.xlu0 %v7244
        %v7246 = vpop.xlane.xlu0 %7245
        %v7247 = vsel %vm1372, %v7115, 0.0
        %7248 = vadd.xlane.f32.xlu0 %v7247
        %v7249 = vpop.xlane.xlu0 %7248
        %v7250 = vsel %vm1372, %v7116, 0.0
        %7251 = vadd.xlane.f32.xlu0 %v7250
        %v7252 = vpop.xlane.xlu0 %7251
        %v7253 = vsel %vm1372, %v7117, 0.0
        %7254 = vadd.xlane.f32.xlu0 %v7253
        %v7255 = vpop.xlane.xlu0 %7254
        %v7256 = vsel %vm1372, %v7118, 0.0
        %7257 = vadd.xlane.f32.xlu0 %v7256
        %v7258 = vpop.xlane.xlu0 %7257
        %v7259 = vsel %vm1372, %v7119, 0.0
        %7260 = vadd.xlane.f32.xlu0 %v7259
        %v7261 = vpop.xlane.xlu0 %7260
        %v7262 = vsel %vm1372, %v7120, 0.0
        %7263 = vadd.xlane.f32.xlu0 %v7262
        %v7264 = vpop.xlane.xlu0 %7263
        %v7265 = vlaneseq
        %v7266 = vshrl.u32 %v7265, 7
        %v7267 = vsub.s32 3, %v7266
        %v7268 = vrot.slane %v692, %v7267
        %v7269 = vadd.f32 %v7123, %v7268
        %v7270 = vadd.f32 %v7126, %v7268
        %v7271 = vadd.f32 %v7129, %v7268
        %v7272 = vadd.f32 %v7132, %v7268
        %v7273 = vadd.f32 %v7135, %v7268
        %v7274 = vadd.f32 %v7138, %v7268
        %v7275 = vadd.f32 %v7141, %v7268
        %v7276 = vadd.f32 %v7144, %v7268
        %v7277 = vadd.f32 %v7147, %v7268
        %v7278 = vadd.f32 %v7150, %v7268
        %v7279 = vadd.f32 %v7153, %v7268
        %v7280 = vadd.f32 %v7156, %v7268
        %v7281 = vadd.f32 %v7159, %v7268
        %v7282 = vadd.f32 %v7162, %v7268
        %v7283 = vadd.f32 %v7165, %v7268
        %v7284 = vadd.f32 %v7168, %v7268
        %v7285 = vadd.f32 %v7171, %v7268
        %v7286 = vadd.f32 %v7174, %v7268
        %v7287 = vadd.f32 %v7177, %v7268
        %v7288 = vadd.f32 %v7180, %v7268
        %v7289 = vadd.f32 %v7183, %v7268
        %v7290 = vadd.f32 %v7186, %v7268
        %v7291 = vadd.f32 %v7189, %v7268
        %v7292 = vadd.f32 %v7192, %v7268
        %v7293 = vadd.f32 %v7195, %v7268
        %v7294 = vadd.f32 %v7198, %v7268
        %v7295 = vadd.f32 %v7201, %v7268
        %v7296 = vadd.f32 %v7204, %v7268
        %v7297 = vadd.f32 %v7207, %v7268
        %v7298 = vadd.f32 %v7210, %v7268
        %v7299 = vadd.f32 %v7213, %v7268
        %v7300 = vadd.f32 %v7216, %v7268
        %v7301 = vadd.f32 %v7219, %v7268
        %v7302 = vadd.f32 %v7222, %v7268
        %v7303 = vadd.f32 %v7225, %v7268
        %v7304 = vadd.f32 %v7228, %v7268
        %v7305 = vadd.f32 %v7231, %v7268
        %v7306 = vadd.f32 %v7234, %v7268
        %v7307 = vadd.f32 %v7237, %v7268
        %v7308 = vadd.f32 %v7240, %v7268
        %v7309 = vadd.f32 %v7243, %v7268
        %v7310 = vadd.f32 %v7246, %v7268
        %v7311 = vadd.f32 %v7249, %v7268
        %v7312 = vadd.f32 %v7252, %v7268
        %v7313 = vadd.f32 %v7255, %v7268
        %v7314 = vadd.f32 %v7258, %v7268
        %v7315 = vadd.f32 %v7261, %v7268
        %v7316 = vadd.f32 %v7264, %v7268
        %7318 = vset.pattern.permute.xlu0 0
        %7319 = vperm.xlu0 %7318, %v7269
        %v7320 = vpop.permute.xlu0 %7319
        %7323 = vset.pattern.permute.xlu0 0
        %7324 = vperm.xlu0 %7323, %v7270
        %v7325 = vpop.permute.xlu0 %7324
        %7328 = vset.pattern.permute.xlu0 0
        %7329 = vperm.xlu0 %7328, %v7271
        %v7330 = vpop.permute.xlu0 %7329
        %7333 = vset.pattern.permute.xlu0 0
        %7334 = vperm.xlu0 %7333, %v7272
        %v7335 = vpop.permute.xlu0 %7334
        %7338 = vset.pattern.permute.xlu0 0
        %7339 = vperm.xlu0 %7338, %v7273
        %v7340 = vpop.permute.xlu0 %7339
        %7343 = vset.pattern.permute.xlu0 0
        %7344 = vperm.xlu0 %7343, %v7274
        %v7345 = vpop.permute.xlu0 %7344
        %7348 = vset.pattern.permute.xlu0 0
        %7349 = vperm.xlu0 %7348, %v7275
        %v7350 = vpop.permute.xlu0 %7349
        %7353 = vset.pattern.permute.xlu0 0
        %7354 = vperm.xlu0 %7353, %v7276
        %v7355 = vpop.permute.xlu0 %7354
        %7358 = vset.pattern.permute.xlu0 0
        %7359 = vperm.xlu0 %7358, %v7277
        %v7360 = vpop.permute.xlu0 %7359
        %7363 = vset.pattern.permute.xlu0 0
        %7364 = vperm.xlu0 %7363, %v7278
        %v7365 = vpop.permute.xlu0 %7364
        %7368 = vset.pattern.permute.xlu0 0
        %7369 = vperm.xlu0 %7368, %v7279
        %v7370 = vpop.permute.xlu0 %7369
        %7373 = vset.pattern.permute.xlu0 0
        %7374 = vperm.xlu0 %7373, %v7280
        %v7375 = vpop.permute.xlu0 %7374
        %7378 = vset.pattern.permute.xlu0 0
        %7379 = vperm.xlu0 %7378, %v7281
        %v7380 = vpop.permute.xlu0 %7379
        %7383 = vset.pattern.permute.xlu0 0
        %7384 = vperm.xlu0 %7383, %v7282
        %v7385 = vpop.permute.xlu0 %7384
        %7388 = vset.pattern.permute.xlu0 0
        %7389 = vperm.xlu0 %7388, %v7283
        %v7390 = vpop.permute.xlu0 %7389
        %7393 = vset.pattern.permute.xlu0 0
        %7394 = vperm.xlu0 %7393, %v7284
        %v7395 = vpop.permute.xlu0 %7394
        %7398 = vset.pattern.permute.xlu0 0
        %7399 = vperm.xlu0 %7398, %v7285
        %v7400 = vpop.permute.xlu0 %7399
        %7403 = vset.pattern.permute.xlu0 0
        %7404 = vperm.xlu0 %7403, %v7286
        %v7405 = vpop.permute.xlu0 %7404
        %7408 = vset.pattern.permute.xlu0 0
        %7409 = vperm.xlu0 %7408, %v7287
        %v7410 = vpop.permute.xlu0 %7409
        %7413 = vset.pattern.permute.xlu0 0
        %7414 = vperm.xlu0 %7413, %v7288
        %v7415 = vpop.permute.xlu0 %7414
        %7418 = vset.pattern.permute.xlu0 0
        %7419 = vperm.xlu0 %7418, %v7289
        %v7420 = vpop.permute.xlu0 %7419
        %7423 = vset.pattern.permute.xlu0 0
        %7424 = vperm.xlu0 %7423, %v7290
        %v7425 = vpop.permute.xlu0 %7424
        %7428 = vset.pattern.permute.xlu0 0
        %7429 = vperm.xlu0 %7428, %v7291
        %v7430 = vpop.permute.xlu0 %7429
        %7433 = vset.pattern.permute.xlu0 0
        %7434 = vperm.xlu0 %7433, %v7292
        %v7435 = vpop.permute.xlu0 %7434
        %7438 = vset.pattern.permute.xlu0 0
        %7439 = vperm.xlu0 %7438, %v7293
        %v7440 = vpop.permute.xlu0 %7439
        %7443 = vset.pattern.permute.xlu0 0
        %7444 = vperm.xlu0 %7443, %v7294
        %v7445 = vpop.permute.xlu0 %7444
        %7448 = vset.pattern.permute.xlu0 0
        %7449 = vperm.xlu0 %7448, %v7295
        %v7450 = vpop.permute.xlu0 %7449
        %7453 = vset.pattern.permute.xlu0 0
        %7454 = vperm.xlu0 %7453, %v7296
        %v7455 = vpop.permute.xlu0 %7454
        %7458 = vset.pattern.permute.xlu0 0
        %7459 = vperm.xlu0 %7458, %v7297
        %v7460 = vpop.permute.xlu0 %7459
        %7463 = vset.pattern.permute.xlu0 0
        %7464 = vperm.xlu0 %7463, %v7298
        %v7465 = vpop.permute.xlu0 %7464
        %7468 = vset.pattern.permute.xlu0 0
        %7469 = vperm.xlu0 %7468, %v7299
        %v7470 = vpop.permute.xlu0 %7469
        %7473 = vset.pattern.permute.xlu0 0
        %7474 = vperm.xlu0 %7473, %v7300
        %v7475 = vpop.permute.xlu0 %7474
        %7478 = vset.pattern.permute.xlu0 0
        %7479 = vperm.xlu0 %7478, %v7301
        %v7480 = vpop.permute.xlu0 %7479
        %7483 = vset.pattern.permute.xlu0 0
        %7484 = vperm.xlu0 %7483, %v7302
        %v7485 = vpop.permute.xlu0 %7484
        %7488 = vset.pattern.permute.xlu0 0
        %7489 = vperm.xlu0 %7488, %v7303
        %v7490 = vpop.permute.xlu0 %7489
        %7493 = vset.pattern.permute.xlu0 0
        %7494 = vperm.xlu0 %7493, %v7304
        %v7495 = vpop.permute.xlu0 %7494
        %7498 = vset.pattern.permute.xlu0 0
        %7499 = vperm.xlu0 %7498, %v7305
        %v7500 = vpop.permute.xlu0 %7499
        %7503 = vset.pattern.permute.xlu0 0
        %7504 = vperm.xlu0 %7503, %v7306
        %v7505 = vpop.permute.xlu0 %7504
        %7508 = vset.pattern.permute.xlu0 0
        %7509 = vperm.xlu0 %7508, %v7307
        %v7510 = vpop.permute.xlu0 %7509
        %7513 = vset.pattern.permute.xlu0 0
        %7514 = vperm.xlu0 %7513, %v7308
        %v7515 = vpop.permute.xlu0 %7514
        %7518 = vset.pattern.permute.xlu0 0
        %7519 = vperm.xlu0 %7518, %v7309
        %v7520 = vpop.permute.xlu0 %7519
        %7523 = vset.pattern.permute.xlu0 0
        %7524 = vperm.xlu0 %7523, %v7310
        %v7525 = vpop.permute.xlu0 %7524
        %7528 = vset.pattern.permute.xlu0 0
        %7529 = vperm.xlu0 %7528, %v7311
        %v7530 = vpop.permute.xlu0 %7529
        %7533 = vset.pattern.permute.xlu0 0
        %7534 = vperm.xlu0 %7533, %v7312
        %v7535 = vpop.permute.xlu0 %7534
        %7538 = vset.pattern.permute.xlu0 0
        %7539 = vperm.xlu0 %7538, %v7313
        %v7540 = vpop.permute.xlu0 %7539
        %7543 = vset.pattern.permute.xlu0 0
        %7544 = vperm.xlu0 %7543, %v7314
        %v7545 = vpop.permute.xlu0 %7544
        %7548 = vset.pattern.permute.xlu0 0
        %7549 = vperm.xlu0 %7548, %v7315
        %v7550 = vpop.permute.xlu0 %7549
        %7553 = vset.pattern.permute.xlu0 0
        %7554 = vperm.xlu0 %7553, %v7316
        %v7555 = vpop.permute.xlu0 %7554
        %v7557 = vmul.f32 %v2271, %v7320
        %v7558 = vmul.f32 %v2272, %v7325
        %v7559 = vmul.f32 %v2273, %v7330
        %v7560 = vmul.f32 %v2274, %v7335
        %v7561 = vmul.f32 %v2275, %v7340
        %v7562 = vmul.f32 %v2276, %v7345
        %v7563 = vmul.f32 %v2277, %v7350
        %v7564 = vmul.f32 %v2278, %v7355
        %v7565 = vmul.f32 %v2279, %v7360
        %v7566 = vmul.f32 %v2280, %v7365
        %v7567 = vmul.f32 %v2281, %v7370
        %v7568 = vmul.f32 %v2282, %v7375
        %v7569 = vmul.f32 %v2283, %v7380
        %v7570 = vmul.f32 %v2284, %v7385
        %v7571 = vmul.f32 %v2285, %v7390
        %v7572 = vmul.f32 %v2286, %v7395
        %v7573 = vmul.f32 %v2287, %v7400
        %v7574 = vmul.f32 %v2288, %v7405
        %v7575 = vmul.f32 %v2289, %v7410
        %v7576 = vmul.f32 %v2290, %v7415
        %v7577 = vmul.f32 %v2291, %v7420
        %v7578 = vmul.f32 %v2292, %v7425
        %v7579 = vmul.f32 %v2293, %v7430
        %v7580 = vmul.f32 %v2294, %v7435
        %v7581 = vmul.f32 %v2295, %v7440
        %v7582 = vmul.f32 %v2296, %v7445
        %v7583 = vmul.f32 %v2297, %v7450
        %v7584 = vmul.f32 %v2298, %v7455
        %v7585 = vmul.f32 %v2299, %v7460
        %v7586 = vmul.f32 %v2300, %v7465
        %v7587 = vmul.f32 %v2301, %v7470
        %v7588 = vmul.f32 %v2302, %v7475
        %v7589 = vmul.f32 %v2303, %v7480
        %v7590 = vmul.f32 %v2304, %v7485
        %v7591 = vmul.f32 %v2305, %v7490
        %v7592 = vmul.f32 %v2306, %v7495
        %v7593 = vmul.f32 %v2307, %v7500
        %v7594 = vmul.f32 %v2308, %v7505
        %v7595 = vmul.f32 %v2309, %v7510
        %v7596 = vmul.f32 %v2310, %v7515
        %v7597 = vmul.f32 %v2311, %v7520
        %v7598 = vmul.f32 %v2312, %v7525
        %v7599 = vmul.f32 %v2313, %v7530
        %v7600 = vmul.f32 %v2314, %v7535
        %v7601 = vmul.f32 %v2315, %v7540
        %v7602 = vmul.f32 %v2316, %v7545
        %v7603 = vmul.f32 %v2317, %v7550
        %v7604 = vmul.f32 %v2318, %v7555
        %v7605 = vsel %vm1372, %v5792, %v7557
        %v7606 = vsel %vm1372, %v5793, %v7558
        %v7607 = vsel %vm1372, %v5794, %v7559
        %v7608 = vsel %vm1372, %v5795, %v7560
        %v7609 = vsel %vm1372, %v5796, %v7561
        %v7610 = vsel %vm1372, %v5797, %v7562
        %v7611 = vsel %vm1372, %v5798, %v7563
        %v7612 = vsel %vm1372, %v5799, %v7564
        %v7613 = vsel %vm1372, %v5800, %v7565
        %v7614 = vsel %vm1372, %v5801, %v7566
        %v7615 = vsel %vm1372, %v5802, %v7567
        %v7616 = vsel %vm1372, %v5803, %v7568
        %v7617 = vsel %vm1372, %v5804, %v7569
        %v7618 = vsel %vm1372, %v5805, %v7570
        %v7619 = vsel %vm1372, %v5806, %v7571
        %v7620 = vsel %vm1372, %v5807, %v7572
        %v7621 = vsel %vm1372, %v5808, %v7573
        %v7622 = vsel %vm1372, %v5809, %v7574
        %v7623 = vsel %vm1372, %v5810, %v7575
        %v7624 = vsel %vm1372, %v5811, %v7576
        %v7625 = vsel %vm1372, %v5812, %v7577
        %v7626 = vsel %vm1372, %v5813, %v7578
        %v7627 = vsel %vm1372, %v5814, %v7579
        %v7628 = vsel %vm1372, %v5815, %v7580
        %v7629 = vsel %vm1372, %v5816, %v7581
        %v7630 = vsel %vm1372, %v5817, %v7582
        %v7631 = vsel %vm1372, %v5818, %v7583
        %v7632 = vsel %vm1372, %v5819, %v7584
        %v7633 = vsel %vm1372, %v5820, %v7585
        %v7634 = vsel %vm1372, %v5821, %v7586
        %v7635 = vsel %vm1372, %v5822, %v7587
        %v7636 = vsel %vm1372, %v5823, %v7588
        %v7637 = vsel %vm1372, %v5824, %v7589
        %v7638 = vsel %vm1372, %v5825, %v7590
        %v7639 = vsel %vm1372, %v5826, %v7591
        %v7640 = vsel %vm1372, %v5827, %v7592
        %v7641 = vsel %vm1372, %v5828, %v7593
        %v7642 = vsel %vm1372, %v5829, %v7594
        %v7643 = vsel %vm1372, %v5830, %v7595
        %v7644 = vsel %vm1372, %v5831, %v7596
        %v7645 = vsel %vm1372, %v5832, %v7597
        %v7646 = vsel %vm1372, %v5833, %v7598
        %v7647 = vsel %vm1372, %v5834, %v7599
        %v7648 = vsel %vm1372, %v5835, %v7600
        %v7649 = vsel %vm1372, %v5836, %v7601
        %v7650 = vsel %vm1372, %v5837, %v7602
        %v7651 = vsel %vm1372, %v5838, %v7603
        %v7652 = vsel %vm1372, %v5839, %v7604
        %vm7653 = vcmask 285696
        %v7654 = vsel %vm7653, %v7605, 1.0
        %v7655 = vsel %vm7653, %v7606, 1.0
        %v7656 = vsel %vm7653, %v7607, 1.0
        %v7657 = vsel %vm7653, %v7608, 1.0
        %v7658 = vsel %vm7653, %v7609, 1.0
        %v7659 = vsel %vm7653, %v7610, 1.0
        %v7660 = vsel %vm7653, %v7611, 1.0
        %v7661 = vsel %vm7653, %v7612, 1.0
        %v7662 = vsel %vm7653, %v7613, 1.0
        %v7663 = vsel %vm7653, %v7614, 1.0
        %v7664 = vsel %vm7653, %v7615, 1.0
        %v7665 = vsel %vm7653, %v7616, 1.0
        %v7666 = vsel %vm7653, %v7617, 1.0
        %v7667 = vsel %vm7653, %v7618, 1.0
        %v7668 = vsel %vm7653, %v7619, 1.0
        %v7669 = vsel %vm7653, %v7620, 1.0
        %v7670 = vsel %vm7653, %v7621, 1.0
        %v7671 = vsel %vm7653, %v7622, 1.0
        %v7672 = vsel %vm7653, %v7623, 1.0
        %v7673 = vsel %vm7653, %v7624, 1.0
        %v7674 = vsel %vm7653, %v7625, 1.0
        %v7675 = vsel %vm7653, %v7626, 1.0
        %v7676 = vsel %vm7653, %v7627, 1.0
        %v7677 = vsel %vm7653, %v7628, 1.0
        %v7678 = vsel %vm7653, %v7629, 1.0
        %v7679 = vsel %vm7653, %v7630, 1.0
        %v7680 = vsel %vm7653, %v7631, 1.0
        %v7681 = vsel %vm7653, %v7632, 1.0
        %v7682 = vsel %vm7653, %v7633, 1.0
        %v7683 = vsel %vm7653, %v7634, 1.0
        %v7684 = vsel %vm7653, %v7635, 1.0
        %v7685 = vsel %vm7653, %v7636, 1.0
        %v7686 = vsel %vm7653, %v7637, 1.0
        %v7687 = vsel %vm7653, %v7638, 1.0
        %v7688 = vsel %vm7653, %v7639, 1.0
        %v7689 = vsel %vm7653, %v7640, 1.0
        %v7690 = vsel %vm7653, %v7641, 1.0
        %v7691 = vsel %vm7653, %v7642, 1.0
        %v7692 = vsel %vm7653, %v7643, 1.0
        %v7693 = vsel %vm7653, %v7644, 1.0
        %v7694 = vsel %vm7653, %v7645, 1.0
        %v7695 = vsel %vm7653, %v7646, 1.0
        %v7696 = vsel %vm7653, %v7647, 1.0
        %v7697 = vsel %vm7653, %v7648, 1.0
        %v7698 = vsel %vm7653, %v7649, 1.0
        %v7699 = vsel %vm7653, %v7650, 1.0
        %v7700 = vsel %vm7653, %v7651, 1.0
        %v7701 = vsel %vm7653, %v7652, 1.0
        %vm7702 = vcmask 293888
        %v7703 = vsel %vm7702, %v7654, 0.0
        %v7704 = vsel %vm7702, %v7655, 0.0
        %v7705 = vsel %vm7702, %v7656, 0.0
        %v7706 = vsel %vm7702, %v7657, 0.0
        %v7707 = vsel %vm7702, %v7658, 0.0
        %v7708 = vsel %vm7702, %v7659, 0.0
        %v7709 = vsel %vm7702, %v7660, 0.0
        %v7710 = vsel %vm7702, %v7661, 0.0
        %v7711 = vsel %vm7702, %v7662, 0.0
        %v7712 = vsel %vm7702, %v7663, 0.0
        %v7713 = vsel %vm7702, %v7664, 0.0
        %v7714 = vsel %vm7702, %v7665, 0.0
        %v7715 = vsel %vm7702, %v7666, 0.0
        %v7716 = vsel %vm7702, %v7667, 0.0
        %v7717 = vsel %vm7702, %v7668, 0.0
        %v7718 = vsel %vm7702, %v7669, 0.0
        %v7719 = vsel %vm7702, %v7670, 0.0
        %v7720 = vsel %vm7702, %v7671, 0.0
        %v7721 = vsel %vm7702, %v7672, 0.0
        %v7722 = vsel %vm7702, %v7673, 0.0
        %v7723 = vsel %vm7702, %v7674, 0.0
        %v7724 = vsel %vm7702, %v7675, 0.0
        %v7725 = vsel %vm7702, %v7676, 0.0
        %v7726 = vsel %vm7702, %v7677, 0.0
        %v7727 = vsel %vm7702, %v7678, 0.0
        %v7728 = vsel %vm7702, %v7679, 0.0
        %v7729 = vsel %vm7702, %v7680, 0.0
        %v7730 = vsel %vm7702, %v7681, 0.0
        %v7731 = vsel %vm7702, %v7682, 0.0
        %v7732 = vsel %vm7702, %v7683, 0.0
        %v7733 = vsel %vm7702, %v7684, 0.0
        %v7734 = vsel %vm7702, %v7685, 0.0
        %v7735 = vsel %vm7702, %v7686, 0.0
        %v7736 = vsel %vm7702, %v7687, 0.0
        %v7737 = vsel %vm7702, %v7688, 0.0
        %v7738 = vsel %vm7702, %v7689, 0.0
        %v7739 = vsel %vm7702, %v7690, 0.0
        %v7740 = vsel %vm7702, %v7691, 0.0
        %v7741 = vsel %vm7702, %v7692, 0.0
        %v7742 = vsel %vm7702, %v7693, 0.0
        %v7743 = vsel %vm7702, %v7694, 0.0
        %v7744 = vsel %vm7702, %v7695, 0.0
        %v7745 = vsel %vm7702, %v7696, 0.0
        %v7746 = vsel %vm7702, %v7697, 0.0
        %v7747 = vsel %vm7702, %v7698, 0.0
        %v7748 = vsel %vm7702, %v7699, 0.0
        %v7749 = vsel %vm7702, %v7700, 0.0
        %v7750 = vsel %vm7702, %v7701, 0.0
        %v7751 = vlaneseq
        %v7752 = vshrl.u32 %v7751, 7
        %v7753 = vadd.s32 %v7752, 8
        %v7754 = vadd.s32 %v7752, 16
        %v7755 = vadd.s32 %v7752, 24
        %v7756 = vld [vmem:[%s512] sm:$0x7]
        %v7757 = vlaneseq
        %v7758 = vshrl.u32 %v7757, 7
        %v7759 = vsub.s32 0, %v7758
        %v7760 = vrot.slane %v7756, %v7759
        %v7761 = vlaneseq
        %v7762 = vshrl.u32 %v7761, 7
        %v7763 = vsub.s32 1, %v7762
        %v7764 = vrot.slane %v7756, %v7763
        %v7765 = vlaneseq
        %v7766 = vshrl.u32 %v7765, 7
        %v7767 = vsub.s32 2, %v7766
        %v7768 = vrot.slane %v7756, %v7767
        %vm7769 = vcmp.eq.s32.totalorder %v7760, %v7752
        %vm7770 = vcmp.eq.s32.totalorder %v7764, %v7752
        %vm7771 = vcmp.eq.s32.totalorder %v7768, %v7752
        %vm7772 = vcmp.eq.s32.totalorder %v7760, %v7753
        %vm7773 = vcmp.eq.s32.totalorder %v7764, %v7753
        %vm7774 = vcmp.eq.s32.totalorder %v7768, %v7753
        %vm7775 = vcmp.eq.s32.totalorder %v7760, %v7754
        %vm7776 = vcmp.eq.s32.totalorder %v7764, %v7754
        %vm7777 = vcmp.eq.s32.totalorder %v7768, %v7754
        %vm7778 = vcmp.eq.s32.totalorder %v7760, %v7755
        %vm7779 = vcmp.eq.s32.totalorder %v7764, %v7755
        %vm7780 = vcmp.eq.s32.totalorder %v7768, %v7755
        %v7781 = vsel %vm7769, 1, 0
        %v7782 = vsel %vm7770, 1, 0
        %v7783 = vsel %vm7771, 1, 0
        %v7784 = vsel %vm7772, 1, 0
        %v7785 = vsel %vm7773, 1, 0
        %v7786 = vsel %vm7774, 1, 0
        %v7787 = vsel %vm7775, 1, 0
        %v7788 = vsel %vm7776, 1, 0
        %v7789 = vsel %vm7777, 1, 0
        %v7790 = vsel %vm7778, 1, 0
        %v7791 = vsel %vm7779, 1, 0
        %v7792 = vsel %vm7780, 1, 0
        %v7793 = vcvt.s32.f32 %v7781
        %v7794 = vcvt.s32.f32 %v7782
        %v7795 = vcvt.s32.f32 %v7783
        %v7796 = vcvt.s32.f32 %v7784
        %v7797 = vcvt.s32.f32 %v7785
        %v7798 = vcvt.s32.f32 %v7786
        %v7799 = vcvt.s32.f32 %v7787
        %v7800 = vcvt.s32.f32 %v7788
        %v7801 = vcvt.s32.f32 %v7789
        %v7802 = vcvt.s32.f32 %v7790
        %v7803 = vcvt.s32.f32 %v7791
        %v7804 = vcvt.s32.f32 %v7792
        %v7805 = vld [vmem:[#allocation3] sm:$0xff]
        %v7806 = vld [vmem:[#allocation3 + $0x8] sm:$0xff]
        %v7807 = vld [vmem:[#allocation3 + $0x10] sm:$0xff]
        %v7808 = vld [vmem:[#allocation3 + $0x18] sm:$0xff]
        %7809 = vmatprep.subr.mxu0 0.0
        %7810 = vmatpush1.msra.mxu0 %v7703
        %7811 = vmatprep.subr.mxu0 0.0
        %7812 = vmatpush1.msra.mxu0 %v7704
        %7813 = vmatprep.subr.mxu0 0.0
        %7814 = vmatpush1.msra.mxu0 %v7705
        %7815 = vmatprep.subr.mxu0 0.0
        %7816 = vmatpush1.msra.mxu0 %v7706
        %7817 = vmatprep.subr.mxu0 0.0
        %7818 = vmatpush1.msra.mxu0 %v7707
        %7819 = vmatprep.subr.mxu0 0.0
        %7820 = vmatpush1.msra.mxu0 %v7708
        %7821 = vmatprep.subr.mxu0 0.0
        %7822 = vmatpush1.msra.mxu0 %v7709
        %7823 = vmatprep.subr.mxu0 0.0
        %7824 = vmatpush1.msra.mxu0 %v7710
        %7825 = vmatprep.subr.mxu0 0.0
        %7826 = vmatpush1.msra.mxu0 %v7711
        %7827 = vmatprep.subr.mxu0 0.0
        %7828 = vmatpush1.msra.mxu0 %v7712
        %7829 = vmatprep.subr.mxu0 0.0
        %7830 = vmatpush1.msra.mxu0 %v7713
        %7831 = vmatprep.subr.mxu0 0.0
        %7832 = vmatpush1.msra.mxu0 %v7714
        %7833 = vmatprep.subr.mxu0 0.0
        %7834 = vmatpush1.msra.mxu0 %v7715
        %7835 = vmatprep.subr.mxu0 0.0
        %7836 = vmatpush1.msra.mxu0 %v7716
        %7837 = vmatprep.subr.mxu0 0.0
        %7838 = vmatpush1.msra.mxu0 %v7717
        %7839 = vmatprep.subr.mxu0 0.0
        %7840 = vmatpush1.msra.mxu0 %v7718
        %7841 = vmatprep.subr.mxu0 0.0
        %7842 = vmatpush1.msra.mxu0 %v7719
        %7843 = vmatprep.subr.mxu0 0.0
        %7844 = vmatpush1.msra.mxu0 %v7720
        %7845 = vmatprep.subr.mxu0 0.0
        %7846 = vmatpush1.msra.mxu0 %v7721
        %7847 = vmatprep.subr.mxu0 0.0
        %7848 = vmatpush1.msra.mxu0 %v7722
        %7849 = vmatprep.subr.mxu0 0.0
        %7850 = vmatpush1.msra.mxu0 %v7723
        %7851 = vmatprep.subr.mxu0 0.0
        %7852 = vmatpush1.msra.mxu0 %v7724
        %7853 = vmatprep.subr.mxu0 0.0
        %7854 = vmatpush1.msra.mxu0 %v7725
        %7855 = vmatprep.subr.mxu0 0.0
        %7856 = vmatpush1.msra.mxu0 %v7726
        %7857 = vmatprep.subr.mxu0 0.0
        %7858 = vmatpush1.msra.mxu0 %v7727
        %7859 = vmatprep.subr.mxu0 0.0
        %7860 = vmatpush1.msra.mxu0 %v7728
        %7861 = vmatprep.subr.mxu0 0.0
        %7862 = vmatpush1.msra.mxu0 %v7729
        %7863 = vmatprep.subr.mxu0 0.0
        %7864 = vmatpush1.msra.mxu0 %v7730
        %7865 = vmatprep.subr.mxu0 0.0
        %7866 = vmatpush1.msra.mxu0 %v7731
        %7867 = vmatprep.subr.mxu0 0.0
        %7868 = vmatpush1.msra.mxu0 %v7732
        %7869 = vmatprep.subr.mxu0 0.0
        %7870 = vmatpush1.msra.mxu0 %v7733
        %7871 = vmatprep.subr.mxu0 0.0
        %7872 = vmatpush1.msra.mxu0 %v7734
        %7873 = vmatprep.mubr.f32.mxu0 %v7794
        %7874 = vmatmul.mubr.f32.gmra.mrb[0].mxu0 %v7793
        %v7875 = vpop.f32.mrb[0].mxu0
        %v7876 = vadd.f32 0.0, %v7875
        %v7877 = vpop.f32.mrb[0].mxu0
        %7878 = vmatprep.mubr.f32.mxu0 %v7797
        %7879 = vmatmul.mubr.f32.gmra.mrb[0].mxu0 %v7796
        %v7880 = vpop.f32.mrb[0].mxu0
        %v7881 = vadd.f32 0.0, %v7880
        %v7882 = vpop.f32.mrb[0].mxu0
        %7883 = vmatprep.mubr.f32.mxu0 %v7800
        %7884 = vmatmul.mubr.f32.gmra.mrb[0].mxu0 %v7799
        %v7885 = vpop.f32.mrb[0].mxu0
        %v7886 = vadd.f32 0.0, %v7885
        %v7887 = vpop.f32.mrb[0].mxu0
        %7888 = vmatprep.mubr.f32.mxu0 %v7803
        %7889 = vmatmul.mubr.f32.gmra.mrb[0].mxu0 %v7802
        %v7890 = vpop.f32.mrb[0].mxu0
        %v7891 = vadd.f32 0.0, %v7890
        %v7892 = vpop.f32.mrb[0].mxu0
        %7893 = vdwg.mxu0
        %7894 = vmatprep.subr.mxu0 0.0
        %7895 = vmatpush1.msra.mxu0 %v7735
        %7896 = vmatprep.subr.mxu0 0.0
        %7897 = vmatpush1.msra.mxu0 %v7736
        %7898 = vmatprep.subr.mxu0 0.0
        %7899 = vmatpush1.msra.mxu0 %v7737
        %7900 = vmatprep.subr.mxu0 0.0
        %7901 = vmatpush1.msra.mxu0 %v7738
        %7902 = vmatprep.subr.mxu0 0.0
        %7903 = vmatpush1.msra.mxu0 %v7739
        %7904 = vmatprep.subr.mxu0 0.0
        %7905 = vmatpush1.msra.mxu0 %v7740
        %7906 = vmatprep.subr.mxu0 0.0
        %7907 = vmatpush1.msra.mxu0 %v7741
        %7908 = vmatprep.subr.mxu0 0.0
        %7909 = vmatpush1.msra.mxu0 %v7742
        %7910 = vmatprep.subr.mxu0 0.0
        %7911 = vmatpush1.msra.mxu0 %v7743
        %7912 = vmatprep.subr.mxu0 0.0
        %7913 = vmatpush1.msra.mxu0 %v7744
        %7914 = vmatprep.subr.mxu0 0.0
        %7915 = vmatpush1.msra.mxu0 %v7745
        %7916 = vmatprep.subr.mxu0 0.0
        %7917 = vmatpush1.msra.mxu0 %v7746
        %7918 = vmatprep.subr.mxu0 0.0
        %7919 = vmatpush1.msra.mxu0 %v7747
        %7920 = vmatprep.subr.mxu0 0.0
        %7921 = vmatpush1.msra.mxu0 %v7748
        %7922 = vmatprep.subr.mxu0 0.0
        %7923 = vmatpush1.msra.mxu0 %v7749
        %7924 = vmatprep.subr.mxu0 0.0
        %7925 = vmatpush1.msra.mxu0 %v7750
        %7926 = vmatprep.subr.mxu0 0.0
        %7927 = vmatpush1.msra.mxu0 0.0
        %7928 = vmatprep.subr.mxu0 0.0
        %7929 = vmatpush1.msra.mxu0 0.0
        %7930 = vmatprep.subr.mxu0 0.0
        %7931 = vmatpush1.msra.mxu0 0.0
        %7932 = vmatprep.subr.mxu0 0.0
        %7933 = vmatpush1.msra.mxu0 0.0
        %7934 = vmatprep.subr.mxu0 0.0
        %7935 = vmatpush1.msra.mxu0 0.0
        %7936 = vmatprep.subr.mxu0 0.0
        %7937 = vmatpush1.msra.mxu0 0.0
        %7938 = vmatprep.subr.mxu0 0.0
        %7939 = vmatpush1.msra.mxu0 0.0
        %7940 = vmatprep.subr.mxu0 0.0
        %7941 = vmatpush1.msra.mxu0 0.0
        %7942 = vmatprep.subr.mxu0 0.0
        %7943 = vmatpush1.msra.mxu0 0.0
        %7944 = vmatprep.subr.mxu0 0.0
        %7945 = vmatpush1.msra.mxu0 0.0
        %7946 = vmatprep.subr.mxu0 0.0
        %7947 = vmatpush1.msra.mxu0 0.0
        %7948 = vmatprep.subr.mxu0 0.0
        %7949 = vmatpush1.msra.mxu0 0.0
        %7950 = vmatprep.subr.mxu0 0.0
        %7951 = vmatpush1.msra.mxu0 0.0
        %7952 = vmatprep.subr.mxu0 0.0
        %7953 = vmatpush1.msra.mxu0 0.0
        %7954 = vmatprep.subr.mxu0 0.0
        %7955 = vmatpush1.msra.mxu0 0.0
        %7956 = vmatprep.subr.mxu0 0.0
        %7957 = vmatpush1.msra.mxu0 0.0
        %7958 = vmatprep.mubr.f32.mxu0 0.0
        %7959 = vmatmul.mubr.f32.gmra.mrb[0].mxu0 %v7795
        %v7960 = vpop.f32.mrb[0].mxu0
        %v7961 = vadd.f32 %v7876, %v7960
        %v7962 = vpop.f32.mrb[0].mxu0
        %7963 = vmatprep.mubr.f32.mxu0 0.0
        %7964 = vmatmul.mubr.f32.gmra.mrb[0].mxu0 %v7798
        %v7965 = vpop.f32.mrb[0].mxu0
        %v7966 = vadd.f32 %v7881, %v7965
        %v7967 = vpop.f32.mrb[0].mxu0
        %7968 = vmatprep.mubr.f32.mxu0 0.0
        %7969 = vmatmul.mubr.f32.gmra.mrb[0].mxu0 %v7801
        %v7970 = vpop.f32.mrb[0].mxu0
        %v7971 = vadd.f32 %v7886, %v7970
        %v7972 = vpop.f32.mrb[0].mxu0
        %7973 = vmatprep.mubr.f32.mxu0 0.0
        %7974 = vmatmul.mubr.f32.gmra.mrb[0].mxu0 %v7804
        %v7975 = vpop.f32.mrb[0].mxu0
        %v7976 = vadd.f32 %v7891, %v7975
        %v7977 = vpop.f32.mrb[0].mxu0
        %7978 = vdwg.mxu0
        %v7979 = vadd.f32 %v7805, %v7961
        %v7980 = vadd.f32 %v7806, %v7966
        %v7981 = vadd.f32 %v7807, %v7971
        %v7982 = vadd.f32 %v7808, %v7976
        %7983 = vst [vmem:[#allocation3] sm:$0xff] %v7979
        %7984 = vst [vmem:[#allocation3 + $0x8] sm:$0xff] %v7980
        %7985 = vst [vmem:[#allocation3 + $0x10] sm:$0xff] %v7981
        %7986 = vst [vmem:[#allocation3 + $0x18] sm:$0xff] %v7982
        // Predicated region
        $region81: #{tpu_custom_call.1} parent=71 // pred_check
          %p7987 = pneg %p525
        $region82: #{tpu_custom_call.1} parent=71 // pred_check_branch
          %7989 = sbr.rel (%p7987) target = $region84
        $region83: #{tpu_custom_call.1} parent=71 // pred_region
          %v7990 = vld [vmem:[#allocation2] sm:$0xff]
          %v7991 = vld [vmem:[#allocation2 + $0x8] sm:$0xff]
          %v7992 = vld [vmem:[#allocation2 + $0x10] sm:$0xff]
          %v7993 = vld [vmem:[#allocation2 + $0x18] sm:$0xff]
          %v7994 = vld [vmem:[#allocation3] sm:$0xff]
          %v7995 = vld [vmem:[#allocation3 + $0x8] sm:$0xff]
          %v7996 = vld [vmem:[#allocation3 + $0x10] sm:$0xff]
          %v7997 = vld [vmem:[#allocation3 + $0x18] sm:$0xff]
          %v7998 = vmax.f32 %v7994, 1.0
          %v7999 = vmax.f32 %v7995, 1.0
          %v8000 = vmax.f32 %v7996, 1.0
          %v8001 = vmax.f32 %v7997, 1.0
          %8003 = vset.pattern.permute.xlu0 35
          %8004 = vperm.xlu0 %8003, %v7998
          %v8005 = vpop.permute.xlu0 %8004
          %8008 = vset.pattern.permute.xlu0 35
          %8009 = vperm.xlu0 %8008, %v7999
          %v8010 = vpop.permute.xlu0 %8009
          %8013 = vset.pattern.permute.xlu0 35
          %8014 = vperm.xlu0 %8013, %v8000
          %v8015 = vpop.permute.xlu0 %8014
          %8018 = vset.pattern.permute.xlu0 35
          %8019 = vperm.xlu0 %8018, %v8001
          %v8020 = vpop.permute.xlu0 %8019
          %v8022 = vrcp.pop %v8005
          %v8023 = vmul.f32 %v7994, %v8022
          %v8024 = vrcp.pop %v8010
          %v8025 = vmul.f32 %v7995, %v8024
          %v8026 = vrcp.pop %v8015
          %v8027 = vmul.f32 %v7996, %v8026
          %v8028 = vrcp.pop %v8020
          %v8029 = vmul.f32 %v7997, %v8028
          %v8030 = vadd.f32 %v7990, %v8023
          %v8031 = vadd.f32 %v7991, %v8025
          %v8032 = vadd.f32 %v7992, %v8027
          %v8033 = vadd.f32 %v7993, %v8029
          %8038 = vrot.lane.b32.xlu0 %v7994, 32
          %v8039 = vpop.permute.xlu0 %8038
          %8040 = vrot.lane.b32.xlu0 %v7995, 32
          %v8041 = vpop.permute.xlu0 %8040
          %8042 = vrot.lane.b32.xlu0 %v7996, 32
          %v8043 = vpop.permute.xlu0 %8042
          %8044 = vrot.lane.b32.xlu0 %v7997, 32
          %v8045 = vpop.permute.xlu0 %8044
          %v8050 = vsel %vm1372, %v7990, %v8039
          %v8051 = vsel %vm1372, %v7991, %v8041
          %v8052 = vsel %vm1372, %v7992, %v8043
          %v8053 = vsel %vm1372, %v7993, %v8045
          %v8054 = vlaneseq
          %v8055 = vshrl.u32 %v8054, 7
          %v8056 = vsub.s32 4, %v8055
          %v8057 = vrot.slane %v692, %v8056
          %v8059 = vsel %vm3332, %v8050, 0
          %v8062 = vsel %vm3332, %v8051, 0
          %v8065 = vsel %vm3332, %v8052, 0
          %v8068 = vsel %vm3332, %v8053, 0
          %8070 = vmatprep.subr.mxu0 0.0
          %8071 = vmatpush1.msra.mxu0 %v679
          %8072 = vmatprep.subr.mxu0 0.0
          %8073 = vmatpush1.msra.mxu0 %v680
          %8074 = vmatprep.subr.mxu0 0.0
          %8075 = vmatpush1.msra.mxu0 %v681
          %8076 = vmatprep.subr.mxu0 0.0
          %8077 = vmatpush1.msra.mxu0 %v682
          %8078 = vmatprep.subr.mxu0 0.0
          %8079 = vmatpush1.msra.mxu0 %v683
          %8080 = vmatprep.subr.mxu0 0.0
          %8081 = vmatpush1.msra.mxu0 %v684
          %8082 = vmatprep.subr.mxu0 0.0
          %8083 = vmatpush1.msra.mxu0 %v685
          %8084 = vmatprep.subr.mxu0 0.0
          %8085 = vmatpush1.msra.mxu0 %v686
          %8086 = vmatprep.subr.mxu0 0.0
          %8087 = vmatpush1.msra.mxu0 0.0
          %8088 = vmatprep.subr.mxu0 0.0
          %8089 = vmatpush1.msra.mxu0 0.0
          %8090 = vmatprep.subr.mxu0 0.0
          %8091 = vmatpush1.msra.mxu0 0.0
          %8092 = vmatprep.subr.mxu0 0.0
          %8093 = vmatpush1.msra.mxu0 0.0
          %8094 = vmatprep.subr.mxu0 0.0
          %8095 = vmatpush1.msra.mxu0 0.0
          %8096 = vmatprep.subr.mxu0 0.0
          %8097 = vmatpush1.msra.mxu0 0.0
          %8098 = vmatprep.subr.mxu0 0.0
          %8099 = vmatpush1.msra.mxu0 0.0
          %8100 = vmatprep.subr.mxu0 0.0
          %8101 = vmatpush1.msra.mxu0 0.0
          %8102 = vmatprep.subr.mxu0 0.0
          %8103 = vmatpush1.msra.mxu0 0.0
          %8104 = vmatprep.subr.mxu0 0.0
          %8105 = vmatpush1.msra.mxu0 0.0
          %8106 = vmatprep.subr.mxu0 0.0
          %8107 = vmatpush1.msra.mxu0 0.0
          %8108 = vmatprep.subr.mxu0 0.0
          %8109 = vmatpush1.msra.mxu0 0.0
          %8110 = vmatprep.subr.mxu0 0.0
          %8111 = vmatpush1.msra.mxu0 0.0
          %8112 = vmatprep.subr.mxu0 0.0
          %8113 = vmatpush1.msra.mxu0 0.0
          %8114 = vmatprep.subr.mxu0 0.0
          %8115 = vmatpush1.msra.mxu0 0.0
          %8116 = vmatprep.subr.mxu0 0.0
          %8117 = vmatpush1.msra.mxu0 0.0
          %8118 = vmatprep.subr.mxu0 0.0
          %8119 = vmatpush1.msra.mxu0 0.0
          %8120 = vmatprep.subr.mxu0 0.0
          %8121 = vmatpush1.msra.mxu0 0.0
          %8122 = vmatprep.subr.mxu0 0.0
          %8123 = vmatpush1.msra.mxu0 0.0
          %8124 = vmatprep.subr.mxu0 0.0
          %8125 = vmatpush1.msra.mxu0 0.0
          %8126 = vmatprep.subr.mxu0 0.0
          %8127 = vmatpush1.msra.mxu0 0.0
          %8128 = vmatprep.subr.mxu0 0.0
          %8129 = vmatpush1.msra.mxu0 0.0
          %8130 = vmatprep.subr.mxu0 0.0
          %8131 = vmatpush1.msra.mxu0 0.0
          %8132 = vmatprep.subr.mxu0 0.0
          %8133 = vmatpush1.msra.mxu0 0.0
          %8134 = vmatprep.mubr.f32.mxu0 0.0
          %8135 = vmatmul.mubr.f32.gmra.mrb[0].mxu0 %v8059
          %v8136 = vpop.f32.mrb[0].mxu0
          %v8137 = vadd.f32 %v8057, %v8136
          %v8138 = vpop.f32.mrb[0].mxu0
          %8139 = vmatprep.mubr.f32.mxu0 0.0
          %8140 = vmatmul.mubr.f32.gmra.mrb[0].mxu0 %v8062
          %v8141 = vpop.f32.mrb[0].mxu0
          %v8142 = vadd.f32 %v8057, %v8141
          %v8143 = vpop.f32.mrb[0].mxu0
          %8144 = vmatprep.mubr.f32.mxu0 0.0
          %8145 = vmatmul.mubr.f32.gmra.mrb[0].mxu0 %v8065
          %v8146 = vpop.f32.mrb[0].mxu0
          %v8147 = vadd.f32 %v8057, %v8146
          %v8148 = vpop.f32.mrb[0].mxu0
          %8149 = vmatprep.mubr.f32.mxu0 0.0
          %8150 = vmatmul.mubr.f32.gmra.mrb[0].mxu0 %v8068
          %v8151 = vpop.f32.mrb[0].mxu0
          %v8152 = vadd.f32 %v8057, %v8151
          %v8153 = vpop.f32.mrb[0].mxu0
          %8154 = vdwg.mxu0
          %v8155 = vsel %vm1372, %v8137, 0.0
          %8156 = vadd.xlane.f32.xlu0 %v8155
          %v8157 = vpop.xlane.xlu0 %8156
          %v8158 = vsel %vm1372, %v8142, 0.0
          %8159 = vadd.xlane.f32.xlu0 %v8158
          %v8160 = vpop.xlane.xlu0 %8159
          %v8161 = vsel %vm1372, %v8147, 0.0
          %8162 = vadd.xlane.f32.xlu0 %v8161
          %v8163 = vpop.xlane.xlu0 %8162
          %v8164 = vsel %vm1372, %v8152, 0.0
          %8165 = vadd.xlane.f32.xlu0 %v8164
          %v8166 = vpop.xlane.xlu0 %8165
          %v8167 = vmul.f32 %v8157, %v3978
          %v8168 = vmul.f32 %v8160, %v3978
          %v8169 = vmul.f32 %v8163, %v3978
          %v8170 = vmul.f32 %v8166, %v3978
          %v8171 = vsub.f32 %v8137, %v8167
          %v8172 = vsub.f32 %v8142, %v8168
          %v8173 = vsub.f32 %v8147, %v8169
          %v8174 = vsub.f32 %v8152, %v8170
          %v8175 = vmul.f32 %v8171, %v8171
          %v8176 = vmul.f32 %v8172, %v8172
          %v8177 = vmul.f32 %v8173, %v8173
          %v8178 = vmul.f32 %v8174, %v8174
          %v8179 = vsel %vm1372, %v8175, 0.0
          %8180 = vadd.xlane.f32.xlu0 %v8179
          %v8181 = vpop.xlane.xlu0 %8180
          %v8182 = vsel %vm1372, %v8176, 0.0
          %8183 = vadd.xlane.f32.xlu0 %v8182
          %v8184 = vpop.xlane.xlu0 %8183
          %v8185 = vsel %vm1372, %v8177, 0.0
          %8186 = vadd.xlane.f32.xlu0 %v8185
          %v8187 = vpop.xlane.xlu0 %8186
          %v8188 = vsel %vm1372, %v8178, 0.0
          %8189 = vadd.xlane.f32.xlu0 %v8188
          %v8190 = vpop.xlane.xlu0 %8189
          %v8191 = vmul.f32 %v8181, %v3978
          %v8192 = vmul.f32 %v8184, %v3978
          %v8193 = vmul.f32 %v8187, %v3978
          %v8194 = vmul.f32 %v8190, %v3978
          %v8195 = vadd.f32 %v8191, 1e-05
          %v8196 = vadd.f32 %v8192, 1e-05
          %v8197 = vadd.f32 %v8193, 1e-05
          %v8198 = vadd.f32 %v8194, 1e-05
          %v8199 = vrsqrt.pop %v8195
          %v8200 = vrsqrt.pop %v8196
          %v8201 = vrsqrt.pop %v8197
          %v8202 = vrsqrt.pop %v8198
          %v8203 = vmul.f32 %v8171, %v8199
          %v8204 = vmul.f32 %v8172, %v8200
          %v8205 = vmul.f32 %v8173, %v8201
          %v8206 = vmul.f32 %v8174, %v8202
          %v8207 = vlaneseq
          %v8208 = vshrl.u32 %v8207, 7
          %v8209 = vsub.s32 5, %v8208
          %v8210 = vrot.slane %v692, %v8209
          %v8211 = vmul.f32 %v8203, %v8210
          %v8212 = vmul.f32 %v8204, %v8210
          %v8213 = vmul.f32 %v8205, %v8210
          %v8214 = vmul.f32 %v8206, %v8210
          %v8215 = vlaneseq
          %v8216 = vshrl.u32 %v8215, 7
          %v8217 = vsub.s32 6, %v8216
          %v8218 = vrot.slane %v692, %v8217
          %v8219 = vadd.f32 %v8211, %v8218
          %v8220 = vadd.f32 %v8212, %v8218
          %v8221 = vadd.f32 %v8213, %v8218
          %v8222 = vadd.f32 %v8214, %v8218
          %v8223 = vmax.f32 %v8219, 0.0
          %v8224 = vmax.f32 %v8220, 0.0
          %v8225 = vmax.f32 %v8221, 0.0
          %v8226 = vmax.f32 %v8222, 0.0
          %v8227 = vlaneseq
          %v8228 = vshrl.u32 %v8227, 7
          %v8229 = vsub.s32 7, %v8228
          %v8230 = vrot.slane %v692, %v8229
          %v8232 = vsel %vm1372, %v8223, 0
          %v8235 = vsel %vm1372, %v8224, 0
          %v8238 = vsel %vm1372, %v8225, 0
          %v8241 = vsel %vm1372, %v8226, 0
          %8243 = vmatprep.subr.mxu0 0.0
          %8244 = vmatpush1.msra.mxu0 %v687
          %8245 = vmatprep.subr.mxu0 0.0
          %8246 = vmatpush1.msra.mxu0 %v688
          %8247 = vmatprep.subr.mxu0 0.0
          %8248 = vmatpush1.msra.mxu0 %v689
          %8249 = vmatprep.subr.mxu0 0.0
          %8250 = vmatpush1.msra.mxu0 %v690
          %8251 = vmatprep.subr.mxu0 0.0
          %8252 = vmatpush1.msra.mxu0 0.0
          %8253 = vmatprep.subr.mxu0 0.0
          %8254 = vmatpush1.msra.mxu0 0.0
          %8255 = vmatprep.subr.mxu0 0.0
          %8256 = vmatpush1.msra.mxu0 0.0
          %8257 = vmatprep.subr.mxu0 0.0
          %8258 = vmatpush1.msra.mxu0 0.0
          %8259 = vmatprep.subr.mxu0 0.0
          %8260 = vmatpush1.msra.mxu0 0.0
          %8261 = vmatprep.subr.mxu0 0.0
          %8262 = vmatpush1.msra.mxu0 0.0
          %8263 = vmatprep.subr.mxu0 0.0
          %8264 = vmatpush1.msra.mxu0 0.0
          %8265 = vmatprep.subr.mxu0 0.0
          %8266 = vmatpush1.msra.mxu0 0.0
          %8267 = vmatprep.subr.mxu0 0.0
          %8268 = vmatpush1.msra.mxu0 0.0
          %8269 = vmatprep.subr.mxu0 0.0
          %8270 = vmatpush1.msra.mxu0 0.0
          %8271 = vmatprep.subr.mxu0 0.0
          %8272 = vmatpush1.msra.mxu0 0.0
          %8273 = vmatprep.subr.mxu0 0.0
          %8274 = vmatpush1.msra.mxu0 0.0
          %8275 = vmatprep.subr.mxu0 0.0
          %8276 = vmatpush1.msra.mxu0 0.0
          %8277 = vmatprep.subr.mxu0 0.0
          %8278 = vmatpush1.msra.mxu0 0.0
          %8279 = vmatprep.subr.mxu0 0.0
          %8280 = vmatpush1.msra.mxu0 0.0
          %8281 = vmatprep.subr.mxu0 0.0
          %8282 = vmatpush1.msra.mxu0 0.0
          %8283 = vmatprep.subr.mxu0 0.0
          %8284 = vmatpush1.msra.mxu0 0.0
          %8285 = vmatprep.subr.mxu0 0.0
          %8286 = vmatpush1.msra.mxu0 0.0
          %8287 = vmatprep.subr.mxu0 0.0
          %8288 = vmatpush1.msra.mxu0 0.0
          %8289 = vmatprep.subr.mxu0 0.0
          %8290 = vmatpush1.msra.mxu0 0.0
          %8291 = vmatprep.subr.mxu0 0.0
          %8292 = vmatpush1.msra.mxu0 0.0
          %8293 = vmatprep.subr.mxu0 0.0
          %8294 = vmatpush1.msra.mxu0 0.0
          %8295 = vmatprep.subr.mxu0 0.0
          %8296 = vmatpush1.msra.mxu0 0.0
          %8297 = vmatprep.subr.mxu0 0.0
          %8298 = vmatpush1.msra.mxu0 0.0
          %8299 = vmatprep.subr.mxu0 0.0
          %8300 = vmatpush1.msra.mxu0 0.0
          %8301 = vmatprep.subr.mxu0 0.0
          %8302 = vmatpush1.msra.mxu0 0.0
          %8303 = vmatprep.subr.mxu0 0.0
          %8304 = vmatpush1.msra.mxu0 0.0
          %8305 = vmatprep.subr.mxu0 0.0
          %8306 = vmatpush1.msra.mxu0 0.0
          %8307 = vmatprep.mubr.f32.mxu0 0.0
          %8308 = vmatmul.mubr.f32.gmra.mrb[0].mxu0 %v8232
          %v8309 = vpop.f32.mrb[0].mxu0
          %v8310 = vadd.f32 %v8230, %v8309
          %v8311 = vpop.f32.mrb[0].mxu0
          %8312 = vmatprep.mubr.f32.mxu0 0.0
          %8313 = vmatmul.mubr.f32.gmra.mrb[0].mxu0 %v8235
          %v8314 = vpop.f32.mrb[0].mxu0
          %v8315 = vadd.f32 %v8230, %v8314
          %v8316 = vpop.f32.mrb[0].mxu0
          %8317 = vmatprep.mubr.f32.mxu0 0.0
          %8318 = vmatmul.mubr.f32.gmra.mrb[0].mxu0 %v8238
          %v8319 = vpop.f32.mrb[0].mxu0
          %v8320 = vadd.f32 %v8230, %v8319
          %v8321 = vpop.f32.mrb[0].mxu0
          %8322 = vmatprep.mubr.f32.mxu0 0.0
          %8323 = vmatmul.mubr.f32.gmra.mrb[0].mxu0 %v8241
          %v8324 = vpop.f32.mrb[0].mxu0
          %v8325 = vadd.f32 %v8230, %v8324
          %v8326 = vpop.f32.mrb[0].mxu0
          %8327 = vdwg.mxu0
          %v8328 = vsel %vm1372, %v8310, 0.0
          %8329 = vadd.xlane.f32.xlu0 %v8328
          %v8330 = vpop.xlane.xlu0 %8329
          %v8331 = vsel %vm1372, %v8315, 0.0
          %8332 = vadd.xlane.f32.xlu0 %v8331
          %v8333 = vpop.xlane.xlu0 %8332
          %v8334 = vsel %vm1372, %v8320, 0.0
          %8335 = vadd.xlane.f32.xlu0 %v8334
          %v8336 = vpop.xlane.xlu0 %8335
          %v8337 = vsel %vm1372, %v8325, 0.0
          %8338 = vadd.xlane.f32.xlu0 %v8337
          %v8339 = vpop.xlane.xlu0 %8338
          %v8340 = vmul.f32 %v8330, %v3978
          %v8341 = vmul.f32 %v8333, %v3978
          %v8342 = vmul.f32 %v8336, %v3978
          %v8343 = vmul.f32 %v8339, %v3978
          %v8344 = vsub.f32 %v8310, %v8340
          %v8345 = vsub.f32 %v8315, %v8341
          %v8346 = vsub.f32 %v8320, %v8342
          %v8347 = vsub.f32 %v8325, %v8343
          %v8348 = vmul.f32 %v8344, %v8344
          %v8349 = vmul.f32 %v8345, %v8345
          %v8350 = vmul.f32 %v8346, %v8346
          %v8351 = vmul.f32 %v8347, %v8347
          %v8352 = vsel %vm1372, %v8348, 0.0
          %8353 = vadd.xlane.f32.xlu0 %v8352
          %v8354 = vpop.xlane.xlu0 %8353
          %v8355 = vsel %vm1372, %v8349, 0.0
          %8356 = vadd.xlane.f32.xlu0 %v8355
          %v8357 = vpop.xlane.xlu0 %8356
          %v8358 = vsel %vm1372, %v8350, 0.0
          %8359 = vadd.xlane.f32.xlu0 %v8358
          %v8360 = vpop.xlane.xlu0 %8359
          %v8361 = vsel %vm1372, %v8351, 0.0
          %8362 = vadd.xlane.f32.xlu0 %v8361
          %v8363 = vpop.xlane.xlu0 %8362
          %v8364 = vmul.f32 %v8354, %v3978
          %v8365 = vmul.f32 %v8357, %v3978
          %v8366 = vmul.f32 %v8360, %v3978
          %v8367 = vmul.f32 %v8363, %v3978
          %v8368 = vadd.f32 %v8364, 1e-05
          %v8369 = vadd.f32 %v8365, 1e-05
          %v8370 = vadd.f32 %v8366, 1e-05
          %v8371 = vadd.f32 %v8367, 1e-05
          %v8372 = vrsqrt.pop %v8368
          %v8373 = vrsqrt.pop %v8369
          %v8374 = vrsqrt.pop %v8370
          %v8375 = vrsqrt.pop %v8371
          %v8376 = vmul.f32 %v8344, %v8372
          %v8377 = vmul.f32 %v8345, %v8373
          %v8378 = vmul.f32 %v8346, %v8374
          %v8379 = vmul.f32 %v8347, %v8375
          %v8380 = vlaneseq
          %v8381 = vshrl.u32 %v8380, 7
          %v8382 = vsub.s32 0, %v8381
          %v8383 = vrot.slane %v693, %v8382
          %v8384 = vmul.f32 %v8376, %v8383
          %v8385 = vmul.f32 %v8377, %v8383
          %v8386 = vmul.f32 %v8378, %v8383
          %v8387 = vmul.f32 %v8379, %v8383
          %v8388 = vlaneseq
          %v8389 = vshrl.u32 %v8388, 7
          %v8390 = vsub.s32 1, %v8389
          %v8391 = vrot.slane %v693, %v8390
          %v8392 = vadd.f32 %v8384, %v8391
          %v8393 = vadd.f32 %v8385, %v8391
          %v8394 = vadd.f32 %v8386, %v8391
          %v8395 = vadd.f32 %v8387, %v8391
          %v8396 = vmax.f32 %v8392, 0.0
          %v8397 = vmax.f32 %v8393, 0.0
          %v8398 = vmax.f32 %v8394, 0.0
          %v8399 = vmax.f32 %v8395, 0.0
          %v8400 = vadd.f32 %v7990, %v8396
          %v8401 = vadd.f32 %v7991, %v8397
          %v8402 = vadd.f32 %v7992, %v8398
          %v8403 = vadd.f32 %v7993, %v8399
          %v8404 = vsel %vm1372, %v8400, %v8030
          %v8405 = vsel %vm1372, %v8401, %v8031
          %v8406 = vsel %vm1372, %v8402, %v8032
          %v8407 = vsel %vm1372, %v8403, %v8033
          %v8408 = vsel %vm7653, %v8404, 0.0
          %v8409 = vsel %vm7653, %v8405, 0.0
          %v8410 = vsel %vm7653, %v8406, 0.0
          %v8411 = vsel %vm7653, %v8407, 0.0
          %8412 = vst [vmem:[#allocation2] sm:$0xff] %v8408
          %8413 = vst [vmem:[#allocation2 + $0x8] sm:$0xff] %v8409
          %8414 = vst [vmem:[#allocation2 + $0x10] sm:$0xff] %v8410
          %8415 = vst [vmem:[#allocation2 + $0x18] sm:$0xff] %v8411
        $region84: #{tpu_custom_call.1} parent=71 // pred_fallthru
          _
        %p8416 = scmp.eq.s32.totalorder %s31, 2
        %p8417 = pnand %p8416, %p525
        %p8418 = pneg %p8417
        // Predicated region
        $region85: #{tpu_custom_call.1} parent=71 // pred_check
          _
        $region86: #{tpu_custom_call.1} parent=71 // pred_check_branch
          %8420 = sbr.rel (%p8417) target = $region88
        $region87: #{tpu_custom_call.1} parent=71 // pred_region
          %v8421 = vld [vmem:[#allocation2] sm:$0xff]
          %v8422 = vld [vmem:[#allocation2 + $0x8] sm:$0xff]
          %v8423 = vld [vmem:[#allocation2 + $0x10] sm:$0xff]
          %v8424 = vld [vmem:[#allocation2 + $0x18] sm:$0xff]
          %v8425 = vld [vmem:[%s4] sm:$0x1]
          %v8426 = vlaneseq
          %v8427 = vshrl.u32 %v8426, 7
          %v8428 = vsub.s32 0, %v8427
          %v8429 = vrot.slane %v8425, %v8428
          %vm8430 = vcmp.eq.s32.totalorder %v8429, %v7752
          %v8431 = vsel %vm8430, 1, 0
          %v8432 = vcvt.s32.f32 %v8431
          %v8434 = vsel %vm1372, %v8432, 0
          %8436 = vmatprep.subr.mxu0 0.0
          %8437 = vmatpush1.msra.mxu0 %v8421
          %8438 = vmatprep.subr.mxu0 0.0
          %8439 = vmatpush1.msra.mxu0 %v8422
          %8440 = vmatprep.subr.mxu0 0.0
          %8441 = vmatpush1.msra.mxu0 %v8423
          %8442 = vmatprep.subr.mxu0 0.0
          %8443 = vmatpush1.msra.mxu0 %v8424
          %8444 = vmatprep.subr.mxu0 0.0
          %8445 = vmatpush1.msra.mxu0 0.0
          %8446 = vmatprep.subr.mxu0 0.0
          %8447 = vmatpush1.msra.mxu0 0.0
          %8448 = vmatprep.subr.mxu0 0.0
          %8449 = vmatpush1.msra.mxu0 0.0
          %8450 = vmatprep.subr.mxu0 0.0
          %8451 = vmatpush1.msra.mxu0 0.0
          %8452 = vmatprep.subr.mxu0 0.0
          %8453 = vmatpush1.msra.mxu0 0.0
          %8454 = vmatprep.subr.mxu0 0.0
          %8455 = vmatpush1.msra.mxu0 0.0
          %8456 = vmatprep.subr.mxu0 0.0
          %8457 = vmatpush1.msra.mxu0 0.0
          %8458 = vmatprep.subr.mxu0 0.0
          %8459 = vmatpush1.msra.mxu0 0.0
          %8460 = vmatprep.subr.mxu0 0.0
          %8461 = vmatpush1.msra.mxu0 0.0
          %8462 = vmatprep.subr.mxu0 0.0
          %8463 = vmatpush1.msra.mxu0 0.0
          %8464 = vmatprep.subr.mxu0 0.0
          %8465 = vmatpush1.msra.mxu0 0.0
          %8466 = vmatprep.subr.mxu0 0.0
          %8467 = vmatpush1.msra.mxu0 0.0
          %8468 = vmatprep.subr.mxu0 0.0
          %8469 = vmatpush1.msra.mxu0 0.0
          %8470 = vmatprep.subr.mxu0 0.0
          %8471 = vmatpush1.msra.mxu0 0.0
          %8472 = vmatprep.subr.mxu0 0.0
          %8473 = vmatpush1.msra.mxu0 0.0
          %8474 = vmatprep.subr.mxu0 0.0
          %8475 = vmatpush1.msra.mxu0 0.0
          %8476 = vmatprep.subr.mxu0 0.0
          %8477 = vmatpush1.msra.mxu0 0.0
          %8478 = vmatprep.subr.mxu0 0.0
          %8479 = vmatpush1.msra.mxu0 0.0
          %8480 = vmatprep.subr.mxu0 0.0
          %8481 = vmatpush1.msra.mxu0 0.0
          %8482 = vmatprep.subr.mxu0 0.0
          %8483 = vmatpush1.msra.mxu0 0.0
          %8484 = vmatprep.subr.mxu0 0.0
          %8485 = vmatpush1.msra.mxu0 0.0
          %8486 = vmatprep.subr.mxu0 0.0
          %8487 = vmatpush1.msra.mxu0 0.0
          %8488 = vmatprep.subr.mxu0 0.0
          %8489 = vmatpush1.msra.mxu0 0.0
          %8490 = vmatprep.subr.mxu0 0.0
          %8491 = vmatpush1.msra.mxu0 0.0
          %8492 = vmatprep.subr.mxu0 0.0
          %8493 = vmatpush1.msra.mxu0 0.0
          %8494 = vmatprep.subr.mxu0 0.0
          %8495 = vmatpush1.msra.mxu0 0.0
          %8496 = vmatprep.subr.mxu0 0.0
          %8497 = vmatpush1.msra.mxu0 0.0
          %8498 = vmatprep.subr.mxu0 0.0
          %8499 = vmatpush1.msra.mxu0 0.0
          %8500 = vmatprep.mubr.f32.mxu0 0.0
          %8501 = vmatmul.mubr.f32.gmra.mrb[0].mxu0 %v8434
          %v8502 = vpop.f32.mrb[0].mxu0
          %v8503 = vadd.f32 0.0, %v8502
          %v8504 = vpop.f32.mrb[0].mxu0
          %8505 = vdwg.mxu0
          %v8506 = vld [vmem:[%s9] sm:$0xff]
          %v8507 = vld [vmem:[%s9 + $0x8] sm:$0xff]
          %v8508 = vld [vmem:[%s9 + $0x10] sm:$0xff]
          %v8509 = vld [vmem:[%s9 + $0x18] sm:$0xff]
          %v8510 = vld [vmem:[%s10] sm:$0x1]
          %v8512 = vlaneseq
          %v8513 = vshrl.u32 %v8512, 7
          %v8514 = vsub.s32 0, %v8513
          %v8515 = vrot.slane %v8510, %v8514
          %v8518 = vsel %vm1372, %v8503, 0
          %8520 = vmatprep.subr.mxu0 0.0
          %8521 = vmatpush1.msra.mxu0 %v8506
          %8522 = vmatprep.subr.mxu0 0.0
          %8523 = vmatpush1.msra.mxu0 %v8507
          %8524 = vmatprep.subr.mxu0 0.0
          %8525 = vmatpush1.msra.mxu0 %v8508
          %8526 = vmatprep.subr.mxu0 0.0
          %8527 = vmatpush1.msra.mxu0 %v8509
          %8528 = vmatprep.subr.mxu0 0.0
          %8529 = vmatpush1.msra.mxu0 0.0
          %8530 = vmatprep.subr.mxu0 0.0
          %8531 = vmatpush1.msra.mxu0 0.0
          %8532 = vmatprep.subr.mxu0 0.0
          %8533 = vmatpush1.msra.mxu0 0.0
          %8534 = vmatprep.subr.mxu0 0.0
          %8535 = vmatpush1.msra.mxu0 0.0
          %8536 = vmatprep.subr.mxu0 0.0
          %8537 = vmatpush1.msra.mxu0 0.0
          %8538 = vmatprep.subr.mxu0 0.0
          %8539 = vmatpush1.msra.mxu0 0.0
          %8540 = vmatprep.subr.mxu0 0.0
          %8541 = vmatpush1.msra.mxu0 0.0
          %8542 = vmatprep.subr.mxu0 0.0
          %8543 = vmatpush1.msra.mxu0 0.0
          %8544 = vmatprep.subr.mxu0 0.0
          %8545 = vmatpush1.msra.mxu0 0.0
          %8546 = vmatprep.subr.mxu0 0.0
          %8547 = vmatpush1.msra.mxu0 0.0
          %8548 = vmatprep.subr.mxu0 0.0
          %8549 = vmatpush1.msra.mxu0 0.0
          %8550 = vmatprep.subr.mxu0 0.0
          %8551 = vmatpush1.msra.mxu0 0.0
          %8552 = vmatprep.subr.mxu0 0.0
          %8553 = vmatpush1.msra.mxu0 0.0
          %8554 = vmatprep.subr.mxu0 0.0
          %8555 = vmatpush1.msra.mxu0 0.0
          %8556 = vmatprep.subr.mxu0 0.0
          %8557 = vmatpush1.msra.mxu0 0.0
          %8558 = vmatprep.subr.mxu0 0.0
          %8559 = vmatpush1.msra.mxu0 0.0
          %8560 = vmatprep.subr.mxu0 0.0
          %8561 = vmatpush1.msra.mxu0 0.0
          %8562 = vmatprep.subr.mxu0 0.0
          %8563 = vmatpush1.msra.mxu0 0.0
          %8564 = vmatprep.subr.mxu0 0.0
          %8565 = vmatpush1.msra.mxu0 0.0
          %8566 = vmatprep.subr.mxu0 0.0
          %8567 = vmatpush1.msra.mxu0 0.0
          %8568 = vmatprep.subr.mxu0 0.0
          %8569 = vmatpush1.msra.mxu0 0.0
          %8570 = vmatprep.subr.mxu0 0.0
          %8571 = vmatpush1.msra.mxu0 0.0
          %8572 = vmatprep.subr.mxu0 0.0
          %8573 = vmatpush1.msra.mxu0 0.0
          %8574 = vmatprep.subr.mxu0 0.0
          %8575 = vmatpush1.msra.mxu0 0.0
          %8576 = vmatprep.subr.mxu0 0.0
          %8577 = vmatpush1.msra.mxu0 0.0
          %8578 = vmatprep.subr.mxu0 0.0
          %8579 = vmatpush1.msra.mxu0 0.0
          %8580 = vmatprep.subr.mxu0 0.0
          %8581 = vmatpush1.msra.mxu0 0.0
          %8582 = vmatprep.subr.mxu0 0.0
          %8583 = vmatpush1.msra.mxu0 0.0
          %8584 = vmatprep.mubr.f32.mxu0 0.0
          %8585 = vmatmul.mubr.f32.gmra.mrb[0].mxu0 %v8518
          %v8586 = vpop.f32.mrb[0].mxu0
          %v8587 = vadd.f32 %v8515, %v8586
          %v8588 = vpop.f32.mrb[0].mxu0
          %8589 = vdwg.mxu0
          %v8590 = vmax.f32 %v8587, 0.0
          %v8591 = vld [vmem:[%s11] sm:$0xff]
          %v8592 = vld [vmem:[%s11 + $0x8] sm:$0xff]
          %v8593 = vld [vmem:[%s11 + $0x10] sm:$0xff]
          %v8594 = vld [vmem:[%s11 + $0x18] sm:$0xff]
          %v8595 = vld [vmem:[#allocation4] sm:$0x1]
          %v8597 = vlaneseq
          %v8598 = vshrl.u32 %v8597, 7
          %v8599 = vsub.s32 0, %v8598
          %v8600 = vrot.slane %v8595, %v8599
          %v8603 = vsel %vm1372, %v8590, 0
          %8605 = vmatprep.subr.mxu0 0.0
          %8606 = vmatpush1.msra.mxu0 %v8591
          %8607 = vmatprep.subr.mxu0 0.0
          %8608 = vmatpush1.msra.mxu0 %v8592
          %8609 = vmatprep.subr.mxu0 0.0
          %8610 = vmatpush1.msra.mxu0 %v8593
          %8611 = vmatprep.subr.mxu0 0.0
          %8612 = vmatpush1.msra.mxu0 %v8594
          %8613 = vmatprep.subr.mxu0 0.0
          %8614 = vmatpush1.msra.mxu0 0.0
          %8615 = vmatprep.subr.mxu0 0.0
          %8616 = vmatpush1.msra.mxu0 0.0
          %8617 = vmatprep.subr.mxu0 0.0
          %8618 = vmatpush1.msra.mxu0 0.0
          %8619 = vmatprep.subr.mxu0 0.0
          %8620 = vmatpush1.msra.mxu0 0.0
          %8621 = vmatprep.subr.mxu0 0.0
          %8622 = vmatpush1.msra.mxu0 0.0
          %8623 = vmatprep.subr.mxu0 0.0
          %8624 = vmatpush1.msra.mxu0 0.0
          %8625 = vmatprep.subr.mxu0 0.0
          %8626 = vmatpush1.msra.mxu0 0.0
          %8627 = vmatprep.subr.mxu0 0.0
          %8628 = vmatpush1.msra.mxu0 0.0
          %8629 = vmatprep.subr.mxu0 0.0
          %8630 = vmatpush1.msra.mxu0 0.0
          %8631 = vmatprep.subr.mxu0 0.0
          %8632 = vmatpush1.msra.mxu0 0.0
          %8633 = vmatprep.subr.mxu0 0.0
          %8634 = vmatpush1.msra.mxu0 0.0
          %8635 = vmatprep.subr.mxu0 0.0
          %8636 = vmatpush1.msra.mxu0 0.0
          %8637 = vmatprep.subr.mxu0 0.0
          %8638 = vmatpush1.msra.mxu0 0.0
          %8639 = vmatprep.subr.mxu0 0.0
          %8640 = vmatpush1.msra.mxu0 0.0
          %8641 = vmatprep.subr.mxu0 0.0
          %8642 = vmatpush1.msra.mxu0 0.0
          %8643 = vmatprep.subr.mxu0 0.0
          %8644 = vmatpush1.msra.mxu0 0.0
          %8645 = vmatprep.subr.mxu0 0.0
          %8646 = vmatpush1.msra.mxu0 0.0
          %8647 = vmatprep.subr.mxu0 0.0
          %8648 = vmatpush1.msra.mxu0 0.0
          %8649 = vmatprep.subr.mxu0 0.0
          %8650 = vmatpush1.msra.mxu0 0.0
          %8651 = vmatprep.subr.mxu0 0.0
          %8652 = vmatpush1.msra.mxu0 0.0
          %8653 = vmatprep.subr.mxu0 0.0
          %8654 = vmatpush1.msra.mxu0 0.0
          %8655 = vmatprep.subr.mxu0 0.0
          %8656 = vmatpush1.msra.mxu0 0.0
          %8657 = vmatprep.subr.mxu0 0.0
          %8658 = vmatpush1.msra.mxu0 0.0
          %8659 = vmatprep.subr.mxu0 0.0
          %8660 = vmatpush1.msra.mxu0 0.0
          %8661 = vmatprep.subr.mxu0 0.0
          %8662 = vmatpush1.msra.mxu0 0.0
          %8663 = vmatprep.subr.mxu0 0.0
          %8664 = vmatpush1.msra.mxu0 0.0
          %8665 = vmatprep.subr.mxu0 0.0
          %8666 = vmatpush1.msra.mxu0 0.0
          %8667 = vmatprep.subr.mxu0 0.0
          %8668 = vmatpush1.msra.mxu0 0.0
          %8669 = vmatprep.mubr.f32.mxu0 0.0
          %8670 = vmatmul.mubr.f32.gmra.mrb[0].mxu0 %v8603
          %v8671 = vpop.f32.mrb[0].mxu0
          %v8672 = vadd.f32 %v8600, %v8671
          %v8673 = vpop.f32.mrb[0].mxu0
          %8674 = vdwg.mxu0
          %vm8675 = vcmask 7168
          %v8676 = vsel %vm8675, %v8672, 0.0
          %8677 = vst [vmem:[#allocation5] sm:$0x7] %v8676
        $region88: #{tpu_custom_call.1} parent=71 // pred_fallthru
          _
        // Predicated region
        $region89: #{tpu_custom_call.1} parent=71 // pred_check
          %p8678 = pneg %p350
        $region90: #{tpu_custom_call.1} parent=71 // pred_check_branch
          %8680 = sbr.rel (%p8678) target = $region92
        $region91: #{tpu_custom_call.1} parent=71 // pred_region
          %s8682 = ssub.s32 64, 64
          %8683 = vsyncadd [#allocation6], %s8682
          %s8685 = sshll.u32 [#allocation5], 4
          %s8686 = int_to_ptr.vmem [resolvable:$true] %s8685
          %8688 = dma.vmem_to_hbm [thread:$0]  %s8686, 64, %s13, [#allocation6]
        $region92: #{tpu_custom_call.1} parent=71 // pred_fallthru
          _
        // Predicated region
        $region93: #{tpu_custom_call.1} parent=71 // pred_check
          %p8689 = pneg %p350
        $region94: #{tpu_custom_call.1} parent=71 // pred_check_branch
          %8691 = sbr.rel (%p8689) target = $region96
        $region95: #{tpu_custom_call.1} parent=71 // pred_region
          %8692 = dma.done [#allocation6], 64
        $region96: #{tpu_custom_call.1} parent=71 // pred_fallthru
          _
      $region72: #{tpu_custom_call.1} parent=5 // pred_fallthru
        _
      %p8693 = scmp.le.s32.totalorder 2, %s22
      // Predicated region
      $region97: #{tpu_custom_call.1} parent=5 // pred_check
        %p8694 = pneg %p8693
      $region98: #{tpu_custom_call.1} parent=5 // pred_check_branch
        %8696 = sbr.rel (%p8694) target = $region100
      $region99: #{tpu_custom_call.1} parent=5 // pred_region
        %s8697 = ssub.s32 %s22, 2
      $region100: #{tpu_custom_call.1} parent=5 // pred_fallthru
        _
    $region6: #{tpu_custom_call.1} parent=1 // loop_footer
      %s26 = sadd.s32 1, %s22
    $region7: #{tpu_custom_call.1} parent=1 // loop_footer_branch
      %21 = sbr.rel target = $region3
    $region8: #{tpu_custom_call.1} parent=1 // loop_exit
      _
    %8698 = vsyncpa [#allocation6], 1
    %s8699 = scalar_lea.sflag [#allocation6], 1
    %8700 = vsyncpa %s8699, 1

</llo_original>
